<compile_context>
chip_gen: v6e
topology: v6e:2x2x1
jax: 0.10.0
libtpu: 0.0.40
codegen_flags: <defaults>
</compile_context>

<pallas_src>
import numpy as np
import jax
import jax.numpy as jnp
from jax.experimental import pallas as pl
from jax.experimental.pallas import tpu as pltpu

# ----------------------------- configuration -------------------------------
SRC_LEN = 8
TRG_LEN = 8
BATCH = 8
SRC_VOCAB = 32
TRG_VOCAB = 128
EMB = 64
HID = 128
VOCAB_PAD = 128          # encoder one-hot padded to a full lane width
TEACHER_FORCING_RATIO = 0.5

_VMEM = pl.BlockSpec(memory_space=pltpu.MemorySpace.VMEM)
_SMEM = pl.BlockSpec(memory_space=pltpu.MemorySpace.SMEM)


# ------------------------------- fused kernel -------------------------------
def _seq2seq_kernel(src_tok_ref, trg_ref, tf_ref,
                    enc_wfold_ref, enc_whh_ref, enc_b_ref,
                    dec_wgates_ref, dec_b_ref, dec_wout_ref, dec_bout_ref,
                    out_ref, xw_ref, enc_ref):
    """Whole seq2seq forward in one kernel invocation.

    src_tok_ref: (S*B, 1) int32 (time-major, flattened)
    trg_ref:     (T, B, 1) int32;  tf_ref: (T,) int32 in SMEM
    enc_wfold_ref: (VOCAB_PAD, 4H) bf16   (enc_emb @ enc_wih, row-padded)
    enc_whh_ref:   (H, 4H) bf16;  enc_b_ref: (1, 4H) f32
    dec_wgates_ref:(V + 2H, 4H) bf16  ([dec_emb@wih_e ; wih_c ; whh] stacked)
    dec_b_ref:     (1, 4H) f32
    dec_wout_ref:  (2H, V) bf16;  dec_bout_ref: (1, V) f32
    out_ref: (T, B, V) f32 output
    xw_ref:  (S*B, 4H) f32 VMEM scratch;  enc_ref: (S, B, H) f32 VMEM scratch
    """
    T, B, V = out_ref.shape
    S = enc_ref.shape[0]
    H = enc_ref.shape[2]
    VPAD = enc_wfold_ref.shape[0]

    # ------------------------------ encoder --------------------------------
    # Lane-dense one-hot @ (folded emb @ W_ih) for ALL timesteps at once; only
    # h @ W_hh remains inside the recurrence.  Result staged in VMEM scratch.
    tok = src_tok_ref[...]                                        # (S*B, 1)
    vidx = jax.lax.broadcasted_iota(jnp.int32, (S * B, VPAD), 1)
    onehot = jnp.where(tok == vidx, 1.0, 0.0).astype(jnp.bfloat16)
    xw_ref[...] = (jnp.dot(onehot, enc_wfold_ref[...],
                           preferred_element_type=jnp.float32)
                   + enc_b_ref[...])                              # (S*B, 4H)

    def enc_step(t, carry):
        h, c = carry
        row = pl.multiple_of(t * B, B)
        gates = xw_ref[pl.ds(row, B), :] + jnp.dot(
            h.astype(jnp.bfloat16), enc_whh_ref[...],
            preferred_element_type=jnp.float32)                   # (B, 4H)
        i_g = jax.nn.sigmoid(gates[:, 0 * H:1 * H])
        f_g = jax.nn.sigmoid(gates[:, 1 * H:2 * H])
        g_g = jnp.tanh(gates[:, 2 * H:3 * H])
        o_g = jax.nn.sigmoid(gates[:, 3 * H:4 * H])
        c = f_g * c + i_g * g_g
        h = o_g * jnp.tanh(c)
        enc_ref[t] = h
        return h, c

    h0 = jnp.zeros((B, H), jnp.float32)
    c0 = jnp.zeros((B, H), jnp.float32)
    h, c = jax.lax.fori_loop(0, S, enc_step, (h0, c0), unroll=True)

    # ------------------------------ decoder --------------------------------
    out_ref[0] = jnp.zeros((B, V), jnp.float32)       # outputs[0] stays zero
    tvidx = jax.lax.broadcasted_iota(jnp.int32, (B, V), 1)

    def dec_step(t, carry):
        h, c, tok = carry

        # --- dot-product attention over the whole (S, B, H) block ---
        enc = enc_ref[...]                                        # (S, B, H)
        scores = jnp.sum(enc * h[None, :, :], axis=-1,
                         keepdims=True)                           # (S, B, 1)
        m = jnp.max(scores, axis=0, keepdims=True)
        e = jnp.exp(scores - m)
        denom = jnp.sum(e, axis=0, keepdims=True)
        w = e / denom                                             # exact softmax
        context = jnp.sum(w * enc, axis=0)                        # (B, H)

        # --- LSTM cell: one stacked-K matmul ( [onehot ; ctx ; h] @ W ) ---
        onehot = jnp.where(tok == tvidx, 1.0, 0.0).astype(jnp.bfloat16)
        ctx_b = context.astype(jnp.bfloat16)
        h_b = h.astype(jnp.bfloat16)
        x_stack = jnp.concatenate([onehot, ctx_b, h_b], axis=-1)  # (B, V+2H)
        gates = (jnp.dot(x_stack, dec_wgates_ref[...],
                         preferred_element_type=jnp.float32)
                 + dec_b_ref[...])                                # (B, 4H)
        i_g = jax.nn.sigmoid(gates[:, 0 * H:1 * H])
        f_g = jax.nn.sigmoid(gates[:, 1 * H:2 * H])
        g_g = jnp.tanh(gates[:, 2 * H:3 * H])
        o_g = jax.nn.sigmoid(gates[:, 3 * H:4 * H])
        c_n = f_g * c + i_g * g_g
        h_n = o_g * jnp.tanh(c_n)

        # --- vocab projection: one stacked-K matmul ( [h ; ctx] @ Wout ) ---
        y_stack = jnp.concatenate([h_n.astype(jnp.bfloat16), ctx_b], axis=-1)
        logits = (jnp.dot(y_stack, dec_wout_ref[...],
                          preferred_element_type=jnp.float32)
                  + dec_bout_ref[...])                            # (B, V)
        out_ref[t] = logits

        # --- next input: teacher forcing vs greedy argmax, on device ---
        mx = jnp.max(logits, axis=-1, keepdims=True)
        top1 = jnp.min(jnp.where(logits >= mx, tvidx, V),
                       axis=-1, keepdims=True)                    # (B, 1) i32
        tok_n = jnp.where(tf_ref[t] != 0, trg_ref[t], top1)
        return h_n, c_n, tok_n

    jax.lax.fori_loop(1, T, dec_step, (h, c, trg_ref[0]), unroll=True)


# --------------------------------- wrapper -----------------------------------
@jax.jit
def seq2seq_forward(params, src, src_len, trg, tf_flags):
    """Mirrors Seq2Seq.forward: returns (trg_len, batch, trg_vocab)."""
    del src_len  # TODO(synk): pack_padded_sequence masking not reproduced.
    S, B = src.shape
    T = trg.shape[0]
    src_flat = src.reshape(S * B, 1).astype(jnp.int32)
    trg_col = trg[:, :, None].astype(jnp.int32)
    return pl.pallas_call(
        _seq2seq_kernel,
        out_shape=jax.ShapeDtypeStruct((T, B, TRG_VOCAB), jnp.float32),
        in_specs=[_VMEM, _VMEM, _SMEM] + [_VMEM] * 7,
        out_specs=_VMEM,
        scratch_shapes=[
            pltpu.VMEM((S * B, 4 * HID), jnp.float32),   # encoder xw staging
            pltpu.VMEM((S, B, HID), jnp.float32),        # encoder outputs
        ],
    )(src_flat, trg_col, tf_flags,
      params["enc_wfold"], params["enc_whh"], params["enc_b"],
      params["dec_wgates"], params["dec_b"],
      params["dec_wout"], params["dec_bout"])


# ------------------------------- parameters ---------------------------------
def init_params(key):
    ks = jax.random.split(key, 7)
    s = 0.1

    def f32(k, shape):
        return jax.random.normal(k, shape, jnp.float32) * s

    enc_emb = f32(ks[0], (SRC_VOCAB, EMB))
    enc_wih = f32(ks[1], (EMB, 4 * HID))
    enc_whh = f32(ks[2], (HID, 4 * HID))
    dec_emb = f32(ks[3], (TRG_VOCAB, EMB))
    dec_wih = f32(ks[4], (EMB + HID, 4 * HID))     # input = [emb ; context]
    dec_whh = f32(ks[5], (HID, 4 * HID))
    dec_wout = f32(ks[6], (2 * HID, TRG_VOCAB))    # projection on [h ; context]

    # Fold embedding tables into W_ih offline (f32 fold, single bf16 rounding).
    enc_fold = jnp.zeros((VOCAB_PAD, 4 * HID), jnp.float32)
    enc_fold = enc_fold.at[:SRC_VOCAB].set(enc_emb @ enc_wih)
    dec_fold = dec_emb @ dec_wih[:EMB]             # (TRG_VOCAB, 4H)

    # Pre-stack decoder gate weights: rows [folded-emb ; wih_ctx ; whh].
    dec_wgates = jnp.concatenate([dec_fold, dec_wih[EMB:], dec_whh], axis=0)

    return {
        "enc_wfold": enc_fold.astype(jnp.bfloat16),      # (128, 4H)
        "enc_whh": enc_whh.astype(jnp.bfloat16),         # (H, 4H)
        "enc_b": jnp.zeros((1, 4 * HID), jnp.float32),
        "dec_wgates": dec_wgates.astype(jnp.bfloat16),   # (V+2H, 4H)
        "dec_b": jnp.zeros((1, 4 * HID), jnp.float32),
        "dec_wout": dec_wout.astype(jnp.bfloat16),       # (2H, V)
        "dec_bout": jnp.zeros((1, TRG_VOCAB), jnp.float32),
    }


# ---------------------------------- main -------------------------------------
if __name__ == "__main__":
    key = jax.random.PRNGKey(0)
    pkey, skey, tkey = jax.random.split(key, 3)

    params = init_params(pkey)

    src = jax.random.randint(skey, (SRC_LEN, BATCH), 0, SRC_VOCAB,
                             dtype=jnp.int32)
    trg = jax.random.randint(tkey, (TRG_LEN, BATCH), 0, TRG_VOCAB,
                             dtype=jnp.int32)
    src_len = jnp.full((BATCH,), SRC_LEN, dtype=jnp.int32)

    # Deterministic teacher-forcing decisions, precomputed as data (no host
    # sync / host RNG inside the decode loop).
    rs = np.random.RandomState(0)
    tf_flags = jnp.asarray(
        (rs.random_sample(TRG_LEN) < TEACHER_FORCING_RATIO).astype(np.int32))

    out = seq2seq_forward(params, src, src_len, trg, tf_flags)
    out = jax.block_until_ready(out)

    assert out.shape == (TRG_LEN, BATCH, TRG_VOCAB)
    assert bool(jnp.all(jnp.isfinite(out)))
    assert bool(jnp.all(out[0] == 0.0))
    print("KERNEL_OK")
</pallas_src>

<mosaic_0001>
module attributes {stable_mosaic.version = 11 : i64} {
  func.func @_seq2seq_kernel(%arg0: memref<64x1xi32, #tpu.memory_space<vmem>>, %arg1: memref<8x8x1xi32, #tpu.memory_space<vmem>>, %arg2: memref<8xi32, #tpu.memory_space<smem>>, %arg3: memref<128x512xbf16, #tpu.memory_space<vmem>>, %arg4: memref<128x512xbf16, #tpu.memory_space<vmem>>, %arg5: memref<1x512xf32, #tpu.memory_space<vmem>>, %arg6: memref<384x512xbf16, #tpu.memory_space<vmem>>, %arg7: memref<1x512xf32, #tpu.memory_space<vmem>>, %arg8: memref<256x128xbf16, #tpu.memory_space<vmem>>, %arg9: memref<1x128xf32, #tpu.memory_space<vmem>>, %arg10: memref<8x8x128xf32, #tpu.memory_space<vmem>>, %arg11: memref<64x512xf32, #tpu.memory_space<vmem>>, %arg12: memref<8x8x128xf32, #tpu.memory_space<vmem>>) attributes {dimension_semantics = [], scalar_prefetch = 0 : i64, scratch_operands = 2 : i64, tpu.core_type = #tpu.core_type<tc>} {
    %c0 = arith.constant 0 : index
    %c0_0 = arith.constant 0 : index
    %0 = vector.load %arg0[%c0, %c0_0] : memref<64x1xi32, #tpu.memory_space<vmem>>, vector<64x1xi32>
    %1 = tpu.iota {dimensions = array<i32: 1>} : vector<64x128xi32>
    %2 = vector.broadcast %0 : vector<64x1xi32> to vector<64x128xi32>
    %3 = arith.cmpi eq, %2, %1 : vector<64x128xi32>
    %cst = arith.constant 1.000000e+00 : f32
    %cst_1 = arith.constant 0.000000e+00 : f32
    %4 = vector.broadcast %cst : f32 to vector<64x128xf32>
    %5 = vector.broadcast %cst_1 : f32 to vector<64x128xf32>
    %6 = arith.select %3, %4, %5 : vector<64x128xi1>, vector<64x128xf32>
    %7 = arith.truncf %6 : vector<64x128xf32> to vector<64x128xbf16>
    %c0_2 = arith.constant 0 : index
    %c0_3 = arith.constant 0 : index
    %8 = vector.load %arg3[%c0_2, %c0_3] : memref<128x512xbf16, #tpu.memory_space<vmem>>, vector<128x512xbf16>
    %cst_4 = arith.constant dense<0.000000e+00> : vector<64x512xf32>
    %9 = tpu.matmul %7, %8, %cst_4 {dimension_numbers = #tpu.dot_dimension_numbers<[1], [0], [0], [1], [0, 0, 1, 1], [], []>} : vector<64x128xbf16>, vector<128x512xbf16>, vector<64x512xf32> -> vector<64x512xf32>
    %c0_5 = arith.constant 0 : index
    %c0_6 = arith.constant 0 : index
    %10 = vector.load %arg5[%c0_5, %c0_6] : memref<1x512xf32, #tpu.memory_space<vmem>>, vector<1x512xf32>
    %11 = vector.broadcast %10 : vector<1x512xf32> to vector<64x512xf32>
    %12 = arith.addf %9, %11 : vector<64x512xf32>
    %c0_7 = arith.constant 0 : index
    %c0_8 = arith.constant 0 : index
    %13 = vector.load %arg11[%c0_7, %c0_8] : memref<64x512xf32, #tpu.memory_space<vmem>>, vector<64x512xf32>
    tpu.vector_store %arg11[%c0_7, %c0_8], %12 {strides = array<i32>} : memref<64x512xf32, #tpu.memory_space<vmem>>, vector<64x512xf32>,
    %cst_9 = arith.constant 0.000000e+00 : f32
    %14 = vector.broadcast %cst_9 : f32 to vector<8x128xf32>
    %cst_10 = arith.constant 0.000000e+00 : f32
    %15 = vector.broadcast %cst_10 : f32 to vector<8x128xf32>
    %c0_i32 = arith.constant 0 : i32
    %c8_i32 = arith.constant 8 : i32
    %16 = arith.muli %c0_i32, %c8_i32 : i32
    %17 = tpu.assume_multiple %16, 8 : i32
    %18 = arith.index_cast %17 : i32 to index
    %c0_11 = arith.constant 0 : index
    %19 = vector.load %arg11[%18, %c0_11] : memref<64x512xf32, #tpu.memory_space<vmem>>, vector<8x512xf32>
    %20 = arith.truncf %14 : vector<8x128xf32> to vector<8x128xbf16>
    %c0_12 = arith.constant 0 : index
    %c0_13 = arith.constant 0 : index
    %21 = vector.load %arg4[%c0_12, %c0_13] : memref<128x512xbf16, #tpu.memory_space<vmem>>, vector<128x512xbf16>
    %cst_14 = arith.constant dense<0.000000e+00> : vector<8x512xf32>
    %22 = tpu.matmul %20, %21, %cst_14 {dimension_numbers = #tpu.dot_dimension_numbers<[1], [0], [0], [1], [0, 0, 1, 1], [], []>} : vector<8x128xbf16>, vector<128x512xbf16>, vector<8x512xf32> -> vector<8x512xf32>
    %23 = arith.addf %19, %22 : vector<8x512xf32>
    %24 = vector.extract_strided_slice %23 {offsets = [0, 0], sizes = [8, 128], strides = [1, 1]} : vector<8x512xf32> to vector<8x128xf32>
    %25 = arith.negf %24 : vector<8x128xf32>
    %26 = math.exp %25 : vector<8x128xf32>
    %cst_15 = arith.constant 1.000000e+00 : f32
    %27 = vector.broadcast %cst_15 : f32 to vector<8x128xf32>
    %28 = arith.addf %27, %26 : vector<8x128xf32>
    %29 = arith.divf %27, %28 : vector<8x128xf32>
    %30 = vector.extract_strided_slice %23 {offsets = [0, 128], sizes = [8, 128], strides = [1, 1]} : vector<8x512xf32> to vector<8x128xf32>
    %31 = arith.negf %30 : vector<8x128xf32>
    %32 = math.exp %31 : vector<8x128xf32>
    %cst_16 = arith.constant 1.000000e+00 : f32
    %33 = vector.broadcast %cst_16 : f32 to vector<8x128xf32>
    %34 = arith.addf %33, %32 : vector<8x128xf32>
    %35 = arith.divf %33, %34 : vector<8x128xf32>
    %36 = vector.extract_strided_slice %23 {offsets = [0, 256], sizes = [8, 128], strides = [1, 1]} : vector<8x512xf32> to vector<8x128xf32>
    %37 = math.tanh %36 : vector<8x128xf32>
    %38 = vector.extract_strided_slice %23 {offsets = [0, 384], sizes = [8, 128], strides = [1, 1]} : vector<8x512xf32> to vector<8x128xf32>
    %39 = arith.negf %38 : vector<8x128xf32>
    %40 = math.exp %39 : vector<8x128xf32>
    %cst_17 = arith.constant 1.000000e+00 : f32
    %41 = vector.broadcast %cst_17 : f32 to vector<8x128xf32>
    %42 = arith.addf %41, %40 : vector<8x128xf32>
    %43 = arith.divf %41, %42 : vector<8x128xf32>
    %44 = arith.mulf %35, %15 : vector<8x128xf32>
    %45 = arith.mulf %29, %37 : vector<8x128xf32>
    %46 = arith.addf %44, %45 : vector<8x128xf32>
    %47 = math.tanh %46 : vector<8x128xf32>
    %48 = arith.mulf %43, %47 : vector<8x128xf32>
    %49 = arith.index_cast %c0_i32 : i32 to index
    %c0_18 = arith.constant 0 : index
    %c0_19 = arith.constant 0 : index
    %50 = vector.load %arg12[%49, %c0_18, %c0_19] : memref<8x8x128xf32, #tpu.memory_space<vmem>>, vector<1x8x128xf32>
    %51 = vector.shape_cast %50 : vector<1x8x128xf32> to vector<8x128xf32>
    %52 = vector.shape_cast %48 : vector<8x128xf32> to vector<1x8x128xf32>
    tpu.vector_store %arg12[%49, %c0_18, %c0_19], %52 {strides = array<i32>} : memref<8x8x128xf32, #tpu.memory_space<vmem>>, vector<1x8x128xf32>,
    %c1_i32 = arith.constant 1 : i32
    %c8_i32_20 = arith.constant 8 : i32
    %53 = arith.muli %c1_i32, %c8_i32_20 : i32
    %54 = tpu.assume_multiple %53, 8 : i32
    %55 = arith.index_cast %54 : i32 to index
    %c0_21 = arith.constant 0 : index
    %56 = vector.load %arg11[%55, %c0_21] : memref<64x512xf32, #tpu.memory_space<vmem>>, vector<8x512xf32>
    %57 = arith.truncf %48 : vector<8x128xf32> to vector<8x128xbf16>
    %c0_22 = arith.constant 0 : index
    %c0_23 = arith.constant 0 : index
    %58 = vector.load %arg4[%c0_22, %c0_23] : memref<128x512xbf16, #tpu.memory_space<vmem>>, vector<128x512xbf16>
    %cst_24 = arith.constant dense<0.000000e+00> : vector<8x512xf32>
    %59 = tpu.matmul %57, %58, %cst_24 {dimension_numbers = #tpu.dot_dimension_numbers<[1], [0], [0], [1], [0, 0, 1, 1], [], []>} : vector<8x128xbf16>, vector<128x512xbf16>, vector<8x512xf32> -> vector<8x512xf32>
    %60 = arith.addf %56, %59 : vector<8x512xf32>
    %61 = vector.extract_strided_slice %60 {offsets = [0, 0], sizes = [8, 128], strides = [1, 1]} : vector<8x512xf32> to vector<8x128xf32>
    %62 = arith.negf %61 : vector<8x128xf32>
    %63 = math.exp %62 : vector<8x128xf32>
    %cst_25 = arith.constant 1.000000e+00 : f32
    %64 = vector.broadcast %cst_25 : f32 to vector<8x128xf32>
    %65 = arith.addf %64, %63 : vector<8x128xf32>
    %66 = arith.divf %64, %65 : vector<8x128xf32>
    %67 = vector.extract_strided_slice %60 {offsets = [0, 128], sizes = [8, 128], strides = [1, 1]} : vector<8x512xf32> to vector<8x128xf32>
    %68 = arith.negf %67 : vector<8x128xf32>
    %69 = math.exp %68 : vector<8x128xf32>
    %cst_26 = arith.constant 1.000000e+00 : f32
    %70 = vector.broadcast %cst_26 : f32 to vector<8x128xf32>
    %71 = arith.addf %70, %69 : vector<8x128xf32>
    %72 = arith.divf %70, %71 : vector<8x128xf32>
    %73 = vector.extract_strided_slice %60 {offsets = [0, 256], sizes = [8, 128], strides = [1, 1]} : vector<8x512xf32> to vector<8x128xf32>
    %74 = math.tanh %73 : vector<8x128xf32>
    %75 = vector.extract_strided_slice %60 {offsets = [0, 384], sizes = [8, 128], strides = [1, 1]} : vector<8x512xf32> to vector<8x128xf32>
    %76 = arith.negf %75 : vector<8x128xf32>
    %77 = math.exp %76 : vector<8x128xf32>
    %cst_27 = arith.constant 1.000000e+00 : f32
    %78 = vector.broadcast %cst_27 : f32 to vector<8x128xf32>
    %79 = arith.addf %78, %77 : vector<8x128xf32>
    %80 = arith.divf %78, %79 : vector<8x128xf32>
    %81 = arith.mulf %72, %46 : vector<8x128xf32>
    %82 = arith.mulf %66, %74 : vector<8x128xf32>
    %83 = arith.addf %81, %82 : vector<8x128xf32>
    %84 = math.tanh %83 : vector<8x128xf32>
    %85 = arith.mulf %80, %84 : vector<8x128xf32>
    %86 = arith.index_cast %c1_i32 : i32 to index
    %c0_28 = arith.constant 0 : index
    %c0_29 = arith.constant 0 : index
    %87 = vector.load %arg12[%86, %c0_28, %c0_29] : memref<8x8x128xf32, #tpu.memory_space<vmem>>, vector<1x8x128xf32>
    %88 = vector.shape_cast %87 : vector<1x8x128xf32> to vector<8x128xf32>
    %89 = vector.shape_cast %85 : vector<8x128xf32> to vector<1x8x128xf32>
    tpu.vector_store %arg12[%86, %c0_28, %c0_29], %89 {strides = array<i32>} : memref<8x8x128xf32, #tpu.memory_space<vmem>>, vector<1x8x128xf32>,
    %c2_i32 = arith.constant 2 : i32
    %c8_i32_30 = arith.constant 8 : i32
    %90 = arith.muli %c2_i32, %c8_i32_30 : i32
    %91 = tpu.assume_multiple %90, 8 : i32
    %92 = arith.index_cast %91 : i32 to index
    %c0_31 = arith.constant 0 : index
    %93 = vector.load %arg11[%92, %c0_31] : memref<64x512xf32, #tpu.memory_space<vmem>>, vector<8x512xf32>
    %94 = arith.truncf %85 : vector<8x128xf32> to vector<8x128xbf16>
    %c0_32 = arith.constant 0 : index
    %c0_33 = arith.constant 0 : index
    %95 = vector.load %arg4[%c0_32, %c0_33] : memref<128x512xbf16, #tpu.memory_space<vmem>>, vector<128x512xbf16>
    %cst_34 = arith.constant dense<0.000000e+00> : vector<8x512xf32>
    %96 = tpu.matmul %94, %95, %cst_34 {dimension_numbers = #tpu.dot_dimension_numbers<[1], [0], [0], [1], [0, 0, 1, 1], [], []>} : vector<8x128xbf16>, vector<128x512xbf16>, vector<8x512xf32> -> vector<8x512xf32>
    %97 = arith.addf %93, %96 : vector<8x512xf32>
    %98 = vector.extract_strided_slice %97 {offsets = [0, 0], sizes = [8, 128], strides = [1, 1]} : vector<8x512xf32> to vector<8x128xf32>
    %99 = arith.negf %98 : vector<8x128xf32>
    %100 = math.exp %99 : vector<8x128xf32>
    %cst_35 = arith.constant 1.000000e+00 : f32
    %101 = vector.broadcast %cst_35 : f32 to vector<8x128xf32>
    %102 = arith.addf %101, %100 : vector<8x128xf32>
    %103 = arith.divf %101, %102 : vector<8x128xf32>
    %104 = vector.extract_strided_slice %97 {offsets = [0, 128], sizes = [8, 128], strides = [1, 1]} : vector<8x512xf32> to vector<8x128xf32>
    %105 = arith.negf %104 : vector<8x128xf32>
    %106 = math.exp %105 : vector<8x128xf32>
    %cst_36 = arith.constant 1.000000e+00 : f32
    %107 = vector.broadcast %cst_36 : f32 to vector<8x128xf32>
    %108 = arith.addf %107, %106 : vector<8x128xf32>
    %109 = arith.divf %107, %108 : vector<8x128xf32>
    %110 = vector.extract_strided_slice %97 {offsets = [0, 256], sizes = [8, 128], strides = [1, 1]} : vector<8x512xf32> to vector<8x128xf32>
    %111 = math.tanh %110 : vector<8x128xf32>
    %112 = vector.extract_strided_slice %97 {offsets = [0, 384], sizes = [8, 128], strides = [1, 1]} : vector<8x512xf32> to vector<8x128xf32>
    %113 = arith.negf %112 : vector<8x128xf32>
    %114 = math.exp %113 : vector<8x128xf32>
    %cst_37 = arith.constant 1.000000e+00 : f32
    %115 = vector.broadcast %cst_37 : f32 to vector<8x128xf32>
    %116 = arith.addf %115, %114 : vector<8x128xf32>
    %117 = arith.divf %115, %116 : vector<8x128xf32>
    %118 = arith.mulf %109, %83 : vector<8x128xf32>
    %119 = arith.mulf %103, %111 : vector<8x128xf32>
    %120 = arith.addf %118, %119 : vector<8x128xf32>
    %121 = math.tanh %120 : vector<8x128xf32>
    %122 = arith.mulf %117, %121 : vector<8x128xf32>
    %123 = arith.index_cast %c2_i32 : i32 to index
    %c0_38 = arith.constant 0 : index
    %c0_39 = arith.constant 0 : index
    %124 = vector.load %arg12[%123, %c0_38, %c0_39] : memref<8x8x128xf32, #tpu.memory_space<vmem>>, vector<1x8x128xf32>
    %125 = vector.shape_cast %124 : vector<1x8x128xf32> to vector<8x128xf32>
    %126 = vector.shape_cast %122 : vector<8x128xf32> to vector<1x8x128xf32>
    tpu.vector_store %arg12[%123, %c0_38, %c0_39], %126 {strides = array<i32>} : memref<8x8x128xf32, #tpu.memory_space<vmem>>, vector<1x8x128xf32>,
    %c3_i32 = arith.constant 3 : i32
    %c8_i32_40 = arith.constant 8 : i32
    %127 = arith.muli %c3_i32, %c8_i32_40 : i32
    %128 = tpu.assume_multiple %127, 8 : i32
    %129 = arith.index_cast %128 : i32 to index
    %c0_41 = arith.constant 0 : index
    %130 = vector.load %arg11[%129, %c0_41] : memref<64x512xf32, #tpu.memory_space<vmem>>, vector<8x512xf32>
    %131 = arith.truncf %122 : vector<8x128xf32> to vector<8x128xbf16>
    %c0_42 = arith.constant 0 : index
    %c0_43 = arith.constant 0 : index
    %132 = vector.load %arg4[%c0_42, %c0_43] : memref<128x512xbf16, #tpu.memory_space<vmem>>, vector<128x512xbf16>
    %cst_44 = arith.constant dense<0.000000e+00> : vector<8x512xf32>
    %133 = tpu.matmul %131, %132, %cst_44 {dimension_numbers = #tpu.dot_dimension_numbers<[1], [0], [0], [1], [0, 0, 1, 1], [], []>} : vector<8x128xbf16>, vector<128x512xbf16>, vector<8x512xf32> -> vector<8x512xf32>
    %134 = arith.addf %130, %133 : vector<8x512xf32>
    %135 = vector.extract_strided_slice %134 {offsets = [0, 0], sizes = [8, 128], strides = [1, 1]} : vector<8x512xf32> to vector<8x128xf32>
    %136 = arith.negf %135 : vector<8x128xf32>
    %137 = math.exp %136 : vector<8x128xf32>
    %cst_45 = arith.constant 1.000000e+00 : f32
    %138 = vector.broadcast %cst_45 : f32 to vector<8x128xf32>
    %139 = arith.addf %138, %137 : vector<8x128xf32>
    %140 = arith.divf %138, %139 : vector<8x128xf32>
    %141 = vector.extract_strided_slice %134 {offsets = [0, 128], sizes = [8, 128], strides = [1, 1]} : vector<8x512xf32> to vector<8x128xf32>
    %142 = arith.negf %141 : vector<8x128xf32>
    %143 = math.exp %142 : vector<8x128xf32>
    %cst_46 = arith.constant 1.000000e+00 : f32
    %144 = vector.broadcast %cst_46 : f32 to vector<8x128xf32>
    %145 = arith.addf %144, %143 : vector<8x128xf32>
    %146 = arith.divf %144, %145 : vector<8x128xf32>
    %147 = vector.extract_strided_slice %134 {offsets = [0, 256], sizes = [8, 128], strides = [1, 1]} : vector<8x512xf32> to vector<8x128xf32>
    %148 = math.tanh %147 : vector<8x128xf32>
    %149 = vector.extract_strided_slice %134 {offsets = [0, 384], sizes = [8, 128], strides = [1, 1]} : vector<8x512xf32> to vector<8x128xf32>
    %150 = arith.negf %149 : vector<8x128xf32>
    %151 = math.exp %150 : vector<8x128xf32>
    %cst_47 = arith.constant 1.000000e+00 : f32
    %152 = vector.broadcast %cst_47 : f32 to vector<8x128xf32>
    %153 = arith.addf %152, %151 : vector<8x128xf32>
    %154 = arith.divf %152, %153 : vector<8x128xf32>
    %155 = arith.mulf %146, %120 : vector<8x128xf32>
    %156 = arith.mulf %140, %148 : vector<8x128xf32>
    %157 = arith.addf %155, %156 : vector<8x128xf32>
    %158 = math.tanh %157 : vector<8x128xf32>
    %159 = arith.mulf %154, %158 : vector<8x128xf32>
    %160 = arith.index_cast %c3_i32 : i32 to index
    %c0_48 = arith.constant 0 : index
    %c0_49 = arith.constant 0 : index
    %161 = vector.load %arg12[%160, %c0_48, %c0_49] : memref<8x8x128xf32, #tpu.memory_space<vmem>>, vector<1x8x128xf32>
    %162 = vector.shape_cast %161 : vector<1x8x128xf32> to vector<8x128xf32>
    %163 = vector.shape_cast %159 : vector<8x128xf32> to vector<1x8x128xf32>
    tpu.vector_store %arg12[%160, %c0_48, %c0_49], %163 {strides = array<i32>} : memref<8x8x128xf32, #tpu.memory_space<vmem>>, vector<1x8x128xf32>,
    %c4_i32 = arith.constant 4 : i32
    %c8_i32_50 = arith.constant 8 : i32
    %164 = arith.muli %c4_i32, %c8_i32_50 : i32
    %165 = tpu.assume_multiple %164, 8 : i32
    %166 = arith.index_cast %165 : i32 to index
    %c0_51 = arith.constant 0 : index
    %167 = vector.load %arg11[%166, %c0_51] : memref<64x512xf32, #tpu.memory_space<vmem>>, vector<8x512xf32>
    %168 = arith.truncf %159 : vector<8x128xf32> to vector<8x128xbf16>
    %c0_52 = arith.constant 0 : index
    %c0_53 = arith.constant 0 : index
    %169 = vector.load %arg4[%c0_52, %c0_53] : memref<128x512xbf16, #tpu.memory_space<vmem>>, vector<128x512xbf16>
    %cst_54 = arith.constant dense<0.000000e+00> : vector<8x512xf32>
    %170 = tpu.matmul %168, %169, %cst_54 {dimension_numbers = #tpu.dot_dimension_numbers<[1], [0], [0], [1], [0, 0, 1, 1], [], []>} : vector<8x128xbf16>, vector<128x512xbf16>, vector<8x512xf32> -> vector<8x512xf32>
    %171 = arith.addf %167, %170 : vector<8x512xf32>
    %172 = vector.extract_strided_slice %171 {offsets = [0, 0], sizes = [8, 128], strides = [1, 1]} : vector<8x512xf32> to vector<8x128xf32>
    %173 = arith.negf %172 : vector<8x128xf32>
    %174 = math.exp %173 : vector<8x128xf32>
    %cst_55 = arith.constant 1.000000e+00 : f32
    %175 = vector.broadcast %cst_55 : f32 to vector<8x128xf32>
    %176 = arith.addf %175, %174 : vector<8x128xf32>
    %177 = arith.divf %175, %176 : vector<8x128xf32>
    %178 = vector.extract_strided_slice %171 {offsets = [0, 128], sizes = [8, 128], strides = [1, 1]} : vector<8x512xf32> to vector<8x128xf32>
    %179 = arith.negf %178 : vector<8x128xf32>
    %180 = math.exp %179 : vector<8x128xf32>
    %cst_56 = arith.constant 1.000000e+00 : f32
    %181 = vector.broadcast %cst_56 : f32 to vector<8x128xf32>
    %182 = arith.addf %181, %180 : vector<8x128xf32>
    %183 = arith.divf %181, %182 : vector<8x128xf32>
    %184 = vector.extract_strided_slice %171 {offsets = [0, 256], sizes = [8, 128], strides = [1, 1]} : vector<8x512xf32> to vector<8x128xf32>
    %185 = math.tanh %184 : vector<8x128xf32>
    %186 = vector.extract_strided_slice %171 {offsets = [0, 384], sizes = [8, 128], strides = [1, 1]} : vector<8x512xf32> to vector<8x128xf32>
    %187 = arith.negf %186 : vector<8x128xf32>
    %188 = math.exp %187 : vector<8x128xf32>
    %cst_57 = arith.constant 1.000000e+00 : f32
    %189 = vector.broadcast %cst_57 : f32 to vector<8x128xf32>
    %190 = arith.addf %189, %188 : vector<8x128xf32>
    %191 = arith.divf %189, %190 : vector<8x128xf32>
    %192 = arith.mulf %183, %157 : vector<8x128xf32>
    %193 = arith.mulf %177, %185 : vector<8x128xf32>
    %194 = arith.addf %192, %193 : vector<8x128xf32>
    %195 = math.tanh %194 : vector<8x128xf32>
    %196 = arith.mulf %191, %195 : vector<8x128xf32>
    %197 = arith.index_cast %c4_i32 : i32 to index
    %c0_58 = arith.constant 0 : index
    %c0_59 = arith.constant 0 : index
    %198 = vector.load %arg12[%197, %c0_58, %c0_59] : memref<8x8x128xf32, #tpu.memory_space<vmem>>, vector<1x8x128xf32>
    %199 = vector.shape_cast %198 : vector<1x8x128xf32> to vector<8x128xf32>
    %200 = vector.shape_cast %196 : vector<8x128xf32> to vector<1x8x128xf32>
    tpu.vector_store %arg12[%197, %c0_58, %c0_59], %200 {strides = array<i32>} : memref<8x8x128xf32, #tpu.memory_space<vmem>>, vector<1x8x128xf32>,
    %c5_i32 = arith.constant 5 : i32
    %c8_i32_60 = arith.constant 8 : i32
    %201 = arith.muli %c5_i32, %c8_i32_60 : i32
    %202 = tpu.assume_multiple %201, 8 : i32
    %203 = arith.index_cast %202 : i32 to index
    %c0_61 = arith.constant 0 : index
    %204 = vector.load %arg11[%203, %c0_61] : memref<64x512xf32, #tpu.memory_space<vmem>>, vector<8x512xf32>
    %205 = arith.truncf %196 : vector<8x128xf32> to vector<8x128xbf16>
    %c0_62 = arith.constant 0 : index
    %c0_63 = arith.constant 0 : index
    %206 = vector.load %arg4[%c0_62, %c0_63] : memref<128x512xbf16, #tpu.memory_space<vmem>>, vector<128x512xbf16>
    %cst_64 = arith.constant dense<0.000000e+00> : vector<8x512xf32>
    %207 = tpu.matmul %205, %206, %cst_64 {dimension_numbers = #tpu.dot_dimension_numbers<[1], [0], [0], [1], [0, 0, 1, 1], [], []>} : vector<8x128xbf16>, vector<128x512xbf16>, vector<8x512xf32> -> vector<8x512xf32>
    %208 = arith.addf %204, %207 : vector<8x512xf32>
    %209 = vector.extract_strided_slice %208 {offsets = [0, 0], sizes = [8, 128], strides = [1, 1]} : vector<8x512xf32> to vector<8x128xf32>
    %210 = arith.negf %209 : vector<8x128xf32>
    %211 = math.exp %210 : vector<8x128xf32>
    %cst_65 = arith.constant 1.000000e+00 : f32
    %212 = vector.broadcast %cst_65 : f32 to vector<8x128xf32>
    %213 = arith.addf %212, %211 : vector<8x128xf32>
    %214 = arith.divf %212, %213 : vector<8x128xf32>
    %215 = vector.extract_strided_slice %208 {offsets = [0, 128], sizes = [8, 128], strides = [1, 1]} : vector<8x512xf32> to vector<8x128xf32>
    %216 = arith.negf %215 : vector<8x128xf32>
    %217 = math.exp %216 : vector<8x128xf32>
    %cst_66 = arith.constant 1.000000e+00 : f32
    %218 = vector.broadcast %cst_66 : f32 to vector<8x128xf32>
    %219 = arith.addf %218, %217 : vector<8x128xf32>
    %220 = arith.divf %218, %219 : vector<8x128xf32>
    %221 = vector.extract_strided_slice %208 {offsets = [0, 256], sizes = [8, 128], strides = [1, 1]} : vector<8x512xf32> to vector<8x128xf32>
    %222 = math.tanh %221 : vector<8x128xf32>
    %223 = vector.extract_strided_slice %208 {offsets = [0, 384], sizes = [8, 128], strides = [1, 1]} : vector<8x512xf32> to vector<8x128xf32>
    %224 = arith.negf %223 : vector<8x128xf32>
    %225 = math.exp %224 : vector<8x128xf32>
    %cst_67 = arith.constant 1.000000e+00 : f32
    %226 = vector.broadcast %cst_67 : f32 to vector<8x128xf32>
    %227 = arith.addf %226, %225 : vector<8x128xf32>
    %228 = arith.divf %226, %227 : vector<8x128xf32>
    %229 = arith.mulf %220, %194 : vector<8x128xf32>
    %230 = arith.mulf %214, %222 : vector<8x128xf32>
    %231 = arith.addf %229, %230 : vector<8x128xf32>
    %232 = math.tanh %231 : vector<8x128xf32>
    %233 = arith.mulf %228, %232 : vector<8x128xf32>
    %234 = arith.index_cast %c5_i32 : i32 to index
    %c0_68 = arith.constant 0 : index
    %c0_69 = arith.constant 0 : index
    %235 = vector.load %arg12[%234, %c0_68, %c0_69] : memref<8x8x128xf32, #tpu.memory_space<vmem>>, vector<1x8x128xf32>
    %236 = vector.shape_cast %235 : vector<1x8x128xf32> to vector<8x128xf32>
    %237 = vector.shape_cast %233 : vector<8x128xf32> to vector<1x8x128xf32>
    tpu.vector_store %arg12[%234, %c0_68, %c0_69], %237 {strides = array<i32>} : memref<8x8x128xf32, #tpu.memory_space<vmem>>, vector<1x8x128xf32>,
    %c6_i32 = arith.constant 6 : i32
    %c8_i32_70 = arith.constant 8 : i32
    %238 = arith.muli %c6_i32, %c8_i32_70 : i32
    %239 = tpu.assume_multiple %238, 8 : i32
    %240 = arith.index_cast %239 : i32 to index
    %c0_71 = arith.constant 0 : index
    %241 = vector.load %arg11[%240, %c0_71] : memref<64x512xf32, #tpu.memory_space<vmem>>, vector<8x512xf32>
    %242 = arith.truncf %233 : vector<8x128xf32> to vector<8x128xbf16>
    %c0_72 = arith.constant 0 : index
    %c0_73 = arith.constant 0 : index
    %243 = vector.load %arg4[%c0_72, %c0_73] : memref<128x512xbf16, #tpu.memory_space<vmem>>, vector<128x512xbf16>
    %cst_74 = arith.constant dense<0.000000e+00> : vector<8x512xf32>
    %244 = tpu.matmul %242, %243, %cst_74 {dimension_numbers = #tpu.dot_dimension_numbers<[1], [0], [0], [1], [0, 0, 1, 1], [], []>} : vector<8x128xbf16>, vector<128x512xbf16>, vector<8x512xf32> -> vector<8x512xf32>
    %245 = arith.addf %241, %244 : vector<8x512xf32>
    %246 = vector.extract_strided_slice %245 {offsets = [0, 0], sizes = [8, 128], strides = [1, 1]} : vector<8x512xf32> to vector<8x128xf32>
    %247 = arith.negf %246 : vector<8x128xf32>
    %248 = math.exp %247 : vector<8x128xf32>
    %cst_75 = arith.constant 1.000000e+00 : f32
    %249 = vector.broadcast %cst_75 : f32 to vector<8x128xf32>
    %250 = arith.addf %249, %248 : vector<8x128xf32>
    %251 = arith.divf %249, %250 : vector<8x128xf32>
    %252 = vector.extract_strided_slice %245 {offsets = [0, 128], sizes = [8, 128], strides = [1, 1]} : vector<8x512xf32> to vector<8x128xf32>
    %253 = arith.negf %252 : vector<8x128xf32>
    %254 = math.exp %253 : vector<8x128xf32>
    %cst_76 = arith.constant 1.000000e+00 : f32
    %255 = vector.broadcast %cst_76 : f32 to vector<8x128xf32>
    %256 = arith.addf %255, %254 : vector<8x128xf32>
    %257 = arith.divf %255, %256 : vector<8x128xf32>
    %258 = vector.extract_strided_slice %245 {offsets = [0, 256], sizes = [8, 128], strides = [1, 1]} : vector<8x512xf32> to vector<8x128xf32>
    %259 = math.tanh %258 : vector<8x128xf32>
    %260 = vector.extract_strided_slice %245 {offsets = [0, 384], sizes = [8, 128], strides = [1, 1]} : vector<8x512xf32> to vector<8x128xf32>
    %261 = arith.negf %260 : vector<8x128xf32>
    %262 = math.exp %261 : vector<8x128xf32>
    %cst_77 = arith.constant 1.000000e+00 : f32
    %263 = vector.broadcast %cst_77 : f32 to vector<8x128xf32>
    %264 = arith.addf %263, %262 : vector<8x128xf32>
    %265 = arith.divf %263, %264 : vector<8x128xf32>
    %266 = arith.mulf %257, %231 : vector<8x128xf32>
    %267 = arith.mulf %251, %259 : vector<8x128xf32>
    %268 = arith.addf %266, %267 : vector<8x128xf32>
    %269 = math.tanh %268 : vector<8x128xf32>
    %270 = arith.mulf %265, %269 : vector<8x128xf32>
    %271 = arith.index_cast %c6_i32 : i32 to index
    %c0_78 = arith.constant 0 : index
    %c0_79 = arith.constant 0 : index
    %272 = vector.load %arg12[%271, %c0_78, %c0_79] : memref<8x8x128xf32, #tpu.memory_space<vmem>>, vector<1x8x128xf32>
    %273 = vector.shape_cast %272 : vector<1x8x128xf32> to vector<8x128xf32>
    %274 = vector.shape_cast %270 : vector<8x128xf32> to vector<1x8x128xf32>
    tpu.vector_store %arg12[%271, %c0_78, %c0_79], %274 {strides = array<i32>} : memref<8x8x128xf32, #tpu.memory_space<vmem>>, vector<1x8x128xf32>,
    %c7_i32 = arith.constant 7 : i32
    %c8_i32_80 = arith.constant 8 : i32
    %275 = arith.muli %c7_i32, %c8_i32_80 : i32
    %276 = tpu.assume_multiple %275, 8 : i32
    %277 = arith.index_cast %276 : i32 to index
    %c0_81 = arith.constant 0 : index
    %278 = vector.load %arg11[%277, %c0_81] : memref<64x512xf32, #tpu.memory_space<vmem>>, vector<8x512xf32>
    %279 = arith.truncf %270 : vector<8x128xf32> to vector<8x128xbf16>
    %c0_82 = arith.constant 0 : index
    %c0_83 = arith.constant 0 : index
    %280 = vector.load %arg4[%c0_82, %c0_83] : memref<128x512xbf16, #tpu.memory_space<vmem>>, vector<128x512xbf16>
    %cst_84 = arith.constant dense<0.000000e+00> : vector<8x512xf32>
    %281 = tpu.matmul %279, %280, %cst_84 {dimension_numbers = #tpu.dot_dimension_numbers<[1], [0], [0], [1], [0, 0, 1, 1], [], []>} : vector<8x128xbf16>, vector<128x512xbf16>, vector<8x512xf32> -> vector<8x512xf32>
    %282 = arith.addf %278, %281 : vector<8x512xf32>
    %283 = vector.extract_strided_slice %282 {offsets = [0, 0], sizes = [8, 128], strides = [1, 1]} : vector<8x512xf32> to vector<8x128xf32>
    %284 = arith.negf %283 : vector<8x128xf32>
    %285 = math.exp %284 : vector<8x128xf32>
    %cst_85 = arith.constant 1.000000e+00 : f32
    %286 = vector.broadcast %cst_85 : f32 to vector<8x128xf32>
    %287 = arith.addf %286, %285 : vector<8x128xf32>
    %288 = arith.divf %286, %287 : vector<8x128xf32>
    %289 = vector.extract_strided_slice %282 {offsets = [0, 128], sizes = [8, 128], strides = [1, 1]} : vector<8x512xf32> to vector<8x128xf32>
    %290 = arith.negf %289 : vector<8x128xf32>
    %291 = math.exp %290 : vector<8x128xf32>
    %cst_86 = arith.constant 1.000000e+00 : f32
    %292 = vector.broadcast %cst_86 : f32 to vector<8x128xf32>
    %293 = arith.addf %292, %291 : vector<8x128xf32>
    %294 = arith.divf %292, %293 : vector<8x128xf32>
    %295 = vector.extract_strided_slice %282 {offsets = [0, 256], sizes = [8, 128], strides = [1, 1]} : vector<8x512xf32> to vector<8x128xf32>
    %296 = math.tanh %295 : vector<8x128xf32>
    %297 = vector.extract_strided_slice %282 {offsets = [0, 384], sizes = [8, 128], strides = [1, 1]} : vector<8x512xf32> to vector<8x128xf32>
    %298 = arith.negf %297 : vector<8x128xf32>
    %299 = math.exp %298 : vector<8x128xf32>
    %cst_87 = arith.constant 1.000000e+00 : f32
    %300 = vector.broadcast %cst_87 : f32 to vector<8x128xf32>
    %301 = arith.addf %300, %299 : vector<8x128xf32>
    %302 = arith.divf %300, %301 : vector<8x128xf32>
    %303 = arith.mulf %294, %268 : vector<8x128xf32>
    %304 = arith.mulf %288, %296 : vector<8x128xf32>
    %305 = arith.addf %303, %304 : vector<8x128xf32>
    %306 = math.tanh %305 : vector<8x128xf32>
    %307 = arith.mulf %302, %306 : vector<8x128xf32>
    %308 = arith.index_cast %c7_i32 : i32 to index
    %c0_88 = arith.constant 0 : index
    %c0_89 = arith.constant 0 : index
    %309 = vector.load %arg12[%308, %c0_88, %c0_89] : memref<8x8x128xf32, #tpu.memory_space<vmem>>, vector<1x8x128xf32>
    %310 = vector.shape_cast %309 : vector<1x8x128xf32> to vector<8x128xf32>
    %311 = vector.shape_cast %307 : vector<8x128xf32> to vector<1x8x128xf32>
    tpu.vector_store %arg12[%308, %c0_88, %c0_89], %311 {strides = array<i32>} : memref<8x8x128xf32, #tpu.memory_space<vmem>>, vector<1x8x128xf32>,
    %c8_i32_90 = arith.constant 8 : i32
    %cst_91 = arith.constant 0.000000e+00 : f32
    %312 = vector.broadcast %cst_91 : f32 to vector<8x128xf32>
    %c0_92 = arith.constant 0 : index
    %c0_93 = arith.constant 0 : index
    %c0_94 = arith.constant 0 : index
    %313 = vector.load %arg10[%c0_92, %c0_93, %c0_94] : memref<8x8x128xf32, #tpu.memory_space<vmem>>, vector<1x8x128xf32>
    %314 = vector.shape_cast %313 : vector<1x8x128xf32> to vector<8x128xf32>
    %315 = vector.shape_cast %312 : vector<8x128xf32> to vector<1x8x128xf32>
    tpu.vector_store %arg10[%c0_92, %c0_93, %c0_94], %315 {strides = array<i32>} : memref<8x8x128xf32, #tpu.memory_space<vmem>>, vector<1x8x128xf32>,
    %316 = tpu.iota {dimensions = array<i32: 1>} : vector<8x128xi32>
    %c0_95 = arith.constant 0 : index
    %c0_96 = arith.constant 0 : index
    %c0_97 = arith.constant 0 : index
    %317 = vector.load %arg1[%c0_95, %c0_96, %c0_97] : memref<8x8x1xi32, #tpu.memory_space<vmem>>, vector<1x8x1xi32>
    %318 = vector.shape_cast %317 : vector<1x8x1xi32> to vector<8x1xi32>
    %c1_i32_98 = arith.constant 1 : i32
    %c0_99 = arith.constant 0 : index
    %c0_100 = arith.constant 0 : index
    %c0_101 = arith.constant 0 : index
    %319 = vector.load %arg12[%c0_99, %c0_100, %c0_101] : memref<8x8x128xf32, #tpu.memory_space<vmem>>, vector<8x8x128xf32>
    %320 = vector.shape_cast %307 : vector<8x128xf32> to vector<1x8x128xf32>
    %321 = vector.broadcast %320 : vector<1x8x128xf32> to vector<8x8x128xf32>
    %322 = arith.mulf %319, %321 : vector<8x8x128xf32>
    %cst_102 = arith.constant dense<0.000000e+00> : vector<8x8xf32>
    %323 = vector.multi_reduction <add>, %322, %cst_102 [2] : vector<8x8x128xf32> to vector<8x8xf32>
    %324 = vector.shape_cast %323 : vector<8x8xf32> to vector<8x8x1xf32>
    %cst_103 = arith.constant dense<0xFF800000> : vector<8x1xf32>
    %325 = vector.multi_reduction <maximumf>, %324, %cst_103 [0] : vector<8x8x1xf32> to vector<8x1xf32>
    %326 = vector.shape_cast %325 : vector<8x1xf32> to vector<1x8x1xf32>
    %327 = vector.broadcast %326 : vector<1x8x1xf32> to vector<8x8x1xf32>
    %328 = arith.subf %324, %327 : vector<8x8x1xf32>
    %329 = math.exp %328 : vector<8x8x1xf32>
    %cst_104 = arith.constant dense<0.000000e+00> : vector<8x1xf32>
    %330 = vector.multi_reduction <add>, %329, %cst_104 [0] : vector<8x8x1xf32> to vector<8x1xf32>
    %331 = vector.shape_cast %330 : vector<8x1xf32> to vector<1x8x1xf32>
    %332 = vector.broadcast %331 : vector<1x8x1xf32> to vector<8x8x1xf32>
    %333 = arith.divf %329, %332 : vector<8x8x1xf32>
    %334 = vector.broadcast %333 : vector<8x8x1xf32> to vector<8x8x128xf32>
    %335 = arith.mulf %334, %319 : vector<8x8x128xf32>
    %cst_105 = arith.constant dense<0.000000e+00> : vector<8x128xf32>
    %336 = vector.multi_reduction <add>, %335, %cst_105 [0] : vector<8x8x128xf32> to vector<8x128xf32>
    %337 = vector.broadcast %318 : vector<8x1xi32> to vector<8x128xi32>
    %338 = arith.cmpi eq, %337, %316 : vector<8x128xi32>
    %cst_106 = arith.constant 1.000000e+00 : f32
    %cst_107 = arith.constant 0.000000e+00 : f32
    %339 = vector.broadcast %cst_106 : f32 to vector<8x128xf32>
    %340 = vector.broadcast %cst_107 : f32 to vector<8x128xf32>
    %341 = arith.select %338, %339, %340 : vector<8x128xi1>, vector<8x128xf32>
    %342 = arith.truncf %341 : vector<8x128xf32> to vector<8x128xbf16>
    %343 = arith.truncf %336 : vector<8x128xf32> to vector<8x128xbf16>
    %344 = arith.truncf %307 : vector<8x128xf32> to vector<8x128xbf16>
    %345 = tpu.concatenate %342, %343, %344 in 1 : vector<8x128xbf16>, vector<8x128xbf16>, vector<8x128xbf16> -> vector<8x384xbf16>
    %c0_108 = arith.constant 0 : index
    %c0_109 = arith.constant 0 : index
    %346 = vector.load %arg6[%c0_108, %c0_109] : memref<384x512xbf16, #tpu.memory_space<vmem>>, vector<384x512xbf16>
    %cst_110 = arith.constant dense<0.000000e+00> : vector<8x512xf32>
    %347 = tpu.matmul %345, %346, %cst_110 {dimension_numbers = #tpu.dot_dimension_numbers<[1], [0], [0], [1], [0, 0, 1, 1], [], []>} : vector<8x384xbf16>, vector<384x512xbf16>, vector<8x512xf32> -> vector<8x512xf32>
    %c0_111 = arith.constant 0 : index
    %c0_112 = arith.constant 0 : index
    %348 = vector.load %arg7[%c0_111, %c0_112] : memref<1x512xf32, #tpu.memory_space<vmem>>, vector<1x512xf32>
    %349 = vector.broadcast %348 : vector<1x512xf32> to vector<8x512xf32>
    %350 = arith.addf %347, %349 : vector<8x512xf32>
    %351 = vector.extract_strided_slice %350 {offsets = [0, 0], sizes = [8, 128], strides = [1, 1]} : vector<8x512xf32> to vector<8x128xf32>
    %352 = arith.negf %351 : vector<8x128xf32>
    %353 = math.exp %352 : vector<8x128xf32>
    %cst_113 = arith.constant 1.000000e+00 : f32
    %354 = vector.broadcast %cst_113 : f32 to vector<8x128xf32>
    %355 = arith.addf %354, %353 : vector<8x128xf32>
    %356 = arith.divf %354, %355 : vector<8x128xf32>
    %357 = vector.extract_strided_slice %350 {offsets = [0, 128], sizes = [8, 128], strides = [1, 1]} : vector<8x512xf32> to vector<8x128xf32>
    %358 = arith.negf %357 : vector<8x128xf32>
    %359 = math.exp %358 : vector<8x128xf32>
    %cst_114 = arith.constant 1.000000e+00 : f32
    %360 = vector.broadcast %cst_114 : f32 to vector<8x128xf32>
    %361 = arith.addf %360, %359 : vector<8x128xf32>
    %362 = arith.divf %360, %361 : vector<8x128xf32>
    %363 = vector.extract_strided_slice %350 {offsets = [0, 256], sizes = [8, 128], strides = [1, 1]} : vector<8x512xf32> to vector<8x128xf32>
    %364 = math.tanh %363 : vector<8x128xf32>
    %365 = vector.extract_strided_slice %350 {offsets = [0, 384], sizes = [8, 128], strides = [1, 1]} : vector<8x512xf32> to vector<8x128xf32>
    %366 = arith.negf %365 : vector<8x128xf32>
    %367 = math.exp %366 : vector<8x128xf32>
    %cst_115 = arith.constant 1.000000e+00 : f32
    %368 = vector.broadcast %cst_115 : f32 to vector<8x128xf32>
    %369 = arith.addf %368, %367 : vector<8x128xf32>
    %370 = arith.divf %368, %369 : vector<8x128xf32>
    %371 = arith.mulf %362, %305 : vector<8x128xf32>
    %372 = arith.mulf %356, %364 : vector<8x128xf32>
    %373 = arith.addf %371, %372 : vector<8x128xf32>
    %374 = math.tanh %373 : vector<8x128xf32>
    %375 = arith.mulf %370, %374 : vector<8x128xf32>
    %376 = arith.truncf %375 : vector<8x128xf32> to vector<8x128xbf16>
    %377 = tpu.concatenate %376, %343 in 1 : vector<8x128xbf16>, vector<8x128xbf16> -> vector<8x256xbf16>
    %c0_116 = arith.constant 0 : index
    %c0_117 = arith.constant 0 : index
    %378 = vector.load %arg8[%c0_116, %c0_117] : memref<256x128xbf16, #tpu.memory_space<vmem>>, vector<256x128xbf16>
    %cst_118 = arith.constant dense<0.000000e+00> : vector<8x128xf32>
    %379 = tpu.matmul %377, %378, %cst_118 {dimension_numbers = #tpu.dot_dimension_numbers<[1], [0], [0], [1], [0, 0, 1, 1], [], []>} : vector<8x256xbf16>, vector<256x128xbf16>, vector<8x128xf32> -> vector<8x128xf32>
    %c0_119 = arith.constant 0 : index
    %c0_120 = arith.constant 0 : index
    %380 = vector.load %arg9[%c0_119, %c0_120] : memref<1x128xf32, #tpu.memory_space<vmem>>, vector<1x128xf32>
    %381 = vector.broadcast %380 : vector<1x128xf32> to vector<8x128xf32>
    %382 = arith.addf %379, %381 : vector<8x128xf32>
    %383 = arith.index_cast %c1_i32_98 : i32 to index
    %c0_121 = arith.constant 0 : index
    %c0_122 = arith.constant 0 : index
    %384 = vector.load %arg10[%383, %c0_121, %c0_122] : memref<8x8x128xf32, #tpu.memory_space<vmem>>, vector<1x8x128xf32>
    %385 = vector.shape_cast %384 : vector<1x8x128xf32> to vector<8x128xf32>
    %386 = vector.shape_cast %382 : vector<8x128xf32> to vector<1x8x128xf32>
    tpu.vector_store %arg10[%383, %c0_121, %c0_122], %386 {strides = array<i32>} : memref<8x8x128xf32, #tpu.memory_space<vmem>>, vector<1x8x128xf32>,
    %cst_123 = arith.constant dense<0xFF800000> : vector<8xf32>
    %387 = vector.multi_reduction <maximumf>, %382, %cst_123 [1] : vector<8x128xf32> to vector<8xf32>
    %388 = vector.shape_cast %387 : vector<8xf32> to vector<8x1xf32>
    %389 = vector.broadcast %388 : vector<8x1xf32> to vector<8x128xf32>
    %390 = arith.cmpf oge, %382, %389 : vector<8x128xf32>
    %c128_i32 = arith.constant 128 : i32
    %391 = vector.broadcast %c128_i32 : i32 to vector<8x128xi32>
    %392 = arith.select %390, %316, %391 : vector<8x128xi1>, vector<8x128xi32>
    %cst_124 = arith.constant dense<2147483647> : vector<8xi32>
    %393 = vector.multi_reduction <minsi>, %392, %cst_124 [1] : vector<8x128xi32> to vector<8xi32>
    %394 = vector.shape_cast %393 : vector<8xi32> to vector<8x1xi32>
    %395 = arith.index_cast %c1_i32_98 : i32 to index
    %396 = memref.load %arg2[%395] : memref<8xi32, #tpu.memory_space<smem>>
    %c0_i32_125 = arith.constant 0 : i32
    %397 = arith.cmpi ne, %396, %c0_i32_125 : i32
    %398 = arith.index_cast %c1_i32_98 : i32 to index
    %c0_126 = arith.constant 0 : index
    %c0_127 = arith.constant 0 : index
    %399 = vector.load %arg1[%398, %c0_126, %c0_127] : memref<8x8x1xi32, #tpu.memory_space<vmem>>, vector<1x8x1xi32>
    %400 = vector.shape_cast %399 : vector<1x8x1xi32> to vector<8x1xi32>
    %401 = arith.select %397, %400, %394 : vector<8x1xi32>
    %c2_i32_128 = arith.constant 2 : i32
    %c0_129 = arith.constant 0 : index
    %c0_130 = arith.constant 0 : index
    %c0_131 = arith.constant 0 : index
    %402 = vector.load %arg12[%c0_129, %c0_130, %c0_131] : memref<8x8x128xf32, #tpu.memory_space<vmem>>, vector<8x8x128xf32>
    %403 = vector.shape_cast %375 : vector<8x128xf32> to vector<1x8x128xf32>
    %404 = vector.broadcast %403 : vector<1x8x128xf32> to vector<8x8x128xf32>
    %405 = arith.mulf %402, %404 : vector<8x8x128xf32>
    %cst_132 = arith.constant dense<0.000000e+00> : vector<8x8xf32>
    %406 = vector.multi_reduction <add>, %405, %cst_132 [2] : vector<8x8x128xf32> to vector<8x8xf32>
    %407 = vector.shape_cast %406 : vector<8x8xf32> to vector<8x8x1xf32>
    %cst_133 = arith.constant dense<0xFF800000> : vector<8x1xf32>
    %408 = vector.multi_reduction <maximumf>, %407, %cst_133 [0] : vector<8x8x1xf32> to vector<8x1xf32>
    %409 = vector.shape_cast %408 : vector<8x1xf32> to vector<1x8x1xf32>
    %410 = vector.broadcast %409 : vector<1x8x1xf32> to vector<8x8x1xf32>
    %411 = arith.subf %407, %410 : vector<8x8x1xf32>
    %412 = math.exp %411 : vector<8x8x1xf32>
    %cst_134 = arith.constant dense<0.000000e+00> : vector<8x1xf32>
    %413 = vector.multi_reduction <add>, %412, %cst_134 [0] : vector<8x8x1xf32> to vector<8x1xf32>
    %414 = vector.shape_cast %413 : vector<8x1xf32> to vector<1x8x1xf32>
    %415 = vector.broadcast %414 : vector<1x8x1xf32> to vector<8x8x1xf32>
    %416 = arith.divf %412, %415 : vector<8x8x1xf32>
    %417 = vector.broadcast %416 : vector<8x8x1xf32> to vector<8x8x128xf32>
    %418 = arith.mulf %417, %402 : vector<8x8x128xf32>
    %cst_135 = arith.constant dense<0.000000e+00> : vector<8x128xf32>
    %419 = vector.multi_reduction <add>, %418, %cst_135 [0] : vector<8x8x128xf32> to vector<8x128xf32>
    %420 = vector.broadcast %401 : vector<8x1xi32> to vector<8x128xi32>
    %421 = arith.cmpi eq, %420, %316 : vector<8x128xi32>
    %cst_136 = arith.constant 1.000000e+00 : f32
    %cst_137 = arith.constant 0.000000e+00 : f32
    %422 = vector.broadcast %cst_136 : f32 to vector<8x128xf32>
    %423 = vector.broadcast %cst_137 : f32 to vector<8x128xf32>
    %424 = arith.select %421, %422, %423 : vector<8x128xi1>, vector<8x128xf32>
    %425 = arith.truncf %424 : vector<8x128xf32> to vector<8x128xbf16>
    %426 = arith.truncf %419 : vector<8x128xf32> to vector<8x128xbf16>
    %427 = arith.truncf %375 : vector<8x128xf32> to vector<8x128xbf16>
    %428 = tpu.concatenate %425, %426, %427 in 1 : vector<8x128xbf16>, vector<8x128xbf16>, vector<8x128xbf16> -> vector<8x384xbf16>
    %c0_138 = arith.constant 0 : index
    %c0_139 = arith.constant 0 : index
    %429 = vector.load %arg6[%c0_138, %c0_139] : memref<384x512xbf16, #tpu.memory_space<vmem>>, vector<384x512xbf16>
    %cst_140 = arith.constant dense<0.000000e+00> : vector<8x512xf32>
    %430 = tpu.matmul %428, %429, %cst_140 {dimension_numbers = #tpu.dot_dimension_numbers<[1], [0], [0], [1], [0, 0, 1, 1], [], []>} : vector<8x384xbf16>, vector<384x512xbf16>, vector<8x512xf32> -> vector<8x512xf32>
    %c0_141 = arith.constant 0 : index
    %c0_142 = arith.constant 0 : index
    %431 = vector.load %arg7[%c0_141, %c0_142] : memref<1x512xf32, #tpu.memory_space<vmem>>, vector<1x512xf32>
    %432 = vector.broadcast %431 : vector<1x512xf32> to vector<8x512xf32>
    %433 = arith.addf %430, %432 : vector<8x512xf32>
    %434 = vector.extract_strided_slice %433 {offsets = [0, 0], sizes = [8, 128], strides = [1, 1]} : vector<8x512xf32> to vector<8x128xf32>
    %435 = arith.negf %434 : vector<8x128xf32>
    %436 = math.exp %435 : vector<8x128xf32>
    %cst_143 = arith.constant 1.000000e+00 : f32
    %437 = vector.broadcast %cst_143 : f32 to vector<8x128xf32>
    %438 = arith.addf %437, %436 : vector<8x128xf32>
    %439 = arith.divf %437, %438 : vector<8x128xf32>
    %440 = vector.extract_strided_slice %433 {offsets = [0, 128], sizes = [8, 128], strides = [1, 1]} : vector<8x512xf32> to vector<8x128xf32>
    %441 = arith.negf %440 : vector<8x128xf32>
    %442 = math.exp %441 : vector<8x128xf32>
    %cst_144 = arith.constant 1.000000e+00 : f32
    %443 = vector.broadcast %cst_144 : f32 to vector<8x128xf32>
    %444 = arith.addf %443, %442 : vector<8x128xf32>
    %445 = arith.divf %443, %444 : vector<8x128xf32>
    %446 = vector.extract_strided_slice %433 {offsets = [0, 256], sizes = [8, 128], strides = [1, 1]} : vector<8x512xf32> to vector<8x128xf32>
    %447 = math.tanh %446 : vector<8x128xf32>
    %448 = vector.extract_strided_slice %433 {offsets = [0, 384], sizes = [8, 128], strides = [1, 1]} : vector<8x512xf32> to vector<8x128xf32>
    %449 = arith.negf %448 : vector<8x128xf32>
    %450 = math.exp %449 : vector<8x128xf32>
    %cst_145 = arith.constant 1.000000e+00 : f32
    %451 = vector.broadcast %cst_145 : f32 to vector<8x128xf32>
    %452 = arith.addf %451, %450 : vector<8x128xf32>
    %453 = arith.divf %451, %452 : vector<8x128xf32>
    %454 = arith.mulf %445, %373 : vector<8x128xf32>
    %455 = arith.mulf %439, %447 : vector<8x128xf32>
    %456 = arith.addf %454, %455 : vector<8x128xf32>
    %457 = math.tanh %456 : vector<8x128xf32>
    %458 = arith.mulf %453, %457 : vector<8x128xf32>
    %459 = arith.truncf %458 : vector<8x128xf32> to vector<8x128xbf16>
    %460 = tpu.concatenate %459, %426 in 1 : vector<8x128xbf16>, vector<8x128xbf16> -> vector<8x256xbf16>
    %c0_146 = arith.constant 0 : index
    %c0_147 = arith.constant 0 : index
    %461 = vector.load %arg8[%c0_146, %c0_147] : memref<256x128xbf16, #tpu.memory_space<vmem>>, vector<256x128xbf16>
    %cst_148 = arith.constant dense<0.000000e+00> : vector<8x128xf32>
    %462 = tpu.matmul %460, %461, %cst_148 {dimension_numbers = #tpu.dot_dimension_numbers<[1], [0], [0], [1], [0, 0, 1, 1], [], []>} : vector<8x256xbf16>, vector<256x128xbf16>, vector<8x128xf32> -> vector<8x128xf32>
    %c0_149 = arith.constant 0 : index
    %c0_150 = arith.constant 0 : index
    %463 = vector.load %arg9[%c0_149, %c0_150] : memref<1x128xf32, #tpu.memory_space<vmem>>, vector<1x128xf32>
    %464 = vector.broadcast %463 : vector<1x128xf32> to vector<8x128xf32>
    %465 = arith.addf %462, %464 : vector<8x128xf32>
    %466 = arith.index_cast %c2_i32_128 : i32 to index
    %c0_151 = arith.constant 0 : index
    %c0_152 = arith.constant 0 : index
    %467 = vector.load %arg10[%466, %c0_151, %c0_152] : memref<8x8x128xf32, #tpu.memory_space<vmem>>, vector<1x8x128xf32>
    %468 = vector.shape_cast %467 : vector<1x8x128xf32> to vector<8x128xf32>
    %469 = vector.shape_cast %465 : vector<8x128xf32> to vector<1x8x128xf32>
    tpu.vector_store %arg10[%466, %c0_151, %c0_152], %469 {strides = array<i32>} : memref<8x8x128xf32, #tpu.memory_space<vmem>>, vector<1x8x128xf32>,
    %cst_153 = arith.constant dense<0xFF800000> : vector<8xf32>
    %470 = vector.multi_reduction <maximumf>, %465, %cst_153 [1] : vector<8x128xf32> to vector<8xf32>
    %471 = vector.shape_cast %470 : vector<8xf32> to vector<8x1xf32>
    %472 = vector.broadcast %471 : vector<8x1xf32> to vector<8x128xf32>
    %473 = arith.cmpf oge, %465, %472 : vector<8x128xf32>
    %c128_i32_154 = arith.constant 128 : i32
    %474 = vector.broadcast %c128_i32_154 : i32 to vector<8x128xi32>
    %475 = arith.select %473, %316, %474 : vector<8x128xi1>, vector<8x128xi32>
    %cst_155 = arith.constant dense<2147483647> : vector<8xi32>
    %476 = vector.multi_reduction <minsi>, %475, %cst_155 [1] : vector<8x128xi32> to vector<8xi32>
    %477 = vector.shape_cast %476 : vector<8xi32> to vector<8x1xi32>
    %478 = arith.index_cast %c2_i32_128 : i32 to index
    %479 = memref.load %arg2[%478] : memref<8xi32, #tpu.memory_space<smem>>
    %c0_i32_156 = arith.constant 0 : i32
    %480 = arith.cmpi ne, %479, %c0_i32_156 : i32
    %481 = arith.index_cast %c2_i32_128 : i32 to index
    %c0_157 = arith.constant 0 : index
    %c0_158 = arith.constant 0 : index
    %482 = vector.load %arg1[%481, %c0_157, %c0_158] : memref<8x8x1xi32, #tpu.memory_space<vmem>>, vector<1x8x1xi32>
    %483 = vector.shape_cast %482 : vector<1x8x1xi32> to vector<8x1xi32>
    %484 = arith.select %480, %483, %477 : vector<8x1xi32>
    %c3_i32_159 = arith.constant 3 : i32
    %c0_160 = arith.constant 0 : index
    %c0_161 = arith.constant 0 : index
    %c0_162 = arith.constant 0 : index
    %485 = vector.load %arg12[%c0_160, %c0_161, %c0_162] : memref<8x8x128xf32, #tpu.memory_space<vmem>>, vector<8x8x128xf32>
    %486 = vector.shape_cast %458 : vector<8x128xf32> to vector<1x8x128xf32>
    %487 = vector.broadcast %486 : vector<1x8x128xf32> to vector<8x8x128xf32>
    %488 = arith.mulf %485, %487 : vector<8x8x128xf32>
    %cst_163 = arith.constant dense<0.000000e+00> : vector<8x8xf32>
    %489 = vector.multi_reduction <add>, %488, %cst_163 [2] : vector<8x8x128xf32> to vector<8x8xf32>
    %490 = vector.shape_cast %489 : vector<8x8xf32> to vector<8x8x1xf32>
    %cst_164 = arith.constant dense<0xFF800000> : vector<8x1xf32>
    %491 = vector.multi_reduction <maximumf>, %490, %cst_164 [0] : vector<8x8x1xf32> to vector<8x1xf32>
    %492 = vector.shape_cast %491 : vector<8x1xf32> to vector<1x8x1xf32>
    %493 = vector.broadcast %492 : vector<1x8x1xf32> to vector<8x8x1xf32>
    %494 = arith.subf %490, %493 : vector<8x8x1xf32>
    %495 = math.exp %494 : vector<8x8x1xf32>
    %cst_165 = arith.constant dense<0.000000e+00> : vector<8x1xf32>
    %496 = vector.multi_reduction <add>, %495, %cst_165 [0] : vector<8x8x1xf32> to vector<8x1xf32>
    %497 = vector.shape_cast %496 : vector<8x1xf32> to vector<1x8x1xf32>
    %498 = vector.broadcast %497 : vector<1x8x1xf32> to vector<8x8x1xf32>
    %499 = arith.divf %495, %498 : vector<8x8x1xf32>
    %500 = vector.broadcast %499 : vector<8x8x1xf32> to vector<8x8x128xf32>
    %501 = arith.mulf %500, %485 : vector<8x8x128xf32>
    %cst_166 = arith.constant dense<0.000000e+00> : vector<8x128xf32>
    %502 = vector.multi_reduction <add>, %501, %cst_166 [0] : vector<8x8x128xf32> to vector<8x128xf32>
    %503 = vector.broadcast %484 : vector<8x1xi32> to vector<8x128xi32>
    %504 = arith.cmpi eq, %503, %316 : vector<8x128xi32>
    %cst_167 = arith.constant 1.000000e+00 : f32
    %cst_168 = arith.constant 0.000000e+00 : f32
    %505 = vector.broadcast %cst_167 : f32 to vector<8x128xf32>
    %506 = vector.broadcast %cst_168 : f32 to vector<8x128xf32>
    %507 = arith.select %504, %505, %506 : vector<8x128xi1>, vector<8x128xf32>
    %508 = arith.truncf %507 : vector<8x128xf32> to vector<8x128xbf16>
    %509 = arith.truncf %502 : vector<8x128xf32> to vector<8x128xbf16>
    %510 = arith.truncf %458 : vector<8x128xf32> to vector<8x128xbf16>
    %511 = tpu.concatenate %508, %509, %510 in 1 : vector<8x128xbf16>, vector<8x128xbf16>, vector<8x128xbf16> -> vector<8x384xbf16>
    %c0_169 = arith.constant 0 : index
    %c0_170 = arith.constant 0 : index
    %512 = vector.load %arg6[%c0_169, %c0_170] : memref<384x512xbf16, #tpu.memory_space<vmem>>, vector<384x512xbf16>
    %cst_171 = arith.constant dense<0.000000e+00> : vector<8x512xf32>
    %513 = tpu.matmul %511, %512, %cst_171 {dimension_numbers = #tpu.dot_dimension_numbers<[1], [0], [0], [1], [0, 0, 1, 1], [], []>} : vector<8x384xbf16>, vector<384x512xbf16>, vector<8x512xf32> -> vector<8x512xf32>
    %c0_172 = arith.constant 0 : index
    %c0_173 = arith.constant 0 : index
    %514 = vector.load %arg7[%c0_172, %c0_173] : memref<1x512xf32, #tpu.memory_space<vmem>>, vector<1x512xf32>
    %515 = vector.broadcast %514 : vector<1x512xf32> to vector<8x512xf32>
    %516 = arith.addf %513, %515 : vector<8x512xf32>
    %517 = vector.extract_strided_slice %516 {offsets = [0, 0], sizes = [8, 128], strides = [1, 1]} : vector<8x512xf32> to vector<8x128xf32>
    %518 = arith.negf %517 : vector<8x128xf32>
    %519 = math.exp %518 : vector<8x128xf32>
    %cst_174 = arith.constant 1.000000e+00 : f32
    %520 = vector.broadcast %cst_174 : f32 to vector<8x128xf32>
    %521 = arith.addf %520, %519 : vector<8x128xf32>
    %522 = arith.divf %520, %521 : vector<8x128xf32>
    %523 = vector.extract_strided_slice %516 {offsets = [0, 128], sizes = [8, 128], strides = [1, 1]} : vector<8x512xf32> to vector<8x128xf32>
    %524 = arith.negf %523 : vector<8x128xf32>
    %525 = math.exp %524 : vector<8x128xf32>
    %cst_175 = arith.constant 1.000000e+00 : f32
    %526 = vector.broadcast %cst_175 : f32 to vector<8x128xf32>
    %527 = arith.addf %526, %525 : vector<8x128xf32>
    %528 = arith.divf %526, %527 : vector<8x128xf32>
    %529 = vector.extract_strided_slice %516 {offsets = [0, 256], sizes = [8, 128], strides = [1, 1]} : vector<8x512xf32> to vector<8x128xf32>
    %530 = math.tanh %529 : vector<8x128xf32>
    %531 = vector.extract_strided_slice %516 {offsets = [0, 384], sizes = [8, 128], strides = [1, 1]} : vector<8x512xf32> to vector<8x128xf32>
    %532 = arith.negf %531 : vector<8x128xf32>
    %533 = math.exp %532 : vector<8x128xf32>
    %cst_176 = arith.constant 1.000000e+00 : f32
    %534 = vector.broadcast %cst_176 : f32 to vector<8x128xf32>
    %535 = arith.addf %534, %533 : vector<8x128xf32>
    %536 = arith.divf %534, %535 : vector<8x128xf32>
    %537 = arith.mulf %528, %456 : vector<8x128xf32>
    %538 = arith.mulf %522, %530 : vector<8x128xf32>
    %539 = arith.addf %537, %538 : vector<8x128xf32>
    %540 = math.tanh %539 : vector<8x128xf32>
    %541 = arith.mulf %536, %540 : vector<8x128xf32>
    %542 = arith.truncf %541 : vector<8x128xf32> to vector<8x128xbf16>
    %543 = tpu.concatenate %542, %509 in 1 : vector<8x128xbf16>, vector<8x128xbf16> -> vector<8x256xbf16>
    %c0_177 = arith.constant 0 : index
    %c0_178 = arith.constant 0 : index
    %544 = vector.load %arg8[%c0_177, %c0_178] : memref<256x128xbf16, #tpu.memory_space<vmem>>, vector<256x128xbf16>
    %cst_179 = arith.constant dense<0.000000e+00> : vector<8x128xf32>
    %545 = tpu.matmul %543, %544, %cst_179 {dimension_numbers = #tpu.dot_dimension_numbers<[1], [0], [0], [1], [0, 0, 1, 1], [], []>} : vector<8x256xbf16>, vector<256x128xbf16>, vector<8x128xf32> -> vector<8x128xf32>
    %c0_180 = arith.constant 0 : index
    %c0_181 = arith.constant 0 : index
    %546 = vector.load %arg9[%c0_180, %c0_181] : memref<1x128xf32, #tpu.memory_space<vmem>>, vector<1x128xf32>
    %547 = vector.broadcast %546 : vector<1x128xf32> to vector<8x128xf32>
    %548 = arith.addf %545, %547 : vector<8x128xf32>
    %549 = arith.index_cast %c3_i32_159 : i32 to index
    %c0_182 = arith.constant 0 : index
    %c0_183 = arith.constant 0 : index
    %550 = vector.load %arg10[%549, %c0_182, %c0_183] : memref<8x8x128xf32, #tpu.memory_space<vmem>>, vector<1x8x128xf32>
    %551 = vector.shape_cast %550 : vector<1x8x128xf32> to vector<8x128xf32>
    %552 = vector.shape_cast %548 : vector<8x128xf32> to vector<1x8x128xf32>
    tpu.vector_store %arg10[%549, %c0_182, %c0_183], %552 {strides = array<i32>} : memref<8x8x128xf32, #tpu.memory_space<vmem>>, vector<1x8x128xf32>,
    %cst_184 = arith.constant dense<0xFF800000> : vector<8xf32>
    %553 = vector.multi_reduction <maximumf>, %548, %cst_184 [1] : vector<8x128xf32> to vector<8xf32>
    %554 = vector.shape_cast %553 : vector<8xf32> to vector<8x1xf32>
    %555 = vector.broadcast %554 : vector<8x1xf32> to vector<8x128xf32>
    %556 = arith.cmpf oge, %548, %555 : vector<8x128xf32>
    %c128_i32_185 = arith.constant 128 : i32
    %557 = vector.broadcast %c128_i32_185 : i32 to vector<8x128xi32>
    %558 = arith.select %556, %316, %557 : vector<8x128xi1>, vector<8x128xi32>
    %cst_186 = arith.constant dense<2147483647> : vector<8xi32>
    %559 = vector.multi_reduction <minsi>, %558, %cst_186 [1] : vector<8x128xi32> to vector<8xi32>
    %560 = vector.shape_cast %559 : vector<8xi32> to vector<8x1xi32>
    %561 = arith.index_cast %c3_i32_159 : i32 to index
    %562 = memref.load %arg2[%561] : memref<8xi32, #tpu.memory_space<smem>>
    %c0_i32_187 = arith.constant 0 : i32
    %563 = arith.cmpi ne, %562, %c0_i32_187 : i32
    %564 = arith.index_cast %c3_i32_159 : i32 to index
    %c0_188 = arith.constant 0 : index
    %c0_189 = arith.constant 0 : index
    %565 = vector.load %arg1[%564, %c0_188, %c0_189] : memref<8x8x1xi32, #tpu.memory_space<vmem>>, vector<1x8x1xi32>
    %566 = vector.shape_cast %565 : vector<1x8x1xi32> to vector<8x1xi32>
    %567 = arith.select %563, %566, %560 : vector<8x1xi32>
    %c4_i32_190 = arith.constant 4 : i32
    %c0_191 = arith.constant 0 : index
    %c0_192 = arith.constant 0 : index
    %c0_193 = arith.constant 0 : index
    %568 = vector.load %arg12[%c0_191, %c0_192, %c0_193] : memref<8x8x128xf32, #tpu.memory_space<vmem>>, vector<8x8x128xf32>
    %569 = vector.shape_cast %541 : vector<8x128xf32> to vector<1x8x128xf32>
    %570 = vector.broadcast %569 : vector<1x8x128xf32> to vector<8x8x128xf32>
    %571 = arith.mulf %568, %570 : vector<8x8x128xf32>
    %cst_194 = arith.constant dense<0.000000e+00> : vector<8x8xf32>
    %572 = vector.multi_reduction <add>, %571, %cst_194 [2] : vector<8x8x128xf32> to vector<8x8xf32>
    %573 = vector.shape_cast %572 : vector<8x8xf32> to vector<8x8x1xf32>
    %cst_195 = arith.constant dense<0xFF800000> : vector<8x1xf32>
    %574 = vector.multi_reduction <maximumf>, %573, %cst_195 [0] : vector<8x8x1xf32> to vector<8x1xf32>
    %575 = vector.shape_cast %574 : vector<8x1xf32> to vector<1x8x1xf32>
    %576 = vector.broadcast %575 : vector<1x8x1xf32> to vector<8x8x1xf32>
    %577 = arith.subf %573, %576 : vector<8x8x1xf32>
    %578 = math.exp %577 : vector<8x8x1xf32>
    %cst_196 = arith.constant dense<0.000000e+00> : vector<8x1xf32>
    %579 = vector.multi_reduction <add>, %578, %cst_196 [0] : vector<8x8x1xf32> to vector<8x1xf32>
    %580 = vector.shape_cast %579 : vector<8x1xf32> to vector<1x8x1xf32>
    %581 = vector.broadcast %580 : vector<1x8x1xf32> to vector<8x8x1xf32>
    %582 = arith.divf %578, %581 : vector<8x8x1xf32>
    %583 = vector.broadcast %582 : vector<8x8x1xf32> to vector<8x8x128xf32>
    %584 = arith.mulf %583, %568 : vector<8x8x128xf32>
    %cst_197 = arith.constant dense<0.000000e+00> : vector<8x128xf32>
    %585 = vector.multi_reduction <add>, %584, %cst_197 [0] : vector<8x8x128xf32> to vector<8x128xf32>
    %586 = vector.broadcast %567 : vector<8x1xi32> to vector<8x128xi32>
    %587 = arith.cmpi eq, %586, %316 : vector<8x128xi32>
    %cst_198 = arith.constant 1.000000e+00 : f32
    %cst_199 = arith.constant 0.000000e+00 : f32
    %588 = vector.broadcast %cst_198 : f32 to vector<8x128xf32>
    %589 = vector.broadcast %cst_199 : f32 to vector<8x128xf32>
    %590 = arith.select %587, %588, %589 : vector<8x128xi1>, vector<8x128xf32>
    %591 = arith.truncf %590 : vector<8x128xf32> to vector<8x128xbf16>
    %592 = arith.truncf %585 : vector<8x128xf32> to vector<8x128xbf16>
    %593 = arith.truncf %541 : vector<8x128xf32> to vector<8x128xbf16>
    %594 = tpu.concatenate %591, %592, %593 in 1 : vector<8x128xbf16>, vector<8x128xbf16>, vector<8x128xbf16> -> vector<8x384xbf16>
    %c0_200 = arith.constant 0 : index
    %c0_201 = arith.constant 0 : index
    %595 = vector.load %arg6[%c0_200, %c0_201] : memref<384x512xbf16, #tpu.memory_space<vmem>>, vector<384x512xbf16>
    %cst_202 = arith.constant dense<0.000000e+00> : vector<8x512xf32>
    %596 = tpu.matmul %594, %595, %cst_202 {dimension_numbers = #tpu.dot_dimension_numbers<[1], [0], [0], [1], [0, 0, 1, 1], [], []>} : vector<8x384xbf16>, vector<384x512xbf16>, vector<8x512xf32> -> vector<8x512xf32>
    %c0_203 = arith.constant 0 : index
    %c0_204 = arith.constant 0 : index
    %597 = vector.load %arg7[%c0_203, %c0_204] : memref<1x512xf32, #tpu.memory_space<vmem>>, vector<1x512xf32>
    %598 = vector.broadcast %597 : vector<1x512xf32> to vector<8x512xf32>
    %599 = arith.addf %596, %598 : vector<8x512xf32>
    %600 = vector.extract_strided_slice %599 {offsets = [0, 0], sizes = [8, 128], strides = [1, 1]} : vector<8x512xf32> to vector<8x128xf32>
    %601 = arith.negf %600 : vector<8x128xf32>
    %602 = math.exp %601 : vector<8x128xf32>
    %cst_205 = arith.constant 1.000000e+00 : f32
    %603 = vector.broadcast %cst_205 : f32 to vector<8x128xf32>
    %604 = arith.addf %603, %602 : vector<8x128xf32>
    %605 = arith.divf %603, %604 : vector<8x128xf32>
    %606 = vector.extract_strided_slice %599 {offsets = [0, 128], sizes = [8, 128], strides = [1, 1]} : vector<8x512xf32> to vector<8x128xf32>
    %607 = arith.negf %606 : vector<8x128xf32>
    %608 = math.exp %607 : vector<8x128xf32>
    %cst_206 = arith.constant 1.000000e+00 : f32
    %609 = vector.broadcast %cst_206 : f32 to vector<8x128xf32>
    %610 = arith.addf %609, %608 : vector<8x128xf32>
    %611 = arith.divf %609, %610 : vector<8x128xf32>
    %612 = vector.extract_strided_slice %599 {offsets = [0, 256], sizes = [8, 128], strides = [1, 1]} : vector<8x512xf32> to vector<8x128xf32>
    %613 = math.tanh %612 : vector<8x128xf32>
    %614 = vector.extract_strided_slice %599 {offsets = [0, 384], sizes = [8, 128], strides = [1, 1]} : vector<8x512xf32> to vector<8x128xf32>
    %615 = arith.negf %614 : vector<8x128xf32>
    %616 = math.exp %615 : vector<8x128xf32>
    %cst_207 = arith.constant 1.000000e+00 : f32
    %617 = vector.broadcast %cst_207 : f32 to vector<8x128xf32>
    %618 = arith.addf %617, %616 : vector<8x128xf32>
    %619 = arith.divf %617, %618 : vector<8x128xf32>
    %620 = arith.mulf %611, %539 : vector<8x128xf32>
    %621 = arith.mulf %605, %613 : vector<8x128xf32>
    %622 = arith.addf %620, %621 : vector<8x128xf32>
    %623 = math.tanh %622 : vector<8x128xf32>
    %624 = arith.mulf %619, %623 : vector<8x128xf32>
    %625 = arith.truncf %624 : vector<8x128xf32> to vector<8x128xbf16>
    %626 = tpu.concatenate %625, %592 in 1 : vector<8x128xbf16>, vector<8x128xbf16> -> vector<8x256xbf16>
    %c0_208 = arith.constant 0 : index
    %c0_209 = arith.constant 0 : index
    %627 = vector.load %arg8[%c0_208, %c0_209] : memref<256x128xbf16, #tpu.memory_space<vmem>>, vector<256x128xbf16>
    %cst_210 = arith.constant dense<0.000000e+00> : vector<8x128xf32>
    %628 = tpu.matmul %626, %627, %cst_210 {dimension_numbers = #tpu.dot_dimension_numbers<[1], [0], [0], [1], [0, 0, 1, 1], [], []>} : vector<8x256xbf16>, vector<256x128xbf16>, vector<8x128xf32> -> vector<8x128xf32>
    %c0_211 = arith.constant 0 : index
    %c0_212 = arith.constant 0 : index
    %629 = vector.load %arg9[%c0_211, %c0_212] : memref<1x128xf32, #tpu.memory_space<vmem>>, vector<1x128xf32>
    %630 = vector.broadcast %629 : vector<1x128xf32> to vector<8x128xf32>
    %631 = arith.addf %628, %630 : vector<8x128xf32>
    %632 = arith.index_cast %c4_i32_190 : i32 to index
    %c0_213 = arith.constant 0 : index
    %c0_214 = arith.constant 0 : index
    %633 = vector.load %arg10[%632, %c0_213, %c0_214] : memref<8x8x128xf32, #tpu.memory_space<vmem>>, vector<1x8x128xf32>
    %634 = vector.shape_cast %633 : vector<1x8x128xf32> to vector<8x128xf32>
    %635 = vector.shape_cast %631 : vector<8x128xf32> to vector<1x8x128xf32>
    tpu.vector_store %arg10[%632, %c0_213, %c0_214], %635 {strides = array<i32>} : memref<8x8x128xf32, #tpu.memory_space<vmem>>, vector<1x8x128xf32>,
    %cst_215 = arith.constant dense<0xFF800000> : vector<8xf32>
    %636 = vector.multi_reduction <maximumf>, %631, %cst_215 [1] : vector<8x128xf32> to vector<8xf32>
    %637 = vector.shape_cast %636 : vector<8xf32> to vector<8x1xf32>
    %638 = vector.broadcast %637 : vector<8x1xf32> to vector<8x128xf32>
    %639 = arith.cmpf oge, %631, %638 : vector<8x128xf32>
    %c128_i32_216 = arith.constant 128 : i32
    %640 = vector.broadcast %c128_i32_216 : i32 to vector<8x128xi32>
    %641 = arith.select %639, %316, %640 : vector<8x128xi1>, vector<8x128xi32>
    %cst_217 = arith.constant dense<2147483647> : vector<8xi32>
    %642 = vector.multi_reduction <minsi>, %641, %cst_217 [1] : vector<8x128xi32> to vector<8xi32>
    %643 = vector.shape_cast %642 : vector<8xi32> to vector<8x1xi32>
    %644 = arith.index_cast %c4_i32_190 : i32 to index
    %645 = memref.load %arg2[%644] : memref<8xi32, #tpu.memory_space<smem>>
    %c0_i32_218 = arith.constant 0 : i32
    %646 = arith.cmpi ne, %645, %c0_i32_218 : i32
    %647 = arith.index_cast %c4_i32_190 : i32 to index
    %c0_219 = arith.constant 0 : index
    %c0_220 = arith.constant 0 : index
    %648 = vector.load %arg1[%647, %c0_219, %c0_220] : memref<8x8x1xi32, #tpu.memory_space<vmem>>, vector<1x8x1xi32>
    %649 = vector.shape_cast %648 : vector<1x8x1xi32> to vector<8x1xi32>
    %650 = arith.select %646, %649, %643 : vector<8x1xi32>
    %c5_i32_221 = arith.constant 5 : i32
    %c0_222 = arith.constant 0 : index
    %c0_223 = arith.constant 0 : index
    %c0_224 = arith.constant 0 : index
    %651 = vector.load %arg12[%c0_222, %c0_223, %c0_224] : memref<8x8x128xf32, #tpu.memory_space<vmem>>, vector<8x8x128xf32>
    %652 = vector.shape_cast %624 : vector<8x128xf32> to vector<1x8x128xf32>
    %653 = vector.broadcast %652 : vector<1x8x128xf32> to vector<8x8x128xf32>
    %654 = arith.mulf %651, %653 : vector<8x8x128xf32>
    %cst_225 = arith.constant dense<0.000000e+00> : vector<8x8xf32>
    %655 = vector.multi_reduction <add>, %654, %cst_225 [2] : vector<8x8x128xf32> to vector<8x8xf32>
    %656 = vector.shape_cast %655 : vector<8x8xf32> to vector<8x8x1xf32>
    %cst_226 = arith.constant dense<0xFF800000> : vector<8x1xf32>
    %657 = vector.multi_reduction <maximumf>, %656, %cst_226 [0] : vector<8x8x1xf32> to vector<8x1xf32>
    %658 = vector.shape_cast %657 : vector<8x1xf32> to vector<1x8x1xf32>
    %659 = vector.broadcast %658 : vector<1x8x1xf32> to vector<8x8x1xf32>
    %660 = arith.subf %656, %659 : vector<8x8x1xf32>
    %661 = math.exp %660 : vector<8x8x1xf32>
    %cst_227 = arith.constant dense<0.000000e+00> : vector<8x1xf32>
    %662 = vector.multi_reduction <add>, %661, %cst_227 [0] : vector<8x8x1xf32> to vector<8x1xf32>
    %663 = vector.shape_cast %662 : vector<8x1xf32> to vector<1x8x1xf32>
    %664 = vector.broadcast %663 : vector<1x8x1xf32> to vector<8x8x1xf32>
    %665 = arith.divf %661, %664 : vector<8x8x1xf32>
    %666 = vector.broadcast %665 : vector<8x8x1xf32> to vector<8x8x128xf32>
    %667 = arith.mulf %666, %651 : vector<8x8x128xf32>
    %cst_228 = arith.constant dense<0.000000e+00> : vector<8x128xf32>
    %668 = vector.multi_reduction <add>, %667, %cst_228 [0] : vector<8x8x128xf32> to vector<8x128xf32>
    %669 = vector.broadcast %650 : vector<8x1xi32> to vector<8x128xi32>
    %670 = arith.cmpi eq, %669, %316 : vector<8x128xi32>
    %cst_229 = arith.constant 1.000000e+00 : f32
    %cst_230 = arith.constant 0.000000e+00 : f32
    %671 = vector.broadcast %cst_229 : f32 to vector<8x128xf32>
    %672 = vector.broadcast %cst_230 : f32 to vector<8x128xf32>
    %673 = arith.select %670, %671, %672 : vector<8x128xi1>, vector<8x128xf32>
    %674 = arith.truncf %673 : vector<8x128xf32> to vector<8x128xbf16>
    %675 = arith.truncf %668 : vector<8x128xf32> to vector<8x128xbf16>
    %676 = arith.truncf %624 : vector<8x128xf32> to vector<8x128xbf16>
    %677 = tpu.concatenate %674, %675, %676 in 1 : vector<8x128xbf16>, vector<8x128xbf16>, vector<8x128xbf16> -> vector<8x384xbf16>
    %c0_231 = arith.constant 0 : index
    %c0_232 = arith.constant 0 : index
    %678 = vector.load %arg6[%c0_231, %c0_232] : memref<384x512xbf16, #tpu.memory_space<vmem>>, vector<384x512xbf16>
    %cst_233 = arith.constant dense<0.000000e+00> : vector<8x512xf32>
    %679 = tpu.matmul %677, %678, %cst_233 {dimension_numbers = #tpu.dot_dimension_numbers<[1], [0], [0], [1], [0, 0, 1, 1], [], []>} : vector<8x384xbf16>, vector<384x512xbf16>, vector<8x512xf32> -> vector<8x512xf32>
    %c0_234 = arith.constant 0 : index
    %c0_235 = arith.constant 0 : index
    %680 = vector.load %arg7[%c0_234, %c0_235] : memref<1x512xf32, #tpu.memory_space<vmem>>, vector<1x512xf32>
    %681 = vector.broadcast %680 : vector<1x512xf32> to vector<8x512xf32>
    %682 = arith.addf %679, %681 : vector<8x512xf32>
    %683 = vector.extract_strided_slice %682 {offsets = [0, 0], sizes = [8, 128], strides = [1, 1]} : vector<8x512xf32> to vector<8x128xf32>
    %684 = arith.negf %683 : vector<8x128xf32>
    %685 = math.exp %684 : vector<8x128xf32>
    %cst_236 = arith.constant 1.000000e+00 : f32
    %686 = vector.broadcast %cst_236 : f32 to vector<8x128xf32>
    %687 = arith.addf %686, %685 : vector<8x128xf32>
    %688 = arith.divf %686, %687 : vector<8x128xf32>
    %689 = vector.extract_strided_slice %682 {offsets = [0, 128], sizes = [8, 128], strides = [1, 1]} : vector<8x512xf32> to vector<8x128xf32>
    %690 = arith.negf %689 : vector<8x128xf32>
    %691 = math.exp %690 : vector<8x128xf32>
    %cst_237 = arith.constant 1.000000e+00 : f32
    %692 = vector.broadcast %cst_237 : f32 to vector<8x128xf32>
    %693 = arith.addf %692, %691 : vector<8x128xf32>
    %694 = arith.divf %692, %693 : vector<8x128xf32>
    %695 = vector.extract_strided_slice %682 {offsets = [0, 256], sizes = [8, 128], strides = [1, 1]} : vector<8x512xf32> to vector<8x128xf32>
    %696 = math.tanh %695 : vector<8x128xf32>
    %697 = vector.extract_strided_slice %682 {offsets = [0, 384], sizes = [8, 128], strides = [1, 1]} : vector<8x512xf32> to vector<8x128xf32>
    %698 = arith.negf %697 : vector<8x128xf32>
    %699 = math.exp %698 : vector<8x128xf32>
    %cst_238 = arith.constant 1.000000e+00 : f32
    %700 = vector.broadcast %cst_238 : f32 to vector<8x128xf32>
    %701 = arith.addf %700, %699 : vector<8x128xf32>
    %702 = arith.divf %700, %701 : vector<8x128xf32>
    %703 = arith.mulf %694, %622 : vector<8x128xf32>
    %704 = arith.mulf %688, %696 : vector<8x128xf32>
    %705 = arith.addf %703, %704 : vector<8x128xf32>
    %706 = math.tanh %705 : vector<8x128xf32>
    %707 = arith.mulf %702, %706 : vector<8x128xf32>
    %708 = arith.truncf %707 : vector<8x128xf32> to vector<8x128xbf16>
    %709 = tpu.concatenate %708, %675 in 1 : vector<8x128xbf16>, vector<8x128xbf16> -> vector<8x256xbf16>
    %c0_239 = arith.constant 0 : index
    %c0_240 = arith.constant 0 : index
    %710 = vector.load %arg8[%c0_239, %c0_240] : memref<256x128xbf16, #tpu.memory_space<vmem>>, vector<256x128xbf16>
    %cst_241 = arith.constant dense<0.000000e+00> : vector<8x128xf32>
    %711 = tpu.matmul %709, %710, %cst_241 {dimension_numbers = #tpu.dot_dimension_numbers<[1], [0], [0], [1], [0, 0, 1, 1], [], []>} : vector<8x256xbf16>, vector<256x128xbf16>, vector<8x128xf32> -> vector<8x128xf32>
    %c0_242 = arith.constant 0 : index
    %c0_243 = arith.constant 0 : index
    %712 = vector.load %arg9[%c0_242, %c0_243] : memref<1x128xf32, #tpu.memory_space<vmem>>, vector<1x128xf32>
    %713 = vector.broadcast %712 : vector<1x128xf32> to vector<8x128xf32>
    %714 = arith.addf %711, %713 : vector<8x128xf32>
    %715 = arith.index_cast %c5_i32_221 : i32 to index
    %c0_244 = arith.constant 0 : index
    %c0_245 = arith.constant 0 : index
    %716 = vector.load %arg10[%715, %c0_244, %c0_245] : memref<8x8x128xf32, #tpu.memory_space<vmem>>, vector<1x8x128xf32>
    %717 = vector.shape_cast %716 : vector<1x8x128xf32> to vector<8x128xf32>
    %718 = vector.shape_cast %714 : vector<8x128xf32> to vector<1x8x128xf32>
    tpu.vector_store %arg10[%715, %c0_244, %c0_245], %718 {strides = array<i32>} : memref<8x8x128xf32, #tpu.memory_space<vmem>>, vector<1x8x128xf32>,
    %cst_246 = arith.constant dense<0xFF800000> : vector<8xf32>
    %719 = vector.multi_reduction <maximumf>, %714, %cst_246 [1] : vector<8x128xf32> to vector<8xf32>
    %720 = vector.shape_cast %719 : vector<8xf32> to vector<8x1xf32>
    %721 = vector.broadcast %720 : vector<8x1xf32> to vector<8x128xf32>
    %722 = arith.cmpf oge, %714, %721 : vector<8x128xf32>
    %c128_i32_247 = arith.constant 128 : i32
    %723 = vector.broadcast %c128_i32_247 : i32 to vector<8x128xi32>
    %724 = arith.select %722, %316, %723 : vector<8x128xi1>, vector<8x128xi32>
    %cst_248 = arith.constant dense<2147483647> : vector<8xi32>
    %725 = vector.multi_reduction <minsi>, %724, %cst_248 [1] : vector<8x128xi32> to vector<8xi32>
    %726 = vector.shape_cast %725 : vector<8xi32> to vector<8x1xi32>
    %727 = arith.index_cast %c5_i32_221 : i32 to index
    %728 = memref.load %arg2[%727] : memref<8xi32, #tpu.memory_space<smem>>
    %c0_i32_249 = arith.constant 0 : i32
    %729 = arith.cmpi ne, %728, %c0_i32_249 : i32
    %730 = arith.index_cast %c5_i32_221 : i32 to index
    %c0_250 = arith.constant 0 : index
    %c0_251 = arith.constant 0 : index
    %731 = vector.load %arg1[%730, %c0_250, %c0_251] : memref<8x8x1xi32, #tpu.memory_space<vmem>>, vector<1x8x1xi32>
    %732 = vector.shape_cast %731 : vector<1x8x1xi32> to vector<8x1xi32>
    %733 = arith.select %729, %732, %726 : vector<8x1xi32>
    %c6_i32_252 = arith.constant 6 : i32
    %c0_253 = arith.constant 0 : index
    %c0_254 = arith.constant 0 : index
    %c0_255 = arith.constant 0 : index
    %734 = vector.load %arg12[%c0_253, %c0_254, %c0_255] : memref<8x8x128xf32, #tpu.memory_space<vmem>>, vector<8x8x128xf32>
    %735 = vector.shape_cast %707 : vector<8x128xf32> to vector<1x8x128xf32>
    %736 = vector.broadcast %735 : vector<1x8x128xf32> to vector<8x8x128xf32>
    %737 = arith.mulf %734, %736 : vector<8x8x128xf32>
    %cst_256 = arith.constant dense<0.000000e+00> : vector<8x8xf32>
    %738 = vector.multi_reduction <add>, %737, %cst_256 [2] : vector<8x8x128xf32> to vector<8x8xf32>
    %739 = vector.shape_cast %738 : vector<8x8xf32> to vector<8x8x1xf32>
    %cst_257 = arith.constant dense<0xFF800000> : vector<8x1xf32>
    %740 = vector.multi_reduction <maximumf>, %739, %cst_257 [0] : vector<8x8x1xf32> to vector<8x1xf32>
    %741 = vector.shape_cast %740 : vector<8x1xf32> to vector<1x8x1xf32>
    %742 = vector.broadcast %741 : vector<1x8x1xf32> to vector<8x8x1xf32>
    %743 = arith.subf %739, %742 : vector<8x8x1xf32>
    %744 = math.exp %743 : vector<8x8x1xf32>
    %cst_258 = arith.constant dense<0.000000e+00> : vector<8x1xf32>
    %745 = vector.multi_reduction <add>, %744, %cst_258 [0] : vector<8x8x1xf32> to vector<8x1xf32>
    %746 = vector.shape_cast %745 : vector<8x1xf32> to vector<1x8x1xf32>
    %747 = vector.broadcast %746 : vector<1x8x1xf32> to vector<8x8x1xf32>
    %748 = arith.divf %744, %747 : vector<8x8x1xf32>
    %749 = vector.broadcast %748 : vector<8x8x1xf32> to vector<8x8x128xf32>
    %750 = arith.mulf %749, %734 : vector<8x8x128xf32>
    %cst_259 = arith.constant dense<0.000000e+00> : vector<8x128xf32>
    %751 = vector.multi_reduction <add>, %750, %cst_259 [0] : vector<8x8x128xf32> to vector<8x128xf32>
    %752 = vector.broadcast %733 : vector<8x1xi32> to vector<8x128xi32>
    %753 = arith.cmpi eq, %752, %316 : vector<8x128xi32>
    %cst_260 = arith.constant 1.000000e+00 : f32
    %cst_261 = arith.constant 0.000000e+00 : f32
    %754 = vector.broadcast %cst_260 : f32 to vector<8x128xf32>
    %755 = vector.broadcast %cst_261 : f32 to vector<8x128xf32>
    %756 = arith.select %753, %754, %755 : vector<8x128xi1>, vector<8x128xf32>
    %757 = arith.truncf %756 : vector<8x128xf32> to vector<8x128xbf16>
    %758 = arith.truncf %751 : vector<8x128xf32> to vector<8x128xbf16>
    %759 = arith.truncf %707 : vector<8x128xf32> to vector<8x128xbf16>
    %760 = tpu.concatenate %757, %758, %759 in 1 : vector<8x128xbf16>, vector<8x128xbf16>, vector<8x128xbf16> -> vector<8x384xbf16>
    %c0_262 = arith.constant 0 : index
    %c0_263 = arith.constant 0 : index
    %761 = vector.load %arg6[%c0_262, %c0_263] : memref<384x512xbf16, #tpu.memory_space<vmem>>, vector<384x512xbf16>
    %cst_264 = arith.constant dense<0.000000e+00> : vector<8x512xf32>
    %762 = tpu.matmul %760, %761, %cst_264 {dimension_numbers = #tpu.dot_dimension_numbers<[1], [0], [0], [1], [0, 0, 1, 1], [], []>} : vector<8x384xbf16>, vector<384x512xbf16>, vector<8x512xf32> -> vector<8x512xf32>
    %c0_265 = arith.constant 0 : index
    %c0_266 = arith.constant 0 : index
    %763 = vector.load %arg7[%c0_265, %c0_266] : memref<1x512xf32, #tpu.memory_space<vmem>>, vector<1x512xf32>
    %764 = vector.broadcast %763 : vector<1x512xf32> to vector<8x512xf32>
    %765 = arith.addf %762, %764 : vector<8x512xf32>
    %766 = vector.extract_strided_slice %765 {offsets = [0, 0], sizes = [8, 128], strides = [1, 1]} : vector<8x512xf32> to vector<8x128xf32>
    %767 = arith.negf %766 : vector<8x128xf32>
    %768 = math.exp %767 : vector<8x128xf32>
    %cst_267 = arith.constant 1.000000e+00 : f32
    %769 = vector.broadcast %cst_267 : f32 to vector<8x128xf32>
    %770 = arith.addf %769, %768 : vector<8x128xf32>
    %771 = arith.divf %769, %770 : vector<8x128xf32>
    %772 = vector.extract_strided_slice %765 {offsets = [0, 128], sizes = [8, 128], strides = [1, 1]} : vector<8x512xf32> to vector<8x128xf32>
    %773 = arith.negf %772 : vector<8x128xf32>
    %774 = math.exp %773 : vector<8x128xf32>
    %cst_268 = arith.constant 1.000000e+00 : f32
    %775 = vector.broadcast %cst_268 : f32 to vector<8x128xf32>
    %776 = arith.addf %775, %774 : vector<8x128xf32>
    %777 = arith.divf %775, %776 : vector<8x128xf32>
    %778 = vector.extract_strided_slice %765 {offsets = [0, 256], sizes = [8, 128], strides = [1, 1]} : vector<8x512xf32> to vector<8x128xf32>
    %779 = math.tanh %778 : vector<8x128xf32>
    %780 = vector.extract_strided_slice %765 {offsets = [0, 384], sizes = [8, 128], strides = [1, 1]} : vector<8x512xf32> to vector<8x128xf32>
    %781 = arith.negf %780 : vector<8x128xf32>
    %782 = math.exp %781 : vector<8x128xf32>
    %cst_269 = arith.constant 1.000000e+00 : f32
    %783 = vector.broadcast %cst_269 : f32 to vector<8x128xf32>
    %784 = arith.addf %783, %782 : vector<8x128xf32>
    %785 = arith.divf %783, %784 : vector<8x128xf32>
    %786 = arith.mulf %777, %705 : vector<8x128xf32>
    %787 = arith.mulf %771, %779 : vector<8x128xf32>
    %788 = arith.addf %786, %787 : vector<8x128xf32>
    %789 = math.tanh %788 : vector<8x128xf32>
    %790 = arith.mulf %785, %789 : vector<8x128xf32>
    %791 = arith.truncf %790 : vector<8x128xf32> to vector<8x128xbf16>
    %792 = tpu.concatenate %791, %758 in 1 : vector<8x128xbf16>, vector<8x128xbf16> -> vector<8x256xbf16>
    %c0_270 = arith.constant 0 : index
    %c0_271 = arith.constant 0 : index
    %793 = vector.load %arg8[%c0_270, %c0_271] : memref<256x128xbf16, #tpu.memory_space<vmem>>, vector<256x128xbf16>
    %cst_272 = arith.constant dense<0.000000e+00> : vector<8x128xf32>
    %794 = tpu.matmul %792, %793, %cst_272 {dimension_numbers = #tpu.dot_dimension_numbers<[1], [0], [0], [1], [0, 0, 1, 1], [], []>} : vector<8x256xbf16>, vector<256x128xbf16>, vector<8x128xf32> -> vector<8x128xf32>
    %c0_273 = arith.constant 0 : index
    %c0_274 = arith.constant 0 : index
    %795 = vector.load %arg9[%c0_273, %c0_274] : memref<1x128xf32, #tpu.memory_space<vmem>>, vector<1x128xf32>
    %796 = vector.broadcast %795 : vector<1x128xf32> to vector<8x128xf32>
    %797 = arith.addf %794, %796 : vector<8x128xf32>
    %798 = arith.index_cast %c6_i32_252 : i32 to index
    %c0_275 = arith.constant 0 : index
    %c0_276 = arith.constant 0 : index
    %799 = vector.load %arg10[%798, %c0_275, %c0_276] : memref<8x8x128xf32, #tpu.memory_space<vmem>>, vector<1x8x128xf32>
    %800 = vector.shape_cast %799 : vector<1x8x128xf32> to vector<8x128xf32>
    %801 = vector.shape_cast %797 : vector<8x128xf32> to vector<1x8x128xf32>
    tpu.vector_store %arg10[%798, %c0_275, %c0_276], %801 {strides = array<i32>} : memref<8x8x128xf32, #tpu.memory_space<vmem>>, vector<1x8x128xf32>,
    %cst_277 = arith.constant dense<0xFF800000> : vector<8xf32>
    %802 = vector.multi_reduction <maximumf>, %797, %cst_277 [1] : vector<8x128xf32> to vector<8xf32>
    %803 = vector.shape_cast %802 : vector<8xf32> to vector<8x1xf32>
    %804 = vector.broadcast %803 : vector<8x1xf32> to vector<8x128xf32>
    %805 = arith.cmpf oge, %797, %804 : vector<8x128xf32>
    %c128_i32_278 = arith.constant 128 : i32
    %806 = vector.broadcast %c128_i32_278 : i32 to vector<8x128xi32>
    %807 = arith.select %805, %316, %806 : vector<8x128xi1>, vector<8x128xi32>
    %cst_279 = arith.constant dense<2147483647> : vector<8xi32>
    %808 = vector.multi_reduction <minsi>, %807, %cst_279 [1] : vector<8x128xi32> to vector<8xi32>
    %809 = vector.shape_cast %808 : vector<8xi32> to vector<8x1xi32>
    %810 = arith.index_cast %c6_i32_252 : i32 to index
    %811 = memref.load %arg2[%810] : memref<8xi32, #tpu.memory_space<smem>>
    %c0_i32_280 = arith.constant 0 : i32
    %812 = arith.cmpi ne, %811, %c0_i32_280 : i32
    %813 = arith.index_cast %c6_i32_252 : i32 to index
    %c0_281 = arith.constant 0 : index
    %c0_282 = arith.constant 0 : index
    %814 = vector.load %arg1[%813, %c0_281, %c0_282] : memref<8x8x1xi32, #tpu.memory_space<vmem>>, vector<1x8x1xi32>
    %815 = vector.shape_cast %814 : vector<1x8x1xi32> to vector<8x1xi32>
    %816 = arith.select %812, %815, %809 : vector<8x1xi32>
    %c7_i32_283 = arith.constant 7 : i32
    %c0_284 = arith.constant 0 : index
    %c0_285 = arith.constant 0 : index
    %c0_286 = arith.constant 0 : index
    %817 = vector.load %arg12[%c0_284, %c0_285, %c0_286] : memref<8x8x128xf32, #tpu.memory_space<vmem>>, vector<8x8x128xf32>
    %818 = vector.shape_cast %790 : vector<8x128xf32> to vector<1x8x128xf32>
    %819 = vector.broadcast %818 : vector<1x8x128xf32> to vector<8x8x128xf32>
    %820 = arith.mulf %817, %819 : vector<8x8x128xf32>
    %cst_287 = arith.constant dense<0.000000e+00> : vector<8x8xf32>
    %821 = vector.multi_reduction <add>, %820, %cst_287 [2] : vector<8x8x128xf32> to vector<8x8xf32>
    %822 = vector.shape_cast %821 : vector<8x8xf32> to vector<8x8x1xf32>
    %cst_288 = arith.constant dense<0xFF800000> : vector<8x1xf32>
    %823 = vector.multi_reduction <maximumf>, %822, %cst_288 [0] : vector<8x8x1xf32> to vector<8x1xf32>
    %824 = vector.shape_cast %823 : vector<8x1xf32> to vector<1x8x1xf32>
    %825 = vector.broadcast %824 : vector<1x8x1xf32> to vector<8x8x1xf32>
    %826 = arith.subf %822, %825 : vector<8x8x1xf32>
    %827 = math.exp %826 : vector<8x8x1xf32>
    %cst_289 = arith.constant dense<0.000000e+00> : vector<8x1xf32>
    %828 = vector.multi_reduction <add>, %827, %cst_289 [0] : vector<8x8x1xf32> to vector<8x1xf32>
    %829 = vector.shape_cast %828 : vector<8x1xf32> to vector<1x8x1xf32>
    %830 = vector.broadcast %829 : vector<1x8x1xf32> to vector<8x8x1xf32>
    %831 = arith.divf %827, %830 : vector<8x8x1xf32>
    %832 = vector.broadcast %831 : vector<8x8x1xf32> to vector<8x8x128xf32>
    %833 = arith.mulf %832, %817 : vector<8x8x128xf32>
    %cst_290 = arith.constant dense<0.000000e+00> : vector<8x128xf32>
    %834 = vector.multi_reduction <add>, %833, %cst_290 [0] : vector<8x8x128xf32> to vector<8x128xf32>
    %835 = vector.broadcast %816 : vector<8x1xi32> to vector<8x128xi32>
    %836 = arith.cmpi eq, %835, %316 : vector<8x128xi32>
    %cst_291 = arith.constant 1.000000e+00 : f32
    %cst_292 = arith.constant 0.000000e+00 : f32
    %837 = vector.broadcast %cst_291 : f32 to vector<8x128xf32>
    %838 = vector.broadcast %cst_292 : f32 to vector<8x128xf32>
    %839 = arith.select %836, %837, %838 : vector<8x128xi1>, vector<8x128xf32>
    %840 = arith.truncf %839 : vector<8x128xf32> to vector<8x128xbf16>
    %841 = arith.truncf %834 : vector<8x128xf32> to vector<8x128xbf16>
    %842 = arith.truncf %790 : vector<8x128xf32> to vector<8x128xbf16>
    %843 = tpu.concatenate %840, %841, %842 in 1 : vector<8x128xbf16>, vector<8x128xbf16>, vector<8x128xbf16> -> vector<8x384xbf16>
    %c0_293 = arith.constant 0 : index
    %c0_294 = arith.constant 0 : index
    %844 = vector.load %arg6[%c0_293, %c0_294] : memref<384x512xbf16, #tpu.memory_space<vmem>>, vector<384x512xbf16>
    %cst_295 = arith.constant dense<0.000000e+00> : vector<8x512xf32>
    %845 = tpu.matmul %843, %844, %cst_295 {dimension_numbers = #tpu.dot_dimension_numbers<[1], [0], [0], [1], [0, 0, 1, 1], [], []>} : vector<8x384xbf16>, vector<384x512xbf16>, vector<8x512xf32> -> vector<8x512xf32>
    %c0_296 = arith.constant 0 : index
    %c0_297 = arith.constant 0 : index
    %846 = vector.load %arg7[%c0_296, %c0_297] : memref<1x512xf32, #tpu.memory_space<vmem>>, vector<1x512xf32>
    %847 = vector.broadcast %846 : vector<1x512xf32> to vector<8x512xf32>
    %848 = arith.addf %845, %847 : vector<8x512xf32>
    %849 = vector.extract_strided_slice %848 {offsets = [0, 0], sizes = [8, 128], strides = [1, 1]} : vector<8x512xf32> to vector<8x128xf32>
    %850 = arith.negf %849 : vector<8x128xf32>
    %851 = math.exp %850 : vector<8x128xf32>
    %cst_298 = arith.constant 1.000000e+00 : f32
    %852 = vector.broadcast %cst_298 : f32 to vector<8x128xf32>
    %853 = arith.addf %852, %851 : vector<8x128xf32>
    %854 = arith.divf %852, %853 : vector<8x128xf32>
    %855 = vector.extract_strided_slice %848 {offsets = [0, 128], sizes = [8, 128], strides = [1, 1]} : vector<8x512xf32> to vector<8x128xf32>
    %856 = arith.negf %855 : vector<8x128xf32>
    %857 = math.exp %856 : vector<8x128xf32>
    %cst_299 = arith.constant 1.000000e+00 : f32
    %858 = vector.broadcast %cst_299 : f32 to vector<8x128xf32>
    %859 = arith.addf %858, %857 : vector<8x128xf32>
    %860 = arith.divf %858, %859 : vector<8x128xf32>
    %861 = vector.extract_strided_slice %848 {offsets = [0, 256], sizes = [8, 128], strides = [1, 1]} : vector<8x512xf32> to vector<8x128xf32>
    %862 = math.tanh %861 : vector<8x128xf32>
    %863 = vector.extract_strided_slice %848 {offsets = [0, 384], sizes = [8, 128], strides = [1, 1]} : vector<8x512xf32> to vector<8x128xf32>
    %864 = arith.negf %863 : vector<8x128xf32>
    %865 = math.exp %864 : vector<8x128xf32>
    %cst_300 = arith.constant 1.000000e+00 : f32
    %866 = vector.broadcast %cst_300 : f32 to vector<8x128xf32>
    %867 = arith.addf %866, %865 : vector<8x128xf32>
    %868 = arith.divf %866, %867 : vector<8x128xf32>
    %869 = arith.mulf %860, %788 : vector<8x128xf32>
    %870 = arith.mulf %854, %862 : vector<8x128xf32>
    %871 = arith.addf %869, %870 : vector<8x128xf32>
    %872 = math.tanh %871 : vector<8x128xf32>
    %873 = arith.mulf %868, %872 : vector<8x128xf32>
    %874 = arith.truncf %873 : vector<8x128xf32> to vector<8x128xbf16>
    %875 = tpu.concatenate %874, %841 in 1 : vector<8x128xbf16>, vector<8x128xbf16> -> vector<8x256xbf16>
    %c0_301 = arith.constant 0 : index
    %c0_302 = arith.constant 0 : index
    %876 = vector.load %arg8[%c0_301, %c0_302] : memref<256x128xbf16, #tpu.memory_space<vmem>>, vector<256x128xbf16>
    %cst_303 = arith.constant dense<0.000000e+00> : vector<8x128xf32>
    %877 = tpu.matmul %875, %876, %cst_303 {dimension_numbers = #tpu.dot_dimension_numbers<[1], [0], [0], [1], [0, 0, 1, 1], [], []>} : vector<8x256xbf16>, vector<256x128xbf16>, vector<8x128xf32> -> vector<8x128xf32>
    %c0_304 = arith.constant 0 : index
    %c0_305 = arith.constant 0 : index
    %878 = vector.load %arg9[%c0_304, %c0_305] : memref<1x128xf32, #tpu.memory_space<vmem>>, vector<1x128xf32>
    %879 = vector.broadcast %878 : vector<1x128xf32> to vector<8x128xf32>
    %880 = arith.addf %877, %879 : vector<8x128xf32>
    %881 = arith.index_cast %c7_i32_283 : i32 to index
    %c0_306 = arith.constant 0 : index
    %c0_307 = arith.constant 0 : index
    %882 = vector.load %arg10[%881, %c0_306, %c0_307] : memref<8x8x128xf32, #tpu.memory_space<vmem>>, vector<1x8x128xf32>
    %883 = vector.shape_cast %882 : vector<1x8x128xf32> to vector<8x128xf32>
    %884 = vector.shape_cast %880 : vector<8x128xf32> to vector<1x8x128xf32>
    tpu.vector_store %arg10[%881, %c0_306, %c0_307], %884 {strides = array<i32>} : memref<8x8x128xf32, #tpu.memory_space<vmem>>, vector<1x8x128xf32>,
    %cst_308 = arith.constant dense<0xFF800000> : vector<8xf32>
    %885 = vector.multi_reduction <maximumf>, %880, %cst_308 [1] : vector<8x128xf32> to vector<8xf32>
    %886 = vector.shape_cast %885 : vector<8xf32> to vector<8x1xf32>
    %887 = vector.broadcast %886 : vector<8x1xf32> to vector<8x128xf32>
    %888 = arith.cmpf oge, %880, %887 : vector<8x128xf32>
    %c128_i32_309 = arith.constant 128 : i32
    %889 = vector.broadcast %c128_i32_309 : i32 to vector<8x128xi32>
    %890 = arith.select %888, %316, %889 : vector<8x128xi1>, vector<8x128xi32>
    %cst_310 = arith.constant dense<2147483647> : vector<8xi32>
    %891 = vector.multi_reduction <minsi>, %890, %cst_310 [1] : vector<8x128xi32> to vector<8xi32>
    %892 = vector.shape_cast %891 : vector<8xi32> to vector<8x1xi32>
    %893 = arith.index_cast %c7_i32_283 : i32 to index
    %894 = memref.load %arg2[%893] : memref<8xi32, #tpu.memory_space<smem>>
    %c0_i32_311 = arith.constant 0 : i32
    %895 = arith.cmpi ne, %894, %c0_i32_311 : i32
    %896 = arith.index_cast %c7_i32_283 : i32 to index
    %c0_312 = arith.constant 0 : index
    %c0_313 = arith.constant 0 : index
    %897 = vector.load %arg1[%896, %c0_312, %c0_313] : memref<8x8x1xi32, #tpu.memory_space<vmem>>, vector<1x8x1xi32>
    %898 = vector.shape_cast %897 : vector<1x8x1xi32> to vector<8x1xi32>
    %899 = arith.select %895, %898, %892 : vector<8x1xi32>
    %c7_i32_314 = arith.constant 7 : i32
    return
  }
}

</mosaic_0001>

<llo_original>
// kernel: seq2seq_forward.1
$region0: #{seq2seq_forward.1}
  #allocation0 [shape = 'u32[]', space=smem, size = 0x4, offset = 0x4, fixed_abs, tag = 'smem constant byte address 0x4 - core index']
  #allocation1 [shape = 'u32[144,128]{1,0:T(1,128)}', space=vmem, size = 0x12000, scoped, tag = 'internal scratch']
  #allocation2 [shape = 'f32[64,512]{1,0:T(8,128)}', space=vmem, size = 0x20000, scoped, tag = 'scratch operand']
  #allocation3 [shape = 'f32[8,8,128]{2,1,0:T(8,128)}', space=vmem, size = 0x8000, scoped, tag = 'scratch operand']
  %s0 = inlined_call_operand.vmem [shape: s32[64,1], index: 0, kind: input, shape index: {}]
  %s1 = inlined_call_operand.vmem [shape: s32[8,8,1], index: 1, kind: input, shape index: {}]
  %s2 = inlined_call_operand.vmem [shape: s32[8], index: 2, kind: input, shape index: {}]
  %s3 = inlined_call_operand.hbm [shape: bf16[128,512], index: 3, kind: input, shape index: {}]
  %s4 = inlined_call_operand.hbm [shape: bf16[128,512], index: 4, kind: input, shape index: {}]
  %s5 = inlined_call_operand.vmem [shape: f32[1,512], index: 5, kind: input, shape index: {}]
  %s6 = inlined_call_operand.hbm [shape: bf16[384,512], index: 6, kind: input, shape index: {}]
  %s7 = inlined_call_operand.vmem [shape: f32[1,512], index: 7, kind: input, shape index: {}]
  %s8 = inlined_call_operand.vmem [shape: bf16[256,128], index: 8, kind: input, shape index: {}]
  %s9 = inlined_call_operand.vmem [shape: f32[1,128], index: 9, kind: input, shape index: {}]
  %s10 = inlined_call_operand.hbm [shape: f32[8,8,128], index: 10, kind: output, shape index: {}]
  %s11 = sld [smem:[#allocation0]]
  $region66: #{seq2seq_forward.1} parent=0
    _
  %s13 = ssub.s32 1, %s11
  %s14 = scalar_select 0, %s13, %s11
  $region1: #{seq2seq_forward.1} parent=0
    #allocation4 [shape = 'u8[512]{0}', space=smem, size = 0x200, scoped, tag = 'input window, operand 2, single buffered']
    #allocation5 [shape = 's32[1]{0}', space=sflag, size = 0x4, scoped, tag = 'scoped memory for seq2seq_forward.1']
    #allocation6 [shape = 's32[1]{0}', space=sflag, size = 0x4, scoped, tag = 'scoped memory for seq2seq_forward.1']
    #allocation7 [shape = 's32[1]{0}', space=sflag, size = 0x4, scoped, tag = 'scoped memory for seq2seq_forward.1']
    #allocation8 [shape = 'u8[131072]{0}', space=vmem, size = 0x20000, scoped, tag = 'input window, operand 3, single buffered']
    #allocation9 [shape = 'u8[131072]{0}', space=vmem, size = 0x20000, scoped, tag = 'input window, operand 4, single buffered']
    #allocation10 [shape = 's32[1]{0}', space=sflag, size = 0x4, scoped, tag = 'scoped memory for seq2seq_forward.1']
    #allocation11 [shape = 'u8[393216]{0}', space=vmem, size = 0x60000, scoped, tag = 'input window, operand 6, single buffered']
    #allocation12 [shape = 'u8[32768]{0}', space=vmem, size = 0x8000, scoped, tag = 'output window, operand 0, single buffered']
    %15 = vsyncpa [#allocation7], 0
    %16 = vsyncpa [#allocation5], 0
    %17 = vsyncpa [#allocation10], 0
    %18 = vsyncpa [#allocation6], 0
    // Predicated region
    $region2: #{seq2seq_forward.1} parent=1 // pred_check
      _
    $region3: #{seq2seq_forward.1} parent=1 // pred_check_branch
      %20 = sbr.rel (0) target = $region5
    $region4: #{seq2seq_forward.1} parent=1 // pred_region
      _
    $region5: #{seq2seq_forward.1} parent=1 // pred_fallthru
      _
    // Predicated region
    $region6: #{seq2seq_forward.1} parent=1 // pred_check
      _
    $region7: #{seq2seq_forward.1} parent=1 // pred_check_branch
      %22 = sbr.rel (0) target = $region9
    $region8: #{seq2seq_forward.1} parent=1 // pred_region
      _
    $region9: #{seq2seq_forward.1} parent=1 // pred_fallthru
      _
    // Predicated region
    $region10: #{seq2seq_forward.1} parent=1 // pred_check
      _
    $region11: #{seq2seq_forward.1} parent=1 // pred_check_branch
      %24 = sbr.rel (0) target = $region13
    $region12: #{seq2seq_forward.1} parent=1 // pred_region
      %s26 = ssub.s32 16, 16
      %27 = vsyncadd [#allocation7], %s26
      %s29 = sshll.u32 %s2, 4
      %s30 = int_to_ptr.vmem [resolvable:$true] %s29
      %32 = dma.vmem_to_smem %s30, 16, [#allocation4], [#allocation7]
    $region13: #{seq2seq_forward.1} parent=1 // pred_fallthru
      _
    // Predicated region
    $region14: #{seq2seq_forward.1} parent=1 // pred_check
      _
    $region15: #{seq2seq_forward.1} parent=1 // pred_check_branch
      %34 = sbr.rel (0) target = $region17
    $region16: #{seq2seq_forward.1} parent=1 // pred_region
      %s36 = ssub.s32 4096, 4096
      %37 = vsyncadd [#allocation5], %s36
      %s38 = sshll.u32 [#allocation8], 4
      %s39 = int_to_ptr.vmem [resolvable:$true] %s38
      %44 = dma.hbm_to_vmem [thread:$0]  %s3, 4096, %s39, [#allocation5], 256, 256, 16
    $region17: #{seq2seq_forward.1} parent=1 // pred_fallthru
      _
    // Predicated region
    $region18: #{seq2seq_forward.1} parent=1 // pred_check
      _
    $region19: #{seq2seq_forward.1} parent=1 // pred_check_branch
      %46 = sbr.rel (0) target = $region21
    $region20: #{seq2seq_forward.1} parent=1 // pred_region
      %s48 = ssub.s32 4096, 4096
      %49 = vsyncadd [#allocation10], %s48
      %s50 = sshll.u32 [#allocation9], 4
      %s51 = int_to_ptr.vmem [resolvable:$true] %s50
      %56 = dma.hbm_to_vmem [thread:$0]  %s4, 4096, %s51, [#allocation10], 256, 256, 16
    $region21: #{seq2seq_forward.1} parent=1 // pred_fallthru
      _
    // Predicated region
    $region22: #{seq2seq_forward.1} parent=1 // pred_check
      _
    $region23: #{seq2seq_forward.1} parent=1 // pred_check_branch
      %58 = sbr.rel (0) target = $region25
    $region24: #{seq2seq_forward.1} parent=1 // pred_region
      _
    $region25: #{seq2seq_forward.1} parent=1 // pred_fallthru
      _
    // Predicated region
    $region26: #{seq2seq_forward.1} parent=1 // pred_check
      _
    $region27: #{seq2seq_forward.1} parent=1 // pred_check_branch
      %60 = sbr.rel (0) target = $region29
    $region28: #{seq2seq_forward.1} parent=1 // pred_region
      %s62 = ssub.s32 12288, 12288
      %63 = vsyncadd [#allocation10], %s62
      %s64 = sshll.u32 [#allocation11], 4
      %s65 = int_to_ptr.vmem [resolvable:$true] %s64
      %70 = dma.hbm_to_vmem [thread:$0]  %s6, 12288, %s65, [#allocation10], 256, 256, 16
    $region29: #{seq2seq_forward.1} parent=1 // pred_fallthru
      _
    // Predicated region
    $region30: #{seq2seq_forward.1} parent=1 // pred_check
      _
    $region31: #{seq2seq_forward.1} parent=1 // pred_check_branch
      %72 = sbr.rel (0) target = $region33
    $region32: #{seq2seq_forward.1} parent=1 // pred_region
      _
    $region33: #{seq2seq_forward.1} parent=1 // pred_fallthru
      _
    // Predicated region
    $region34: #{seq2seq_forward.1} parent=1 // pred_check
      _
    $region35: #{seq2seq_forward.1} parent=1 // pred_check_branch
      %74 = sbr.rel (0) target = $region37
    $region36: #{seq2seq_forward.1} parent=1 // pred_region
      _
    $region37: #{seq2seq_forward.1} parent=1 // pred_fallthru
      _
    // Predicated region
    $region38: #{seq2seq_forward.1} parent=1 // pred_check
      _
    $region39: #{seq2seq_forward.1} parent=1 // pred_check_branch
      %76 = sbr.rel (0) target = $region41
    $region40: #{seq2seq_forward.1} parent=1 // pred_region
      _
    $region41: #{seq2seq_forward.1} parent=1 // pred_fallthru
      _
    // Predicated region
    $region42: #{seq2seq_forward.1} parent=1 // pred_check
      _
    $region43: #{seq2seq_forward.1} parent=1 // pred_check_branch
      %78 = sbr.rel (0) target = $region45
    $region44: #{seq2seq_forward.1} parent=1 // pred_region
      %79 = dma.done [#allocation7], 16
    $region45: #{seq2seq_forward.1} parent=1 // pred_fallthru
      _
    // Predicated region
    $region46: #{seq2seq_forward.1} parent=1 // pred_check
      _
    $region47: #{seq2seq_forward.1} parent=1 // pred_check_branch
      %81 = sbr.rel (0) target = $region49
    $region48: #{seq2seq_forward.1} parent=1 // pred_region
      %82 = dma.done [#allocation5], 4096
    $region49: #{seq2seq_forward.1} parent=1 // pred_fallthru
      _
    // Predicated region
    $region50: #{seq2seq_forward.1} parent=1 // pred_check
      _
    $region51: #{seq2seq_forward.1} parent=1 // pred_check_branch
      %84 = sbr.rel (0) target = $region53
    $region52: #{seq2seq_forward.1} parent=1 // pred_region
      %85 = dma.done [#allocation10], 4096
    $region53: #{seq2seq_forward.1} parent=1 // pred_fallthru
      _
    // Predicated region
    $region54: #{seq2seq_forward.1} parent=1 // pred_check
      _
    $region55: #{seq2seq_forward.1} parent=1 // pred_check_branch
      %87 = sbr.rel (0) target = $region57
    $region56: #{seq2seq_forward.1} parent=1 // pred_region
      %88 = dma.done [#allocation10], 12288
    $region57: #{seq2seq_forward.1} parent=1 // pred_fallthru
      _
    %89 = sfence
    %v91 = vld [vmem:[%s0] sm:$0xff]
    %v92 = vld [vmem:[%s0 + $0x8] sm:$0xff]
    %v93 = vld [vmem:[%s0 + $0x10] sm:$0xff]
    %v94 = vld [vmem:[%s0 + $0x18] sm:$0xff]
    %v95 = vld [vmem:[%s0 + $0x20] sm:$0xff]
    %v96 = vld [vmem:[%s0 + $0x28] sm:$0xff]
    %v97 = vld [vmem:[%s0 + $0x30] sm:$0xff]
    %v98 = vld [vmem:[%s0 + $0x38] sm:$0xff]
    %v99 = vlaneseq
    %v100 = vand.u32 %v99, 127
    %101 = vset.pattern.permute.xlu0 0
    %102 = vperm.xlu0 %101, %v91
    %v103 = vpop.permute.xlu0 %102
    %104 = vset.pattern.permute.xlu0 0
    %105 = vperm.xlu0 %104, %v92
    %v106 = vpop.permute.xlu0 %105
    %107 = vset.pattern.permute.xlu0 0
    %108 = vperm.xlu0 %107, %v93
    %v109 = vpop.permute.xlu0 %108
    %110 = vset.pattern.permute.xlu0 0
    %111 = vperm.xlu0 %110, %v94
    %v112 = vpop.permute.xlu0 %111
    %113 = vset.pattern.permute.xlu0 0
    %114 = vperm.xlu0 %113, %v95
    %v115 = vpop.permute.xlu0 %114
    %116 = vset.pattern.permute.xlu0 0
    %117 = vperm.xlu0 %116, %v96
    %v118 = vpop.permute.xlu0 %117
    %119 = vset.pattern.permute.xlu0 0
    %120 = vperm.xlu0 %119, %v97
    %v121 = vpop.permute.xlu0 %120
    %122 = vset.pattern.permute.xlu0 0
    %123 = vperm.xlu0 %122, %v98
    %v124 = vpop.permute.xlu0 %123
    %vm125 = vcmp.eq.s32.totalorder %v103, %v100
    %vm126 = vcmp.eq.s32.totalorder %v106, %v100
    %vm127 = vcmp.eq.s32.totalorder %v109, %v100
    %vm128 = vcmp.eq.s32.totalorder %v112, %v100
    %vm129 = vcmp.eq.s32.totalorder %v115, %v100
    %vm130 = vcmp.eq.s32.totalorder %v118, %v100
    %vm131 = vcmp.eq.s32.totalorder %v121, %v100
    %vm132 = vcmp.eq.s32.totalorder %v124, %v100
    %v133 = vsel %vm125, 1.0, 0.0
    %v134 = vsel %vm126, 1.0, 0.0
    %v135 = vsel %vm127, 1.0, 0.0
    %v136 = vsel %vm128, 1.0, 0.0
    %v137 = vsel %vm129, 1.0, 0.0
    %v138 = vsel %vm130, 1.0, 0.0
    %v139 = vsel %vm131, 1.0, 0.0
    %v140 = vsel %vm132, 1.0, 0.0
    %v141 = vpack.c.bf16 %v134, %v133
    %v142 = vpack.c.bf16 %v136, %v135
    %v143 = vpack.c.bf16 %v138, %v137
    %v144 = vpack.c.bf16 %v140, %v139
    %v145 = vld [vmem:[#allocation8] sm:$0xff]
    %v146 = vld [vmem:[#allocation8 + $0x8] sm:$0xff]
    %v147 = vld [vmem:[#allocation8 + $0x10] sm:$0xff]
    %v148 = vld [vmem:[#allocation8 + $0x18] sm:$0xff]
    %v149 = vld [vmem:[#allocation8 + $0x20] sm:$0xff]
    %v150 = vld [vmem:[#allocation8 + $0x28] sm:$0xff]
    %v151 = vld [vmem:[#allocation8 + $0x30] sm:$0xff]
    %v152 = vld [vmem:[#allocation8 + $0x38] sm:$0xff]
    %v153 = vld [vmem:[#allocation8 + $0x40] sm:$0xff]
    %v154 = vld [vmem:[#allocation8 + $0x48] sm:$0xff]
    %v155 = vld [vmem:[#allocation8 + $0x50] sm:$0xff]
    %v156 = vld [vmem:[#allocation8 + $0x58] sm:$0xff]
    %v157 = vld [vmem:[#allocation8 + $0x60] sm:$0xff]
    %v158 = vld [vmem:[#allocation8 + $0x68] sm:$0xff]
    %v159 = vld [vmem:[#allocation8 + $0x70] sm:$0xff]
    %v160 = vld [vmem:[#allocation8 + $0x78] sm:$0xff]
    %v161 = vld [vmem:[#allocation8 + $0x80] sm:$0xff]
    %v162 = vld [vmem:[#allocation8 + $0x88] sm:$0xff]
    %v163 = vld [vmem:[#allocation8 + $0x90] sm:$0xff]
    %v164 = vld [vmem:[#allocation8 + $0x98] sm:$0xff]
    %v165 = vld [vmem:[#allocation8 + $0xa0] sm:$0xff]
    %v166 = vld [vmem:[#allocation8 + $0xa8] sm:$0xff]
    %v167 = vld [vmem:[#allocation8 + $0xb0] sm:$0xff]
    %v168 = vld [vmem:[#allocation8 + $0xb8] sm:$0xff]
    %v169 = vld [vmem:[#allocation8 + $0xc0] sm:$0xff]
    %v170 = vld [vmem:[#allocation8 + $0xc8] sm:$0xff]
    %v171 = vld [vmem:[#allocation8 + $0xd0] sm:$0xff]
    %v172 = vld [vmem:[#allocation8 + $0xd8] sm:$0xff]
    %v173 = vld [vmem:[#allocation8 + $0xe0] sm:$0xff]
    %v174 = vld [vmem:[#allocation8 + $0xe8] sm:$0xff]
    %v175 = vld [vmem:[#allocation8 + $0xf0] sm:$0xff]
    %v176 = vld [vmem:[#allocation8 + $0xf8] sm:$0xff]
    %v177 = vld [vmem:[%s5] sm:$0xf]
    %v179 = vlaneseq
    %v180 = vshrl.u32 %v179, 7
    %v181 = vsub.s32 0, %v180
    %v182 = vrot.slane %v177, %v181
    %v183 = vlaneseq
    %v184 = vshrl.u32 %v183, 7
    %v185 = vsub.s32 1, %v184
    %v186 = vrot.slane %v177, %v185
    %v187 = vlaneseq
    %v188 = vshrl.u32 %v187, 7
    %v189 = vsub.s32 2, %v188
    %v190 = vrot.slane %v177, %v189
    %v191 = vlaneseq
    %v192 = vshrl.u32 %v191, 7
    %v193 = vsub.s32 3, %v192
    %v194 = vrot.slane %v177, %v193
    %v231 = vunpack.c.l.b16 %v145
    %v232 = vunpack.c.h.b16 %v145
    %v233 = vunpack.c.l.b16 %v146
    %v234 = vunpack.c.h.b16 %v146
    %v235 = vunpack.c.l.b16 %v147
    %v236 = vunpack.c.h.b16 %v147
    %v237 = vunpack.c.l.b16 %v148
    %v238 = vunpack.c.h.b16 %v148
    %v239 = vunpack.c.l.b16 %v149
    %v240 = vunpack.c.h.b16 %v149
    %v241 = vunpack.c.l.b16 %v150
    %v242 = vunpack.c.h.b16 %v150
    %v243 = vunpack.c.l.b16 %v151
    %v244 = vunpack.c.h.b16 %v151
    %v245 = vunpack.c.l.b16 %v152
    %v246 = vunpack.c.h.b16 %v152
    %v247 = vunpack.c.l.b16 %v153
    %v248 = vunpack.c.h.b16 %v153
    %v249 = vunpack.c.l.b16 %v154
    %v250 = vunpack.c.h.b16 %v154
    %v251 = vunpack.c.l.b16 %v155
    %v252 = vunpack.c.h.b16 %v155
    %v253 = vunpack.c.l.b16 %v156
    %v254 = vunpack.c.h.b16 %v156
    %v255 = vunpack.c.l.b16 %v157
    %v256 = vunpack.c.h.b16 %v157
    %v257 = vunpack.c.l.b16 %v158
    %v258 = vunpack.c.h.b16 %v158
    %v259 = vunpack.c.l.b16 %v159
    %v260 = vunpack.c.h.b16 %v159
    %v261 = vunpack.c.l.b16 %v160
    %v262 = vunpack.c.h.b16 %v160
    %v263 = vunpack.c.l.b16 %v161
    %v264 = vunpack.c.h.b16 %v161
    %v265 = vunpack.c.l.b16 %v162
    %v266 = vunpack.c.h.b16 %v162
    %v267 = vunpack.c.l.b16 %v163
    %v268 = vunpack.c.h.b16 %v163
    %v269 = vunpack.c.l.b16 %v164
    %v270 = vunpack.c.h.b16 %v164
    %v271 = vunpack.c.l.b16 %v165
    %v272 = vunpack.c.h.b16 %v165
    %v273 = vunpack.c.l.b16 %v166
    %v274 = vunpack.c.h.b16 %v166
    %v275 = vunpack.c.l.b16 %v167
    %v276 = vunpack.c.h.b16 %v167
    %v277 = vunpack.c.l.b16 %v168
    %v278 = vunpack.c.h.b16 %v168
    %v279 = vunpack.c.l.b16 %v169
    %v280 = vunpack.c.h.b16 %v169
    %v281 = vunpack.c.l.b16 %v170
    %v282 = vunpack.c.h.b16 %v170
    %v283 = vunpack.c.l.b16 %v171
    %v284 = vunpack.c.h.b16 %v171
    %v285 = vunpack.c.l.b16 %v172
    %v286 = vunpack.c.h.b16 %v172
    %v287 = vunpack.c.l.b16 %v173
    %v288 = vunpack.c.h.b16 %v173
    %v289 = vunpack.c.l.b16 %v174
    %v290 = vunpack.c.h.b16 %v174
    %v291 = vunpack.c.l.b16 %v175
    %v292 = vunpack.c.h.b16 %v175
    %v293 = vunpack.c.l.b16 %v176
    %v294 = vunpack.c.h.b16 %v176
    %v295 = vpack.c.b16 %v235, %v231
    %v296 = vpack.c.b16 %v236, %v232
    %v297 = vpack.c.b16 %v237, %v233
    %v298 = vpack.c.b16 %v238, %v234
    %v299 = vpack.c.b16 %v243, %v239
    %v300 = vpack.c.b16 %v244, %v240
    %v301 = vpack.c.b16 %v245, %v241
    %v302 = vpack.c.b16 %v246, %v242
    %v303 = vpack.c.b16 %v251, %v247
    %v304 = vpack.c.b16 %v252, %v248
    %v305 = vpack.c.b16 %v253, %v249
    %v306 = vpack.c.b16 %v254, %v250
    %v307 = vpack.c.b16 %v259, %v255
    %v308 = vpack.c.b16 %v260, %v256
    %v309 = vpack.c.b16 %v261, %v257
    %v310 = vpack.c.b16 %v262, %v258
    %v311 = vpack.c.b16 %v267, %v263
    %v312 = vpack.c.b16 %v268, %v264
    %v313 = vpack.c.b16 %v269, %v265
    %v314 = vpack.c.b16 %v270, %v266
    %v315 = vpack.c.b16 %v275, %v271
    %v316 = vpack.c.b16 %v276, %v272
    %v317 = vpack.c.b16 %v277, %v273
    %v318 = vpack.c.b16 %v278, %v274
    %v319 = vpack.c.b16 %v283, %v279
    %v320 = vpack.c.b16 %v284, %v280
    %v321 = vpack.c.b16 %v285, %v281
    %v322 = vpack.c.b16 %v286, %v282
    %v323 = vpack.c.b16 %v291, %v287
    %v324 = vpack.c.b16 %v292, %v288
    %v325 = vpack.c.b16 %v293, %v289
    %v326 = vpack.c.b16 %v294, %v290
    %359 = vmatprep.subr.bf16.mxu0 %v324
    %360 = vmatpush1.bf16.msra.mxu0 %v323
    %361 = vmatprep.subr.bf16.mxu0 %v320
    %362 = vmatpush1.bf16.msra.mxu0 %v319
    %363 = vmatprep.subr.bf16.mxu0 %v316
    %364 = vmatpush1.bf16.msra.mxu0 %v315
    %365 = vmatprep.subr.bf16.mxu0 %v312
    %366 = vmatpush1.bf16.msra.mxu0 %v311
    %367 = vmatprep.subr.bf16.mxu0 %v308
    %368 = vmatpush1.bf16.msra.mxu0 %v307
    %369 = vmatprep.subr.bf16.mxu0 %v304
    %370 = vmatpush1.bf16.msra.mxu0 %v303
    %371 = vmatprep.subr.bf16.mxu0 %v300
    %372 = vmatpush1.bf16.msra.mxu0 %v299
    %373 = vmatprep.subr.bf16.mxu0 %v296
    %374 = vmatpush1.bf16.msra.mxu0 %v295
    %375 = vmatprep.subr.bf16.mxu0 0
    %376 = vmatpush2.bf16.msra.mxu0 0
    %377 = vmatprep.subr.bf16.mxu0 0
    %378 = vmatpush2.bf16.msra.mxu0 0
    %379 = vmatprep.subr.bf16.mxu0 0
    %380 = vmatpush2.bf16.msra.mxu0 0
    %381 = vmatprep.subr.bf16.mxu0 0
    %382 = vmatpush2.bf16.msra.mxu0 0
    %383 = vmatprep.subr.bf16.mxu0 0
    %384 = vmatpush2.bf16.msra.mxu0 0
    %385 = vmatprep.subr.bf16.mxu0 0
    %386 = vmatpush2.bf16.msra.mxu0 0
    %387 = vmatprep.subr.bf16.mxu0 0
    %388 = vmatpush2.bf16.msra.mxu0 0
    %389 = vmatprep.subr.bf16.mxu0 0
    %390 = vmatpush2.bf16.msra.mxu0 0
    %391 = vmatprep.mubr.bf16.mxu0 0
    %392 = vmatmul.mubr.bf16.gmra.mxu0 %v141
    %v393 = vpop.f32.mrf.mxu0
    %v394 = vadd.f32 %v182, %v393
    %v395 = vpop.f32.mrf.mxu0
    %v396 = vadd.f32 %v186, %v395
    %v397 = vpop.f32.mrf.mxu0
    %v398 = vadd.f32 %v182, %v397
    %v399 = vpop.f32.mrf.mxu0
    %v400 = vadd.f32 %v186, %v399
    %401 = vmatprep.mubr.bf16.mxu0 0
    %402 = vmatmul.mubr.bf16.gmra.mxu0 %v142
    %v403 = vpop.f32.mrf.mxu0
    %v404 = vadd.f32 %v182, %v403
    %v405 = vpop.f32.mrf.mxu0
    %v406 = vadd.f32 %v186, %v405
    %v407 = vpop.f32.mrf.mxu0
    %v408 = vadd.f32 %v182, %v407
    %v409 = vpop.f32.mrf.mxu0
    %v410 = vadd.f32 %v186, %v409
    %411 = vmatprep.mubr.bf16.mxu0 0
    %412 = vmatmul.mubr.bf16.gmra.mxu0 %v143
    %v413 = vpop.f32.mrf.mxu0
    %v414 = vadd.f32 %v182, %v413
    %v415 = vpop.f32.mrf.mxu0
    %v416 = vadd.f32 %v186, %v415
    %v417 = vpop.f32.mrf.mxu0
    %v418 = vadd.f32 %v182, %v417
    %v419 = vpop.f32.mrf.mxu0
    %v420 = vadd.f32 %v186, %v419
    %421 = vmatprep.mubr.bf16.mxu0 0
    %422 = vmatmul.mubr.bf16.gmra.mxu0 %v144
    %v423 = vpop.f32.mrf.mxu0
    %v424 = vadd.f32 %v182, %v423
    %v425 = vpop.f32.mrf.mxu0
    %v426 = vadd.f32 %v186, %v425
    %v427 = vpop.f32.mrf.mxu0
    %v428 = vadd.f32 %v182, %v427
    %v429 = vpop.f32.mrf.mxu0
    %v430 = vadd.f32 %v186, %v429
    %431 = vdwg.mxu0
    %432 = vmatprep.subr.bf16.mxu0 %v326
    %433 = vmatpush1.bf16.msra.mxu0 %v325
    %434 = vmatprep.subr.bf16.mxu0 %v322
    %435 = vmatpush1.bf16.msra.mxu0 %v321
    %436 = vmatprep.subr.bf16.mxu0 %v318
    %437 = vmatpush1.bf16.msra.mxu0 %v317
    %438 = vmatprep.subr.bf16.mxu0 %v314
    %439 = vmatpush1.bf16.msra.mxu0 %v313
    %440 = vmatprep.subr.bf16.mxu0 %v310
    %441 = vmatpush1.bf16.msra.mxu0 %v309
    %442 = vmatprep.subr.bf16.mxu0 %v306
    %443 = vmatpush1.bf16.msra.mxu0 %v305
    %444 = vmatprep.subr.bf16.mxu0 %v302
    %445 = vmatpush1.bf16.msra.mxu0 %v301
    %446 = vmatprep.subr.bf16.mxu0 %v298
    %447 = vmatpush1.bf16.msra.mxu0 %v297
    %448 = vmatprep.subr.bf16.mxu0 0
    %449 = vmatpush2.bf16.msra.mxu0 0
    %450 = vmatprep.subr.bf16.mxu0 0
    %451 = vmatpush2.bf16.msra.mxu0 0
    %452 = vmatprep.subr.bf16.mxu0 0
    %453 = vmatpush2.bf16.msra.mxu0 0
    %454 = vmatprep.subr.bf16.mxu0 0
    %455 = vmatpush2.bf16.msra.mxu0 0
    %456 = vmatprep.subr.bf16.mxu0 0
    %457 = vmatpush2.bf16.msra.mxu0 0
    %458 = vmatprep.subr.bf16.mxu0 0
    %459 = vmatpush2.bf16.msra.mxu0 0
    %460 = vmatprep.subr.bf16.mxu0 0
    %461 = vmatpush2.bf16.msra.mxu0 0
    %462 = vmatprep.subr.bf16.mxu0 0
    %463 = vmatpush2.bf16.msra.mxu0 0
    %464 = vmatprep.mubr.bf16.mxu0 0
    %465 = vmatmul.mubr.bf16.gmra.mxu0 %v141
    %v466 = vpop.f32.mrf.mxu0
    %v467 = vadd.f32 %v190, %v466
    %v468 = vpop.f32.mrf.mxu0
    %v469 = vadd.f32 %v194, %v468
    %v470 = vpop.f32.mrf.mxu0
    %v471 = vadd.f32 %v190, %v470
    %v472 = vpop.f32.mrf.mxu0
    %v473 = vadd.f32 %v194, %v472
    %474 = vmatprep.mubr.bf16.mxu0 0
    %475 = vmatmul.mubr.bf16.gmra.mxu0 %v142
    %v476 = vpop.f32.mrf.mxu0
    %v477 = vadd.f32 %v190, %v476
    %v478 = vpop.f32.mrf.mxu0
    %v479 = vadd.f32 %v194, %v478
    %v480 = vpop.f32.mrf.mxu0
    %v481 = vadd.f32 %v190, %v480
    %v482 = vpop.f32.mrf.mxu0
    %v483 = vadd.f32 %v194, %v482
    %484 = vmatprep.mubr.bf16.mxu0 0
    %485 = vmatmul.mubr.bf16.gmra.mxu0 %v143
    %v486 = vpop.f32.mrf.mxu0
    %v487 = vadd.f32 %v190, %v486
    %v488 = vpop.f32.mrf.mxu0
    %v489 = vadd.f32 %v194, %v488
    %v490 = vpop.f32.mrf.mxu0
    %v491 = vadd.f32 %v190, %v490
    %v492 = vpop.f32.mrf.mxu0
    %v493 = vadd.f32 %v194, %v492
    %494 = vmatprep.mubr.bf16.mxu0 0
    %495 = vmatmul.mubr.bf16.gmra.mxu0 %v144
    %v496 = vpop.f32.mrf.mxu0
    %v497 = vadd.f32 %v190, %v496
    %v498 = vpop.f32.mrf.mxu0
    %v499 = vadd.f32 %v194, %v498
    %v500 = vpop.f32.mrf.mxu0
    %v501 = vadd.f32 %v190, %v500
    %v502 = vpop.f32.mrf.mxu0
    %v503 = vadd.f32 %v194, %v502
    %504 = vdwg.mxu0
    %505 = vst [vmem:[#allocation2] sm:$0xff] %v394
    %506 = vst [vmem:[#allocation2 + $0x8] sm:$0xff] %v396
    %507 = vst [vmem:[#allocation2 + $0x10] sm:$0xff] %v467
    %508 = vst [vmem:[#allocation2 + $0x18] sm:$0xff] %v469
    %509 = vst [vmem:[#allocation2 + $0x20] sm:$0xff] %v398
    %510 = vst [vmem:[#allocation2 + $0x28] sm:$0xff] %v400
    %511 = vst [vmem:[#allocation2 + $0x30] sm:$0xff] %v471
    %512 = vst [vmem:[#allocation2 + $0x38] sm:$0xff] %v473
    %513 = vst [vmem:[#allocation2 + $0x40] sm:$0xff] %v404
    %514 = vst [vmem:[#allocation2 + $0x48] sm:$0xff] %v406
    %515 = vst [vmem:[#allocation2 + $0x50] sm:$0xff] %v477
    %516 = vst [vmem:[#allocation2 + $0x58] sm:$0xff] %v479
    %517 = vst [vmem:[#allocation2 + $0x60] sm:$0xff] %v408
    %518 = vst [vmem:[#allocation2 + $0x68] sm:$0xff] %v410
    %519 = vst [vmem:[#allocation2 + $0x70] sm:$0xff] %v481
    %520 = vst [vmem:[#allocation2 + $0x78] sm:$0xff] %v483
    %521 = vst [vmem:[#allocation2 + $0x80] sm:$0xff] %v414
    %522 = vst [vmem:[#allocation2 + $0x88] sm:$0xff] %v416
    %523 = vst [vmem:[#allocation2 + $0x90] sm:$0xff] %v487
    %524 = vst [vmem:[#allocation2 + $0x98] sm:$0xff] %v489
    %525 = vst [vmem:[#allocation2 + $0xa0] sm:$0xff] %v418
    %526 = vst [vmem:[#allocation2 + $0xa8] sm:$0xff] %v420
    %527 = vst [vmem:[#allocation2 + $0xb0] sm:$0xff] %v491
    %528 = vst [vmem:[#allocation2 + $0xb8] sm:$0xff] %v493
    %529 = vst [vmem:[#allocation2 + $0xc0] sm:$0xff] %v424
    %530 = vst [vmem:[#allocation2 + $0xc8] sm:$0xff] %v426
    %531 = vst [vmem:[#allocation2 + $0xd0] sm:$0xff] %v497
    %532 = vst [vmem:[#allocation2 + $0xd8] sm:$0xff] %v499
    %533 = vst [vmem:[#allocation2 + $0xe0] sm:$0xff] %v428
    %534 = vst [vmem:[#allocation2 + $0xe8] sm:$0xff] %v430
    %535 = vst [vmem:[#allocation2 + $0xf0] sm:$0xff] %v501
    %536 = vst [vmem:[#allocation2 + $0xf8] sm:$0xff] %v503
    %s537 = smul.u32 0, 4
    %s538 = smul.addr %s537, 8
    %s539 = scalar_lea.vmem [#allocation2], %s538
    %v540 = vld [vmem:[%s539] sm:$0xff]
    %v541 = vld [vmem:[%s539 + $0x8] sm:$0xff]
    %v542 = vld [vmem:[%s539 + $0x10] sm:$0xff]
    %v543 = vld [vmem:[%s539 + $0x18] sm:$0xff]
    %v544 = vld [vmem:[#allocation9] sm:$0xff]
    %v545 = vld [vmem:[#allocation9 + $0x8] sm:$0xff]
    %v546 = vld [vmem:[#allocation9 + $0x10] sm:$0xff]
    %v547 = vld [vmem:[#allocation9 + $0x18] sm:$0xff]
    %v548 = vld [vmem:[#allocation9 + $0x20] sm:$0xff]
    %v549 = vld [vmem:[#allocation9 + $0x28] sm:$0xff]
    %v550 = vld [vmem:[#allocation9 + $0x30] sm:$0xff]
    %v551 = vld [vmem:[#allocation9 + $0x38] sm:$0xff]
    %v552 = vld [vmem:[#allocation9 + $0x40] sm:$0xff]
    %v553 = vld [vmem:[#allocation9 + $0x48] sm:$0xff]
    %v554 = vld [vmem:[#allocation9 + $0x50] sm:$0xff]
    %v555 = vld [vmem:[#allocation9 + $0x58] sm:$0xff]
    %v556 = vld [vmem:[#allocation9 + $0x60] sm:$0xff]
    %v557 = vld [vmem:[#allocation9 + $0x68] sm:$0xff]
    %v558 = vld [vmem:[#allocation9 + $0x70] sm:$0xff]
    %v559 = vld [vmem:[#allocation9 + $0x78] sm:$0xff]
    %v560 = vld [vmem:[#allocation9 + $0x80] sm:$0xff]
    %v561 = vld [vmem:[#allocation9 + $0x88] sm:$0xff]
    %v562 = vld [vmem:[#allocation9 + $0x90] sm:$0xff]
    %v563 = vld [vmem:[#allocation9 + $0x98] sm:$0xff]
    %v564 = vld [vmem:[#allocation9 + $0xa0] sm:$0xff]
    %v565 = vld [vmem:[#allocation9 + $0xa8] sm:$0xff]
    %v566 = vld [vmem:[#allocation9 + $0xb0] sm:$0xff]
    %v567 = vld [vmem:[#allocation9 + $0xb8] sm:$0xff]
    %v568 = vld [vmem:[#allocation9 + $0xc0] sm:$0xff]
    %v569 = vld [vmem:[#allocation9 + $0xc8] sm:$0xff]
    %v570 = vld [vmem:[#allocation9 + $0xd0] sm:$0xff]
    %v571 = vld [vmem:[#allocation9 + $0xd8] sm:$0xff]
    %v572 = vld [vmem:[#allocation9 + $0xe0] sm:$0xff]
    %v573 = vld [vmem:[#allocation9 + $0xe8] sm:$0xff]
    %v574 = vld [vmem:[#allocation9 + $0xf0] sm:$0xff]
    %v575 = vld [vmem:[#allocation9 + $0xf8] sm:$0xff]
    %v608 = vunpack.c.l.b16 %v544
    %v609 = vunpack.c.h.b16 %v544
    %v610 = vunpack.c.l.b16 %v545
    %v611 = vunpack.c.h.b16 %v545
    %v612 = vunpack.c.l.b16 %v546
    %v613 = vunpack.c.h.b16 %v546
    %v614 = vunpack.c.l.b16 %v547
    %v615 = vunpack.c.h.b16 %v547
    %v616 = vunpack.c.l.b16 %v548
    %v617 = vunpack.c.h.b16 %v548
    %v618 = vunpack.c.l.b16 %v549
    %v619 = vunpack.c.h.b16 %v549
    %v620 = vunpack.c.l.b16 %v550
    %v621 = vunpack.c.h.b16 %v550
    %v622 = vunpack.c.l.b16 %v551
    %v623 = vunpack.c.h.b16 %v551
    %v624 = vunpack.c.l.b16 %v552
    %v625 = vunpack.c.h.b16 %v552
    %v626 = vunpack.c.l.b16 %v553
    %v627 = vunpack.c.h.b16 %v553
    %v628 = vunpack.c.l.b16 %v554
    %v629 = vunpack.c.h.b16 %v554
    %v630 = vunpack.c.l.b16 %v555
    %v631 = vunpack.c.h.b16 %v555
    %v632 = vunpack.c.l.b16 %v556
    %v633 = vunpack.c.h.b16 %v556
    %v634 = vunpack.c.l.b16 %v557
    %v635 = vunpack.c.h.b16 %v557
    %v636 = vunpack.c.l.b16 %v558
    %v637 = vunpack.c.h.b16 %v558
    %v638 = vunpack.c.l.b16 %v559
    %v639 = vunpack.c.h.b16 %v559
    %v640 = vunpack.c.l.b16 %v560
    %v641 = vunpack.c.h.b16 %v560
    %v642 = vunpack.c.l.b16 %v561
    %v643 = vunpack.c.h.b16 %v561
    %v644 = vunpack.c.l.b16 %v562
    %v645 = vunpack.c.h.b16 %v562
    %v646 = vunpack.c.l.b16 %v563
    %v647 = vunpack.c.h.b16 %v563
    %v648 = vunpack.c.l.b16 %v564
    %v649 = vunpack.c.h.b16 %v564
    %v650 = vunpack.c.l.b16 %v565
    %v651 = vunpack.c.h.b16 %v565
    %v652 = vunpack.c.l.b16 %v566
    %v653 = vunpack.c.h.b16 %v566
    %v654 = vunpack.c.l.b16 %v567
    %v655 = vunpack.c.h.b16 %v567
    %v656 = vunpack.c.l.b16 %v568
    %v657 = vunpack.c.h.b16 %v568
    %v658 = vunpack.c.l.b16 %v569
    %v659 = vunpack.c.h.b16 %v569
    %v660 = vunpack.c.l.b16 %v570
    %v661 = vunpack.c.h.b16 %v570
    %v662 = vunpack.c.l.b16 %v571
    %v663 = vunpack.c.h.b16 %v571
    %v664 = vunpack.c.l.b16 %v572
    %v665 = vunpack.c.h.b16 %v572
    %v666 = vunpack.c.l.b16 %v573
    %v667 = vunpack.c.h.b16 %v573
    %v668 = vunpack.c.l.b16 %v574
    %v669 = vunpack.c.h.b16 %v574
    %v670 = vunpack.c.l.b16 %v575
    %v671 = vunpack.c.h.b16 %v575
    %v672 = vpack.c.b16 %v612, %v608
    %v673 = vpack.c.b16 %v613, %v609
    %v674 = vpack.c.b16 %v614, %v610
    %v675 = vpack.c.b16 %v615, %v611
    %v676 = vpack.c.b16 %v620, %v616
    %v677 = vpack.c.b16 %v621, %v617
    %v678 = vpack.c.b16 %v622, %v618
    %v679 = vpack.c.b16 %v623, %v619
    %v680 = vpack.c.b16 %v628, %v624
    %v681 = vpack.c.b16 %v629, %v625
    %v682 = vpack.c.b16 %v630, %v626
    %v683 = vpack.c.b16 %v631, %v627
    %v684 = vpack.c.b16 %v636, %v632
    %v685 = vpack.c.b16 %v637, %v633
    %v686 = vpack.c.b16 %v638, %v634
    %v687 = vpack.c.b16 %v639, %v635
    %v688 = vpack.c.b16 %v644, %v640
    %v689 = vpack.c.b16 %v645, %v641
    %v690 = vpack.c.b16 %v646, %v642
    %v691 = vpack.c.b16 %v647, %v643
    %v692 = vpack.c.b16 %v652, %v648
    %v693 = vpack.c.b16 %v653, %v649
    %v694 = vpack.c.b16 %v654, %v650
    %v695 = vpack.c.b16 %v655, %v651
    %v696 = vpack.c.b16 %v660, %v656
    %v697 = vpack.c.b16 %v661, %v657
    %v698 = vpack.c.b16 %v662, %v658
    %v699 = vpack.c.b16 %v663, %v659
    %v700 = vpack.c.b16 %v668, %v664
    %v701 = vpack.c.b16 %v669, %v665
    %v702 = vpack.c.b16 %v670, %v666
    %v703 = vpack.c.b16 %v671, %v667
    %736 = vmatprep.subr.bf16.mxu0 %v701
    %737 = vmatpush1.bf16.msra.mxu0 %v700
    %738 = vmatprep.subr.bf16.mxu0 %v697
    %739 = vmatpush1.bf16.msra.mxu0 %v696
    %740 = vmatprep.subr.bf16.mxu0 %v693
    %741 = vmatpush1.bf16.msra.mxu0 %v692
    %742 = vmatprep.subr.bf16.mxu0 %v689
    %743 = vmatpush1.bf16.msra.mxu0 %v688
    %744 = vmatprep.subr.bf16.mxu0 %v685
    %745 = vmatpush1.bf16.msra.mxu0 %v684
    %746 = vmatprep.subr.bf16.mxu0 %v681
    %747 = vmatpush1.bf16.msra.mxu0 %v680
    %748 = vmatprep.subr.bf16.mxu0 %v677
    %749 = vmatpush1.bf16.msra.mxu0 %v676
    %750 = vmatprep.subr.bf16.mxu0 %v673
    %751 = vmatpush1.bf16.msra.mxu0 %v672
    %752 = vmatprep.subr.bf16.mxu0 0
    %753 = vmatpush2.bf16.msra.mxu0 0
    %754 = vmatprep.subr.bf16.mxu0 0
    %755 = vmatpush2.bf16.msra.mxu0 0
    %756 = vmatprep.subr.bf16.mxu0 0
    %757 = vmatpush2.bf16.msra.mxu0 0
    %758 = vmatprep.subr.bf16.mxu0 0
    %759 = vmatpush2.bf16.msra.mxu0 0
    %760 = vmatprep.subr.bf16.mxu0 0
    %761 = vmatpush2.bf16.msra.mxu0 0
    %762 = vmatprep.subr.bf16.mxu0 0
    %763 = vmatpush2.bf16.msra.mxu0 0
    %764 = vmatprep.subr.bf16.mxu0 0
    %765 = vmatpush2.bf16.msra.mxu0 0
    %766 = vmatprep.subr.bf16.mxu0 0
    %767 = vmatpush2.bf16.msra.mxu0 0
    %768 = vmatprep.mubr.bf16.mxu0 0
    %769 = vmatmul.mubr.bf16.gmra.mxu0 0
    %v770 = vpop.f32.mrf.mxu0
    %v771 = vadd.f32 0.0, %v770
    %v772 = vpop.f32.mrf.mxu0
    %v773 = vadd.f32 0.0, %v772
    %v774 = vpop.f32.mrf.mxu0
    %v775 = vpop.f32.mrf.mxu0
    %776 = vdwg.mxu0
    %777 = vmatprep.subr.bf16.mxu0 %v703
    %778 = vmatpush1.bf16.msra.mxu0 %v702
    %779 = vmatprep.subr.bf16.mxu0 %v699
    %780 = vmatpush1.bf16.msra.mxu0 %v698
    %781 = vmatprep.subr.bf16.mxu0 %v695
    %782 = vmatpush1.bf16.msra.mxu0 %v694
    %783 = vmatprep.subr.bf16.mxu0 %v691
    %784 = vmatpush1.bf16.msra.mxu0 %v690
    %785 = vmatprep.subr.bf16.mxu0 %v687
    %786 = vmatpush1.bf16.msra.mxu0 %v686
    %787 = vmatprep.subr.bf16.mxu0 %v683
    %788 = vmatpush1.bf16.msra.mxu0 %v682
    %789 = vmatprep.subr.bf16.mxu0 %v679
    %790 = vmatpush1.bf16.msra.mxu0 %v678
    %791 = vmatprep.subr.bf16.mxu0 %v675
    %792 = vmatpush1.bf16.msra.mxu0 %v674
    %793 = vmatprep.subr.bf16.mxu0 0
    %794 = vmatpush2.bf16.msra.mxu0 0
    %795 = vmatprep.subr.bf16.mxu0 0
    %796 = vmatpush2.bf16.msra.mxu0 0
    %797 = vmatprep.subr.bf16.mxu0 0
    %798 = vmatpush2.bf16.msra.mxu0 0
    %799 = vmatprep.subr.bf16.mxu0 0
    %800 = vmatpush2.bf16.msra.mxu0 0
    %801 = vmatprep.subr.bf16.mxu0 0
    %802 = vmatpush2.bf16.msra.mxu0 0
    %803 = vmatprep.subr.bf16.mxu0 0
    %804 = vmatpush2.bf16.msra.mxu0 0
    %805 = vmatprep.subr.bf16.mxu0 0
    %806 = vmatpush2.bf16.msra.mxu0 0
    %807 = vmatprep.subr.bf16.mxu0 0
    %808 = vmatpush2.bf16.msra.mxu0 0
    %809 = vmatprep.mubr.bf16.mxu0 0
    %810 = vmatmul.mubr.bf16.gmra.mxu0 0
    %v811 = vpop.f32.mrf.mxu0
    %v812 = vadd.f32 0.0, %v811
    %v813 = vpop.f32.mrf.mxu0
    %v814 = vadd.f32 0.0, %v813
    %v815 = vpop.f32.mrf.mxu0
    %v816 = vpop.f32.mrf.mxu0
    %817 = vdwg.mxu0
    %v818 = vadd.f32 %v540, %v771
    %v819 = vadd.f32 %v541, %v773
    %v820 = vadd.f32 %v542, %v812
    %v821 = vadd.f32 %v543, %v814
    %v822 = vxor.u32 %v818, 2147483648
    %v823 = vmul.f32 %v822, 1.442695
    %v824 = vpow.pop %v823
    %v825 = vadd.f32 %v824, 1.0
    %v826 = vrcp.pop %v825
    %v827 = vmul.f32 1.0, %v826
    %v828 = vxor.u32 %v819, 2147483648
    %v829 = vmul.f32 %v828, 1.442695
    %v830 = vpow.pop %v829
    %v831 = vadd.f32 %v830, 1.0
    %v832 = vrcp.pop %v831
    %v833 = vmul.f32 1.0, %v832
    %v834 = vtanh.pop %v820
    %v835 = vxor.u32 %v821, 2147483648
    %v836 = vmul.f32 %v835, 1.442695
    %v837 = vpow.pop %v836
    %v838 = vadd.f32 %v837, 1.0
    %v839 = vrcp.pop %v838
    %v840 = vmul.f32 1.0, %v839
    %v841 = vmul.f32 %v833, 0.0
    %v842 = vmul.f32 %v827, %v834
    %v843 = vadd.f32 %v841, %v842
    %v844 = vtanh.pop %v843
    %v845 = vmul.f32 %v840, %v844
    %846 = vst [vmem:[#allocation3] sm:$0xff] %v845
    %s847 = smul.u32 1, 4
    %s848 = smul.addr %s847, 8
    %s849 = scalar_lea.vmem [#allocation2], %s848
    %v850 = vld [vmem:[%s849] sm:$0xff]
    %v851 = vld [vmem:[%s849 + $0x8] sm:$0xff]
    %v852 = vld [vmem:[%s849 + $0x10] sm:$0xff]
    %v853 = vld [vmem:[%s849 + $0x18] sm:$0xff]
    %v854 = vpack.c.bf16 %v845, %v845
    %v855 = vld [vmem:[#allocation9] sm:$0xff]
    %v856 = vld [vmem:[#allocation9 + $0x8] sm:$0xff]
    %v857 = vld [vmem:[#allocation9 + $0x10] sm:$0xff]
    %v858 = vld [vmem:[#allocation9 + $0x18] sm:$0xff]
    %v859 = vld [vmem:[#allocation9 + $0x20] sm:$0xff]
    %v860 = vld [vmem:[#allocation9 + $0x28] sm:$0xff]
    %v861 = vld [vmem:[#allocation9 + $0x30] sm:$0xff]
    %v862 = vld [vmem:[#allocation9 + $0x38] sm:$0xff]
    %v863 = vld [vmem:[#allocation9 + $0x40] sm:$0xff]
    %v864 = vld [vmem:[#allocation9 + $0x48] sm:$0xff]
    %v865 = vld [vmem:[#allocation9 + $0x50] sm:$0xff]
    %v866 = vld [vmem:[#allocation9 + $0x58] sm:$0xff]
    %v867 = vld [vmem:[#allocation9 + $0x60] sm:$0xff]
    %v868 = vld [vmem:[#allocation9 + $0x68] sm:$0xff]
    %v869 = vld [vmem:[#allocation9 + $0x70] sm:$0xff]
    %v870 = vld [vmem:[#allocation9 + $0x78] sm:$0xff]
    %v871 = vld [vmem:[#allocation9 + $0x80] sm:$0xff]
    %v872 = vld [vmem:[#allocation9 + $0x88] sm:$0xff]
    %v873 = vld [vmem:[#allocation9 + $0x90] sm:$0xff]
    %v874 = vld [vmem:[#allocation9 + $0x98] sm:$0xff]
    %v875 = vld [vmem:[#allocation9 + $0xa0] sm:$0xff]
    %v876 = vld [vmem:[#allocation9 + $0xa8] sm:$0xff]
    %v877 = vld [vmem:[#allocation9 + $0xb0] sm:$0xff]
    %v878 = vld [vmem:[#allocation9 + $0xb8] sm:$0xff]
    %v879 = vld [vmem:[#allocation9 + $0xc0] sm:$0xff]
    %v880 = vld [vmem:[#allocation9 + $0xc8] sm:$0xff]
    %v881 = vld [vmem:[#allocation9 + $0xd0] sm:$0xff]
    %v882 = vld [vmem:[#allocation9 + $0xd8] sm:$0xff]
    %v883 = vld [vmem:[#allocation9 + $0xe0] sm:$0xff]
    %v884 = vld [vmem:[#allocation9 + $0xe8] sm:$0xff]
    %v885 = vld [vmem:[#allocation9 + $0xf0] sm:$0xff]
    %v886 = vld [vmem:[#allocation9 + $0xf8] sm:$0xff]
    %v919 = vunpack.c.l.b16 %v855
    %v920 = vunpack.c.h.b16 %v855
    %v921 = vunpack.c.l.b16 %v856
    %v922 = vunpack.c.h.b16 %v856
    %v923 = vunpack.c.l.b16 %v857
    %v924 = vunpack.c.h.b16 %v857
    %v925 = vunpack.c.l.b16 %v858
    %v926 = vunpack.c.h.b16 %v858
    %v927 = vunpack.c.l.b16 %v859
    %v928 = vunpack.c.h.b16 %v859
    %v929 = vunpack.c.l.b16 %v860
    %v930 = vunpack.c.h.b16 %v860
    %v931 = vunpack.c.l.b16 %v861
    %v932 = vunpack.c.h.b16 %v861
    %v933 = vunpack.c.l.b16 %v862
    %v934 = vunpack.c.h.b16 %v862
    %v935 = vunpack.c.l.b16 %v863
    %v936 = vunpack.c.h.b16 %v863
    %v937 = vunpack.c.l.b16 %v864
    %v938 = vunpack.c.h.b16 %v864
    %v939 = vunpack.c.l.b16 %v865
    %v940 = vunpack.c.h.b16 %v865
    %v941 = vunpack.c.l.b16 %v866
    %v942 = vunpack.c.h.b16 %v866
    %v943 = vunpack.c.l.b16 %v867
    %v944 = vunpack.c.h.b16 %v867
    %v945 = vunpack.c.l.b16 %v868
    %v946 = vunpack.c.h.b16 %v868
    %v947 = vunpack.c.l.b16 %v869
    %v948 = vunpack.c.h.b16 %v869
    %v949 = vunpack.c.l.b16 %v870
    %v950 = vunpack.c.h.b16 %v870
    %v951 = vunpack.c.l.b16 %v871
    %v952 = vunpack.c.h.b16 %v871
    %v953 = vunpack.c.l.b16 %v872
    %v954 = vunpack.c.h.b16 %v872
    %v955 = vunpack.c.l.b16 %v873
    %v956 = vunpack.c.h.b16 %v873
    %v957 = vunpack.c.l.b16 %v874
    %v958 = vunpack.c.h.b16 %v874
    %v959 = vunpack.c.l.b16 %v875
    %v960 = vunpack.c.h.b16 %v875
    %v961 = vunpack.c.l.b16 %v876
    %v962 = vunpack.c.h.b16 %v876
    %v963 = vunpack.c.l.b16 %v877
    %v964 = vunpack.c.h.b16 %v877
    %v965 = vunpack.c.l.b16 %v878
    %v966 = vunpack.c.h.b16 %v878
    %v967 = vunpack.c.l.b16 %v879
    %v968 = vunpack.c.h.b16 %v879
    %v969 = vunpack.c.l.b16 %v880
    %v970 = vunpack.c.h.b16 %v880
    %v971 = vunpack.c.l.b16 %v881
    %v972 = vunpack.c.h.b16 %v881
    %v973 = vunpack.c.l.b16 %v882
    %v974 = vunpack.c.h.b16 %v882
    %v975 = vunpack.c.l.b16 %v883
    %v976 = vunpack.c.h.b16 %v883
    %v977 = vunpack.c.l.b16 %v884
    %v978 = vunpack.c.h.b16 %v884
    %v979 = vunpack.c.l.b16 %v885
    %v980 = vunpack.c.h.b16 %v885
    %v981 = vunpack.c.l.b16 %v886
    %v982 = vunpack.c.h.b16 %v886
    %v983 = vpack.c.b16 %v923, %v919
    %v984 = vpack.c.b16 %v924, %v920
    %v985 = vpack.c.b16 %v925, %v921
    %v986 = vpack.c.b16 %v926, %v922
    %v987 = vpack.c.b16 %v931, %v927
    %v988 = vpack.c.b16 %v932, %v928
    %v989 = vpack.c.b16 %v933, %v929
    %v990 = vpack.c.b16 %v934, %v930
    %v991 = vpack.c.b16 %v939, %v935
    %v992 = vpack.c.b16 %v940, %v936
    %v993 = vpack.c.b16 %v941, %v937
    %v994 = vpack.c.b16 %v942, %v938
    %v995 = vpack.c.b16 %v947, %v943
    %v996 = vpack.c.b16 %v948, %v944
    %v997 = vpack.c.b16 %v949, %v945
    %v998 = vpack.c.b16 %v950, %v946
    %v999 = vpack.c.b16 %v955, %v951
    %v1000 = vpack.c.b16 %v956, %v952
    %v1001 = vpack.c.b16 %v957, %v953
    %v1002 = vpack.c.b16 %v958, %v954
    %v1003 = vpack.c.b16 %v963, %v959
    %v1004 = vpack.c.b16 %v964, %v960
    %v1005 = vpack.c.b16 %v965, %v961
    %v1006 = vpack.c.b16 %v966, %v962
    %v1007 = vpack.c.b16 %v971, %v967
    %v1008 = vpack.c.b16 %v972, %v968
    %v1009 = vpack.c.b16 %v973, %v969
    %v1010 = vpack.c.b16 %v974, %v970
    %v1011 = vpack.c.b16 %v979, %v975
    %v1012 = vpack.c.b16 %v980, %v976
    %v1013 = vpack.c.b16 %v981, %v977
    %v1014 = vpack.c.b16 %v982, %v978
    %1047 = vmatprep.subr.bf16.mxu0 %v1012
    %1048 = vmatpush1.bf16.msra.mxu0 %v1011
    %1049 = vmatprep.subr.bf16.mxu0 %v1008
    %1050 = vmatpush1.bf16.msra.mxu0 %v1007
    %1051 = vmatprep.subr.bf16.mxu0 %v1004
    %1052 = vmatpush1.bf16.msra.mxu0 %v1003
    %1053 = vmatprep.subr.bf16.mxu0 %v1000
    %1054 = vmatpush1.bf16.msra.mxu0 %v999
    %1055 = vmatprep.subr.bf16.mxu0 %v996
    %1056 = vmatpush1.bf16.msra.mxu0 %v995
    %1057 = vmatprep.subr.bf16.mxu0 %v992
    %1058 = vmatpush1.bf16.msra.mxu0 %v991
    %1059 = vmatprep.subr.bf16.mxu0 %v988
    %1060 = vmatpush1.bf16.msra.mxu0 %v987
    %1061 = vmatprep.subr.bf16.mxu0 %v984
    %1062 = vmatpush1.bf16.msra.mxu0 %v983
    %1063 = vmatprep.subr.bf16.mxu0 0
    %1064 = vmatpush2.bf16.msra.mxu0 0
    %1065 = vmatprep.subr.bf16.mxu0 0
    %1066 = vmatpush2.bf16.msra.mxu0 0
    %1067 = vmatprep.subr.bf16.mxu0 0
    %1068 = vmatpush2.bf16.msra.mxu0 0
    %1069 = vmatprep.subr.bf16.mxu0 0
    %1070 = vmatpush2.bf16.msra.mxu0 0
    %1071 = vmatprep.subr.bf16.mxu0 0
    %1072 = vmatpush2.bf16.msra.mxu0 0
    %1073 = vmatprep.subr.bf16.mxu0 0
    %1074 = vmatpush2.bf16.msra.mxu0 0
    %1075 = vmatprep.subr.bf16.mxu0 0
    %1076 = vmatpush2.bf16.msra.mxu0 0
    %1077 = vmatprep.subr.bf16.mxu0 0
    %1078 = vmatpush2.bf16.msra.mxu0 0
    %1079 = vmatprep.mubr.bf16.mxu0 0
    %1080 = vmatmul.mubr.bf16.gmra.mxu0 %v854
    %v1081 = vpop.f32.mrf.mxu0
    %v1082 = vadd.f32 0.0, %v1081
    %v1083 = vpop.f32.mrf.mxu0
    %v1084 = vadd.f32 0.0, %v1083
    %v1085 = vpop.f32.mrf.mxu0
    %v1086 = vpop.f32.mrf.mxu0
    %1087 = vdwg.mxu0
    %1088 = vmatprep.subr.bf16.mxu0 %v1014
    %1089 = vmatpush1.bf16.msra.mxu0 %v1013
    %1090 = vmatprep.subr.bf16.mxu0 %v1010
    %1091 = vmatpush1.bf16.msra.mxu0 %v1009
    %1092 = vmatprep.subr.bf16.mxu0 %v1006
    %1093 = vmatpush1.bf16.msra.mxu0 %v1005
    %1094 = vmatprep.subr.bf16.mxu0 %v1002
    %1095 = vmatpush1.bf16.msra.mxu0 %v1001
    %1096 = vmatprep.subr.bf16.mxu0 %v998
    %1097 = vmatpush1.bf16.msra.mxu0 %v997
    %1098 = vmatprep.subr.bf16.mxu0 %v994
    %1099 = vmatpush1.bf16.msra.mxu0 %v993
    %1100 = vmatprep.subr.bf16.mxu0 %v990
    %1101 = vmatpush1.bf16.msra.mxu0 %v989
    %1102 = vmatprep.subr.bf16.mxu0 %v986
    %1103 = vmatpush1.bf16.msra.mxu0 %v985
    %1104 = vmatprep.subr.bf16.mxu0 0
    %1105 = vmatpush2.bf16.msra.mxu0 0
    %1106 = vmatprep.subr.bf16.mxu0 0
    %1107 = vmatpush2.bf16.msra.mxu0 0
    %1108 = vmatprep.subr.bf16.mxu0 0
    %1109 = vmatpush2.bf16.msra.mxu0 0
    %1110 = vmatprep.subr.bf16.mxu0 0
    %1111 = vmatpush2.bf16.msra.mxu0 0
    %1112 = vmatprep.subr.bf16.mxu0 0
    %1113 = vmatpush2.bf16.msra.mxu0 0
    %1114 = vmatprep.subr.bf16.mxu0 0
    %1115 = vmatpush2.bf16.msra.mxu0 0
    %1116 = vmatprep.subr.bf16.mxu0 0
    %1117 = vmatpush2.bf16.msra.mxu0 0
    %1118 = vmatprep.subr.bf16.mxu0 0
    %1119 = vmatpush2.bf16.msra.mxu0 0
    %1120 = vmatprep.mubr.bf16.mxu0 0
    %1121 = vmatmul.mubr.bf16.gmra.mxu0 %v854
    %v1122 = vpop.f32.mrf.mxu0
    %v1123 = vadd.f32 0.0, %v1122
    %v1124 = vpop.f32.mrf.mxu0
    %v1125 = vadd.f32 0.0, %v1124
    %v1126 = vpop.f32.mrf.mxu0
    %v1127 = vpop.f32.mrf.mxu0
    %1128 = vdwg.mxu0
    %v1129 = vadd.f32 %v850, %v1082
    %v1130 = vadd.f32 %v851, %v1084
    %v1131 = vadd.f32 %v852, %v1123
    %v1132 = vadd.f32 %v853, %v1125
    %v1133 = vxor.u32 %v1129, 2147483648
    %v1134 = vmul.f32 %v1133, 1.442695
    %v1135 = vpow.pop %v1134
    %v1136 = vadd.f32 %v1135, 1.0
    %v1137 = vrcp.pop %v1136
    %v1138 = vmul.f32 1.0, %v1137
    %v1139 = vxor.u32 %v1130, 2147483648
    %v1140 = vmul.f32 %v1139, 1.442695
    %v1141 = vpow.pop %v1140
    %v1142 = vadd.f32 %v1141, 1.0
    %v1143 = vrcp.pop %v1142
    %v1144 = vmul.f32 1.0, %v1143
    %v1145 = vtanh.pop %v1131
    %v1146 = vxor.u32 %v1132, 2147483648
    %v1147 = vmul.f32 %v1146, 1.442695
    %v1148 = vpow.pop %v1147
    %v1149 = vadd.f32 %v1148, 1.0
    %v1150 = vrcp.pop %v1149
    %v1151 = vmul.f32 1.0, %v1150
    %v1152 = vmul.f32 %v1144, %v843
    %v1153 = vmul.f32 %v1138, %v1145
    %v1154 = vadd.f32 %v1152, %v1153
    %v1155 = vtanh.pop %v1154
    %v1156 = vmul.f32 %v1151, %v1155
    %s1157 = scalar_lea.vmem [#allocation3], 8
    %1158 = vst [vmem:[%s1157] sm:$0xff] %v1156
    %s1159 = smul.u32 2, 4
    %s1160 = smul.addr %s1159, 8
    %s1161 = scalar_lea.vmem [#allocation2], %s1160
    %v1162 = vld [vmem:[%s1161] sm:$0xff]
    %v1163 = vld [vmem:[%s1161 + $0x8] sm:$0xff]
    %v1164 = vld [vmem:[%s1161 + $0x10] sm:$0xff]
    %v1165 = vld [vmem:[%s1161 + $0x18] sm:$0xff]
    %v1166 = vpack.c.bf16 %v1156, %v1156
    %v1167 = vld [vmem:[#allocation9] sm:$0xff]
    %v1168 = vld [vmem:[#allocation9 + $0x8] sm:$0xff]
    %v1169 = vld [vmem:[#allocation9 + $0x10] sm:$0xff]
    %v1170 = vld [vmem:[#allocation9 + $0x18] sm:$0xff]
    %v1171 = vld [vmem:[#allocation9 + $0x20] sm:$0xff]
    %v1172 = vld [vmem:[#allocation9 + $0x28] sm:$0xff]
    %v1173 = vld [vmem:[#allocation9 + $0x30] sm:$0xff]
    %v1174 = vld [vmem:[#allocation9 + $0x38] sm:$0xff]
    %v1175 = vld [vmem:[#allocation9 + $0x40] sm:$0xff]
    %v1176 = vld [vmem:[#allocation9 + $0x48] sm:$0xff]
    %v1177 = vld [vmem:[#allocation9 + $0x50] sm:$0xff]
    %v1178 = vld [vmem:[#allocation9 + $0x58] sm:$0xff]
    %v1179 = vld [vmem:[#allocation9 + $0x60] sm:$0xff]
    %v1180 = vld [vmem:[#allocation9 + $0x68] sm:$0xff]
    %v1181 = vld [vmem:[#allocation9 + $0x70] sm:$0xff]
    %v1182 = vld [vmem:[#allocation9 + $0x78] sm:$0xff]
    %v1183 = vld [vmem:[#allocation9 + $0x80] sm:$0xff]
    %v1184 = vld [vmem:[#allocation9 + $0x88] sm:$0xff]
    %v1185 = vld [vmem:[#allocation9 + $0x90] sm:$0xff]
    %v1186 = vld [vmem:[#allocation9 + $0x98] sm:$0xff]
    %v1187 = vld [vmem:[#allocation9 + $0xa0] sm:$0xff]
    %v1188 = vld [vmem:[#allocation9 + $0xa8] sm:$0xff]
    %v1189 = vld [vmem:[#allocation9 + $0xb0] sm:$0xff]
    %v1190 = vld [vmem:[#allocation9 + $0xb8] sm:$0xff]
    %v1191 = vld [vmem:[#allocation9 + $0xc0] sm:$0xff]
    %v1192 = vld [vmem:[#allocation9 + $0xc8] sm:$0xff]
    %v1193 = vld [vmem:[#allocation9 + $0xd0] sm:$0xff]
    %v1194 = vld [vmem:[#allocation9 + $0xd8] sm:$0xff]
    %v1195 = vld [vmem:[#allocation9 + $0xe0] sm:$0xff]
    %v1196 = vld [vmem:[#allocation9 + $0xe8] sm:$0xff]
    %v1197 = vld [vmem:[#allocation9 + $0xf0] sm:$0xff]
    %v1198 = vld [vmem:[#allocation9 + $0xf8] sm:$0xff]
    %v1231 = vunpack.c.l.b16 %v1167
    %v1232 = vunpack.c.h.b16 %v1167
    %v1233 = vunpack.c.l.b16 %v1168
    %v1234 = vunpack.c.h.b16 %v1168
    %v1235 = vunpack.c.l.b16 %v1169
    %v1236 = vunpack.c.h.b16 %v1169
    %v1237 = vunpack.c.l.b16 %v1170
    %v1238 = vunpack.c.h.b16 %v1170
    %v1239 = vunpack.c.l.b16 %v1171
    %v1240 = vunpack.c.h.b16 %v1171
    %v1241 = vunpack.c.l.b16 %v1172
    %v1242 = vunpack.c.h.b16 %v1172
    %v1243 = vunpack.c.l.b16 %v1173
    %v1244 = vunpack.c.h.b16 %v1173
    %v1245 = vunpack.c.l.b16 %v1174
    %v1246 = vunpack.c.h.b16 %v1174
    %v1247 = vunpack.c.l.b16 %v1175
    %v1248 = vunpack.c.h.b16 %v1175
    %v1249 = vunpack.c.l.b16 %v1176
    %v1250 = vunpack.c.h.b16 %v1176
    %v1251 = vunpack.c.l.b16 %v1177
    %v1252 = vunpack.c.h.b16 %v1177
    %v1253 = vunpack.c.l.b16 %v1178
    %v1254 = vunpack.c.h.b16 %v1178
    %v1255 = vunpack.c.l.b16 %v1179
    %v1256 = vunpack.c.h.b16 %v1179
    %v1257 = vunpack.c.l.b16 %v1180
    %v1258 = vunpack.c.h.b16 %v1180
    %v1259 = vunpack.c.l.b16 %v1181
    %v1260 = vunpack.c.h.b16 %v1181
    %v1261 = vunpack.c.l.b16 %v1182
    %v1262 = vunpack.c.h.b16 %v1182
    %v1263 = vunpack.c.l.b16 %v1183
    %v1264 = vunpack.c.h.b16 %v1183
    %v1265 = vunpack.c.l.b16 %v1184
    %v1266 = vunpack.c.h.b16 %v1184
    %v1267 = vunpack.c.l.b16 %v1185
    %v1268 = vunpack.c.h.b16 %v1185
    %v1269 = vunpack.c.l.b16 %v1186
    %v1270 = vunpack.c.h.b16 %v1186
    %v1271 = vunpack.c.l.b16 %v1187
    %v1272 = vunpack.c.h.b16 %v1187
    %v1273 = vunpack.c.l.b16 %v1188
    %v1274 = vunpack.c.h.b16 %v1188
    %v1275 = vunpack.c.l.b16 %v1189
    %v1276 = vunpack.c.h.b16 %v1189
    %v1277 = vunpack.c.l.b16 %v1190
    %v1278 = vunpack.c.h.b16 %v1190
    %v1279 = vunpack.c.l.b16 %v1191
    %v1280 = vunpack.c.h.b16 %v1191
    %v1281 = vunpack.c.l.b16 %v1192
    %v1282 = vunpack.c.h.b16 %v1192
    %v1283 = vunpack.c.l.b16 %v1193
    %v1284 = vunpack.c.h.b16 %v1193
    %v1285 = vunpack.c.l.b16 %v1194
    %v1286 = vunpack.c.h.b16 %v1194
    %v1287 = vunpack.c.l.b16 %v1195
    %v1288 = vunpack.c.h.b16 %v1195
    %v1289 = vunpack.c.l.b16 %v1196
    %v1290 = vunpack.c.h.b16 %v1196
    %v1291 = vunpack.c.l.b16 %v1197
    %v1292 = vunpack.c.h.b16 %v1197
    %v1293 = vunpack.c.l.b16 %v1198
    %v1294 = vunpack.c.h.b16 %v1198
    %v1295 = vpack.c.b16 %v1235, %v1231
    %v1296 = vpack.c.b16 %v1236, %v1232
    %v1297 = vpack.c.b16 %v1237, %v1233
    %v1298 = vpack.c.b16 %v1238, %v1234
    %v1299 = vpack.c.b16 %v1243, %v1239
    %v1300 = vpack.c.b16 %v1244, %v1240
    %v1301 = vpack.c.b16 %v1245, %v1241
    %v1302 = vpack.c.b16 %v1246, %v1242
    %v1303 = vpack.c.b16 %v1251, %v1247
    %v1304 = vpack.c.b16 %v1252, %v1248
    %v1305 = vpack.c.b16 %v1253, %v1249
    %v1306 = vpack.c.b16 %v1254, %v1250
    %v1307 = vpack.c.b16 %v1259, %v1255
    %v1308 = vpack.c.b16 %v1260, %v1256
    %v1309 = vpack.c.b16 %v1261, %v1257
    %v1310 = vpack.c.b16 %v1262, %v1258
    %v1311 = vpack.c.b16 %v1267, %v1263
    %v1312 = vpack.c.b16 %v1268, %v1264
    %v1313 = vpack.c.b16 %v1269, %v1265
    %v1314 = vpack.c.b16 %v1270, %v1266
    %v1315 = vpack.c.b16 %v1275, %v1271
    %v1316 = vpack.c.b16 %v1276, %v1272
    %v1317 = vpack.c.b16 %v1277, %v1273
    %v1318 = vpack.c.b16 %v1278, %v1274
    %v1319 = vpack.c.b16 %v1283, %v1279
    %v1320 = vpack.c.b16 %v1284, %v1280
    %v1321 = vpack.c.b16 %v1285, %v1281
    %v1322 = vpack.c.b16 %v1286, %v1282
    %v1323 = vpack.c.b16 %v1291, %v1287
    %v1324 = vpack.c.b16 %v1292, %v1288
    %v1325 = vpack.c.b16 %v1293, %v1289
    %v1326 = vpack.c.b16 %v1294, %v1290
    %1359 = vmatprep.subr.bf16.mxu0 %v1324
    %1360 = vmatpush1.bf16.msra.mxu0 %v1323
    %1361 = vmatprep.subr.bf16.mxu0 %v1320
    %1362 = vmatpush1.bf16.msra.mxu0 %v1319
    %1363 = vmatprep.subr.bf16.mxu0 %v1316
    %1364 = vmatpush1.bf16.msra.mxu0 %v1315
    %1365 = vmatprep.subr.bf16.mxu0 %v1312
    %1366 = vmatpush1.bf16.msra.mxu0 %v1311
    %1367 = vmatprep.subr.bf16.mxu0 %v1308
    %1368 = vmatpush1.bf16.msra.mxu0 %v1307
    %1369 = vmatprep.subr.bf16.mxu0 %v1304
    %1370 = vmatpush1.bf16.msra.mxu0 %v1303
    %1371 = vmatprep.subr.bf16.mxu0 %v1300
    %1372 = vmatpush1.bf16.msra.mxu0 %v1299
    %1373 = vmatprep.subr.bf16.mxu0 %v1296
    %1374 = vmatpush1.bf16.msra.mxu0 %v1295
    %1375 = vmatprep.subr.bf16.mxu0 0
    %1376 = vmatpush2.bf16.msra.mxu0 0
    %1377 = vmatprep.subr.bf16.mxu0 0
    %1378 = vmatpush2.bf16.msra.mxu0 0
    %1379 = vmatprep.subr.bf16.mxu0 0
    %1380 = vmatpush2.bf16.msra.mxu0 0
    %1381 = vmatprep.subr.bf16.mxu0 0
    %1382 = vmatpush2.bf16.msra.mxu0 0
    %1383 = vmatprep.subr.bf16.mxu0 0
    %1384 = vmatpush2.bf16.msra.mxu0 0
    %1385 = vmatprep.subr.bf16.mxu0 0
    %1386 = vmatpush2.bf16.msra.mxu0 0
    %1387 = vmatprep.subr.bf16.mxu0 0
    %1388 = vmatpush2.bf16.msra.mxu0 0
    %1389 = vmatprep.subr.bf16.mxu0 0
    %1390 = vmatpush2.bf16.msra.mxu0 0
    %1391 = vmatprep.mubr.bf16.mxu0 0
    %1392 = vmatmul.mubr.bf16.gmra.mxu0 %v1166
    %v1393 = vpop.f32.mrf.mxu0
    %v1394 = vadd.f32 0.0, %v1393
    %v1395 = vpop.f32.mrf.mxu0
    %v1396 = vadd.f32 0.0, %v1395
    %v1397 = vpop.f32.mrf.mxu0
    %v1398 = vpop.f32.mrf.mxu0
    %1399 = vdwg.mxu0
    %1400 = vmatprep.subr.bf16.mxu0 %v1326
    %1401 = vmatpush1.bf16.msra.mxu0 %v1325
    %1402 = vmatprep.subr.bf16.mxu0 %v1322
    %1403 = vmatpush1.bf16.msra.mxu0 %v1321
    %1404 = vmatprep.subr.bf16.mxu0 %v1318
    %1405 = vmatpush1.bf16.msra.mxu0 %v1317
    %1406 = vmatprep.subr.bf16.mxu0 %v1314
    %1407 = vmatpush1.bf16.msra.mxu0 %v1313
    %1408 = vmatprep.subr.bf16.mxu0 %v1310
    %1409 = vmatpush1.bf16.msra.mxu0 %v1309
    %1410 = vmatprep.subr.bf16.mxu0 %v1306
    %1411 = vmatpush1.bf16.msra.mxu0 %v1305
    %1412 = vmatprep.subr.bf16.mxu0 %v1302
    %1413 = vmatpush1.bf16.msra.mxu0 %v1301
    %1414 = vmatprep.subr.bf16.mxu0 %v1298
    %1415 = vmatpush1.bf16.msra.mxu0 %v1297
    %1416 = vmatprep.subr.bf16.mxu0 0
    %1417 = vmatpush2.bf16.msra.mxu0 0
    %1418 = vmatprep.subr.bf16.mxu0 0
    %1419 = vmatpush2.bf16.msra.mxu0 0
    %1420 = vmatprep.subr.bf16.mxu0 0
    %1421 = vmatpush2.bf16.msra.mxu0 0
    %1422 = vmatprep.subr.bf16.mxu0 0
    %1423 = vmatpush2.bf16.msra.mxu0 0
    %1424 = vmatprep.subr.bf16.mxu0 0
    %1425 = vmatpush2.bf16.msra.mxu0 0
    %1426 = vmatprep.subr.bf16.mxu0 0
    %1427 = vmatpush2.bf16.msra.mxu0 0
    %1428 = vmatprep.subr.bf16.mxu0 0
    %1429 = vmatpush2.bf16.msra.mxu0 0
    %1430 = vmatprep.subr.bf16.mxu0 0
    %1431 = vmatpush2.bf16.msra.mxu0 0
    %1432 = vmatprep.mubr.bf16.mxu0 0
    %1433 = vmatmul.mubr.bf16.gmra.mxu0 %v1166
    %v1434 = vpop.f32.mrf.mxu0
    %v1435 = vadd.f32 0.0, %v1434
    %v1436 = vpop.f32.mrf.mxu0
    %v1437 = vadd.f32 0.0, %v1436
    %v1438 = vpop.f32.mrf.mxu0
    %v1439 = vpop.f32.mrf.mxu0
    %1440 = vdwg.mxu0
    %v1441 = vadd.f32 %v1162, %v1394
    %v1442 = vadd.f32 %v1163, %v1396
    %v1443 = vadd.f32 %v1164, %v1435
    %v1444 = vadd.f32 %v1165, %v1437
    %v1445 = vxor.u32 %v1441, 2147483648
    %v1446 = vmul.f32 %v1445, 1.442695
    %v1447 = vpow.pop %v1446
    %v1448 = vadd.f32 %v1447, 1.0
    %v1449 = vrcp.pop %v1448
    %v1450 = vmul.f32 1.0, %v1449
    %v1451 = vxor.u32 %v1442, 2147483648
    %v1452 = vmul.f32 %v1451, 1.442695
    %v1453 = vpow.pop %v1452
    %v1454 = vadd.f32 %v1453, 1.0
    %v1455 = vrcp.pop %v1454
    %v1456 = vmul.f32 1.0, %v1455
    %v1457 = vtanh.pop %v1443
    %v1458 = vxor.u32 %v1444, 2147483648
    %v1459 = vmul.f32 %v1458, 1.442695
    %v1460 = vpow.pop %v1459
    %v1461 = vadd.f32 %v1460, 1.0
    %v1462 = vrcp.pop %v1461
    %v1463 = vmul.f32 1.0, %v1462
    %v1464 = vmul.f32 %v1456, %v1154
    %v1465 = vmul.f32 %v1450, %v1457
    %v1466 = vadd.f32 %v1464, %v1465
    %v1467 = vtanh.pop %v1466
    %v1468 = vmul.f32 %v1463, %v1467
    %s1469 = scalar_lea.vmem [#allocation3], 16
    %1470 = vst [vmem:[%s1469] sm:$0xff] %v1468
    %s1471 = smul.u32 3, 4
    %s1472 = smul.addr %s1471, 8
    %s1473 = scalar_lea.vmem [#allocation2], %s1472
    %v1474 = vld [vmem:[%s1473] sm:$0xff]
    %v1475 = vld [vmem:[%s1473 + $0x8] sm:$0xff]
    %v1476 = vld [vmem:[%s1473 + $0x10] sm:$0xff]
    %v1477 = vld [vmem:[%s1473 + $0x18] sm:$0xff]
    %v1478 = vpack.c.bf16 %v1468, %v1468
    %v1479 = vld [vmem:[#allocation9] sm:$0xff]
    %v1480 = vld [vmem:[#allocation9 + $0x8] sm:$0xff]
    %v1481 = vld [vmem:[#allocation9 + $0x10] sm:$0xff]
    %v1482 = vld [vmem:[#allocation9 + $0x18] sm:$0xff]
    %v1483 = vld [vmem:[#allocation9 + $0x20] sm:$0xff]
    %v1484 = vld [vmem:[#allocation9 + $0x28] sm:$0xff]
    %v1485 = vld [vmem:[#allocation9 + $0x30] sm:$0xff]
    %v1486 = vld [vmem:[#allocation9 + $0x38] sm:$0xff]
    %v1487 = vld [vmem:[#allocation9 + $0x40] sm:$0xff]
    %v1488 = vld [vmem:[#allocation9 + $0x48] sm:$0xff]
    %v1489 = vld [vmem:[#allocation9 + $0x50] sm:$0xff]
    %v1490 = vld [vmem:[#allocation9 + $0x58] sm:$0xff]
    %v1491 = vld [vmem:[#allocation9 + $0x60] sm:$0xff]
    %v1492 = vld [vmem:[#allocation9 + $0x68] sm:$0xff]
    %v1493 = vld [vmem:[#allocation9 + $0x70] sm:$0xff]
    %v1494 = vld [vmem:[#allocation9 + $0x78] sm:$0xff]
    %v1495 = vld [vmem:[#allocation9 + $0x80] sm:$0xff]
    %v1496 = vld [vmem:[#allocation9 + $0x88] sm:$0xff]
    %v1497 = vld [vmem:[#allocation9 + $0x90] sm:$0xff]
    %v1498 = vld [vmem:[#allocation9 + $0x98] sm:$0xff]
    %v1499 = vld [vmem:[#allocation9 + $0xa0] sm:$0xff]
    %v1500 = vld [vmem:[#allocation9 + $0xa8] sm:$0xff]
    %v1501 = vld [vmem:[#allocation9 + $0xb0] sm:$0xff]
    %v1502 = vld [vmem:[#allocation9 + $0xb8] sm:$0xff]
    %v1503 = vld [vmem:[#allocation9 + $0xc0] sm:$0xff]
    %v1504 = vld [vmem:[#allocation9 + $0xc8] sm:$0xff]
    %v1505 = vld [vmem:[#allocation9 + $0xd0] sm:$0xff]
    %v1506 = vld [vmem:[#allocation9 + $0xd8] sm:$0xff]
    %v1507 = vld [vmem:[#allocation9 + $0xe0] sm:$0xff]
    %v1508 = vld [vmem:[#allocation9 + $0xe8] sm:$0xff]
    %v1509 = vld [vmem:[#allocation9 + $0xf0] sm:$0xff]
    %v1510 = vld [vmem:[#allocation9 + $0xf8] sm:$0xff]
    %v1543 = vunpack.c.l.b16 %v1479
    %v1544 = vunpack.c.h.b16 %v1479
    %v1545 = vunpack.c.l.b16 %v1480
    %v1546 = vunpack.c.h.b16 %v1480
    %v1547 = vunpack.c.l.b16 %v1481
    %v1548 = vunpack.c.h.b16 %v1481
    %v1549 = vunpack.c.l.b16 %v1482
    %v1550 = vunpack.c.h.b16 %v1482
    %v1551 = vunpack.c.l.b16 %v1483
    %v1552 = vunpack.c.h.b16 %v1483
    %v1553 = vunpack.c.l.b16 %v1484
    %v1554 = vunpack.c.h.b16 %v1484
    %v1555 = vunpack.c.l.b16 %v1485
    %v1556 = vunpack.c.h.b16 %v1485
    %v1557 = vunpack.c.l.b16 %v1486
    %v1558 = vunpack.c.h.b16 %v1486
    %v1559 = vunpack.c.l.b16 %v1487
    %v1560 = vunpack.c.h.b16 %v1487
    %v1561 = vunpack.c.l.b16 %v1488
    %v1562 = vunpack.c.h.b16 %v1488
    %v1563 = vunpack.c.l.b16 %v1489
    %v1564 = vunpack.c.h.b16 %v1489
    %v1565 = vunpack.c.l.b16 %v1490
    %v1566 = vunpack.c.h.b16 %v1490
    %v1567 = vunpack.c.l.b16 %v1491
    %v1568 = vunpack.c.h.b16 %v1491
    %v1569 = vunpack.c.l.b16 %v1492
    %v1570 = vunpack.c.h.b16 %v1492
    %v1571 = vunpack.c.l.b16 %v1493
    %v1572 = vunpack.c.h.b16 %v1493
    %v1573 = vunpack.c.l.b16 %v1494
    %v1574 = vunpack.c.h.b16 %v1494
    %v1575 = vunpack.c.l.b16 %v1495
    %v1576 = vunpack.c.h.b16 %v1495
    %v1577 = vunpack.c.l.b16 %v1496
    %v1578 = vunpack.c.h.b16 %v1496
    %v1579 = vunpack.c.l.b16 %v1497
    %v1580 = vunpack.c.h.b16 %v1497
    %v1581 = vunpack.c.l.b16 %v1498
    %v1582 = vunpack.c.h.b16 %v1498
    %v1583 = vunpack.c.l.b16 %v1499
    %v1584 = vunpack.c.h.b16 %v1499
    %v1585 = vunpack.c.l.b16 %v1500
    %v1586 = vunpack.c.h.b16 %v1500
    %v1587 = vunpack.c.l.b16 %v1501
    %v1588 = vunpack.c.h.b16 %v1501
    %v1589 = vunpack.c.l.b16 %v1502
    %v1590 = vunpack.c.h.b16 %v1502
    %v1591 = vunpack.c.l.b16 %v1503
    %v1592 = vunpack.c.h.b16 %v1503
    %v1593 = vunpack.c.l.b16 %v1504
    %v1594 = vunpack.c.h.b16 %v1504
    %v1595 = vunpack.c.l.b16 %v1505
    %v1596 = vunpack.c.h.b16 %v1505
    %v1597 = vunpack.c.l.b16 %v1506
    %v1598 = vunpack.c.h.b16 %v1506
    %v1599 = vunpack.c.l.b16 %v1507
    %v1600 = vunpack.c.h.b16 %v1507
    %v1601 = vunpack.c.l.b16 %v1508
    %v1602 = vunpack.c.h.b16 %v1508
    %v1603 = vunpack.c.l.b16 %v1509
    %v1604 = vunpack.c.h.b16 %v1509
    %v1605 = vunpack.c.l.b16 %v1510
    %v1606 = vunpack.c.h.b16 %v1510
    %v1607 = vpack.c.b16 %v1547, %v1543
    %v1608 = vpack.c.b16 %v1548, %v1544
    %v1609 = vpack.c.b16 %v1549, %v1545
    %v1610 = vpack.c.b16 %v1550, %v1546
    %v1611 = vpack.c.b16 %v1555, %v1551
    %v1612 = vpack.c.b16 %v1556, %v1552
    %v1613 = vpack.c.b16 %v1557, %v1553
    %v1614 = vpack.c.b16 %v1558, %v1554
    %v1615 = vpack.c.b16 %v1563, %v1559
    %v1616 = vpack.c.b16 %v1564, %v1560
    %v1617 = vpack.c.b16 %v1565, %v1561
    %v1618 = vpack.c.b16 %v1566, %v1562
    %v1619 = vpack.c.b16 %v1571, %v1567
    %v1620 = vpack.c.b16 %v1572, %v1568
    %v1621 = vpack.c.b16 %v1573, %v1569
    %v1622 = vpack.c.b16 %v1574, %v1570
    %v1623 = vpack.c.b16 %v1579, %v1575
    %v1624 = vpack.c.b16 %v1580, %v1576
    %v1625 = vpack.c.b16 %v1581, %v1577
    %v1626 = vpack.c.b16 %v1582, %v1578
    %v1627 = vpack.c.b16 %v1587, %v1583
    %v1628 = vpack.c.b16 %v1588, %v1584
    %v1629 = vpack.c.b16 %v1589, %v1585
    %v1630 = vpack.c.b16 %v1590, %v1586
    %v1631 = vpack.c.b16 %v1595, %v1591
    %v1632 = vpack.c.b16 %v1596, %v1592
    %v1633 = vpack.c.b16 %v1597, %v1593
    %v1634 = vpack.c.b16 %v1598, %v1594
    %v1635 = vpack.c.b16 %v1603, %v1599
    %v1636 = vpack.c.b16 %v1604, %v1600
    %v1637 = vpack.c.b16 %v1605, %v1601
    %v1638 = vpack.c.b16 %v1606, %v1602
    %1671 = vmatprep.subr.bf16.mxu0 %v1636
    %1672 = vmatpush1.bf16.msra.mxu0 %v1635
    %1673 = vmatprep.subr.bf16.mxu0 %v1632
    %1674 = vmatpush1.bf16.msra.mxu0 %v1631
    %1675 = vmatprep.subr.bf16.mxu0 %v1628
    %1676 = vmatpush1.bf16.msra.mxu0 %v1627
    %1677 = vmatprep.subr.bf16.mxu0 %v1624
    %1678 = vmatpush1.bf16.msra.mxu0 %v1623
    %1679 = vmatprep.subr.bf16.mxu0 %v1620
    %1680 = vmatpush1.bf16.msra.mxu0 %v1619
    %1681 = vmatprep.subr.bf16.mxu0 %v1616
    %1682 = vmatpush1.bf16.msra.mxu0 %v1615
    %1683 = vmatprep.subr.bf16.mxu0 %v1612
    %1684 = vmatpush1.bf16.msra.mxu0 %v1611
    %1685 = vmatprep.subr.bf16.mxu0 %v1608
    %1686 = vmatpush1.bf16.msra.mxu0 %v1607
    %1687 = vmatprep.subr.bf16.mxu0 0
    %1688 = vmatpush2.bf16.msra.mxu0 0
    %1689 = vmatprep.subr.bf16.mxu0 0
    %1690 = vmatpush2.bf16.msra.mxu0 0
    %1691 = vmatprep.subr.bf16.mxu0 0
    %1692 = vmatpush2.bf16.msra.mxu0 0
    %1693 = vmatprep.subr.bf16.mxu0 0
    %1694 = vmatpush2.bf16.msra.mxu0 0
    %1695 = vmatprep.subr.bf16.mxu0 0
    %1696 = vmatpush2.bf16.msra.mxu0 0
    %1697 = vmatprep.subr.bf16.mxu0 0
    %1698 = vmatpush2.bf16.msra.mxu0 0
    %1699 = vmatprep.subr.bf16.mxu0 0
    %1700 = vmatpush2.bf16.msra.mxu0 0
    %1701 = vmatprep.subr.bf16.mxu0 0
    %1702 = vmatpush2.bf16.msra.mxu0 0
    %1703 = vmatprep.mubr.bf16.mxu0 0
    %1704 = vmatmul.mubr.bf16.gmra.mxu0 %v1478
    %v1705 = vpop.f32.mrf.mxu0
    %v1706 = vadd.f32 0.0, %v1705
    %v1707 = vpop.f32.mrf.mxu0
    %v1708 = vadd.f32 0.0, %v1707
    %v1709 = vpop.f32.mrf.mxu0
    %v1710 = vpop.f32.mrf.mxu0
    %1711 = vdwg.mxu0
    %1712 = vmatprep.subr.bf16.mxu0 %v1638
    %1713 = vmatpush1.bf16.msra.mxu0 %v1637
    %1714 = vmatprep.subr.bf16.mxu0 %v1634
    %1715 = vmatpush1.bf16.msra.mxu0 %v1633
    %1716 = vmatprep.subr.bf16.mxu0 %v1630
    %1717 = vmatpush1.bf16.msra.mxu0 %v1629
    %1718 = vmatprep.subr.bf16.mxu0 %v1626
    %1719 = vmatpush1.bf16.msra.mxu0 %v1625
    %1720 = vmatprep.subr.bf16.mxu0 %v1622
    %1721 = vmatpush1.bf16.msra.mxu0 %v1621
    %1722 = vmatprep.subr.bf16.mxu0 %v1618
    %1723 = vmatpush1.bf16.msra.mxu0 %v1617
    %1724 = vmatprep.subr.bf16.mxu0 %v1614
    %1725 = vmatpush1.bf16.msra.mxu0 %v1613
    %1726 = vmatprep.subr.bf16.mxu0 %v1610
    %1727 = vmatpush1.bf16.msra.mxu0 %v1609
    %1728 = vmatprep.subr.bf16.mxu0 0
    %1729 = vmatpush2.bf16.msra.mxu0 0
    %1730 = vmatprep.subr.bf16.mxu0 0
    %1731 = vmatpush2.bf16.msra.mxu0 0
    %1732 = vmatprep.subr.bf16.mxu0 0
    %1733 = vmatpush2.bf16.msra.mxu0 0
    %1734 = vmatprep.subr.bf16.mxu0 0
    %1735 = vmatpush2.bf16.msra.mxu0 0
    %1736 = vmatprep.subr.bf16.mxu0 0
    %1737 = vmatpush2.bf16.msra.mxu0 0
    %1738 = vmatprep.subr.bf16.mxu0 0
    %1739 = vmatpush2.bf16.msra.mxu0 0
    %1740 = vmatprep.subr.bf16.mxu0 0
    %1741 = vmatpush2.bf16.msra.mxu0 0
    %1742 = vmatprep.subr.bf16.mxu0 0
    %1743 = vmatpush2.bf16.msra.mxu0 0
    %1744 = vmatprep.mubr.bf16.mxu0 0
    %1745 = vmatmul.mubr.bf16.gmra.mxu0 %v1478
    %v1746 = vpop.f32.mrf.mxu0
    %v1747 = vadd.f32 0.0, %v1746
    %v1748 = vpop.f32.mrf.mxu0
    %v1749 = vadd.f32 0.0, %v1748
    %v1750 = vpop.f32.mrf.mxu0
    %v1751 = vpop.f32.mrf.mxu0
    %1752 = vdwg.mxu0
    %v1753 = vadd.f32 %v1474, %v1706
    %v1754 = vadd.f32 %v1475, %v1708
    %v1755 = vadd.f32 %v1476, %v1747
    %v1756 = vadd.f32 %v1477, %v1749
    %v1757 = vxor.u32 %v1753, 2147483648
    %v1758 = vmul.f32 %v1757, 1.442695
    %v1759 = vpow.pop %v1758
    %v1760 = vadd.f32 %v1759, 1.0
    %v1761 = vrcp.pop %v1760
    %v1762 = vmul.f32 1.0, %v1761
    %v1763 = vxor.u32 %v1754, 2147483648
    %v1764 = vmul.f32 %v1763, 1.442695
    %v1765 = vpow.pop %v1764
    %v1766 = vadd.f32 %v1765, 1.0
    %v1767 = vrcp.pop %v1766
    %v1768 = vmul.f32 1.0, %v1767
    %v1769 = vtanh.pop %v1755
    %v1770 = vxor.u32 %v1756, 2147483648
    %v1771 = vmul.f32 %v1770, 1.442695
    %v1772 = vpow.pop %v1771
    %v1773 = vadd.f32 %v1772, 1.0
    %v1774 = vrcp.pop %v1773
    %v1775 = vmul.f32 1.0, %v1774
    %v1776 = vmul.f32 %v1768, %v1466
    %v1777 = vmul.f32 %v1762, %v1769
    %v1778 = vadd.f32 %v1776, %v1777
    %v1779 = vtanh.pop %v1778
    %v1780 = vmul.f32 %v1775, %v1779
    %s1781 = scalar_lea.vmem [#allocation3], 24
    %1782 = vst [vmem:[%s1781] sm:$0xff] %v1780
    %s1783 = smul.u32 4, 4
    %s1784 = smul.addr %s1783, 8
    %s1785 = scalar_lea.vmem [#allocation2], %s1784
    %v1786 = vld [vmem:[%s1785] sm:$0xff]
    %v1787 = vld [vmem:[%s1785 + $0x8] sm:$0xff]
    %v1788 = vld [vmem:[%s1785 + $0x10] sm:$0xff]
    %v1789 = vld [vmem:[%s1785 + $0x18] sm:$0xff]
    %v1790 = vpack.c.bf16 %v1780, %v1780
    %v1791 = vld [vmem:[#allocation9] sm:$0xff]
    %v1792 = vld [vmem:[#allocation9 + $0x8] sm:$0xff]
    %v1793 = vld [vmem:[#allocation9 + $0x10] sm:$0xff]
    %v1794 = vld [vmem:[#allocation9 + $0x18] sm:$0xff]
    %v1795 = vld [vmem:[#allocation9 + $0x20] sm:$0xff]
    %v1796 = vld [vmem:[#allocation9 + $0x28] sm:$0xff]
    %v1797 = vld [vmem:[#allocation9 + $0x30] sm:$0xff]
    %v1798 = vld [vmem:[#allocation9 + $0x38] sm:$0xff]
    %v1799 = vld [vmem:[#allocation9 + $0x40] sm:$0xff]
    %v1800 = vld [vmem:[#allocation9 + $0x48] sm:$0xff]
    %v1801 = vld [vmem:[#allocation9 + $0x50] sm:$0xff]
    %v1802 = vld [vmem:[#allocation9 + $0x58] sm:$0xff]
    %v1803 = vld [vmem:[#allocation9 + $0x60] sm:$0xff]
    %v1804 = vld [vmem:[#allocation9 + $0x68] sm:$0xff]
    %v1805 = vld [vmem:[#allocation9 + $0x70] sm:$0xff]
    %v1806 = vld [vmem:[#allocation9 + $0x78] sm:$0xff]
    %v1807 = vld [vmem:[#allocation9 + $0x80] sm:$0xff]
    %v1808 = vld [vmem:[#allocation9 + $0x88] sm:$0xff]
    %v1809 = vld [vmem:[#allocation9 + $0x90] sm:$0xff]
    %v1810 = vld [vmem:[#allocation9 + $0x98] sm:$0xff]
    %v1811 = vld [vmem:[#allocation9 + $0xa0] sm:$0xff]
    %v1812 = vld [vmem:[#allocation9 + $0xa8] sm:$0xff]
    %v1813 = vld [vmem:[#allocation9 + $0xb0] sm:$0xff]
    %v1814 = vld [vmem:[#allocation9 + $0xb8] sm:$0xff]
    %v1815 = vld [vmem:[#allocation9 + $0xc0] sm:$0xff]
    %v1816 = vld [vmem:[#allocation9 + $0xc8] sm:$0xff]
    %v1817 = vld [vmem:[#allocation9 + $0xd0] sm:$0xff]
    %v1818 = vld [vmem:[#allocation9 + $0xd8] sm:$0xff]
    %v1819 = vld [vmem:[#allocation9 + $0xe0] sm:$0xff]
    %v1820 = vld [vmem:[#allocation9 + $0xe8] sm:$0xff]
    %v1821 = vld [vmem:[#allocation9 + $0xf0] sm:$0xff]
    %v1822 = vld [vmem:[#allocation9 + $0xf8] sm:$0xff]
    %v1855 = vunpack.c.l.b16 %v1791
    %v1856 = vunpack.c.h.b16 %v1791
    %v1857 = vunpack.c.l.b16 %v1792
    %v1858 = vunpack.c.h.b16 %v1792
    %v1859 = vunpack.c.l.b16 %v1793
    %v1860 = vunpack.c.h.b16 %v1793
    %v1861 = vunpack.c.l.b16 %v1794
    %v1862 = vunpack.c.h.b16 %v1794
    %v1863 = vunpack.c.l.b16 %v1795
    %v1864 = vunpack.c.h.b16 %v1795
    %v1865 = vunpack.c.l.b16 %v1796
    %v1866 = vunpack.c.h.b16 %v1796
    %v1867 = vunpack.c.l.b16 %v1797
    %v1868 = vunpack.c.h.b16 %v1797
    %v1869 = vunpack.c.l.b16 %v1798
    %v1870 = vunpack.c.h.b16 %v1798
    %v1871 = vunpack.c.l.b16 %v1799
    %v1872 = vunpack.c.h.b16 %v1799
    %v1873 = vunpack.c.l.b16 %v1800
    %v1874 = vunpack.c.h.b16 %v1800
    %v1875 = vunpack.c.l.b16 %v1801
    %v1876 = vunpack.c.h.b16 %v1801
    %v1877 = vunpack.c.l.b16 %v1802
    %v1878 = vunpack.c.h.b16 %v1802
    %v1879 = vunpack.c.l.b16 %v1803
    %v1880 = vunpack.c.h.b16 %v1803
    %v1881 = vunpack.c.l.b16 %v1804
    %v1882 = vunpack.c.h.b16 %v1804
    %v1883 = vunpack.c.l.b16 %v1805
    %v1884 = vunpack.c.h.b16 %v1805
    %v1885 = vunpack.c.l.b16 %v1806
    %v1886 = vunpack.c.h.b16 %v1806
    %v1887 = vunpack.c.l.b16 %v1807
    %v1888 = vunpack.c.h.b16 %v1807
    %v1889 = vunpack.c.l.b16 %v1808
    %v1890 = vunpack.c.h.b16 %v1808
    %v1891 = vunpack.c.l.b16 %v1809
    %v1892 = vunpack.c.h.b16 %v1809
    %v1893 = vunpack.c.l.b16 %v1810
    %v1894 = vunpack.c.h.b16 %v1810
    %v1895 = vunpack.c.l.b16 %v1811
    %v1896 = vunpack.c.h.b16 %v1811
    %v1897 = vunpack.c.l.b16 %v1812
    %v1898 = vunpack.c.h.b16 %v1812
    %v1899 = vunpack.c.l.b16 %v1813
    %v1900 = vunpack.c.h.b16 %v1813
    %v1901 = vunpack.c.l.b16 %v1814
    %v1902 = vunpack.c.h.b16 %v1814
    %v1903 = vunpack.c.l.b16 %v1815
    %v1904 = vunpack.c.h.b16 %v1815
    %v1905 = vunpack.c.l.b16 %v1816
    %v1906 = vunpack.c.h.b16 %v1816
    %v1907 = vunpack.c.l.b16 %v1817
    %v1908 = vunpack.c.h.b16 %v1817
    %v1909 = vunpack.c.l.b16 %v1818
    %v1910 = vunpack.c.h.b16 %v1818
    %v1911 = vunpack.c.l.b16 %v1819
    %v1912 = vunpack.c.h.b16 %v1819
    %v1913 = vunpack.c.l.b16 %v1820
    %v1914 = vunpack.c.h.b16 %v1820
    %v1915 = vunpack.c.l.b16 %v1821
    %v1916 = vunpack.c.h.b16 %v1821
    %v1917 = vunpack.c.l.b16 %v1822
    %v1918 = vunpack.c.h.b16 %v1822
    %v1919 = vpack.c.b16 %v1859, %v1855
    %v1920 = vpack.c.b16 %v1860, %v1856
    %v1921 = vpack.c.b16 %v1861, %v1857
    %v1922 = vpack.c.b16 %v1862, %v1858
    %v1923 = vpack.c.b16 %v1867, %v1863
    %v1924 = vpack.c.b16 %v1868, %v1864
    %v1925 = vpack.c.b16 %v1869, %v1865
    %v1926 = vpack.c.b16 %v1870, %v1866
    %v1927 = vpack.c.b16 %v1875, %v1871
    %v1928 = vpack.c.b16 %v1876, %v1872
    %v1929 = vpack.c.b16 %v1877, %v1873
    %v1930 = vpack.c.b16 %v1878, %v1874
    %v1931 = vpack.c.b16 %v1883, %v1879
    %v1932 = vpack.c.b16 %v1884, %v1880
    %v1933 = vpack.c.b16 %v1885, %v1881
    %v1934 = vpack.c.b16 %v1886, %v1882
    %v1935 = vpack.c.b16 %v1891, %v1887
    %v1936 = vpack.c.b16 %v1892, %v1888
    %v1937 = vpack.c.b16 %v1893, %v1889
    %v1938 = vpack.c.b16 %v1894, %v1890
    %v1939 = vpack.c.b16 %v1899, %v1895
    %v1940 = vpack.c.b16 %v1900, %v1896
    %v1941 = vpack.c.b16 %v1901, %v1897
    %v1942 = vpack.c.b16 %v1902, %v1898
    %v1943 = vpack.c.b16 %v1907, %v1903
    %v1944 = vpack.c.b16 %v1908, %v1904
    %v1945 = vpack.c.b16 %v1909, %v1905
    %v1946 = vpack.c.b16 %v1910, %v1906
    %v1947 = vpack.c.b16 %v1915, %v1911
    %v1948 = vpack.c.b16 %v1916, %v1912
    %v1949 = vpack.c.b16 %v1917, %v1913
    %v1950 = vpack.c.b16 %v1918, %v1914
    %1983 = vmatprep.subr.bf16.mxu0 %v1948
    %1984 = vmatpush1.bf16.msra.mxu0 %v1947
    %1985 = vmatprep.subr.bf16.mxu0 %v1944
    %1986 = vmatpush1.bf16.msra.mxu0 %v1943
    %1987 = vmatprep.subr.bf16.mxu0 %v1940
    %1988 = vmatpush1.bf16.msra.mxu0 %v1939
    %1989 = vmatprep.subr.bf16.mxu0 %v1936
    %1990 = vmatpush1.bf16.msra.mxu0 %v1935
    %1991 = vmatprep.subr.bf16.mxu0 %v1932
    %1992 = vmatpush1.bf16.msra.mxu0 %v1931
    %1993 = vmatprep.subr.bf16.mxu0 %v1928
    %1994 = vmatpush1.bf16.msra.mxu0 %v1927
    %1995 = vmatprep.subr.bf16.mxu0 %v1924
    %1996 = vmatpush1.bf16.msra.mxu0 %v1923
    %1997 = vmatprep.subr.bf16.mxu0 %v1920
    %1998 = vmatpush1.bf16.msra.mxu0 %v1919
    %1999 = vmatprep.subr.bf16.mxu0 0
    %2000 = vmatpush2.bf16.msra.mxu0 0
    %2001 = vmatprep.subr.bf16.mxu0 0
    %2002 = vmatpush2.bf16.msra.mxu0 0
    %2003 = vmatprep.subr.bf16.mxu0 0
    %2004 = vmatpush2.bf16.msra.mxu0 0
    %2005 = vmatprep.subr.bf16.mxu0 0
    %2006 = vmatpush2.bf16.msra.mxu0 0
    %2007 = vmatprep.subr.bf16.mxu0 0
    %2008 = vmatpush2.bf16.msra.mxu0 0
    %2009 = vmatprep.subr.bf16.mxu0 0
    %2010 = vmatpush2.bf16.msra.mxu0 0
    %2011 = vmatprep.subr.bf16.mxu0 0
    %2012 = vmatpush2.bf16.msra.mxu0 0
    %2013 = vmatprep.subr.bf16.mxu0 0
    %2014 = vmatpush2.bf16.msra.mxu0 0
    %2015 = vmatprep.mubr.bf16.mxu0 0
    %2016 = vmatmul.mubr.bf16.gmra.mxu0 %v1790
    %v2017 = vpop.f32.mrf.mxu0
    %v2018 = vadd.f32 0.0, %v2017
    %v2019 = vpop.f32.mrf.mxu0
    %v2020 = vadd.f32 0.0, %v2019
    %v2021 = vpop.f32.mrf.mxu0
    %v2022 = vpop.f32.mrf.mxu0
    %2023 = vdwg.mxu0
    %2024 = vmatprep.subr.bf16.mxu0 %v1950
    %2025 = vmatpush1.bf16.msra.mxu0 %v1949
    %2026 = vmatprep.subr.bf16.mxu0 %v1946
    %2027 = vmatpush1.bf16.msra.mxu0 %v1945
    %2028 = vmatprep.subr.bf16.mxu0 %v1942
    %2029 = vmatpush1.bf16.msra.mxu0 %v1941
    %2030 = vmatprep.subr.bf16.mxu0 %v1938
    %2031 = vmatpush1.bf16.msra.mxu0 %v1937
    %2032 = vmatprep.subr.bf16.mxu0 %v1934
    %2033 = vmatpush1.bf16.msra.mxu0 %v1933
    %2034 = vmatprep.subr.bf16.mxu0 %v1930
    %2035 = vmatpush1.bf16.msra.mxu0 %v1929
    %2036 = vmatprep.subr.bf16.mxu0 %v1926
    %2037 = vmatpush1.bf16.msra.mxu0 %v1925
    %2038 = vmatprep.subr.bf16.mxu0 %v1922
    %2039 = vmatpush1.bf16.msra.mxu0 %v1921
    %2040 = vmatprep.subr.bf16.mxu0 0
    %2041 = vmatpush2.bf16.msra.mxu0 0
    %2042 = vmatprep.subr.bf16.mxu0 0
    %2043 = vmatpush2.bf16.msra.mxu0 0
    %2044 = vmatprep.subr.bf16.mxu0 0
    %2045 = vmatpush2.bf16.msra.mxu0 0
    %2046 = vmatprep.subr.bf16.mxu0 0
    %2047 = vmatpush2.bf16.msra.mxu0 0
    %2048 = vmatprep.subr.bf16.mxu0 0
    %2049 = vmatpush2.bf16.msra.mxu0 0
    %2050 = vmatprep.subr.bf16.mxu0 0
    %2051 = vmatpush2.bf16.msra.mxu0 0
    %2052 = vmatprep.subr.bf16.mxu0 0
    %2053 = vmatpush2.bf16.msra.mxu0 0
    %2054 = vmatprep.subr.bf16.mxu0 0
    %2055 = vmatpush2.bf16.msra.mxu0 0
    %2056 = vmatprep.mubr.bf16.mxu0 0
    %2057 = vmatmul.mubr.bf16.gmra.mxu0 %v1790
    %v2058 = vpop.f32.mrf.mxu0
    %v2059 = vadd.f32 0.0, %v2058
    %v2060 = vpop.f32.mrf.mxu0
    %v2061 = vadd.f32 0.0, %v2060
    %v2062 = vpop.f32.mrf.mxu0
    %v2063 = vpop.f32.mrf.mxu0
    %2064 = vdwg.mxu0
    %v2065 = vadd.f32 %v1786, %v2018
    %v2066 = vadd.f32 %v1787, %v2020
    %v2067 = vadd.f32 %v1788, %v2059
    %v2068 = vadd.f32 %v1789, %v2061
    %v2069 = vxor.u32 %v2065, 2147483648
    %v2070 = vmul.f32 %v2069, 1.442695
    %v2071 = vpow.pop %v2070
    %v2072 = vadd.f32 %v2071, 1.0
    %v2073 = vrcp.pop %v2072
    %v2074 = vmul.f32 1.0, %v2073
    %v2075 = vxor.u32 %v2066, 2147483648
    %v2076 = vmul.f32 %v2075, 1.442695
    %v2077 = vpow.pop %v2076
    %v2078 = vadd.f32 %v2077, 1.0
    %v2079 = vrcp.pop %v2078
    %v2080 = vmul.f32 1.0, %v2079
    %v2081 = vtanh.pop %v2067
    %v2082 = vxor.u32 %v2068, 2147483648
    %v2083 = vmul.f32 %v2082, 1.442695
    %v2084 = vpow.pop %v2083
    %v2085 = vadd.f32 %v2084, 1.0
    %v2086 = vrcp.pop %v2085
    %v2087 = vmul.f32 1.0, %v2086
    %v2088 = vmul.f32 %v2080, %v1778
    %v2089 = vmul.f32 %v2074, %v2081
    %v2090 = vadd.f32 %v2088, %v2089
    %v2091 = vtanh.pop %v2090
    %v2092 = vmul.f32 %v2087, %v2091
    %s2093 = scalar_lea.vmem [#allocation3], 32
    %2094 = vst [vmem:[%s2093] sm:$0xff] %v2092
    %s2095 = smul.u32 5, 4
    %s2096 = smul.addr %s2095, 8
    %s2097 = scalar_lea.vmem [#allocation2], %s2096
    %v2098 = vld [vmem:[%s2097] sm:$0xff]
    %v2099 = vld [vmem:[%s2097 + $0x8] sm:$0xff]
    %v2100 = vld [vmem:[%s2097 + $0x10] sm:$0xff]
    %v2101 = vld [vmem:[%s2097 + $0x18] sm:$0xff]
    %v2102 = vpack.c.bf16 %v2092, %v2092
    %v2103 = vld [vmem:[#allocation9] sm:$0xff]
    %v2104 = vld [vmem:[#allocation9 + $0x8] sm:$0xff]
    %v2105 = vld [vmem:[#allocation9 + $0x10] sm:$0xff]
    %v2106 = vld [vmem:[#allocation9 + $0x18] sm:$0xff]
    %v2107 = vld [vmem:[#allocation9 + $0x20] sm:$0xff]
    %v2108 = vld [vmem:[#allocation9 + $0x28] sm:$0xff]
    %v2109 = vld [vmem:[#allocation9 + $0x30] sm:$0xff]
    %v2110 = vld [vmem:[#allocation9 + $0x38] sm:$0xff]
    %v2111 = vld [vmem:[#allocation9 + $0x40] sm:$0xff]
    %v2112 = vld [vmem:[#allocation9 + $0x48] sm:$0xff]
    %v2113 = vld [vmem:[#allocation9 + $0x50] sm:$0xff]
    %v2114 = vld [vmem:[#allocation9 + $0x58] sm:$0xff]
    %v2115 = vld [vmem:[#allocation9 + $0x60] sm:$0xff]
    %v2116 = vld [vmem:[#allocation9 + $0x68] sm:$0xff]
    %v2117 = vld [vmem:[#allocation9 + $0x70] sm:$0xff]
    %v2118 = vld [vmem:[#allocation9 + $0x78] sm:$0xff]
    %v2119 = vld [vmem:[#allocation9 + $0x80] sm:$0xff]
    %v2120 = vld [vmem:[#allocation9 + $0x88] sm:$0xff]
    %v2121 = vld [vmem:[#allocation9 + $0x90] sm:$0xff]
    %v2122 = vld [vmem:[#allocation9 + $0x98] sm:$0xff]
    %v2123 = vld [vmem:[#allocation9 + $0xa0] sm:$0xff]
    %v2124 = vld [vmem:[#allocation9 + $0xa8] sm:$0xff]
    %v2125 = vld [vmem:[#allocation9 + $0xb0] sm:$0xff]
    %v2126 = vld [vmem:[#allocation9 + $0xb8] sm:$0xff]
    %v2127 = vld [vmem:[#allocation9 + $0xc0] sm:$0xff]
    %v2128 = vld [vmem:[#allocation9 + $0xc8] sm:$0xff]
    %v2129 = vld [vmem:[#allocation9 + $0xd0] sm:$0xff]
    %v2130 = vld [vmem:[#allocation9 + $0xd8] sm:$0xff]
    %v2131 = vld [vmem:[#allocation9 + $0xe0] sm:$0xff]
    %v2132 = vld [vmem:[#allocation9 + $0xe8] sm:$0xff]
    %v2133 = vld [vmem:[#allocation9 + $0xf0] sm:$0xff]
    %v2134 = vld [vmem:[#allocation9 + $0xf8] sm:$0xff]
    %v2167 = vunpack.c.l.b16 %v2103
    %v2168 = vunpack.c.h.b16 %v2103
    %v2169 = vunpack.c.l.b16 %v2104
    %v2170 = vunpack.c.h.b16 %v2104
    %v2171 = vunpack.c.l.b16 %v2105
    %v2172 = vunpack.c.h.b16 %v2105
    %v2173 = vunpack.c.l.b16 %v2106
    %v2174 = vunpack.c.h.b16 %v2106
    %v2175 = vunpack.c.l.b16 %v2107
    %v2176 = vunpack.c.h.b16 %v2107
    %v2177 = vunpack.c.l.b16 %v2108
    %v2178 = vunpack.c.h.b16 %v2108
    %v2179 = vunpack.c.l.b16 %v2109
    %v2180 = vunpack.c.h.b16 %v2109
    %v2181 = vunpack.c.l.b16 %v2110
    %v2182 = vunpack.c.h.b16 %v2110
    %v2183 = vunpack.c.l.b16 %v2111
    %v2184 = vunpack.c.h.b16 %v2111
    %v2185 = vunpack.c.l.b16 %v2112
    %v2186 = vunpack.c.h.b16 %v2112
    %v2187 = vunpack.c.l.b16 %v2113
    %v2188 = vunpack.c.h.b16 %v2113
    %v2189 = vunpack.c.l.b16 %v2114
    %v2190 = vunpack.c.h.b16 %v2114
    %v2191 = vunpack.c.l.b16 %v2115
    %v2192 = vunpack.c.h.b16 %v2115
    %v2193 = vunpack.c.l.b16 %v2116
    %v2194 = vunpack.c.h.b16 %v2116
    %v2195 = vunpack.c.l.b16 %v2117
    %v2196 = vunpack.c.h.b16 %v2117
    %v2197 = vunpack.c.l.b16 %v2118
    %v2198 = vunpack.c.h.b16 %v2118
    %v2199 = vunpack.c.l.b16 %v2119
    %v2200 = vunpack.c.h.b16 %v2119
    %v2201 = vunpack.c.l.b16 %v2120
    %v2202 = vunpack.c.h.b16 %v2120
    %v2203 = vunpack.c.l.b16 %v2121
    %v2204 = vunpack.c.h.b16 %v2121
    %v2205 = vunpack.c.l.b16 %v2122
    %v2206 = vunpack.c.h.b16 %v2122
    %v2207 = vunpack.c.l.b16 %v2123
    %v2208 = vunpack.c.h.b16 %v2123
    %v2209 = vunpack.c.l.b16 %v2124
    %v2210 = vunpack.c.h.b16 %v2124
    %v2211 = vunpack.c.l.b16 %v2125
    %v2212 = vunpack.c.h.b16 %v2125
    %v2213 = vunpack.c.l.b16 %v2126
    %v2214 = vunpack.c.h.b16 %v2126
    %v2215 = vunpack.c.l.b16 %v2127
    %v2216 = vunpack.c.h.b16 %v2127
    %v2217 = vunpack.c.l.b16 %v2128
    %v2218 = vunpack.c.h.b16 %v2128
    %v2219 = vunpack.c.l.b16 %v2129
    %v2220 = vunpack.c.h.b16 %v2129
    %v2221 = vunpack.c.l.b16 %v2130
    %v2222 = vunpack.c.h.b16 %v2130
    %v2223 = vunpack.c.l.b16 %v2131
    %v2224 = vunpack.c.h.b16 %v2131
    %v2225 = vunpack.c.l.b16 %v2132
    %v2226 = vunpack.c.h.b16 %v2132
    %v2227 = vunpack.c.l.b16 %v2133
    %v2228 = vunpack.c.h.b16 %v2133
    %v2229 = vunpack.c.l.b16 %v2134
    %v2230 = vunpack.c.h.b16 %v2134
    %v2231 = vpack.c.b16 %v2171, %v2167
    %v2232 = vpack.c.b16 %v2172, %v2168
    %v2233 = vpack.c.b16 %v2173, %v2169
    %v2234 = vpack.c.b16 %v2174, %v2170
    %v2235 = vpack.c.b16 %v2179, %v2175
    %v2236 = vpack.c.b16 %v2180, %v2176
    %v2237 = vpack.c.b16 %v2181, %v2177
    %v2238 = vpack.c.b16 %v2182, %v2178
    %v2239 = vpack.c.b16 %v2187, %v2183
    %v2240 = vpack.c.b16 %v2188, %v2184
    %v2241 = vpack.c.b16 %v2189, %v2185
    %v2242 = vpack.c.b16 %v2190, %v2186
    %v2243 = vpack.c.b16 %v2195, %v2191
    %v2244 = vpack.c.b16 %v2196, %v2192
    %v2245 = vpack.c.b16 %v2197, %v2193
    %v2246 = vpack.c.b16 %v2198, %v2194
    %v2247 = vpack.c.b16 %v2203, %v2199
    %v2248 = vpack.c.b16 %v2204, %v2200
    %v2249 = vpack.c.b16 %v2205, %v2201
    %v2250 = vpack.c.b16 %v2206, %v2202
    %v2251 = vpack.c.b16 %v2211, %v2207
    %v2252 = vpack.c.b16 %v2212, %v2208
    %v2253 = vpack.c.b16 %v2213, %v2209
    %v2254 = vpack.c.b16 %v2214, %v2210
    %v2255 = vpack.c.b16 %v2219, %v2215
    %v2256 = vpack.c.b16 %v2220, %v2216
    %v2257 = vpack.c.b16 %v2221, %v2217
    %v2258 = vpack.c.b16 %v2222, %v2218
    %v2259 = vpack.c.b16 %v2227, %v2223
    %v2260 = vpack.c.b16 %v2228, %v2224
    %v2261 = vpack.c.b16 %v2229, %v2225
    %v2262 = vpack.c.b16 %v2230, %v2226
    %2295 = vmatprep.subr.bf16.mxu0 %v2260
    %2296 = vmatpush1.bf16.msra.mxu0 %v2259
    %2297 = vmatprep.subr.bf16.mxu0 %v2256
    %2298 = vmatpush1.bf16.msra.mxu0 %v2255
    %2299 = vmatprep.subr.bf16.mxu0 %v2252
    %2300 = vmatpush1.bf16.msra.mxu0 %v2251
    %2301 = vmatprep.subr.bf16.mxu0 %v2248
    %2302 = vmatpush1.bf16.msra.mxu0 %v2247
    %2303 = vmatprep.subr.bf16.mxu0 %v2244
    %2304 = vmatpush1.bf16.msra.mxu0 %v2243
    %2305 = vmatprep.subr.bf16.mxu0 %v2240
    %2306 = vmatpush1.bf16.msra.mxu0 %v2239
    %2307 = vmatprep.subr.bf16.mxu0 %v2236
    %2308 = vmatpush1.bf16.msra.mxu0 %v2235
    %2309 = vmatprep.subr.bf16.mxu0 %v2232
    %2310 = vmatpush1.bf16.msra.mxu0 %v2231
    %2311 = vmatprep.subr.bf16.mxu0 0
    %2312 = vmatpush2.bf16.msra.mxu0 0
    %2313 = vmatprep.subr.bf16.mxu0 0
    %2314 = vmatpush2.bf16.msra.mxu0 0
    %2315 = vmatprep.subr.bf16.mxu0 0
    %2316 = vmatpush2.bf16.msra.mxu0 0
    %2317 = vmatprep.subr.bf16.mxu0 0
    %2318 = vmatpush2.bf16.msra.mxu0 0
    %2319 = vmatprep.subr.bf16.mxu0 0
    %2320 = vmatpush2.bf16.msra.mxu0 0
    %2321 = vmatprep.subr.bf16.mxu0 0
    %2322 = vmatpush2.bf16.msra.mxu0 0
    %2323 = vmatprep.subr.bf16.mxu0 0
    %2324 = vmatpush2.bf16.msra.mxu0 0
    %2325 = vmatprep.subr.bf16.mxu0 0
    %2326 = vmatpush2.bf16.msra.mxu0 0
    %2327 = vmatprep.mubr.bf16.mxu0 0
    %2328 = vmatmul.mubr.bf16.gmra.mxu0 %v2102
    %v2329 = vpop.f32.mrf.mxu0
    %v2330 = vadd.f32 0.0, %v2329
    %v2331 = vpop.f32.mrf.mxu0
    %v2332 = vadd.f32 0.0, %v2331
    %v2333 = vpop.f32.mrf.mxu0
    %v2334 = vpop.f32.mrf.mxu0
    %2335 = vdwg.mxu0
    %2336 = vmatprep.subr.bf16.mxu0 %v2262
    %2337 = vmatpush1.bf16.msra.mxu0 %v2261
    %2338 = vmatprep.subr.bf16.mxu0 %v2258
    %2339 = vmatpush1.bf16.msra.mxu0 %v2257
    %2340 = vmatprep.subr.bf16.mxu0 %v2254
    %2341 = vmatpush1.bf16.msra.mxu0 %v2253
    %2342 = vmatprep.subr.bf16.mxu0 %v2250
    %2343 = vmatpush1.bf16.msra.mxu0 %v2249
    %2344 = vmatprep.subr.bf16.mxu0 %v2246
    %2345 = vmatpush1.bf16.msra.mxu0 %v2245
    %2346 = vmatprep.subr.bf16.mxu0 %v2242
    %2347 = vmatpush1.bf16.msra.mxu0 %v2241
    %2348 = vmatprep.subr.bf16.mxu0 %v2238
    %2349 = vmatpush1.bf16.msra.mxu0 %v2237
    %2350 = vmatprep.subr.bf16.mxu0 %v2234
    %2351 = vmatpush1.bf16.msra.mxu0 %v2233
    %2352 = vmatprep.subr.bf16.mxu0 0
    %2353 = vmatpush2.bf16.msra.mxu0 0
    %2354 = vmatprep.subr.bf16.mxu0 0
    %2355 = vmatpush2.bf16.msra.mxu0 0
    %2356 = vmatprep.subr.bf16.mxu0 0
    %2357 = vmatpush2.bf16.msra.mxu0 0
    %2358 = vmatprep.subr.bf16.mxu0 0
    %2359 = vmatpush2.bf16.msra.mxu0 0
    %2360 = vmatprep.subr.bf16.mxu0 0
    %2361 = vmatpush2.bf16.msra.mxu0 0
    %2362 = vmatprep.subr.bf16.mxu0 0
    %2363 = vmatpush2.bf16.msra.mxu0 0
    %2364 = vmatprep.subr.bf16.mxu0 0
    %2365 = vmatpush2.bf16.msra.mxu0 0
    %2366 = vmatprep.subr.bf16.mxu0 0
    %2367 = vmatpush2.bf16.msra.mxu0 0
    %2368 = vmatprep.mubr.bf16.mxu0 0
    %2369 = vmatmul.mubr.bf16.gmra.mxu0 %v2102
    %v2370 = vpop.f32.mrf.mxu0
    %v2371 = vadd.f32 0.0, %v2370
    %v2372 = vpop.f32.mrf.mxu0
    %v2373 = vadd.f32 0.0, %v2372
    %v2374 = vpop.f32.mrf.mxu0
    %v2375 = vpop.f32.mrf.mxu0
    %2376 = vdwg.mxu0
    %v2377 = vadd.f32 %v2098, %v2330
    %v2378 = vadd.f32 %v2099, %v2332
    %v2379 = vadd.f32 %v2100, %v2371
    %v2380 = vadd.f32 %v2101, %v2373
    %v2381 = vxor.u32 %v2377, 2147483648
    %v2382 = vmul.f32 %v2381, 1.442695
    %v2383 = vpow.pop %v2382
    %v2384 = vadd.f32 %v2383, 1.0
    %v2385 = vrcp.pop %v2384
    %v2386 = vmul.f32 1.0, %v2385
    %v2387 = vxor.u32 %v2378, 2147483648
    %v2388 = vmul.f32 %v2387, 1.442695
    %v2389 = vpow.pop %v2388
    %v2390 = vadd.f32 %v2389, 1.0
    %v2391 = vrcp.pop %v2390
    %v2392 = vmul.f32 1.0, %v2391
    %v2393 = vtanh.pop %v2379
    %v2394 = vxor.u32 %v2380, 2147483648
    %v2395 = vmul.f32 %v2394, 1.442695
    %v2396 = vpow.pop %v2395
    %v2397 = vadd.f32 %v2396, 1.0
    %v2398 = vrcp.pop %v2397
    %v2399 = vmul.f32 1.0, %v2398
    %v2400 = vmul.f32 %v2392, %v2090
    %v2401 = vmul.f32 %v2386, %v2393
    %v2402 = vadd.f32 %v2400, %v2401
    %v2403 = vtanh.pop %v2402
    %v2404 = vmul.f32 %v2399, %v2403
    %s2405 = scalar_lea.vmem [#allocation3], 40
    %2406 = vst [vmem:[%s2405] sm:$0xff] %v2404
    %s2407 = smul.u32 6, 4
    %s2408 = smul.addr %s2407, 8
    %s2409 = scalar_lea.vmem [#allocation2], %s2408
    %v2410 = vld [vmem:[%s2409] sm:$0xff]
    %v2411 = vld [vmem:[%s2409 + $0x8] sm:$0xff]
    %v2412 = vld [vmem:[%s2409 + $0x10] sm:$0xff]
    %v2413 = vld [vmem:[%s2409 + $0x18] sm:$0xff]
    %v2414 = vpack.c.bf16 %v2404, %v2404
    %v2415 = vld [vmem:[#allocation9] sm:$0xff]
    %v2416 = vld [vmem:[#allocation9 + $0x8] sm:$0xff]
    %v2417 = vld [vmem:[#allocation9 + $0x10] sm:$0xff]
    %v2418 = vld [vmem:[#allocation9 + $0x18] sm:$0xff]
    %v2419 = vld [vmem:[#allocation9 + $0x20] sm:$0xff]
    %v2420 = vld [vmem:[#allocation9 + $0x28] sm:$0xff]
    %v2421 = vld [vmem:[#allocation9 + $0x30] sm:$0xff]
    %v2422 = vld [vmem:[#allocation9 + $0x38] sm:$0xff]
    %v2423 = vld [vmem:[#allocation9 + $0x40] sm:$0xff]
    %v2424 = vld [vmem:[#allocation9 + $0x48] sm:$0xff]
    %v2425 = vld [vmem:[#allocation9 + $0x50] sm:$0xff]
    %v2426 = vld [vmem:[#allocation9 + $0x58] sm:$0xff]
    %v2427 = vld [vmem:[#allocation9 + $0x60] sm:$0xff]
    %v2428 = vld [vmem:[#allocation9 + $0x68] sm:$0xff]
    %v2429 = vld [vmem:[#allocation9 + $0x70] sm:$0xff]
    %v2430 = vld [vmem:[#allocation9 + $0x78] sm:$0xff]
    %v2431 = vld [vmem:[#allocation9 + $0x80] sm:$0xff]
    %v2432 = vld [vmem:[#allocation9 + $0x88] sm:$0xff]
    %v2433 = vld [vmem:[#allocation9 + $0x90] sm:$0xff]
    %v2434 = vld [vmem:[#allocation9 + $0x98] sm:$0xff]
    %v2435 = vld [vmem:[#allocation9 + $0xa0] sm:$0xff]
    %v2436 = vld [vmem:[#allocation9 + $0xa8] sm:$0xff]
    %v2437 = vld [vmem:[#allocation9 + $0xb0] sm:$0xff]
    %v2438 = vld [vmem:[#allocation9 + $0xb8] sm:$0xff]
    %v2439 = vld [vmem:[#allocation9 + $0xc0] sm:$0xff]
    %v2440 = vld [vmem:[#allocation9 + $0xc8] sm:$0xff]
    %v2441 = vld [vmem:[#allocation9 + $0xd0] sm:$0xff]
    %v2442 = vld [vmem:[#allocation9 + $0xd8] sm:$0xff]
    %v2443 = vld [vmem:[#allocation9 + $0xe0] sm:$0xff]
    %v2444 = vld [vmem:[#allocation9 + $0xe8] sm:$0xff]
    %v2445 = vld [vmem:[#allocation9 + $0xf0] sm:$0xff]
    %v2446 = vld [vmem:[#allocation9 + $0xf8] sm:$0xff]
    %v2479 = vunpack.c.l.b16 %v2415
    %v2480 = vunpack.c.h.b16 %v2415
    %v2481 = vunpack.c.l.b16 %v2416
    %v2482 = vunpack.c.h.b16 %v2416
    %v2483 = vunpack.c.l.b16 %v2417
    %v2484 = vunpack.c.h.b16 %v2417
    %v2485 = vunpack.c.l.b16 %v2418
    %v2486 = vunpack.c.h.b16 %v2418
    %v2487 = vunpack.c.l.b16 %v2419
    %v2488 = vunpack.c.h.b16 %v2419
    %v2489 = vunpack.c.l.b16 %v2420
    %v2490 = vunpack.c.h.b16 %v2420
    %v2491 = vunpack.c.l.b16 %v2421
    %v2492 = vunpack.c.h.b16 %v2421
    %v2493 = vunpack.c.l.b16 %v2422
    %v2494 = vunpack.c.h.b16 %v2422
    %v2495 = vunpack.c.l.b16 %v2423
    %v2496 = vunpack.c.h.b16 %v2423
    %v2497 = vunpack.c.l.b16 %v2424
    %v2498 = vunpack.c.h.b16 %v2424
    %v2499 = vunpack.c.l.b16 %v2425
    %v2500 = vunpack.c.h.b16 %v2425
    %v2501 = vunpack.c.l.b16 %v2426
    %v2502 = vunpack.c.h.b16 %v2426
    %v2503 = vunpack.c.l.b16 %v2427
    %v2504 = vunpack.c.h.b16 %v2427
    %v2505 = vunpack.c.l.b16 %v2428
    %v2506 = vunpack.c.h.b16 %v2428
    %v2507 = vunpack.c.l.b16 %v2429
    %v2508 = vunpack.c.h.b16 %v2429
    %v2509 = vunpack.c.l.b16 %v2430
    %v2510 = vunpack.c.h.b16 %v2430
    %v2511 = vunpack.c.l.b16 %v2431
    %v2512 = vunpack.c.h.b16 %v2431
    %v2513 = vunpack.c.l.b16 %v2432
    %v2514 = vunpack.c.h.b16 %v2432
    %v2515 = vunpack.c.l.b16 %v2433
    %v2516 = vunpack.c.h.b16 %v2433
    %v2517 = vunpack.c.l.b16 %v2434
    %v2518 = vunpack.c.h.b16 %v2434
    %v2519 = vunpack.c.l.b16 %v2435
    %v2520 = vunpack.c.h.b16 %v2435
    %v2521 = vunpack.c.l.b16 %v2436
    %v2522 = vunpack.c.h.b16 %v2436
    %v2523 = vunpack.c.l.b16 %v2437
    %v2524 = vunpack.c.h.b16 %v2437
    %v2525 = vunpack.c.l.b16 %v2438
    %v2526 = vunpack.c.h.b16 %v2438
    %v2527 = vunpack.c.l.b16 %v2439
    %v2528 = vunpack.c.h.b16 %v2439
    %v2529 = vunpack.c.l.b16 %v2440
    %v2530 = vunpack.c.h.b16 %v2440
    %v2531 = vunpack.c.l.b16 %v2441
    %v2532 = vunpack.c.h.b16 %v2441
    %v2533 = vunpack.c.l.b16 %v2442
    %v2534 = vunpack.c.h.b16 %v2442
    %v2535 = vunpack.c.l.b16 %v2443
    %v2536 = vunpack.c.h.b16 %v2443
    %v2537 = vunpack.c.l.b16 %v2444
    %v2538 = vunpack.c.h.b16 %v2444
    %v2539 = vunpack.c.l.b16 %v2445
    %v2540 = vunpack.c.h.b16 %v2445
    %v2541 = vunpack.c.l.b16 %v2446
    %v2542 = vunpack.c.h.b16 %v2446
    %v2543 = vpack.c.b16 %v2483, %v2479
    %v2544 = vpack.c.b16 %v2484, %v2480
    %v2545 = vpack.c.b16 %v2485, %v2481
    %v2546 = vpack.c.b16 %v2486, %v2482
    %v2547 = vpack.c.b16 %v2491, %v2487
    %v2548 = vpack.c.b16 %v2492, %v2488
    %v2549 = vpack.c.b16 %v2493, %v2489
    %v2550 = vpack.c.b16 %v2494, %v2490
    %v2551 = vpack.c.b16 %v2499, %v2495
    %v2552 = vpack.c.b16 %v2500, %v2496
    %v2553 = vpack.c.b16 %v2501, %v2497
    %v2554 = vpack.c.b16 %v2502, %v2498
    %v2555 = vpack.c.b16 %v2507, %v2503
    %v2556 = vpack.c.b16 %v2508, %v2504
    %v2557 = vpack.c.b16 %v2509, %v2505
    %v2558 = vpack.c.b16 %v2510, %v2506
    %v2559 = vpack.c.b16 %v2515, %v2511
    %v2560 = vpack.c.b16 %v2516, %v2512
    %v2561 = vpack.c.b16 %v2517, %v2513
    %v2562 = vpack.c.b16 %v2518, %v2514
    %v2563 = vpack.c.b16 %v2523, %v2519
    %v2564 = vpack.c.b16 %v2524, %v2520
    %v2565 = vpack.c.b16 %v2525, %v2521
    %v2566 = vpack.c.b16 %v2526, %v2522
    %v2567 = vpack.c.b16 %v2531, %v2527
    %v2568 = vpack.c.b16 %v2532, %v2528
    %v2569 = vpack.c.b16 %v2533, %v2529
    %v2570 = vpack.c.b16 %v2534, %v2530
    %v2571 = vpack.c.b16 %v2539, %v2535
    %v2572 = vpack.c.b16 %v2540, %v2536
    %v2573 = vpack.c.b16 %v2541, %v2537
    %v2574 = vpack.c.b16 %v2542, %v2538
    %2607 = vmatprep.subr.bf16.mxu0 %v2572
    %2608 = vmatpush1.bf16.msra.mxu0 %v2571
    %2609 = vmatprep.subr.bf16.mxu0 %v2568
    %2610 = vmatpush1.bf16.msra.mxu0 %v2567
    %2611 = vmatprep.subr.bf16.mxu0 %v2564
    %2612 = vmatpush1.bf16.msra.mxu0 %v2563
    %2613 = vmatprep.subr.bf16.mxu0 %v2560
    %2614 = vmatpush1.bf16.msra.mxu0 %v2559
    %2615 = vmatprep.subr.bf16.mxu0 %v2556
    %2616 = vmatpush1.bf16.msra.mxu0 %v2555
    %2617 = vmatprep.subr.bf16.mxu0 %v2552
    %2618 = vmatpush1.bf16.msra.mxu0 %v2551
    %2619 = vmatprep.subr.bf16.mxu0 %v2548
    %2620 = vmatpush1.bf16.msra.mxu0 %v2547
    %2621 = vmatprep.subr.bf16.mxu0 %v2544
    %2622 = vmatpush1.bf16.msra.mxu0 %v2543
    %2623 = vmatprep.subr.bf16.mxu0 0
    %2624 = vmatpush2.bf16.msra.mxu0 0
    %2625 = vmatprep.subr.bf16.mxu0 0
    %2626 = vmatpush2.bf16.msra.mxu0 0
    %2627 = vmatprep.subr.bf16.mxu0 0
    %2628 = vmatpush2.bf16.msra.mxu0 0
    %2629 = vmatprep.subr.bf16.mxu0 0
    %2630 = vmatpush2.bf16.msra.mxu0 0
    %2631 = vmatprep.subr.bf16.mxu0 0
    %2632 = vmatpush2.bf16.msra.mxu0 0
    %2633 = vmatprep.subr.bf16.mxu0 0
    %2634 = vmatpush2.bf16.msra.mxu0 0
    %2635 = vmatprep.subr.bf16.mxu0 0
    %2636 = vmatpush2.bf16.msra.mxu0 0
    %2637 = vmatprep.subr.bf16.mxu0 0
    %2638 = vmatpush2.bf16.msra.mxu0 0
    %2639 = vmatprep.mubr.bf16.mxu0 0
    %2640 = vmatmul.mubr.bf16.gmra.mxu0 %v2414
    %v2641 = vpop.f32.mrf.mxu0
    %v2642 = vadd.f32 0.0, %v2641
    %v2643 = vpop.f32.mrf.mxu0
    %v2644 = vadd.f32 0.0, %v2643
    %v2645 = vpop.f32.mrf.mxu0
    %v2646 = vpop.f32.mrf.mxu0
    %2647 = vdwg.mxu0
    %2648 = vmatprep.subr.bf16.mxu0 %v2574
    %2649 = vmatpush1.bf16.msra.mxu0 %v2573
    %2650 = vmatprep.subr.bf16.mxu0 %v2570
    %2651 = vmatpush1.bf16.msra.mxu0 %v2569
    %2652 = vmatprep.subr.bf16.mxu0 %v2566
    %2653 = vmatpush1.bf16.msra.mxu0 %v2565
    %2654 = vmatprep.subr.bf16.mxu0 %v2562
    %2655 = vmatpush1.bf16.msra.mxu0 %v2561
    %2656 = vmatprep.subr.bf16.mxu0 %v2558
    %2657 = vmatpush1.bf16.msra.mxu0 %v2557
    %2658 = vmatprep.subr.bf16.mxu0 %v2554
    %2659 = vmatpush1.bf16.msra.mxu0 %v2553
    %2660 = vmatprep.subr.bf16.mxu0 %v2550
    %2661 = vmatpush1.bf16.msra.mxu0 %v2549
    %2662 = vmatprep.subr.bf16.mxu0 %v2546
    %2663 = vmatpush1.bf16.msra.mxu0 %v2545
    %2664 = vmatprep.subr.bf16.mxu0 0
    %2665 = vmatpush2.bf16.msra.mxu0 0
    %2666 = vmatprep.subr.bf16.mxu0 0
    %2667 = vmatpush2.bf16.msra.mxu0 0
    %2668 = vmatprep.subr.bf16.mxu0 0
    %2669 = vmatpush2.bf16.msra.mxu0 0
    %2670 = vmatprep.subr.bf16.mxu0 0
    %2671 = vmatpush2.bf16.msra.mxu0 0
    %2672 = vmatprep.subr.bf16.mxu0 0
    %2673 = vmatpush2.bf16.msra.mxu0 0
    %2674 = vmatprep.subr.bf16.mxu0 0
    %2675 = vmatpush2.bf16.msra.mxu0 0
    %2676 = vmatprep.subr.bf16.mxu0 0
    %2677 = vmatpush2.bf16.msra.mxu0 0
    %2678 = vmatprep.subr.bf16.mxu0 0
    %2679 = vmatpush2.bf16.msra.mxu0 0
    %2680 = vmatprep.mubr.bf16.mxu0 0
    %2681 = vmatmul.mubr.bf16.gmra.mxu0 %v2414
    %v2682 = vpop.f32.mrf.mxu0
    %v2683 = vadd.f32 0.0, %v2682
    %v2684 = vpop.f32.mrf.mxu0
    %v2685 = vadd.f32 0.0, %v2684
    %v2686 = vpop.f32.mrf.mxu0
    %v2687 = vpop.f32.mrf.mxu0
    %2688 = vdwg.mxu0
    %v2689 = vadd.f32 %v2410, %v2642
    %v2690 = vadd.f32 %v2411, %v2644
    %v2691 = vadd.f32 %v2412, %v2683
    %v2692 = vadd.f32 %v2413, %v2685
    %v2693 = vxor.u32 %v2689, 2147483648
    %v2694 = vmul.f32 %v2693, 1.442695
    %v2695 = vpow.pop %v2694
    %v2696 = vadd.f32 %v2695, 1.0
    %v2697 = vrcp.pop %v2696
    %v2698 = vmul.f32 1.0, %v2697
    %v2699 = vxor.u32 %v2690, 2147483648
    %v2700 = vmul.f32 %v2699, 1.442695
    %v2701 = vpow.pop %v2700
    %v2702 = vadd.f32 %v2701, 1.0
    %v2703 = vrcp.pop %v2702
    %v2704 = vmul.f32 1.0, %v2703
    %v2705 = vtanh.pop %v2691
    %v2706 = vxor.u32 %v2692, 2147483648
    %v2707 = vmul.f32 %v2706, 1.442695
    %v2708 = vpow.pop %v2707
    %v2709 = vadd.f32 %v2708, 1.0
    %v2710 = vrcp.pop %v2709
    %v2711 = vmul.f32 1.0, %v2710
    %v2712 = vmul.f32 %v2704, %v2402
    %v2713 = vmul.f32 %v2698, %v2705
    %v2714 = vadd.f32 %v2712, %v2713
    %v2715 = vtanh.pop %v2714
    %v2716 = vmul.f32 %v2711, %v2715
    %s2717 = scalar_lea.vmem [#allocation3], 48
    %2718 = vst [vmem:[%s2717] sm:$0xff] %v2716
    %s2719 = smul.u32 7, 4
    %s2720 = smul.addr %s2719, 8
    %s2721 = scalar_lea.vmem [#allocation2], %s2720
    %v2722 = vld [vmem:[%s2721] sm:$0xff]
    %v2723 = vld [vmem:[%s2721 + $0x8] sm:$0xff]
    %v2724 = vld [vmem:[%s2721 + $0x10] sm:$0xff]
    %v2725 = vld [vmem:[%s2721 + $0x18] sm:$0xff]
    %v2726 = vpack.c.bf16 %v2716, %v2716
    %v2727 = vld [vmem:[#allocation9] sm:$0xff]
    %v2728 = vld [vmem:[#allocation9 + $0x8] sm:$0xff]
    %v2729 = vld [vmem:[#allocation9 + $0x10] sm:$0xff]
    %v2730 = vld [vmem:[#allocation9 + $0x18] sm:$0xff]
    %v2731 = vld [vmem:[#allocation9 + $0x20] sm:$0xff]
    %v2732 = vld [vmem:[#allocation9 + $0x28] sm:$0xff]
    %v2733 = vld [vmem:[#allocation9 + $0x30] sm:$0xff]
    %v2734 = vld [vmem:[#allocation9 + $0x38] sm:$0xff]
    %v2735 = vld [vmem:[#allocation9 + $0x40] sm:$0xff]
    %v2736 = vld [vmem:[#allocation9 + $0x48] sm:$0xff]
    %v2737 = vld [vmem:[#allocation9 + $0x50] sm:$0xff]
    %v2738 = vld [vmem:[#allocation9 + $0x58] sm:$0xff]
    %v2739 = vld [vmem:[#allocation9 + $0x60] sm:$0xff]
    %v2740 = vld [vmem:[#allocation9 + $0x68] sm:$0xff]
    %v2741 = vld [vmem:[#allocation9 + $0x70] sm:$0xff]
    %v2742 = vld [vmem:[#allocation9 + $0x78] sm:$0xff]
    %v2743 = vld [vmem:[#allocation9 + $0x80] sm:$0xff]
    %v2744 = vld [vmem:[#allocation9 + $0x88] sm:$0xff]
    %v2745 = vld [vmem:[#allocation9 + $0x90] sm:$0xff]
    %v2746 = vld [vmem:[#allocation9 + $0x98] sm:$0xff]
    %v2747 = vld [vmem:[#allocation9 + $0xa0] sm:$0xff]
    %v2748 = vld [vmem:[#allocation9 + $0xa8] sm:$0xff]
    %v2749 = vld [vmem:[#allocation9 + $0xb0] sm:$0xff]
    %v2750 = vld [vmem:[#allocation9 + $0xb8] sm:$0xff]
    %v2751 = vld [vmem:[#allocation9 + $0xc0] sm:$0xff]
    %v2752 = vld [vmem:[#allocation9 + $0xc8] sm:$0xff]
    %v2753 = vld [vmem:[#allocation9 + $0xd0] sm:$0xff]
    %v2754 = vld [vmem:[#allocation9 + $0xd8] sm:$0xff]
    %v2755 = vld [vmem:[#allocation9 + $0xe0] sm:$0xff]
    %v2756 = vld [vmem:[#allocation9 + $0xe8] sm:$0xff]
    %v2757 = vld [vmem:[#allocation9 + $0xf0] sm:$0xff]
    %v2758 = vld [vmem:[#allocation9 + $0xf8] sm:$0xff]
    %v2791 = vunpack.c.l.b16 %v2727
    %v2792 = vunpack.c.h.b16 %v2727
    %v2793 = vunpack.c.l.b16 %v2728
    %v2794 = vunpack.c.h.b16 %v2728
    %v2795 = vunpack.c.l.b16 %v2729
    %v2796 = vunpack.c.h.b16 %v2729
    %v2797 = vunpack.c.l.b16 %v2730
    %v2798 = vunpack.c.h.b16 %v2730
    %v2799 = vunpack.c.l.b16 %v2731
    %v2800 = vunpack.c.h.b16 %v2731
    %v2801 = vunpack.c.l.b16 %v2732
    %v2802 = vunpack.c.h.b16 %v2732
    %v2803 = vunpack.c.l.b16 %v2733
    %v2804 = vunpack.c.h.b16 %v2733
    %v2805 = vunpack.c.l.b16 %v2734
    %v2806 = vunpack.c.h.b16 %v2734
    %v2807 = vunpack.c.l.b16 %v2735
    %v2808 = vunpack.c.h.b16 %v2735
    %v2809 = vunpack.c.l.b16 %v2736
    %v2810 = vunpack.c.h.b16 %v2736
    %v2811 = vunpack.c.l.b16 %v2737
    %v2812 = vunpack.c.h.b16 %v2737
    %v2813 = vunpack.c.l.b16 %v2738
    %v2814 = vunpack.c.h.b16 %v2738
    %v2815 = vunpack.c.l.b16 %v2739
    %v2816 = vunpack.c.h.b16 %v2739
    %v2817 = vunpack.c.l.b16 %v2740
    %v2818 = vunpack.c.h.b16 %v2740
    %v2819 = vunpack.c.l.b16 %v2741
    %v2820 = vunpack.c.h.b16 %v2741
    %v2821 = vunpack.c.l.b16 %v2742
    %v2822 = vunpack.c.h.b16 %v2742
    %v2823 = vunpack.c.l.b16 %v2743
    %v2824 = vunpack.c.h.b16 %v2743
    %v2825 = vunpack.c.l.b16 %v2744
    %v2826 = vunpack.c.h.b16 %v2744
    %v2827 = vunpack.c.l.b16 %v2745
    %v2828 = vunpack.c.h.b16 %v2745
    %v2829 = vunpack.c.l.b16 %v2746
    %v2830 = vunpack.c.h.b16 %v2746
    %v2831 = vunpack.c.l.b16 %v2747
    %v2832 = vunpack.c.h.b16 %v2747
    %v2833 = vunpack.c.l.b16 %v2748
    %v2834 = vunpack.c.h.b16 %v2748
    %v2835 = vunpack.c.l.b16 %v2749
    %v2836 = vunpack.c.h.b16 %v2749
    %v2837 = vunpack.c.l.b16 %v2750
    %v2838 = vunpack.c.h.b16 %v2750
    %v2839 = vunpack.c.l.b16 %v2751
    %v2840 = vunpack.c.h.b16 %v2751
    %v2841 = vunpack.c.l.b16 %v2752
    %v2842 = vunpack.c.h.b16 %v2752
    %v2843 = vunpack.c.l.b16 %v2753
    %v2844 = vunpack.c.h.b16 %v2753
    %v2845 = vunpack.c.l.b16 %v2754
    %v2846 = vunpack.c.h.b16 %v2754
    %v2847 = vunpack.c.l.b16 %v2755
    %v2848 = vunpack.c.h.b16 %v2755
    %v2849 = vunpack.c.l.b16 %v2756
    %v2850 = vunpack.c.h.b16 %v2756
    %v2851 = vunpack.c.l.b16 %v2757
    %v2852 = vunpack.c.h.b16 %v2757
    %v2853 = vunpack.c.l.b16 %v2758
    %v2854 = vunpack.c.h.b16 %v2758
    %v2855 = vpack.c.b16 %v2795, %v2791
    %v2856 = vpack.c.b16 %v2796, %v2792
    %v2857 = vpack.c.b16 %v2797, %v2793
    %v2858 = vpack.c.b16 %v2798, %v2794
    %v2859 = vpack.c.b16 %v2803, %v2799
    %v2860 = vpack.c.b16 %v2804, %v2800
    %v2861 = vpack.c.b16 %v2805, %v2801
    %v2862 = vpack.c.b16 %v2806, %v2802
    %v2863 = vpack.c.b16 %v2811, %v2807
    %v2864 = vpack.c.b16 %v2812, %v2808
    %v2865 = vpack.c.b16 %v2813, %v2809
    %v2866 = vpack.c.b16 %v2814, %v2810
    %v2867 = vpack.c.b16 %v2819, %v2815
    %v2868 = vpack.c.b16 %v2820, %v2816
    %v2869 = vpack.c.b16 %v2821, %v2817
    %v2870 = vpack.c.b16 %v2822, %v2818
    %v2871 = vpack.c.b16 %v2827, %v2823
    %v2872 = vpack.c.b16 %v2828, %v2824
    %v2873 = vpack.c.b16 %v2829, %v2825
    %v2874 = vpack.c.b16 %v2830, %v2826
    %v2875 = vpack.c.b16 %v2835, %v2831
    %v2876 = vpack.c.b16 %v2836, %v2832
    %v2877 = vpack.c.b16 %v2837, %v2833
    %v2878 = vpack.c.b16 %v2838, %v2834
    %v2879 = vpack.c.b16 %v2843, %v2839
    %v2880 = vpack.c.b16 %v2844, %v2840
    %v2881 = vpack.c.b16 %v2845, %v2841
    %v2882 = vpack.c.b16 %v2846, %v2842
    %v2883 = vpack.c.b16 %v2851, %v2847
    %v2884 = vpack.c.b16 %v2852, %v2848
    %v2885 = vpack.c.b16 %v2853, %v2849
    %v2886 = vpack.c.b16 %v2854, %v2850
    %2919 = vmatprep.subr.bf16.mxu0 %v2884
    %2920 = vmatpush1.bf16.msra.mxu0 %v2883
    %2921 = vmatprep.subr.bf16.mxu0 %v2880
    %2922 = vmatpush1.bf16.msra.mxu0 %v2879
    %2923 = vmatprep.subr.bf16.mxu0 %v2876
    %2924 = vmatpush1.bf16.msra.mxu0 %v2875
    %2925 = vmatprep.subr.bf16.mxu0 %v2872
    %2926 = vmatpush1.bf16.msra.mxu0 %v2871
    %2927 = vmatprep.subr.bf16.mxu0 %v2868
    %2928 = vmatpush1.bf16.msra.mxu0 %v2867
    %2929 = vmatprep.subr.bf16.mxu0 %v2864
    %2930 = vmatpush1.bf16.msra.mxu0 %v2863
    %2931 = vmatprep.subr.bf16.mxu0 %v2860
    %2932 = vmatpush1.bf16.msra.mxu0 %v2859
    %2933 = vmatprep.subr.bf16.mxu0 %v2856
    %2934 = vmatpush1.bf16.msra.mxu0 %v2855
    %2935 = vmatprep.subr.bf16.mxu0 0
    %2936 = vmatpush2.bf16.msra.mxu0 0
    %2937 = vmatprep.subr.bf16.mxu0 0
    %2938 = vmatpush2.bf16.msra.mxu0 0
    %2939 = vmatprep.subr.bf16.mxu0 0
    %2940 = vmatpush2.bf16.msra.mxu0 0
    %2941 = vmatprep.subr.bf16.mxu0 0
    %2942 = vmatpush2.bf16.msra.mxu0 0
    %2943 = vmatprep.subr.bf16.mxu0 0
    %2944 = vmatpush2.bf16.msra.mxu0 0
    %2945 = vmatprep.subr.bf16.mxu0 0
    %2946 = vmatpush2.bf16.msra.mxu0 0
    %2947 = vmatprep.subr.bf16.mxu0 0
    %2948 = vmatpush2.bf16.msra.mxu0 0
    %2949 = vmatprep.subr.bf16.mxu0 0
    %2950 = vmatpush2.bf16.msra.mxu0 0
    %2951 = vmatprep.mubr.bf16.mxu0 0
    %2952 = vmatmul.mubr.bf16.gmra.mxu0 %v2726
    %v2953 = vpop.f32.mrf.mxu0
    %v2954 = vadd.f32 0.0, %v2953
    %v2955 = vpop.f32.mrf.mxu0
    %v2956 = vadd.f32 0.0, %v2955
    %v2957 = vpop.f32.mrf.mxu0
    %v2958 = vpop.f32.mrf.mxu0
    %2959 = vdwg.mxu0
    %2960 = vmatprep.subr.bf16.mxu0 %v2886
    %2961 = vmatpush1.bf16.msra.mxu0 %v2885
    %2962 = vmatprep.subr.bf16.mxu0 %v2882
    %2963 = vmatpush1.bf16.msra.mxu0 %v2881
    %2964 = vmatprep.subr.bf16.mxu0 %v2878
    %2965 = vmatpush1.bf16.msra.mxu0 %v2877
    %2966 = vmatprep.subr.bf16.mxu0 %v2874
    %2967 = vmatpush1.bf16.msra.mxu0 %v2873
    %2968 = vmatprep.subr.bf16.mxu0 %v2870
    %2969 = vmatpush1.bf16.msra.mxu0 %v2869
    %2970 = vmatprep.subr.bf16.mxu0 %v2866
    %2971 = vmatpush1.bf16.msra.mxu0 %v2865
    %2972 = vmatprep.subr.bf16.mxu0 %v2862
    %2973 = vmatpush1.bf16.msra.mxu0 %v2861
    %2974 = vmatprep.subr.bf16.mxu0 %v2858
    %2975 = vmatpush1.bf16.msra.mxu0 %v2857
    %2976 = vmatprep.subr.bf16.mxu0 0
    %2977 = vmatpush2.bf16.msra.mxu0 0
    %2978 = vmatprep.subr.bf16.mxu0 0
    %2979 = vmatpush2.bf16.msra.mxu0 0
    %2980 = vmatprep.subr.bf16.mxu0 0
    %2981 = vmatpush2.bf16.msra.mxu0 0
    %2982 = vmatprep.subr.bf16.mxu0 0
    %2983 = vmatpush2.bf16.msra.mxu0 0
    %2984 = vmatprep.subr.bf16.mxu0 0
    %2985 = vmatpush2.bf16.msra.mxu0 0
    %2986 = vmatprep.subr.bf16.mxu0 0
    %2987 = vmatpush2.bf16.msra.mxu0 0
    %2988 = vmatprep.subr.bf16.mxu0 0
    %2989 = vmatpush2.bf16.msra.mxu0 0
    %2990 = vmatprep.subr.bf16.mxu0 0
    %2991 = vmatpush2.bf16.msra.mxu0 0
    %2992 = vmatprep.mubr.bf16.mxu0 0
    %2993 = vmatmul.mubr.bf16.gmra.mxu0 %v2726
    %v2994 = vpop.f32.mrf.mxu0
    %v2995 = vadd.f32 0.0, %v2994
    %v2996 = vpop.f32.mrf.mxu0
    %v2997 = vadd.f32 0.0, %v2996
    %v2998 = vpop.f32.mrf.mxu0
    %v2999 = vpop.f32.mrf.mxu0
    %3000 = vdwg.mxu0
    %v3001 = vadd.f32 %v2722, %v2954
    %v3002 = vadd.f32 %v2723, %v2956
    %v3003 = vadd.f32 %v2724, %v2995
    %v3004 = vadd.f32 %v2725, %v2997
    %v3005 = vxor.u32 %v3001, 2147483648
    %v3006 = vmul.f32 %v3005, 1.442695
    %v3007 = vpow.pop %v3006
    %v3008 = vadd.f32 %v3007, 1.0
    %v3009 = vrcp.pop %v3008
    %v3010 = vmul.f32 1.0, %v3009
    %v3011 = vxor.u32 %v3002, 2147483648
    %v3012 = vmul.f32 %v3011, 1.442695
    %v3013 = vpow.pop %v3012
    %v3014 = vadd.f32 %v3013, 1.0
    %v3015 = vrcp.pop %v3014
    %v3016 = vmul.f32 1.0, %v3015
    %v3017 = vtanh.pop %v3003
    %v3018 = vxor.u32 %v3004, 2147483648
    %v3019 = vmul.f32 %v3018, 1.442695
    %v3020 = vpow.pop %v3019
    %v3021 = vadd.f32 %v3020, 1.0
    %v3022 = vrcp.pop %v3021
    %v3023 = vmul.f32 1.0, %v3022
    %v3024 = vmul.f32 %v3016, %v2714
    %v3025 = vmul.f32 %v3010, %v3017
    %v3026 = vadd.f32 %v3024, %v3025
    %v3027 = vtanh.pop %v3026
    %v3028 = vmul.f32 %v3023, %v3027
    %s3029 = scalar_lea.vmem [#allocation3], 56
    %3030 = vst [vmem:[%s3029] sm:$0xff] %v3028
    %3031 = vst [vmem:[#allocation12] sm:$0xff] 0.0
    %v3032 = vld [vmem:[%s1] sm:$0xff]
    %v3033 = vld [vmem:[#allocation3] sm:$0xff]
    %v3034 = vld [vmem:[#allocation3 + $0x8] sm:$0xff]
    %v3035 = vld [vmem:[#allocation3 + $0x10] sm:$0xff]
    %v3036 = vld [vmem:[#allocation3 + $0x18] sm:$0xff]
    %v3037 = vld [vmem:[#allocation3 + $0x20] sm:$0xff]
    %v3038 = vld [vmem:[#allocation3 + $0x28] sm:$0xff]
    %v3039 = vld [vmem:[#allocation3 + $0x30] sm:$0xff]
    %v3040 = vld [vmem:[#allocation3 + $0x38] sm:$0xff]
    %v3041 = vmul.f32 %v3033, %v3028
    %v3042 = vmul.f32 %v3034, %v3028
    %v3043 = vmul.f32 %v3035, %v3028
    %v3044 = vmul.f32 %v3036, %v3028
    %v3045 = vmul.f32 %v3037, %v3028
    %v3046 = vmul.f32 %v3038, %v3028
    %v3047 = vmul.f32 %v3039, %v3028
    %v3048 = vmul.f32 %v3040, %v3028
    %3049 = vadd.xlane.f32.xlu0 %v3041
    %v3050 = vpop.xlane.xlu0 %3049
    %3051 = vadd.xlane.f32.xlu0 %v3042
    %v3052 = vpop.xlane.xlu0 %3051
    %3053 = vadd.xlane.f32.xlu0 %v3043
    %v3054 = vpop.xlane.xlu0 %3053
    %3055 = vadd.xlane.f32.xlu0 %v3044
    %v3056 = vpop.xlane.xlu0 %3055
    %3057 = vadd.xlane.f32.xlu0 %v3045
    %v3058 = vpop.xlane.xlu0 %3057
    %3059 = vadd.xlane.f32.xlu0 %v3046
    %v3060 = vpop.xlane.xlu0 %3059
    %3061 = vadd.xlane.f32.xlu0 %v3047
    %v3062 = vpop.xlane.xlu0 %3061
    %3063 = vadd.xlane.f32.xlu0 %v3048
    %v3064 = vpop.xlane.xlu0 %3063
    %v3065 = vmax.f32 %v3050, %v3058
    %v3066 = vmax.f32 %v3052, %v3060
    %v3067 = vmax.f32 %v3054, %v3062
    %v3068 = vmax.f32 %v3056, %v3064
    %v3069 = vmax.f32 %v3065, %v3066
    %v3070 = vmax.f32 %v3067, %v3068
    %v3071 = vmax.f32 %v3069, %v3070
    %v3072 = vsub.f32 %v3050, %v3071
    %v3073 = vsub.f32 %v3052, %v3071
    %v3074 = vsub.f32 %v3054, %v3071
    %v3075 = vsub.f32 %v3056, %v3071
    %v3076 = vsub.f32 %v3058, %v3071
    %v3077 = vsub.f32 %v3060, %v3071
    %v3078 = vsub.f32 %v3062, %v3071
    %v3079 = vsub.f32 %v3064, %v3071
    %v3080 = vmul.f32 %v3072, 1.442695
    %v3081 = vpow.pop %v3080
    %v3082 = vmul.f32 %v3073, 1.442695
    %v3083 = vpow.pop %v3082
    %v3084 = vmul.f32 %v3074, 1.442695
    %v3085 = vpow.pop %v3084
    %v3086 = vmul.f32 %v3075, 1.442695
    %v3087 = vpow.pop %v3086
    %v3088 = vmul.f32 %v3076, 1.442695
    %v3089 = vpow.pop %v3088
    %v3090 = vmul.f32 %v3077, 1.442695
    %v3091 = vpow.pop %v3090
    %v3092 = vmul.f32 %v3078, 1.442695
    %v3093 = vpow.pop %v3092
    %v3094 = vmul.f32 %v3079, 1.442695
    %v3095 = vpow.pop %v3094
    %v3096 = vadd.f32 %v3081, %v3083
    %v3097 = vadd.f32 %v3096, %v3085
    %v3098 = vadd.f32 %v3097, %v3087
    %v3099 = vadd.f32 %v3098, %v3089
    %v3100 = vadd.f32 %v3099, %v3091
    %v3101 = vadd.f32 %v3100, %v3093
    %v3102 = vadd.f32 %v3101, %v3095
    %v3103 = vrcp.pop %v3102
    %v3104 = vmul.f32 %v3081, %v3103
    %v3105 = vmul.f32 %v3083, %v3103
    %v3106 = vmul.f32 %v3085, %v3103
    %v3107 = vmul.f32 %v3087, %v3103
    %v3108 = vmul.f32 %v3089, %v3103
    %v3109 = vmul.f32 %v3091, %v3103
    %v3110 = vmul.f32 %v3093, %v3103
    %v3111 = vmul.f32 %v3095, %v3103
    %v3112 = vmul.f32 %v3104, %v3033
    %v3113 = vmul.f32 %v3105, %v3034
    %v3114 = vmul.f32 %v3106, %v3035
    %v3115 = vmul.f32 %v3107, %v3036
    %v3116 = vmul.f32 %v3108, %v3037
    %v3117 = vmul.f32 %v3109, %v3038
    %v3118 = vmul.f32 %v3110, %v3039
    %v3119 = vmul.f32 %v3111, %v3040
    %v3120 = vadd.f32 %v3112, %v3113
    %v3121 = vadd.f32 %v3120, %v3114
    %v3122 = vadd.f32 %v3121, %v3115
    %v3123 = vadd.f32 %v3122, %v3116
    %v3124 = vadd.f32 %v3123, %v3117
    %v3125 = vadd.f32 %v3124, %v3118
    %v3126 = vadd.f32 %v3125, %v3119
    %3127 = vset.pattern.permute.xlu0 0
    %3128 = vperm.xlu0 %3127, %v3032
    %v3129 = vpop.permute.xlu0 %3128
    %vm3130 = vcmp.eq.s32.totalorder %v3129, %v100
    %v3131 = vsel %vm3130, 1.0, 0.0
    %v3132 = vpack.c.bf16 %v3131, %v3131
    %v3133 = vpack.c.bf16 %v3126, %v3126
    %v3134 = vpack.c.bf16 %v3028, %v3028
    %v3135 = vld [vmem:[#allocation11] sm:$0xff]
    %v3136 = vld [vmem:[#allocation11 + $0x8] sm:$0xff]
    %v3137 = vld [vmem:[#allocation11 + $0x10] sm:$0xff]
    %v3138 = vld [vmem:[#allocation11 + $0x18] sm:$0xff]
    %v3139 = vld [vmem:[#allocation11 + $0x20] sm:$0xff]
    %v3140 = vld [vmem:[#allocation11 + $0x28] sm:$0xff]
    %v3141 = vld [vmem:[#allocation11 + $0x30] sm:$0xff]
    %v3142 = vld [vmem:[#allocation11 + $0x38] sm:$0xff]
    %v3143 = vld [vmem:[#allocation11 + $0x40] sm:$0xff]
    %v3144 = vld [vmem:[#allocation11 + $0x48] sm:$0xff]
    %v3145 = vld [vmem:[#allocation11 + $0x50] sm:$0xff]
    %v3146 = vld [vmem:[#allocation11 + $0x58] sm:$0xff]
    %v3147 = vld [vmem:[#allocation11 + $0x60] sm:$0xff]
    %v3148 = vld [vmem:[#allocation11 + $0x68] sm:$0xff]
    %v3149 = vld [vmem:[#allocation11 + $0x70] sm:$0xff]
    %v3150 = vld [vmem:[#allocation11 + $0x78] sm:$0xff]
    %v3151 = vld [vmem:[#allocation11 + $0x80] sm:$0xff]
    %v3152 = vld [vmem:[#allocation11 + $0x88] sm:$0xff]
    %v3153 = vld [vmem:[#allocation11 + $0x90] sm:$0xff]
    %v3154 = vld [vmem:[#allocation11 + $0x98] sm:$0xff]
    %v3155 = vld [vmem:[#allocation11 + $0xa0] sm:$0xff]
    %v3156 = vld [vmem:[#allocation11 + $0xa8] sm:$0xff]
    %v3157 = vld [vmem:[#allocation11 + $0xb0] sm:$0xff]
    %v3158 = vld [vmem:[#allocation11 + $0xb8] sm:$0xff]
    %v3159 = vld [vmem:[#allocation11 + $0xc0] sm:$0xff]
    %v3160 = vld [vmem:[#allocation11 + $0xc8] sm:$0xff]
    %v3161 = vld [vmem:[#allocation11 + $0xd0] sm:$0xff]
    %v3162 = vld [vmem:[#allocation11 + $0xd8] sm:$0xff]
    %v3163 = vld [vmem:[#allocation11 + $0xe0] sm:$0xff]
    %v3164 = vld [vmem:[#allocation11 + $0xe8] sm:$0xff]
    %v3165 = vld [vmem:[#allocation11 + $0xf0] sm:$0xff]
    %v3166 = vld [vmem:[#allocation11 + $0xf8] sm:$0xff]
    %v3167 = vld [vmem:[#allocation11 + $0x100] sm:$0xff]
    %v3168 = vld [vmem:[#allocation11 + $0x108] sm:$0xff]
    %v3169 = vld [vmem:[#allocation11 + $0x110] sm:$0xff]
    %v3170 = vld [vmem:[#allocation11 + $0x118] sm:$0xff]
    %v3171 = vld [vmem:[#allocation11 + $0x120] sm:$0xff]
    %v3172 = vld [vmem:[#allocation11 + $0x128] sm:$0xff]
    %v3173 = vld [vmem:[#allocation11 + $0x130] sm:$0xff]
    %v3174 = vld [vmem:[#allocation11 + $0x138] sm:$0xff]
    %v3175 = vld [vmem:[#allocation11 + $0x140] sm:$0xff]
    %v3176 = vld [vmem:[#allocation11 + $0x148] sm:$0xff]
    %v3177 = vld [vmem:[#allocation11 + $0x150] sm:$0xff]
    %v3178 = vld [vmem:[#allocation11 + $0x158] sm:$0xff]
    %v3179 = vld [vmem:[#allocation11 + $0x160] sm:$0xff]
    %v3180 = vld [vmem:[#allocation11 + $0x168] sm:$0xff]
    %v3181 = vld [vmem:[#allocation11 + $0x170] sm:$0xff]
    %v3182 = vld [vmem:[#allocation11 + $0x178] sm:$0xff]
    %v3183 = vld [vmem:[#allocation11 + $0x180] sm:$0xff]
    %v3184 = vld [vmem:[#allocation11 + $0x188] sm:$0xff]
    %v3185 = vld [vmem:[#allocation11 + $0x190] sm:$0xff]
    %v3186 = vld [vmem:[#allocation11 + $0x198] sm:$0xff]
    %v3187 = vld [vmem:[#allocation11 + $0x1a0] sm:$0xff]
    %v3188 = vld [vmem:[#allocation11 + $0x1a8] sm:$0xff]
    %v3189 = vld [vmem:[#allocation11 + $0x1b0] sm:$0xff]
    %v3190 = vld [vmem:[#allocation11 + $0x1b8] sm:$0xff]
    %v3191 = vld [vmem:[#allocation11 + $0x1c0] sm:$0xff]
    %v3192 = vld [vmem:[#allocation11 + $0x1c8] sm:$0xff]
    %v3193 = vld [vmem:[#allocation11 + $0x1d0] sm:$0xff]
    %v3194 = vld [vmem:[#allocation11 + $0x1d8] sm:$0xff]
    %v3195 = vld [vmem:[#allocation11 + $0x1e0] sm:$0xff]
    %v3196 = vld [vmem:[#allocation11 + $0x1e8] sm:$0xff]
    %v3197 = vld [vmem:[#allocation11 + $0x1f0] sm:$0xff]
    %v3198 = vld [vmem:[#allocation11 + $0x1f8] sm:$0xff]
    %v3199 = vld [vmem:[#allocation11 + $0x200] sm:$0xff]
    %v3200 = vld [vmem:[#allocation11 + $0x208] sm:$0xff]
    %v3201 = vld [vmem:[#allocation11 + $0x210] sm:$0xff]
    %v3202 = vld [vmem:[#allocation11 + $0x218] sm:$0xff]
    %v3203 = vld [vmem:[#allocation11 + $0x220] sm:$0xff]
    %v3204 = vld [vmem:[#allocation11 + $0x228] sm:$0xff]
    %v3205 = vld [vmem:[#allocation11 + $0x230] sm:$0xff]
    %v3206 = vld [vmem:[#allocation11 + $0x238] sm:$0xff]
    %v3207 = vld [vmem:[#allocation11 + $0x240] sm:$0xff]
    %v3208 = vld [vmem:[#allocation11 + $0x248] sm:$0xff]
    %v3209 = vld [vmem:[#allocation11 + $0x250] sm:$0xff]
    %v3210 = vld [vmem:[#allocation11 + $0x258] sm:$0xff]
    %v3211 = vld [vmem:[#allocation11 + $0x260] sm:$0xff]
    %v3212 = vld [vmem:[#allocation11 + $0x268] sm:$0xff]
    %v3213 = vld [vmem:[#allocation11 + $0x270] sm:$0xff]
    %v3214 = vld [vmem:[#allocation11 + $0x278] sm:$0xff]
    %v3215 = vld [vmem:[#allocation11 + $0x280] sm:$0xff]
    %v3216 = vld [vmem:[#allocation11 + $0x288] sm:$0xff]
    %v3217 = vld [vmem:[#allocation11 + $0x290] sm:$0xff]
    %v3218 = vld [vmem:[#allocation11 + $0x298] sm:$0xff]
    %v3219 = vld [vmem:[#allocation11 + $0x2a0] sm:$0xff]
    %v3220 = vld [vmem:[#allocation11 + $0x2a8] sm:$0xff]
    %v3221 = vld [vmem:[#allocation11 + $0x2b0] sm:$0xff]
    %v3222 = vld [vmem:[#allocation11 + $0x2b8] sm:$0xff]
    %v3223 = vld [vmem:[#allocation11 + $0x2c0] sm:$0xff]
    %v3224 = vld [vmem:[#allocation11 + $0x2c8] sm:$0xff]
    %v3225 = vld [vmem:[#allocation11 + $0x2d0] sm:$0xff]
    %v3226 = vld [vmem:[#allocation11 + $0x2d8] sm:$0xff]
    %v3227 = vld [vmem:[#allocation11 + $0x2e0] sm:$0xff]
    %v3228 = vld [vmem:[#allocation11 + $0x2e8] sm:$0xff]
    %v3229 = vld [vmem:[#allocation11 + $0x2f0] sm:$0xff]
    %v3230 = vld [vmem:[#allocation11 + $0x2f8] sm:$0xff]
    %v3231 = vld [vmem:[%s7] sm:$0xf]
    %v3233 = vlaneseq
    %v3234 = vshrl.u32 %v3233, 7
    %v3235 = vsub.s32 0, %v3234
    %v3236 = vrot.slane %v3231, %v3235
    %v3237 = vlaneseq
    %v3238 = vshrl.u32 %v3237, 7
    %v3239 = vsub.s32 1, %v3238
    %v3240 = vrot.slane %v3231, %v3239
    %v3241 = vlaneseq
    %v3242 = vshrl.u32 %v3241, 7
    %v3243 = vsub.s32 2, %v3242
    %v3244 = vrot.slane %v3231, %v3243
    %v3245 = vlaneseq
    %v3246 = vshrl.u32 %v3245, 7
    %v3247 = vsub.s32 3, %v3246
    %v3248 = vrot.slane %v3231, %v3247
    %v3349 = vunpack.c.l.b16 %v3135
    %v3350 = vunpack.c.h.b16 %v3135
    %v3351 = vunpack.c.l.b16 %v3136
    %v3352 = vunpack.c.h.b16 %v3136
    %v3353 = vunpack.c.l.b16 %v3137
    %v3354 = vunpack.c.h.b16 %v3137
    %v3355 = vunpack.c.l.b16 %v3138
    %v3356 = vunpack.c.h.b16 %v3138
    %v3357 = vunpack.c.l.b16 %v3139
    %v3358 = vunpack.c.h.b16 %v3139
    %v3359 = vunpack.c.l.b16 %v3140
    %v3360 = vunpack.c.h.b16 %v3140
    %v3361 = vunpack.c.l.b16 %v3141
    %v3362 = vunpack.c.h.b16 %v3141
    %v3363 = vunpack.c.l.b16 %v3142
    %v3364 = vunpack.c.h.b16 %v3142
    %v3365 = vunpack.c.l.b16 %v3143
    %v3366 = vunpack.c.h.b16 %v3143
    %v3367 = vunpack.c.l.b16 %v3144
    %v3368 = vunpack.c.h.b16 %v3144
    %v3369 = vunpack.c.l.b16 %v3145
    %v3370 = vunpack.c.h.b16 %v3145
    %v3371 = vunpack.c.l.b16 %v3146
    %v3372 = vunpack.c.h.b16 %v3146
    %v3373 = vunpack.c.l.b16 %v3147
    %v3374 = vunpack.c.h.b16 %v3147
    %v3375 = vunpack.c.l.b16 %v3148
    %v3376 = vunpack.c.h.b16 %v3148
    %v3377 = vunpack.c.l.b16 %v3149
    %v3378 = vunpack.c.h.b16 %v3149
    %v3379 = vunpack.c.l.b16 %v3150
    %v3380 = vunpack.c.h.b16 %v3150
    %v3381 = vunpack.c.l.b16 %v3151
    %v3382 = vunpack.c.h.b16 %v3151
    %v3383 = vunpack.c.l.b16 %v3152
    %v3384 = vunpack.c.h.b16 %v3152
    %v3385 = vunpack.c.l.b16 %v3153
    %v3386 = vunpack.c.h.b16 %v3153
    %v3387 = vunpack.c.l.b16 %v3154
    %v3388 = vunpack.c.h.b16 %v3154
    %v3389 = vunpack.c.l.b16 %v3155
    %v3390 = vunpack.c.h.b16 %v3155
    %v3391 = vunpack.c.l.b16 %v3156
    %v3392 = vunpack.c.h.b16 %v3156
    %v3393 = vunpack.c.l.b16 %v3157
    %v3394 = vunpack.c.h.b16 %v3157
    %v3395 = vunpack.c.l.b16 %v3158
    %v3396 = vunpack.c.h.b16 %v3158
    %v3397 = vunpack.c.l.b16 %v3159
    %v3398 = vunpack.c.h.b16 %v3159
    %v3399 = vunpack.c.l.b16 %v3160
    %v3400 = vunpack.c.h.b16 %v3160
    %v3401 = vunpack.c.l.b16 %v3161
    %v3402 = vunpack.c.h.b16 %v3161
    %v3403 = vunpack.c.l.b16 %v3162
    %v3404 = vunpack.c.h.b16 %v3162
    %v3405 = vunpack.c.l.b16 %v3163
    %v3406 = vunpack.c.h.b16 %v3163
    %v3407 = vunpack.c.l.b16 %v3164
    %v3408 = vunpack.c.h.b16 %v3164
    %v3409 = vunpack.c.l.b16 %v3165
    %v3410 = vunpack.c.h.b16 %v3165
    %v3411 = vunpack.c.l.b16 %v3166
    %v3412 = vunpack.c.h.b16 %v3166
    %v3413 = vunpack.c.l.b16 %v3167
    %v3414 = vunpack.c.h.b16 %v3167
    %v3415 = vunpack.c.l.b16 %v3168
    %v3416 = vunpack.c.h.b16 %v3168
    %v3417 = vunpack.c.l.b16 %v3169
    %v3418 = vunpack.c.h.b16 %v3169
    %v3419 = vunpack.c.l.b16 %v3170
    %v3420 = vunpack.c.h.b16 %v3170
    %v3421 = vunpack.c.l.b16 %v3171
    %v3422 = vunpack.c.h.b16 %v3171
    %v3423 = vunpack.c.l.b16 %v3172
    %v3424 = vunpack.c.h.b16 %v3172
    %v3425 = vunpack.c.l.b16 %v3173
    %v3426 = vunpack.c.h.b16 %v3173
    %v3427 = vunpack.c.l.b16 %v3174
    %v3428 = vunpack.c.h.b16 %v3174
    %v3429 = vunpack.c.l.b16 %v3175
    %v3430 = vunpack.c.h.b16 %v3175
    %v3431 = vunpack.c.l.b16 %v3176
    %v3432 = vunpack.c.h.b16 %v3176
    %v3433 = vunpack.c.l.b16 %v3177
    %v3434 = vunpack.c.h.b16 %v3177
    %v3435 = vunpack.c.l.b16 %v3178
    %v3436 = vunpack.c.h.b16 %v3178
    %v3437 = vunpack.c.l.b16 %v3179
    %v3438 = vunpack.c.h.b16 %v3179
    %v3439 = vunpack.c.l.b16 %v3180
    %v3440 = vunpack.c.h.b16 %v3180
    %v3441 = vunpack.c.l.b16 %v3181
    %v3442 = vunpack.c.h.b16 %v3181
    %v3443 = vunpack.c.l.b16 %v3182
    %v3444 = vunpack.c.h.b16 %v3182
    %v3445 = vunpack.c.l.b16 %v3183
    %v3446 = vunpack.c.h.b16 %v3183
    %v3447 = vunpack.c.l.b16 %v3184
    %v3448 = vunpack.c.h.b16 %v3184
    %v3449 = vunpack.c.l.b16 %v3185
    %v3450 = vunpack.c.h.b16 %v3185
    %v3451 = vunpack.c.l.b16 %v3186
    %v3452 = vunpack.c.h.b16 %v3186
    %v3453 = vunpack.c.l.b16 %v3187
    %v3454 = vunpack.c.h.b16 %v3187
    %v3455 = vunpack.c.l.b16 %v3188
    %v3456 = vunpack.c.h.b16 %v3188
    %v3457 = vunpack.c.l.b16 %v3189
    %v3458 = vunpack.c.h.b16 %v3189
    %v3459 = vunpack.c.l.b16 %v3190
    %v3460 = vunpack.c.h.b16 %v3190
    %v3461 = vunpack.c.l.b16 %v3191
    %v3462 = vunpack.c.h.b16 %v3191
    %v3463 = vunpack.c.l.b16 %v3192
    %v3464 = vunpack.c.h.b16 %v3192
    %v3465 = vunpack.c.l.b16 %v3193
    %v3466 = vunpack.c.h.b16 %v3193
    %v3467 = vunpack.c.l.b16 %v3194
    %v3468 = vunpack.c.h.b16 %v3194
    %v3469 = vunpack.c.l.b16 %v3195
    %v3470 = vunpack.c.h.b16 %v3195
    %v3471 = vunpack.c.l.b16 %v3196
    %v3472 = vunpack.c.h.b16 %v3196
    %v3473 = vunpack.c.l.b16 %v3197
    %v3474 = vunpack.c.h.b16 %v3197
    %v3475 = vunpack.c.l.b16 %v3198
    %v3476 = vunpack.c.h.b16 %v3198
    %v3477 = vunpack.c.l.b16 %v3199
    %v3478 = vunpack.c.h.b16 %v3199
    %v3479 = vunpack.c.l.b16 %v3200
    %v3480 = vunpack.c.h.b16 %v3200
    %v3481 = vunpack.c.l.b16 %v3201
    %v3482 = vunpack.c.h.b16 %v3201
    %v3483 = vunpack.c.l.b16 %v3202
    %v3484 = vunpack.c.h.b16 %v3202
    %v3485 = vunpack.c.l.b16 %v3203
    %v3486 = vunpack.c.h.b16 %v3203
    %v3487 = vunpack.c.l.b16 %v3204
    %v3488 = vunpack.c.h.b16 %v3204
    %v3489 = vunpack.c.l.b16 %v3205
    %v3490 = vunpack.c.h.b16 %v3205
    %v3491 = vunpack.c.l.b16 %v3206
    %v3492 = vunpack.c.h.b16 %v3206
    %v3493 = vunpack.c.l.b16 %v3207
    %v3494 = vunpack.c.h.b16 %v3207
    %v3495 = vunpack.c.l.b16 %v3208
    %v3496 = vunpack.c.h.b16 %v3208
    %v3497 = vunpack.c.l.b16 %v3209
    %v3498 = vunpack.c.h.b16 %v3209
    %v3499 = vunpack.c.l.b16 %v3210
    %v3500 = vunpack.c.h.b16 %v3210
    %v3501 = vunpack.c.l.b16 %v3211
    %v3502 = vunpack.c.h.b16 %v3211
    %v3503 = vunpack.c.l.b16 %v3212
    %v3504 = vunpack.c.h.b16 %v3212
    %v3505 = vunpack.c.l.b16 %v3213
    %v3506 = vunpack.c.h.b16 %v3213
    %v3507 = vunpack.c.l.b16 %v3214
    %v3508 = vunpack.c.h.b16 %v3214
    %v3509 = vunpack.c.l.b16 %v3215
    %v3510 = vunpack.c.h.b16 %v3215
    %v3511 = vunpack.c.l.b16 %v3216
    %v3512 = vunpack.c.h.b16 %v3216
    %v3513 = vunpack.c.l.b16 %v3217
    %v3514 = vunpack.c.h.b16 %v3217
    %v3515 = vunpack.c.l.b16 %v3218
    %v3516 = vunpack.c.h.b16 %v3218
    %v3517 = vunpack.c.l.b16 %v3219
    %v3518 = vunpack.c.h.b16 %v3219
    %v3519 = vunpack.c.l.b16 %v3220
    %v3520 = vunpack.c.h.b16 %v3220
    %v3521 = vunpack.c.l.b16 %v3221
    %v3522 = vunpack.c.h.b16 %v3221
    %v3523 = vunpack.c.l.b16 %v3222
    %v3524 = vunpack.c.h.b16 %v3222
    %v3525 = vunpack.c.l.b16 %v3223
    %v3526 = vunpack.c.h.b16 %v3223
    %v3527 = vunpack.c.l.b16 %v3224
    %v3528 = vunpack.c.h.b16 %v3224
    %v3529 = vunpack.c.l.b16 %v3225
    %v3530 = vunpack.c.h.b16 %v3225
    %v3531 = vunpack.c.l.b16 %v3226
    %v3532 = vunpack.c.h.b16 %v3226
    %v3533 = vunpack.c.l.b16 %v3227
    %v3534 = vunpack.c.h.b16 %v3227
    %v3535 = vunpack.c.l.b16 %v3228
    %v3536 = vunpack.c.h.b16 %v3228
    %v3537 = vunpack.c.l.b16 %v3229
    %v3538 = vunpack.c.h.b16 %v3229
    %v3539 = vunpack.c.l.b16 %v3230
    %v3540 = vunpack.c.h.b16 %v3230
    %v3541 = vpack.c.b16 %v3353, %v3349
    %v3542 = vpack.c.b16 %v3354, %v3350
    %v3543 = vpack.c.b16 %v3355, %v3351
    %v3544 = vpack.c.b16 %v3356, %v3352
    %v3545 = vpack.c.b16 %v3361, %v3357
    %v3546 = vpack.c.b16 %v3362, %v3358
    %v3547 = vpack.c.b16 %v3363, %v3359
    %v3548 = vpack.c.b16 %v3364, %v3360
    %v3549 = vpack.c.b16 %v3369, %v3365
    %v3550 = vpack.c.b16 %v3370, %v3366
    %v3551 = vpack.c.b16 %v3371, %v3367
    %v3552 = vpack.c.b16 %v3372, %v3368
    %v3553 = vpack.c.b16 %v3377, %v3373
    %v3554 = vpack.c.b16 %v3378, %v3374
    %v3555 = vpack.c.b16 %v3379, %v3375
    %v3556 = vpack.c.b16 %v3380, %v3376
    %v3557 = vpack.c.b16 %v3385, %v3381
    %v3558 = vpack.c.b16 %v3386, %v3382
    %v3559 = vpack.c.b16 %v3387, %v3383
    %v3560 = vpack.c.b16 %v3388, %v3384
    %v3561 = vpack.c.b16 %v3393, %v3389
    %v3562 = vpack.c.b16 %v3394, %v3390
    %v3563 = vpack.c.b16 %v3395, %v3391
    %v3564 = vpack.c.b16 %v3396, %v3392
    %v3565 = vpack.c.b16 %v3401, %v3397
    %v3566 = vpack.c.b16 %v3402, %v3398
    %v3567 = vpack.c.b16 %v3403, %v3399
    %v3568 = vpack.c.b16 %v3404, %v3400
    %v3569 = vpack.c.b16 %v3409, %v3405
    %v3570 = vpack.c.b16 %v3410, %v3406
    %v3571 = vpack.c.b16 %v3411, %v3407
    %v3572 = vpack.c.b16 %v3412, %v3408
    %v3573 = vpack.c.b16 %v3417, %v3413
    %v3574 = vpack.c.b16 %v3418, %v3414
    %v3575 = vpack.c.b16 %v3419, %v3415
    %v3576 = vpack.c.b16 %v3420, %v3416
    %v3577 = vpack.c.b16 %v3425, %v3421
    %v3578 = vpack.c.b16 %v3426, %v3422
    %v3579 = vpack.c.b16 %v3427, %v3423
    %v3580 = vpack.c.b16 %v3428, %v3424
    %v3581 = vpack.c.b16 %v3433, %v3429
    %v3582 = vpack.c.b16 %v3434, %v3430
    %v3583 = vpack.c.b16 %v3435, %v3431
    %v3584 = vpack.c.b16 %v3436, %v3432
    %v3585 = vpack.c.b16 %v3441, %v3437
    %v3586 = vpack.c.b16 %v3442, %v3438
    %v3587 = vpack.c.b16 %v3443, %v3439
    %v3588 = vpack.c.b16 %v3444, %v3440
    %v3589 = vpack.c.b16 %v3449, %v3445
    %v3590 = vpack.c.b16 %v3450, %v3446
    %v3591 = vpack.c.b16 %v3451, %v3447
    %v3592 = vpack.c.b16 %v3452, %v3448
    %v3593 = vpack.c.b16 %v3457, %v3453
    %v3594 = vpack.c.b16 %v3458, %v3454
    %v3595 = vpack.c.b16 %v3459, %v3455
    %v3596 = vpack.c.b16 %v3460, %v3456
    %v3597 = vpack.c.b16 %v3465, %v3461
    %v3598 = vpack.c.b16 %v3466, %v3462
    %v3599 = vpack.c.b16 %v3467, %v3463
    %v3600 = vpack.c.b16 %v3468, %v3464
    %v3601 = vpack.c.b16 %v3473, %v3469
    %v3602 = vpack.c.b16 %v3474, %v3470
    %v3603 = vpack.c.b16 %v3475, %v3471
    %v3604 = vpack.c.b16 %v3476, %v3472
    %v3605 = vpack.c.b16 %v3481, %v3477
    %v3606 = vpack.c.b16 %v3482, %v3478
    %v3607 = vpack.c.b16 %v3483, %v3479
    %v3608 = vpack.c.b16 %v3484, %v3480
    %v3609 = vpack.c.b16 %v3489, %v3485
    %v3610 = vpack.c.b16 %v3490, %v3486
    %v3611 = vpack.c.b16 %v3491, %v3487
    %v3612 = vpack.c.b16 %v3492, %v3488
    %v3613 = vpack.c.b16 %v3497, %v3493
    %v3614 = vpack.c.b16 %v3498, %v3494
    %v3615 = vpack.c.b16 %v3499, %v3495
    %v3616 = vpack.c.b16 %v3500, %v3496
    %v3617 = vpack.c.b16 %v3505, %v3501
    %v3618 = vpack.c.b16 %v3506, %v3502
    %v3619 = vpack.c.b16 %v3507, %v3503
    %v3620 = vpack.c.b16 %v3508, %v3504
    %v3621 = vpack.c.b16 %v3513, %v3509
    %v3622 = vpack.c.b16 %v3514, %v3510
    %v3623 = vpack.c.b16 %v3515, %v3511
    %v3624 = vpack.c.b16 %v3516, %v3512
    %v3625 = vpack.c.b16 %v3521, %v3517
    %v3626 = vpack.c.b16 %v3522, %v3518
    %v3627 = vpack.c.b16 %v3523, %v3519
    %v3628 = vpack.c.b16 %v3524, %v3520
    %v3629 = vpack.c.b16 %v3529, %v3525
    %v3630 = vpack.c.b16 %v3530, %v3526
    %v3631 = vpack.c.b16 %v3531, %v3527
    %v3632 = vpack.c.b16 %v3532, %v3528
    %v3633 = vpack.c.b16 %v3537, %v3533
    %v3634 = vpack.c.b16 %v3538, %v3534
    %v3635 = vpack.c.b16 %v3539, %v3535
    %v3636 = vpack.c.b16 %v3540, %v3536
    %3733 = vmatprep.subr.bf16.mxu0 %v3570
    %3734 = vmatpush1.bf16.msra.mxu0 %v3569
    %3735 = vmatprep.subr.bf16.mxu0 %v3566
    %3736 = vmatpush1.bf16.msra.mxu0 %v3565
    %3737 = vmatprep.subr.bf16.mxu0 %v3562
    %3738 = vmatpush1.bf16.msra.mxu0 %v3561
    %3739 = vmatprep.subr.bf16.mxu0 %v3558
    %3740 = vmatpush1.bf16.msra.mxu0 %v3557
    %3741 = vmatprep.subr.bf16.mxu0 %v3554
    %3742 = vmatpush1.bf16.msra.mxu0 %v3553
    %3743 = vmatprep.subr.bf16.mxu0 %v3550
    %3744 = vmatpush1.bf16.msra.mxu0 %v3549
    %3745 = vmatprep.subr.bf16.mxu0 %v3546
    %3746 = vmatpush1.bf16.msra.mxu0 %v3545
    %3747 = vmatprep.subr.bf16.mxu0 %v3542
    %3748 = vmatpush1.bf16.msra.mxu0 %v3541
    %3749 = vmatprep.subr.bf16.mxu0 %v3602
    %3750 = vmatpush2.bf16.msra.mxu0 %v3601
    %3751 = vmatprep.subr.bf16.mxu0 %v3598
    %3752 = vmatpush2.bf16.msra.mxu0 %v3597
    %3753 = vmatprep.subr.bf16.mxu0 %v3594
    %3754 = vmatpush2.bf16.msra.mxu0 %v3593
    %3755 = vmatprep.subr.bf16.mxu0 %v3590
    %3756 = vmatpush2.bf16.msra.mxu0 %v3589
    %3757 = vmatprep.subr.bf16.mxu0 %v3586
    %3758 = vmatpush2.bf16.msra.mxu0 %v3585
    %3759 = vmatprep.subr.bf16.mxu0 %v3582
    %3760 = vmatpush2.bf16.msra.mxu0 %v3581
    %3761 = vmatprep.subr.bf16.mxu0 %v3578
    %3762 = vmatpush2.bf16.msra.mxu0 %v3577
    %3763 = vmatprep.subr.bf16.mxu0 %v3574
    %3764 = vmatpush2.bf16.msra.mxu0 %v3573
    %3765 = vmatprep.mubr.bf16.mxu0 %v3133
    %3766 = vmatmul.mubr.bf16.gmra.mxu0 %v3132
    %v3767 = vpop.f32.mrf.mxu0
    %v3768 = vadd.f32 %v3236, %v3767
    %v3769 = vpop.f32.mrf.mxu0
    %v3770 = vadd.f32 %v3240, %v3769
    %v3771 = vpop.f32.mrf.mxu0
    %v3772 = vpop.f32.mrf.mxu0
    %3773 = vdwg.mxu0
    %3774 = vmatprep.subr.bf16.mxu0 %v3634
    %3775 = vmatpush1.bf16.msra.mxu0 %v3633
    %3776 = vmatprep.subr.bf16.mxu0 %v3630
    %3777 = vmatpush1.bf16.msra.mxu0 %v3629
    %3778 = vmatprep.subr.bf16.mxu0 %v3626
    %3779 = vmatpush1.bf16.msra.mxu0 %v3625
    %3780 = vmatprep.subr.bf16.mxu0 %v3622
    %3781 = vmatpush1.bf16.msra.mxu0 %v3621
    %3782 = vmatprep.subr.bf16.mxu0 %v3618
    %3783 = vmatpush1.bf16.msra.mxu0 %v3617
    %3784 = vmatprep.subr.bf16.mxu0 %v3614
    %3785 = vmatpush1.bf16.msra.mxu0 %v3613
    %3786 = vmatprep.subr.bf16.mxu0 %v3610
    %3787 = vmatpush1.bf16.msra.mxu0 %v3609
    %3788 = vmatprep.subr.bf16.mxu0 %v3606
    %3789 = vmatpush1.bf16.msra.mxu0 %v3605
    %3790 = vmatprep.subr.bf16.mxu0 0
    %3791 = vmatpush2.bf16.msra.mxu0 0
    %3792 = vmatprep.subr.bf16.mxu0 0
    %3793 = vmatpush2.bf16.msra.mxu0 0
    %3794 = vmatprep.subr.bf16.mxu0 0
    %3795 = vmatpush2.bf16.msra.mxu0 0
    %3796 = vmatprep.subr.bf16.mxu0 0
    %3797 = vmatpush2.bf16.msra.mxu0 0
    %3798 = vmatprep.subr.bf16.mxu0 0
    %3799 = vmatpush2.bf16.msra.mxu0 0
    %3800 = vmatprep.subr.bf16.mxu0 0
    %3801 = vmatpush2.bf16.msra.mxu0 0
    %3802 = vmatprep.subr.bf16.mxu0 0
    %3803 = vmatpush2.bf16.msra.mxu0 0
    %3804 = vmatprep.subr.bf16.mxu0 0
    %3805 = vmatpush2.bf16.msra.mxu0 0
    %3806 = vmatprep.mubr.bf16.mxu0 0
    %3807 = vmatmul.mubr.bf16.gmra.mxu0 %v3134
    %v3808 = vpop.f32.mrf.mxu0
    %v3809 = vadd.f32 %v3768, %v3808
    %v3810 = vpop.f32.mrf.mxu0
    %v3811 = vadd.f32 %v3770, %v3810
    %v3812 = vpop.f32.mrf.mxu0
    %v3813 = vpop.f32.mrf.mxu0
    %3814 = vdwg.mxu0
    %3815 = vmatprep.subr.bf16.mxu0 %v3572
    %3816 = vmatpush1.bf16.msra.mxu0 %v3571
    %3817 = vmatprep.subr.bf16.mxu0 %v3568
    %3818 = vmatpush1.bf16.msra.mxu0 %v3567
    %3819 = vmatprep.subr.bf16.mxu0 %v3564
    %3820 = vmatpush1.bf16.msra.mxu0 %v3563
    %3821 = vmatprep.subr.bf16.mxu0 %v3560
    %3822 = vmatpush1.bf16.msra.mxu0 %v3559
    %3823 = vmatprep.subr.bf16.mxu0 %v3556
    %3824 = vmatpush1.bf16.msra.mxu0 %v3555
    %3825 = vmatprep.subr.bf16.mxu0 %v3552
    %3826 = vmatpush1.bf16.msra.mxu0 %v3551
    %3827 = vmatprep.subr.bf16.mxu0 %v3548
    %3828 = vmatpush1.bf16.msra.mxu0 %v3547
    %3829 = vmatprep.subr.bf16.mxu0 %v3544
    %3830 = vmatpush1.bf16.msra.mxu0 %v3543
    %3831 = vmatprep.subr.bf16.mxu0 %v3604
    %3832 = vmatpush2.bf16.msra.mxu0 %v3603
    %3833 = vmatprep.subr.bf16.mxu0 %v3600
    %3834 = vmatpush2.bf16.msra.mxu0 %v3599
    %3835 = vmatprep.subr.bf16.mxu0 %v3596
    %3836 = vmatpush2.bf16.msra.mxu0 %v3595
    %3837 = vmatprep.subr.bf16.mxu0 %v3592
    %3838 = vmatpush2.bf16.msra.mxu0 %v3591
    %3839 = vmatprep.subr.bf16.mxu0 %v3588
    %3840 = vmatpush2.bf16.msra.mxu0 %v3587
    %3841 = vmatprep.subr.bf16.mxu0 %v3584
    %3842 = vmatpush2.bf16.msra.mxu0 %v3583
    %3843 = vmatprep.subr.bf16.mxu0 %v3580
    %3844 = vmatpush2.bf16.msra.mxu0 %v3579
    %3845 = vmatprep.subr.bf16.mxu0 %v3576
    %3846 = vmatpush2.bf16.msra.mxu0 %v3575
    %3847 = vmatprep.mubr.bf16.mxu0 %v3133
    %3848 = vmatmul.mubr.bf16.gmra.mxu0 %v3132
    %v3849 = vpop.f32.mrf.mxu0
    %v3850 = vadd.f32 %v3244, %v3849
    %v3851 = vpop.f32.mrf.mxu0
    %v3852 = vadd.f32 %v3248, %v3851
    %v3853 = vpop.f32.mrf.mxu0
    %v3854 = vpop.f32.mrf.mxu0
    %3855 = vdwg.mxu0
    %3856 = vmatprep.subr.bf16.mxu0 %v3636
    %3857 = vmatpush1.bf16.msra.mxu0 %v3635
    %3858 = vmatprep.subr.bf16.mxu0 %v3632
    %3859 = vmatpush1.bf16.msra.mxu0 %v3631
    %3860 = vmatprep.subr.bf16.mxu0 %v3628
    %3861 = vmatpush1.bf16.msra.mxu0 %v3627
    %3862 = vmatprep.subr.bf16.mxu0 %v3624
    %3863 = vmatpush1.bf16.msra.mxu0 %v3623
    %3864 = vmatprep.subr.bf16.mxu0 %v3620
    %3865 = vmatpush1.bf16.msra.mxu0 %v3619
    %3866 = vmatprep.subr.bf16.mxu0 %v3616
    %3867 = vmatpush1.bf16.msra.mxu0 %v3615
    %3868 = vmatprep.subr.bf16.mxu0 %v3612
    %3869 = vmatpush1.bf16.msra.mxu0 %v3611
    %3870 = vmatprep.subr.bf16.mxu0 %v3608
    %3871 = vmatpush1.bf16.msra.mxu0 %v3607
    %3872 = vmatprep.subr.bf16.mxu0 0
    %3873 = vmatpush2.bf16.msra.mxu0 0
    %3874 = vmatprep.subr.bf16.mxu0 0
    %3875 = vmatpush2.bf16.msra.mxu0 0
    %3876 = vmatprep.subr.bf16.mxu0 0
    %3877 = vmatpush2.bf16.msra.mxu0 0
    %3878 = vmatprep.subr.bf16.mxu0 0
    %3879 = vmatpush2.bf16.msra.mxu0 0
    %3880 = vmatprep.subr.bf16.mxu0 0
    %3881 = vmatpush2.bf16.msra.mxu0 0
    %3882 = vmatprep.subr.bf16.mxu0 0
    %3883 = vmatpush2.bf16.msra.mxu0 0
    %3884 = vmatprep.subr.bf16.mxu0 0
    %3885 = vmatpush2.bf16.msra.mxu0 0
    %3886 = vmatprep.subr.bf16.mxu0 0
    %3887 = vmatpush2.bf16.msra.mxu0 0
    %3888 = vmatprep.mubr.bf16.mxu0 0
    %3889 = vmatmul.mubr.bf16.gmra.mxu0 %v3134
    %v3890 = vpop.f32.mrf.mxu0
    %v3891 = vadd.f32 %v3850, %v3890
    %v3892 = vpop.f32.mrf.mxu0
    %v3893 = vadd.f32 %v3852, %v3892
    %v3894 = vpop.f32.mrf.mxu0
    %v3895 = vpop.f32.mrf.mxu0
    %3896 = vdwg.mxu0
    %v3897 = vxor.u32 %v3809, 2147483648
    %v3898 = vmul.f32 %v3897, 1.442695
    %v3899 = vpow.pop %v3898
    %v3900 = vadd.f32 %v3899, 1.0
    %v3901 = vrcp.pop %v3900
    %v3902 = vmul.f32 1.0, %v3901
    %v3903 = vxor.u32 %v3811, 2147483648
    %v3904 = vmul.f32 %v3903, 1.442695
    %v3905 = vpow.pop %v3904
    %v3906 = vadd.f32 %v3905, 1.0
    %v3907 = vrcp.pop %v3906
    %v3908 = vmul.f32 1.0, %v3907
    %v3909 = vtanh.pop %v3891
    %v3910 = vxor.u32 %v3893, 2147483648
    %v3911 = vmul.f32 %v3910, 1.442695
    %v3912 = vpow.pop %v3911
    %v3913 = vadd.f32 %v3912, 1.0
    %v3914 = vrcp.pop %v3913
    %v3915 = vmul.f32 1.0, %v3914
    %v3916 = vmul.f32 %v3908, %v3026
    %v3917 = vmul.f32 %v3902, %v3909
    %v3918 = vadd.f32 %v3916, %v3917
    %v3919 = vtanh.pop %v3918
    %v3920 = vmul.f32 %v3915, %v3919
    %v3921 = vpack.c.bf16 %v3920, %v3920
    %v3922 = vld [vmem:[%s8] sm:$0xf]
    %v3923 = vld [vmem:[%s8 + $0x4] sm:$0xf]
    %v3924 = vld [vmem:[%s8 + $0x8] sm:$0xf]
    %v3925 = vld [vmem:[%s8 + $0xc] sm:$0xf]
    %v3926 = vld [vmem:[%s8 + $0x10] sm:$0xf]
    %v3927 = vld [vmem:[%s8 + $0x14] sm:$0xf]
    %v3928 = vld [vmem:[%s8 + $0x18] sm:$0xf]
    %v3929 = vld [vmem:[%s8 + $0x1c] sm:$0xf]
    %v3930 = vld [vmem:[%s8 + $0x20] sm:$0xf]
    %v3931 = vld [vmem:[%s8 + $0x24] sm:$0xf]
    %v3932 = vld [vmem:[%s8 + $0x28] sm:$0xf]
    %v3933 = vld [vmem:[%s8 + $0x2c] sm:$0xf]
    %v3934 = vld [vmem:[%s8 + $0x30] sm:$0xf]
    %v3935 = vld [vmem:[%s8 + $0x34] sm:$0xf]
    %v3936 = vld [vmem:[%s8 + $0x38] sm:$0xf]
    %v3937 = vld [vmem:[%s8 + $0x3c] sm:$0xf]
    %v3938 = vld [vmem:[%s8 + $0x40] sm:$0xf]
    %v3939 = vld [vmem:[%s8 + $0x44] sm:$0xf]
    %v3940 = vld [vmem:[%s8 + $0x48] sm:$0xf]
    %v3941 = vld [vmem:[%s8 + $0x4c] sm:$0xf]
    %v3942 = vld [vmem:[%s8 + $0x50] sm:$0xf]
    %v3943 = vld [vmem:[%s8 + $0x54] sm:$0xf]
    %v3944 = vld [vmem:[%s8 + $0x58] sm:$0xf]
    %v3945 = vld [vmem:[%s8 + $0x5c] sm:$0xf]
    %v3946 = vld [vmem:[%s8 + $0x60] sm:$0xf]
    %v3947 = vld [vmem:[%s8 + $0x64] sm:$0xf]
    %v3948 = vld [vmem:[%s8 + $0x68] sm:$0xf]
    %v3949 = vld [vmem:[%s8 + $0x6c] sm:$0xf]
    %v3950 = vld [vmem:[%s8 + $0x70] sm:$0xf]
    %v3951 = vld [vmem:[%s8 + $0x74] sm:$0xf]
    %v3952 = vld [vmem:[%s8 + $0x78] sm:$0xf]
    %v3953 = vld [vmem:[%s8 + $0x7c] sm:$0xf]
    %v3954 = vld [vmem:[%s9] sm:$0x1]
    %v3956 = vlaneseq
    %v3957 = vshrl.u32 %v3956, 7
    %v3958 = vsub.s32 0, %v3957
    %v3959 = vrot.slane %v3954, %v3958
    %v3993 = vunpack.c.l.b16 %v3922
    %v3994 = vunpack.c.l.b16 %v3923
    %v3995 = vunpack.c.l.b16 %v3924
    %v3996 = vunpack.c.l.b16 %v3925
    %v3997 = vunpack.c.l.b16 %v3926
    %v3998 = vunpack.c.l.b16 %v3927
    %v3999 = vunpack.c.l.b16 %v3928
    %v4000 = vunpack.c.l.b16 %v3929
    %v4001 = vunpack.c.l.b16 %v3930
    %v4002 = vunpack.c.l.b16 %v3931
    %v4003 = vunpack.c.l.b16 %v3932
    %v4004 = vunpack.c.l.b16 %v3933
    %v4005 = vunpack.c.l.b16 %v3934
    %v4006 = vunpack.c.l.b16 %v3935
    %v4007 = vunpack.c.l.b16 %v3936
    %v4008 = vunpack.c.l.b16 %v3937
    %v4009 = vunpack.c.l.b16 %v3938
    %v4010 = vunpack.c.l.b16 %v3939
    %v4011 = vunpack.c.l.b16 %v3940
    %v4012 = vunpack.c.l.b16 %v3941
    %v4013 = vunpack.c.l.b16 %v3942
    %v4014 = vunpack.c.l.b16 %v3943
    %v4015 = vunpack.c.l.b16 %v3944
    %v4016 = vunpack.c.l.b16 %v3945
    %v4017 = vunpack.c.l.b16 %v3946
    %v4018 = vunpack.c.l.b16 %v3947
    %v4019 = vunpack.c.l.b16 %v3948
    %v4020 = vunpack.c.l.b16 %v3949
    %v4021 = vunpack.c.l.b16 %v3950
    %v4022 = vunpack.c.l.b16 %v3951
    %v4023 = vunpack.c.l.b16 %v3952
    %v4024 = vunpack.c.l.b16 %v3953
    %v4025 = vpack.c.b16 %v3994, %v3993
    %v4026 = vpack.c.b16 %v3996, %v3995
    %v4027 = vpack.c.b16 %v3998, %v3997
    %v4028 = vpack.c.b16 %v4000, %v3999
    %v4029 = vpack.c.b16 %v4002, %v4001
    %v4030 = vpack.c.b16 %v4004, %v4003
    %v4031 = vpack.c.b16 %v4006, %v4005
    %v4032 = vpack.c.b16 %v4008, %v4007
    %v4033 = vpack.c.b16 %v4010, %v4009
    %v4034 = vpack.c.b16 %v4012, %v4011
    %v4035 = vpack.c.b16 %v4014, %v4013
    %v4036 = vpack.c.b16 %v4016, %v4015
    %v4037 = vpack.c.b16 %v4018, %v4017
    %v4038 = vpack.c.b16 %v4020, %v4019
    %v4039 = vpack.c.b16 %v4022, %v4021
    %v4040 = vpack.c.b16 %v4024, %v4023
    %4057 = vmatprep.subr.bf16.mxu0 0
    %4058 = vmatpush1.bf16.msra.mxu0 %v4032
    %4059 = vmatprep.subr.bf16.mxu0 0
    %4060 = vmatpush1.bf16.msra.mxu0 %v4031
    %4061 = vmatprep.subr.bf16.mxu0 0
    %4062 = vmatpush1.bf16.msra.mxu0 %v4030
    %4063 = vmatprep.subr.bf16.mxu0 0
    %4064 = vmatpush1.bf16.msra.mxu0 %v4029
    %4065 = vmatprep.subr.bf16.mxu0 0
    %4066 = vmatpush1.bf16.msra.mxu0 %v4028
    %4067 = vmatprep.subr.bf16.mxu0 0
    %4068 = vmatpush1.bf16.msra.mxu0 %v4027
    %4069 = vmatprep.subr.bf16.mxu0 0
    %4070 = vmatpush1.bf16.msra.mxu0 %v4026
    %4071 = vmatprep.subr.bf16.mxu0 0
    %4072 = vmatpush1.bf16.msra.mxu0 %v4025
    %4073 = vmatprep.subr.bf16.mxu0 0
    %4074 = vmatpush2.bf16.msra.mxu0 %v4040
    %4075 = vmatprep.subr.bf16.mxu0 0
    %4076 = vmatpush2.bf16.msra.mxu0 %v4039
    %4077 = vmatprep.subr.bf16.mxu0 0
    %4078 = vmatpush2.bf16.msra.mxu0 %v4038
    %4079 = vmatprep.subr.bf16.mxu0 0
    %4080 = vmatpush2.bf16.msra.mxu0 %v4037
    %4081 = vmatprep.subr.bf16.mxu0 0
    %4082 = vmatpush2.bf16.msra.mxu0 %v4036
    %4083 = vmatprep.subr.bf16.mxu0 0
    %4084 = vmatpush2.bf16.msra.mxu0 %v4035
    %4085 = vmatprep.subr.bf16.mxu0 0
    %4086 = vmatpush2.bf16.msra.mxu0 %v4034
    %4087 = vmatprep.subr.bf16.mxu0 0
    %4088 = vmatpush2.bf16.msra.mxu0 %v4033
    %4089 = vmatprep.mubr.bf16.mxu0 %v3133
    %4090 = vmatmul.mubr.bf16.gmra.mxu0 %v3921
    %v4091 = vpop.f32.mrf.mxu0
    %v4092 = vadd.f32 %v3959, %v4091
    %v4093 = vpop.f32.mrf.mxu0
    %v4094 = vpop.f32.mrf.mxu0
    %v4095 = vpop.f32.mrf.mxu0
    %4096 = vdwg.mxu0
    %s4097 = scalar_lea.vmem [#allocation12], 8
    %4098 = vst [vmem:[%s4097] sm:$0xff] %v4092
    %4099 = vmax.xlane.f32.xlu0 %v4092
    %v4100 = vpop.xlane.xlu0 %4099
    %vm4101 = vcmp.ge.f32.partialorder %v4092, %v4100
    %v4102 = vsel %vm4101, %v100, 128
    %v4103 = vand.u32 %v4102, 65535
    %v4104 = vshra.s32 %v4102, 16
    %v4105 = vcvt.s32.f32 %v4103
    %v4106 = vcvt.s32.f32 %v4104
    %4107 = vmin.xlane.f32.xlu0 %v4106
    %v4108 = vpop.xlane.xlu0 %4107
    %vm4109 = vcmp.eq.f32.partialorder %v4106, %v4108
    %v4110 = vsel %vm4109, %v4105, inf
    %4111 = vmin.xlane.f32.xlu0 %v4110
    %v4112 = vpop.xlane.xlu0 %4111
    %v4113 = vcvt.f32.s32 %v4112
    %v4114 = vcvt.f32.s32 %v4108
    %v4115 = vshll.u32 %v4114, 16
    %v4116 = vadd.s32 %v4115, %v4113
    %s4117 = sld [smem:[#allocation4 + $0x1]]
    %p4118 = scmp.ne.s32.totalorder %s4117, 0
    %s4119 = scalar_lea.vmem %s1, 8
    %v4120 = vld [vmem:[%s4119] sm:$0xff]
    %s4121 = scalar_select %p4118, 1, 0
    %v4122 = vstv %s4121
    %vm4123 = vcmp.eq.s32.totalorder %v4122, 1
    %v4124 = vsel %vm4123, %v4120, %v4116
    %v4125 = vld [vmem:[#allocation3] sm:$0xff]
    %v4126 = vld [vmem:[#allocation3 + $0x8] sm:$0xff]
    %v4127 = vld [vmem:[#allocation3 + $0x10] sm:$0xff]
    %v4128 = vld [vmem:[#allocation3 + $0x18] sm:$0xff]
    %v4129 = vld [vmem:[#allocation3 + $0x20] sm:$0xff]
    %v4130 = vld [vmem:[#allocation3 + $0x28] sm:$0xff]
    %v4131 = vld [vmem:[#allocation3 + $0x30] sm:$0xff]
    %v4132 = vld [vmem:[#allocation3 + $0x38] sm:$0xff]
    %v4133 = vmul.f32 %v4125, %v3920
    %v4134 = vmul.f32 %v4126, %v3920
    %v4135 = vmul.f32 %v4127, %v3920
    %v4136 = vmul.f32 %v4128, %v3920
    %v4137 = vmul.f32 %v4129, %v3920
    %v4138 = vmul.f32 %v4130, %v3920
    %v4139 = vmul.f32 %v4131, %v3920
    %v4140 = vmul.f32 %v4132, %v3920
    %4141 = vadd.xlane.f32.xlu0 %v4133
    %v4142 = vpop.xlane.xlu0 %4141
    %4143 = vadd.xlane.f32.xlu0 %v4134
    %v4144 = vpop.xlane.xlu0 %4143
    %4145 = vadd.xlane.f32.xlu0 %v4135
    %v4146 = vpop.xlane.xlu0 %4145
    %4147 = vadd.xlane.f32.xlu0 %v4136
    %v4148 = vpop.xlane.xlu0 %4147
    %4149 = vadd.xlane.f32.xlu0 %v4137
    %v4150 = vpop.xlane.xlu0 %4149
    %4151 = vadd.xlane.f32.xlu0 %v4138
    %v4152 = vpop.xlane.xlu0 %4151
    %4153 = vadd.xlane.f32.xlu0 %v4139
    %v4154 = vpop.xlane.xlu0 %4153
    %4155 = vadd.xlane.f32.xlu0 %v4140
    %v4156 = vpop.xlane.xlu0 %4155
    %v4157 = vmax.f32 %v4142, %v4150
    %v4158 = vmax.f32 %v4144, %v4152
    %v4159 = vmax.f32 %v4146, %v4154
    %v4160 = vmax.f32 %v4148, %v4156
    %v4161 = vmax.f32 %v4157, %v4158
    %v4162 = vmax.f32 %v4159, %v4160
    %v4163 = vmax.f32 %v4161, %v4162
    %v4164 = vsub.f32 %v4142, %v4163
    %v4165 = vsub.f32 %v4144, %v4163
    %v4166 = vsub.f32 %v4146, %v4163
    %v4167 = vsub.f32 %v4148, %v4163
    %v4168 = vsub.f32 %v4150, %v4163
    %v4169 = vsub.f32 %v4152, %v4163
    %v4170 = vsub.f32 %v4154, %v4163
    %v4171 = vsub.f32 %v4156, %v4163
    %v4172 = vmul.f32 %v4164, 1.442695
    %v4173 = vpow.pop %v4172
    %v4174 = vmul.f32 %v4165, 1.442695
    %v4175 = vpow.pop %v4174
    %v4176 = vmul.f32 %v4166, 1.442695
    %v4177 = vpow.pop %v4176
    %v4178 = vmul.f32 %v4167, 1.442695
    %v4179 = vpow.pop %v4178
    %v4180 = vmul.f32 %v4168, 1.442695
    %v4181 = vpow.pop %v4180
    %v4182 = vmul.f32 %v4169, 1.442695
    %v4183 = vpow.pop %v4182
    %v4184 = vmul.f32 %v4170, 1.442695
    %v4185 = vpow.pop %v4184
    %v4186 = vmul.f32 %v4171, 1.442695
    %v4187 = vpow.pop %v4186
    %v4188 = vadd.f32 %v4173, %v4175
    %v4189 = vadd.f32 %v4188, %v4177
    %v4190 = vadd.f32 %v4189, %v4179
    %v4191 = vadd.f32 %v4190, %v4181
    %v4192 = vadd.f32 %v4191, %v4183
    %v4193 = vadd.f32 %v4192, %v4185
    %v4194 = vadd.f32 %v4193, %v4187
    %v4195 = vrcp.pop %v4194
    %v4196 = vmul.f32 %v4173, %v4195
    %v4197 = vmul.f32 %v4175, %v4195
    %v4198 = vmul.f32 %v4177, %v4195
    %v4199 = vmul.f32 %v4179, %v4195
    %v4200 = vmul.f32 %v4181, %v4195
    %v4201 = vmul.f32 %v4183, %v4195
    %v4202 = vmul.f32 %v4185, %v4195
    %v4203 = vmul.f32 %v4187, %v4195
    %v4204 = vmul.f32 %v4196, %v4125
    %v4205 = vmul.f32 %v4197, %v4126
    %v4206 = vmul.f32 %v4198, %v4127
    %v4207 = vmul.f32 %v4199, %v4128
    %v4208 = vmul.f32 %v4200, %v4129
    %v4209 = vmul.f32 %v4201, %v4130
    %v4210 = vmul.f32 %v4202, %v4131
    %v4211 = vmul.f32 %v4203, %v4132
    %v4212 = vadd.f32 %v4204, %v4205
    %v4213 = vadd.f32 %v4212, %v4206
    %v4214 = vadd.f32 %v4213, %v4207
    %v4215 = vadd.f32 %v4214, %v4208
    %v4216 = vadd.f32 %v4215, %v4209
    %v4217 = vadd.f32 %v4216, %v4210
    %v4218 = vadd.f32 %v4217, %v4211
    %4219 = vset.pattern.permute.xlu0 0
    %4220 = vperm.xlu0 %4219, %v4124
    %v4221 = vpop.permute.xlu0 %4220
    %vm4222 = vcmp.eq.s32.totalorder %v4221, %v100
    %v4223 = vsel %vm4222, 1.0, 0.0
    %v4224 = vpack.c.bf16 %v4223, %v4223
    %v4225 = vpack.c.bf16 %v4218, %v4218
    %v4226 = vld [vmem:[#allocation11] sm:$0xff]
    %v4227 = vld [vmem:[#allocation11 + $0x8] sm:$0xff]
    %v4228 = vld [vmem:[#allocation11 + $0x10] sm:$0xff]
    %v4229 = vld [vmem:[#allocation11 + $0x18] sm:$0xff]
    %v4230 = vld [vmem:[#allocation11 + $0x20] sm:$0xff]
    %v4231 = vld [vmem:[#allocation11 + $0x28] sm:$0xff]
    %v4232 = vld [vmem:[#allocation11 + $0x30] sm:$0xff]
    %v4233 = vld [vmem:[#allocation11 + $0x38] sm:$0xff]
    %v4234 = vld [vmem:[#allocation11 + $0x40] sm:$0xff]
    %v4235 = vld [vmem:[#allocation11 + $0x48] sm:$0xff]
    %v4236 = vld [vmem:[#allocation11 + $0x50] sm:$0xff]
    %v4237 = vld [vmem:[#allocation11 + $0x58] sm:$0xff]
    %v4238 = vld [vmem:[#allocation11 + $0x60] sm:$0xff]
    %v4239 = vld [vmem:[#allocation11 + $0x68] sm:$0xff]
    %v4240 = vld [vmem:[#allocation11 + $0x70] sm:$0xff]
    %v4241 = vld [vmem:[#allocation11 + $0x78] sm:$0xff]
    %v4242 = vld [vmem:[#allocation11 + $0x80] sm:$0xff]
    %v4243 = vld [vmem:[#allocation11 + $0x88] sm:$0xff]
    %v4244 = vld [vmem:[#allocation11 + $0x90] sm:$0xff]
    %v4245 = vld [vmem:[#allocation11 + $0x98] sm:$0xff]
    %v4246 = vld [vmem:[#allocation11 + $0xa0] sm:$0xff]
    %v4247 = vld [vmem:[#allocation11 + $0xa8] sm:$0xff]
    %v4248 = vld [vmem:[#allocation11 + $0xb0] sm:$0xff]
    %v4249 = vld [vmem:[#allocation11 + $0xb8] sm:$0xff]
    %v4250 = vld [vmem:[#allocation11 + $0xc0] sm:$0xff]
    %v4251 = vld [vmem:[#allocation11 + $0xc8] sm:$0xff]
    %v4252 = vld [vmem:[#allocation11 + $0xd0] sm:$0xff]
    %v4253 = vld [vmem:[#allocation11 + $0xd8] sm:$0xff]
    %v4254 = vld [vmem:[#allocation11 + $0xe0] sm:$0xff]
    %v4255 = vld [vmem:[#allocation11 + $0xe8] sm:$0xff]
    %v4256 = vld [vmem:[#allocation11 + $0xf0] sm:$0xff]
    %v4257 = vld [vmem:[#allocation11 + $0xf8] sm:$0xff]
    %v4258 = vld [vmem:[#allocation11 + $0x100] sm:$0xff]
    %v4259 = vld [vmem:[#allocation11 + $0x108] sm:$0xff]
    %v4260 = vld [vmem:[#allocation11 + $0x110] sm:$0xff]
    %v4261 = vld [vmem:[#allocation11 + $0x118] sm:$0xff]
    %v4262 = vld [vmem:[#allocation11 + $0x120] sm:$0xff]
    %v4263 = vld [vmem:[#allocation11 + $0x128] sm:$0xff]
    %v4264 = vld [vmem:[#allocation11 + $0x130] sm:$0xff]
    %v4265 = vld [vmem:[#allocation11 + $0x138] sm:$0xff]
    %v4266 = vld [vmem:[#allocation11 + $0x140] sm:$0xff]
    %v4267 = vld [vmem:[#allocation11 + $0x148] sm:$0xff]
    %v4268 = vld [vmem:[#allocation11 + $0x150] sm:$0xff]
    %v4269 = vld [vmem:[#allocation11 + $0x158] sm:$0xff]
    %v4270 = vld [vmem:[#allocation11 + $0x160] sm:$0xff]
    %v4271 = vld [vmem:[#allocation11 + $0x168] sm:$0xff]
    %v4272 = vld [vmem:[#allocation11 + $0x170] sm:$0xff]
    %v4273 = vld [vmem:[#allocation11 + $0x178] sm:$0xff]
    %v4274 = vld [vmem:[#allocation11 + $0x180] sm:$0xff]
    %v4275 = vld [vmem:[#allocation11 + $0x188] sm:$0xff]
    %v4276 = vld [vmem:[#allocation11 + $0x190] sm:$0xff]
    %v4277 = vld [vmem:[#allocation11 + $0x198] sm:$0xff]
    %v4278 = vld [vmem:[#allocation11 + $0x1a0] sm:$0xff]
    %v4279 = vld [vmem:[#allocation11 + $0x1a8] sm:$0xff]
    %v4280 = vld [vmem:[#allocation11 + $0x1b0] sm:$0xff]
    %v4281 = vld [vmem:[#allocation11 + $0x1b8] sm:$0xff]
    %v4282 = vld [vmem:[#allocation11 + $0x1c0] sm:$0xff]
    %v4283 = vld [vmem:[#allocation11 + $0x1c8] sm:$0xff]
    %v4284 = vld [vmem:[#allocation11 + $0x1d0] sm:$0xff]
    %v4285 = vld [vmem:[#allocation11 + $0x1d8] sm:$0xff]
    %v4286 = vld [vmem:[#allocation11 + $0x1e0] sm:$0xff]
    %v4287 = vld [vmem:[#allocation11 + $0x1e8] sm:$0xff]
    %v4288 = vld [vmem:[#allocation11 + $0x1f0] sm:$0xff]
    %v4289 = vld [vmem:[#allocation11 + $0x1f8] sm:$0xff]
    %v4290 = vld [vmem:[#allocation11 + $0x200] sm:$0xff]
    %v4291 = vld [vmem:[#allocation11 + $0x208] sm:$0xff]
    %v4292 = vld [vmem:[#allocation11 + $0x210] sm:$0xff]
    %v4293 = vld [vmem:[#allocation11 + $0x218] sm:$0xff]
    %v4294 = vld [vmem:[#allocation11 + $0x220] sm:$0xff]
    %v4295 = vld [vmem:[#allocation11 + $0x228] sm:$0xff]
    %v4296 = vld [vmem:[#allocation11 + $0x230] sm:$0xff]
    %v4297 = vld [vmem:[#allocation11 + $0x238] sm:$0xff]
    %v4298 = vld [vmem:[#allocation11 + $0x240] sm:$0xff]
    %v4299 = vld [vmem:[#allocation11 + $0x248] sm:$0xff]
    %v4300 = vld [vmem:[#allocation11 + $0x250] sm:$0xff]
    %v4301 = vld [vmem:[#allocation11 + $0x258] sm:$0xff]
    %v4302 = vld [vmem:[#allocation11 + $0x260] sm:$0xff]
    %v4303 = vld [vmem:[#allocation11 + $0x268] sm:$0xff]
    %v4304 = vld [vmem:[#allocation11 + $0x270] sm:$0xff]
    %v4305 = vld [vmem:[#allocation11 + $0x278] sm:$0xff]
    %v4306 = vld [vmem:[#allocation11 + $0x280] sm:$0xff]
    %v4307 = vld [vmem:[#allocation11 + $0x288] sm:$0xff]
    %v4308 = vld [vmem:[#allocation11 + $0x290] sm:$0xff]
    %v4309 = vld [vmem:[#allocation11 + $0x298] sm:$0xff]
    %v4310 = vld [vmem:[#allocation11 + $0x2a0] sm:$0xff]
    %v4311 = vld [vmem:[#allocation11 + $0x2a8] sm:$0xff]
    %v4312 = vld [vmem:[#allocation11 + $0x2b0] sm:$0xff]
    %v4313 = vld [vmem:[#allocation11 + $0x2b8] sm:$0xff]
    %v4314 = vld [vmem:[#allocation11 + $0x2c0] sm:$0xff]
    %v4315 = vld [vmem:[#allocation11 + $0x2c8] sm:$0xff]
    %v4316 = vld [vmem:[#allocation11 + $0x2d0] sm:$0xff]
    %v4317 = vld [vmem:[#allocation11 + $0x2d8] sm:$0xff]
    %v4318 = vld [vmem:[#allocation11 + $0x2e0] sm:$0xff]
    %v4319 = vld [vmem:[#allocation11 + $0x2e8] sm:$0xff]
    %v4320 = vld [vmem:[#allocation11 + $0x2f0] sm:$0xff]
    %v4321 = vld [vmem:[#allocation11 + $0x2f8] sm:$0xff]
    %v4322 = vld [vmem:[%s7] sm:$0xf]
    %v4324 = vlaneseq
    %v4325 = vshrl.u32 %v4324, 7
    %v4326 = vsub.s32 0, %v4325
    %v4327 = vrot.slane %v4322, %v4326
    %v4328 = vlaneseq
    %v4329 = vshrl.u32 %v4328, 7
    %v4330 = vsub.s32 1, %v4329
    %v4331 = vrot.slane %v4322, %v4330
    %v4332 = vlaneseq
    %v4333 = vshrl.u32 %v4332, 7
    %v4334 = vsub.s32 2, %v4333
    %v4335 = vrot.slane %v4322, %v4334
    %v4336 = vlaneseq
    %v4337 = vshrl.u32 %v4336, 7
    %v4338 = vsub.s32 3, %v4337
    %v4339 = vrot.slane %v4322, %v4338
    %v4440 = vunpack.c.l.b16 %v4226
    %v4441 = vunpack.c.h.b16 %v4226
    %v4442 = vunpack.c.l.b16 %v4227
    %v4443 = vunpack.c.h.b16 %v4227
    %v4444 = vunpack.c.l.b16 %v4228
    %v4445 = vunpack.c.h.b16 %v4228
    %v4446 = vunpack.c.l.b16 %v4229
    %v4447 = vunpack.c.h.b16 %v4229
    %v4448 = vunpack.c.l.b16 %v4230
    %v4449 = vunpack.c.h.b16 %v4230
    %v4450 = vunpack.c.l.b16 %v4231
    %v4451 = vunpack.c.h.b16 %v4231
    %v4452 = vunpack.c.l.b16 %v4232
    %v4453 = vunpack.c.h.b16 %v4232
    %v4454 = vunpack.c.l.b16 %v4233
    %v4455 = vunpack.c.h.b16 %v4233
    %v4456 = vunpack.c.l.b16 %v4234
    %v4457 = vunpack.c.h.b16 %v4234
    %v4458 = vunpack.c.l.b16 %v4235
    %v4459 = vunpack.c.h.b16 %v4235
    %v4460 = vunpack.c.l.b16 %v4236
    %v4461 = vunpack.c.h.b16 %v4236
    %v4462 = vunpack.c.l.b16 %v4237
    %v4463 = vunpack.c.h.b16 %v4237
    %v4464 = vunpack.c.l.b16 %v4238
    %v4465 = vunpack.c.h.b16 %v4238
    %v4466 = vunpack.c.l.b16 %v4239
    %v4467 = vunpack.c.h.b16 %v4239
    %v4468 = vunpack.c.l.b16 %v4240
    %v4469 = vunpack.c.h.b16 %v4240
    %v4470 = vunpack.c.l.b16 %v4241
    %v4471 = vunpack.c.h.b16 %v4241
    %v4472 = vunpack.c.l.b16 %v4242
    %v4473 = vunpack.c.h.b16 %v4242
    %v4474 = vunpack.c.l.b16 %v4243
    %v4475 = vunpack.c.h.b16 %v4243
    %v4476 = vunpack.c.l.b16 %v4244
    %v4477 = vunpack.c.h.b16 %v4244
    %v4478 = vunpack.c.l.b16 %v4245
    %v4479 = vunpack.c.h.b16 %v4245
    %v4480 = vunpack.c.l.b16 %v4246
    %v4481 = vunpack.c.h.b16 %v4246
    %v4482 = vunpack.c.l.b16 %v4247
    %v4483 = vunpack.c.h.b16 %v4247
    %v4484 = vunpack.c.l.b16 %v4248
    %v4485 = vunpack.c.h.b16 %v4248
    %v4486 = vunpack.c.l.b16 %v4249
    %v4487 = vunpack.c.h.b16 %v4249
    %v4488 = vunpack.c.l.b16 %v4250
    %v4489 = vunpack.c.h.b16 %v4250
    %v4490 = vunpack.c.l.b16 %v4251
    %v4491 = vunpack.c.h.b16 %v4251
    %v4492 = vunpack.c.l.b16 %v4252
    %v4493 = vunpack.c.h.b16 %v4252
    %v4494 = vunpack.c.l.b16 %v4253
    %v4495 = vunpack.c.h.b16 %v4253
    %v4496 = vunpack.c.l.b16 %v4254
    %v4497 = vunpack.c.h.b16 %v4254
    %v4498 = vunpack.c.l.b16 %v4255
    %v4499 = vunpack.c.h.b16 %v4255
    %v4500 = vunpack.c.l.b16 %v4256
    %v4501 = vunpack.c.h.b16 %v4256
    %v4502 = vunpack.c.l.b16 %v4257
    %v4503 = vunpack.c.h.b16 %v4257
    %v4504 = vunpack.c.l.b16 %v4258
    %v4505 = vunpack.c.h.b16 %v4258
    %v4506 = vunpack.c.l.b16 %v4259
    %v4507 = vunpack.c.h.b16 %v4259
    %v4508 = vunpack.c.l.b16 %v4260
    %v4509 = vunpack.c.h.b16 %v4260
    %v4510 = vunpack.c.l.b16 %v4261
    %v4511 = vunpack.c.h.b16 %v4261
    %v4512 = vunpack.c.l.b16 %v4262
    %v4513 = vunpack.c.h.b16 %v4262
    %v4514 = vunpack.c.l.b16 %v4263
    %v4515 = vunpack.c.h.b16 %v4263
    %v4516 = vunpack.c.l.b16 %v4264
    %v4517 = vunpack.c.h.b16 %v4264
    %v4518 = vunpack.c.l.b16 %v4265
    %v4519 = vunpack.c.h.b16 %v4265
    %v4520 = vunpack.c.l.b16 %v4266
    %v4521 = vunpack.c.h.b16 %v4266
    %v4522 = vunpack.c.l.b16 %v4267
    %v4523 = vunpack.c.h.b16 %v4267
    %v4524 = vunpack.c.l.b16 %v4268
    %v4525 = vunpack.c.h.b16 %v4268
    %v4526 = vunpack.c.l.b16 %v4269
    %v4527 = vunpack.c.h.b16 %v4269
    %v4528 = vunpack.c.l.b16 %v4270
    %v4529 = vunpack.c.h.b16 %v4270
    %v4530 = vunpack.c.l.b16 %v4271
    %v4531 = vunpack.c.h.b16 %v4271
    %v4532 = vunpack.c.l.b16 %v4272
    %v4533 = vunpack.c.h.b16 %v4272
    %v4534 = vunpack.c.l.b16 %v4273
    %v4535 = vunpack.c.h.b16 %v4273
    %v4536 = vunpack.c.l.b16 %v4274
    %v4537 = vunpack.c.h.b16 %v4274
    %v4538 = vunpack.c.l.b16 %v4275
    %v4539 = vunpack.c.h.b16 %v4275
    %v4540 = vunpack.c.l.b16 %v4276
    %v4541 = vunpack.c.h.b16 %v4276
    %v4542 = vunpack.c.l.b16 %v4277
    %v4543 = vunpack.c.h.b16 %v4277
    %v4544 = vunpack.c.l.b16 %v4278
    %v4545 = vunpack.c.h.b16 %v4278
    %v4546 = vunpack.c.l.b16 %v4279
    %v4547 = vunpack.c.h.b16 %v4279
    %v4548 = vunpack.c.l.b16 %v4280
    %v4549 = vunpack.c.h.b16 %v4280
    %v4550 = vunpack.c.l.b16 %v4281
    %v4551 = vunpack.c.h.b16 %v4281
    %v4552 = vunpack.c.l.b16 %v4282
    %v4553 = vunpack.c.h.b16 %v4282
    %v4554 = vunpack.c.l.b16 %v4283
    %v4555 = vunpack.c.h.b16 %v4283
    %v4556 = vunpack.c.l.b16 %v4284
    %v4557 = vunpack.c.h.b16 %v4284
    %v4558 = vunpack.c.l.b16 %v4285
    %v4559 = vunpack.c.h.b16 %v4285
    %v4560 = vunpack.c.l.b16 %v4286
    %v4561 = vunpack.c.h.b16 %v4286
    %v4562 = vunpack.c.l.b16 %v4287
    %v4563 = vunpack.c.h.b16 %v4287
    %v4564 = vunpack.c.l.b16 %v4288
    %v4565 = vunpack.c.h.b16 %v4288
    %v4566 = vunpack.c.l.b16 %v4289
    %v4567 = vunpack.c.h.b16 %v4289
    %v4568 = vunpack.c.l.b16 %v4290
    %v4569 = vunpack.c.h.b16 %v4290
    %v4570 = vunpack.c.l.b16 %v4291
    %v4571 = vunpack.c.h.b16 %v4291
    %v4572 = vunpack.c.l.b16 %v4292
    %v4573 = vunpack.c.h.b16 %v4292
    %v4574 = vunpack.c.l.b16 %v4293
    %v4575 = vunpack.c.h.b16 %v4293
    %v4576 = vunpack.c.l.b16 %v4294
    %v4577 = vunpack.c.h.b16 %v4294
    %v4578 = vunpack.c.l.b16 %v4295
    %v4579 = vunpack.c.h.b16 %v4295
    %v4580 = vunpack.c.l.b16 %v4296
    %v4581 = vunpack.c.h.b16 %v4296
    %v4582 = vunpack.c.l.b16 %v4297
    %v4583 = vunpack.c.h.b16 %v4297
    %v4584 = vunpack.c.l.b16 %v4298
    %v4585 = vunpack.c.h.b16 %v4298
    %v4586 = vunpack.c.l.b16 %v4299
    %v4587 = vunpack.c.h.b16 %v4299
    %v4588 = vunpack.c.l.b16 %v4300
    %v4589 = vunpack.c.h.b16 %v4300
    %v4590 = vunpack.c.l.b16 %v4301
    %v4591 = vunpack.c.h.b16 %v4301
    %v4592 = vunpack.c.l.b16 %v4302
    %v4593 = vunpack.c.h.b16 %v4302
    %v4594 = vunpack.c.l.b16 %v4303
    %v4595 = vunpack.c.h.b16 %v4303
    %v4596 = vunpack.c.l.b16 %v4304
    %v4597 = vunpack.c.h.b16 %v4304
    %v4598 = vunpack.c.l.b16 %v4305
    %v4599 = vunpack.c.h.b16 %v4305
    %v4600 = vunpack.c.l.b16 %v4306
    %v4601 = vunpack.c.h.b16 %v4306
    %v4602 = vunpack.c.l.b16 %v4307
    %v4603 = vunpack.c.h.b16 %v4307
    %v4604 = vunpack.c.l.b16 %v4308
    %v4605 = vunpack.c.h.b16 %v4308
    %v4606 = vunpack.c.l.b16 %v4309
    %v4607 = vunpack.c.h.b16 %v4309
    %v4608 = vunpack.c.l.b16 %v4310
    %v4609 = vunpack.c.h.b16 %v4310
    %v4610 = vunpack.c.l.b16 %v4311
    %v4611 = vunpack.c.h.b16 %v4311
    %v4612 = vunpack.c.l.b16 %v4312
    %v4613 = vunpack.c.h.b16 %v4312
    %v4614 = vunpack.c.l.b16 %v4313
    %v4615 = vunpack.c.h.b16 %v4313
    %v4616 = vunpack.c.l.b16 %v4314
    %v4617 = vunpack.c.h.b16 %v4314
    %v4618 = vunpack.c.l.b16 %v4315
    %v4619 = vunpack.c.h.b16 %v4315
    %v4620 = vunpack.c.l.b16 %v4316
    %v4621 = vunpack.c.h.b16 %v4316
    %v4622 = vunpack.c.l.b16 %v4317
    %v4623 = vunpack.c.h.b16 %v4317
    %v4624 = vunpack.c.l.b16 %v4318
    %v4625 = vunpack.c.h.b16 %v4318
    %v4626 = vunpack.c.l.b16 %v4319
    %v4627 = vunpack.c.h.b16 %v4319
    %v4628 = vunpack.c.l.b16 %v4320
    %v4629 = vunpack.c.h.b16 %v4320
    %v4630 = vunpack.c.l.b16 %v4321
    %v4631 = vunpack.c.h.b16 %v4321
    %v4632 = vpack.c.b16 %v4444, %v4440
    %v4633 = vpack.c.b16 %v4445, %v4441
    %v4634 = vpack.c.b16 %v4446, %v4442
    %v4635 = vpack.c.b16 %v4447, %v4443
    %v4636 = vpack.c.b16 %v4452, %v4448
    %v4637 = vpack.c.b16 %v4453, %v4449
    %v4638 = vpack.c.b16 %v4454, %v4450
    %v4639 = vpack.c.b16 %v4455, %v4451
    %v4640 = vpack.c.b16 %v4460, %v4456
    %v4641 = vpack.c.b16 %v4461, %v4457
    %v4642 = vpack.c.b16 %v4462, %v4458
    %v4643 = vpack.c.b16 %v4463, %v4459
    %v4644 = vpack.c.b16 %v4468, %v4464
    %v4645 = vpack.c.b16 %v4469, %v4465
    %v4646 = vpack.c.b16 %v4470, %v4466
    %v4647 = vpack.c.b16 %v4471, %v4467
    %v4648 = vpack.c.b16 %v4476, %v4472
    %v4649 = vpack.c.b16 %v4477, %v4473
    %v4650 = vpack.c.b16 %v4478, %v4474
    %v4651 = vpack.c.b16 %v4479, %v4475
    %v4652 = vpack.c.b16 %v4484, %v4480
    %v4653 = vpack.c.b16 %v4485, %v4481
    %v4654 = vpack.c.b16 %v4486, %v4482
    %v4655 = vpack.c.b16 %v4487, %v4483
    %v4656 = vpack.c.b16 %v4492, %v4488
    %v4657 = vpack.c.b16 %v4493, %v4489
    %v4658 = vpack.c.b16 %v4494, %v4490
    %v4659 = vpack.c.b16 %v4495, %v4491
    %v4660 = vpack.c.b16 %v4500, %v4496
    %v4661 = vpack.c.b16 %v4501, %v4497
    %v4662 = vpack.c.b16 %v4502, %v4498
    %v4663 = vpack.c.b16 %v4503, %v4499
    %v4664 = vpack.c.b16 %v4508, %v4504
    %v4665 = vpack.c.b16 %v4509, %v4505
    %v4666 = vpack.c.b16 %v4510, %v4506
    %v4667 = vpack.c.b16 %v4511, %v4507
    %v4668 = vpack.c.b16 %v4516, %v4512
    %v4669 = vpack.c.b16 %v4517, %v4513
    %v4670 = vpack.c.b16 %v4518, %v4514
    %v4671 = vpack.c.b16 %v4519, %v4515
    %v4672 = vpack.c.b16 %v4524, %v4520
    %v4673 = vpack.c.b16 %v4525, %v4521
    %v4674 = vpack.c.b16 %v4526, %v4522
    %v4675 = vpack.c.b16 %v4527, %v4523
    %v4676 = vpack.c.b16 %v4532, %v4528
    %v4677 = vpack.c.b16 %v4533, %v4529
    %v4678 = vpack.c.b16 %v4534, %v4530
    %v4679 = vpack.c.b16 %v4535, %v4531
    %v4680 = vpack.c.b16 %v4540, %v4536
    %v4681 = vpack.c.b16 %v4541, %v4537
    %v4682 = vpack.c.b16 %v4542, %v4538
    %v4683 = vpack.c.b16 %v4543, %v4539
    %v4684 = vpack.c.b16 %v4548, %v4544
    %v4685 = vpack.c.b16 %v4549, %v4545
    %v4686 = vpack.c.b16 %v4550, %v4546
    %v4687 = vpack.c.b16 %v4551, %v4547
    %v4688 = vpack.c.b16 %v4556, %v4552
    %v4689 = vpack.c.b16 %v4557, %v4553
    %v4690 = vpack.c.b16 %v4558, %v4554
    %v4691 = vpack.c.b16 %v4559, %v4555
    %v4692 = vpack.c.b16 %v4564, %v4560
    %v4693 = vpack.c.b16 %v4565, %v4561
    %v4694 = vpack.c.b16 %v4566, %v4562
    %v4695 = vpack.c.b16 %v4567, %v4563
    %v4696 = vpack.c.b16 %v4572, %v4568
    %v4697 = vpack.c.b16 %v4573, %v4569
    %v4698 = vpack.c.b16 %v4574, %v4570
    %v4699 = vpack.c.b16 %v4575, %v4571
    %v4700 = vpack.c.b16 %v4580, %v4576
    %v4701 = vpack.c.b16 %v4581, %v4577
    %v4702 = vpack.c.b16 %v4582, %v4578
    %v4703 = vpack.c.b16 %v4583, %v4579
    %v4704 = vpack.c.b16 %v4588, %v4584
    %v4705 = vpack.c.b16 %v4589, %v4585
    %v4706 = vpack.c.b16 %v4590, %v4586
    %v4707 = vpack.c.b16 %v4591, %v4587
    %v4708 = vpack.c.b16 %v4596, %v4592
    %v4709 = vpack.c.b16 %v4597, %v4593
    %v4710 = vpack.c.b16 %v4598, %v4594
    %v4711 = vpack.c.b16 %v4599, %v4595
    %v4712 = vpack.c.b16 %v4604, %v4600
    %v4713 = vpack.c.b16 %v4605, %v4601
    %v4714 = vpack.c.b16 %v4606, %v4602
    %v4715 = vpack.c.b16 %v4607, %v4603
    %v4716 = vpack.c.b16 %v4612, %v4608
    %v4717 = vpack.c.b16 %v4613, %v4609
    %v4718 = vpack.c.b16 %v4614, %v4610
    %v4719 = vpack.c.b16 %v4615, %v4611
    %v4720 = vpack.c.b16 %v4620, %v4616
    %v4721 = vpack.c.b16 %v4621, %v4617
    %v4722 = vpack.c.b16 %v4622, %v4618
    %v4723 = vpack.c.b16 %v4623, %v4619
    %v4724 = vpack.c.b16 %v4628, %v4624
    %v4725 = vpack.c.b16 %v4629, %v4625
    %v4726 = vpack.c.b16 %v4630, %v4626
    %v4727 = vpack.c.b16 %v4631, %v4627
    %4824 = vmatprep.subr.bf16.mxu0 %v4661
    %4825 = vmatpush1.bf16.msra.mxu0 %v4660
    %4826 = vmatprep.subr.bf16.mxu0 %v4657
    %4827 = vmatpush1.bf16.msra.mxu0 %v4656
    %4828 = vmatprep.subr.bf16.mxu0 %v4653
    %4829 = vmatpush1.bf16.msra.mxu0 %v4652
    %4830 = vmatprep.subr.bf16.mxu0 %v4649
    %4831 = vmatpush1.bf16.msra.mxu0 %v4648
    %4832 = vmatprep.subr.bf16.mxu0 %v4645
    %4833 = vmatpush1.bf16.msra.mxu0 %v4644
    %4834 = vmatprep.subr.bf16.mxu0 %v4641
    %4835 = vmatpush1.bf16.msra.mxu0 %v4640
    %4836 = vmatprep.subr.bf16.mxu0 %v4637
    %4837 = vmatpush1.bf16.msra.mxu0 %v4636
    %4838 = vmatprep.subr.bf16.mxu0 %v4633
    %4839 = vmatpush1.bf16.msra.mxu0 %v4632
    %4840 = vmatprep.subr.bf16.mxu0 %v4693
    %4841 = vmatpush2.bf16.msra.mxu0 %v4692
    %4842 = vmatprep.subr.bf16.mxu0 %v4689
    %4843 = vmatpush2.bf16.msra.mxu0 %v4688
    %4844 = vmatprep.subr.bf16.mxu0 %v4685
    %4845 = vmatpush2.bf16.msra.mxu0 %v4684
    %4846 = vmatprep.subr.bf16.mxu0 %v4681
    %4847 = vmatpush2.bf16.msra.mxu0 %v4680
    %4848 = vmatprep.subr.bf16.mxu0 %v4677
    %4849 = vmatpush2.bf16.msra.mxu0 %v4676
    %4850 = vmatprep.subr.bf16.mxu0 %v4673
    %4851 = vmatpush2.bf16.msra.mxu0 %v4672
    %4852 = vmatprep.subr.bf16.mxu0 %v4669
    %4853 = vmatpush2.bf16.msra.mxu0 %v4668
    %4854 = vmatprep.subr.bf16.mxu0 %v4665
    %4855 = vmatpush2.bf16.msra.mxu0 %v4664
    %4856 = vmatprep.mubr.bf16.mxu0 %v4225
    %4857 = vmatmul.mubr.bf16.gmra.mxu0 %v4224
    %v4858 = vpop.f32.mrf.mxu0
    %v4859 = vadd.f32 %v4327, %v4858
    %v4860 = vpop.f32.mrf.mxu0
    %v4861 = vadd.f32 %v4331, %v4860
    %v4862 = vpop.f32.mrf.mxu0
    %v4863 = vpop.f32.mrf.mxu0
    %4864 = vdwg.mxu0
    %4865 = vmatprep.subr.bf16.mxu0 %v4725
    %4866 = vmatpush1.bf16.msra.mxu0 %v4724
    %4867 = vmatprep.subr.bf16.mxu0 %v4721
    %4868 = vmatpush1.bf16.msra.mxu0 %v4720
    %4869 = vmatprep.subr.bf16.mxu0 %v4717
    %4870 = vmatpush1.bf16.msra.mxu0 %v4716
    %4871 = vmatprep.subr.bf16.mxu0 %v4713
    %4872 = vmatpush1.bf16.msra.mxu0 %v4712
    %4873 = vmatprep.subr.bf16.mxu0 %v4709
    %4874 = vmatpush1.bf16.msra.mxu0 %v4708
    %4875 = vmatprep.subr.bf16.mxu0 %v4705
    %4876 = vmatpush1.bf16.msra.mxu0 %v4704
    %4877 = vmatprep.subr.bf16.mxu0 %v4701
    %4878 = vmatpush1.bf16.msra.mxu0 %v4700
    %4879 = vmatprep.subr.bf16.mxu0 %v4697
    %4880 = vmatpush1.bf16.msra.mxu0 %v4696
    %4881 = vmatprep.subr.bf16.mxu0 0
    %4882 = vmatpush2.bf16.msra.mxu0 0
    %4883 = vmatprep.subr.bf16.mxu0 0
    %4884 = vmatpush2.bf16.msra.mxu0 0
    %4885 = vmatprep.subr.bf16.mxu0 0
    %4886 = vmatpush2.bf16.msra.mxu0 0
    %4887 = vmatprep.subr.bf16.mxu0 0
    %4888 = vmatpush2.bf16.msra.mxu0 0
    %4889 = vmatprep.subr.bf16.mxu0 0
    %4890 = vmatpush2.bf16.msra.mxu0 0
    %4891 = vmatprep.subr.bf16.mxu0 0
    %4892 = vmatpush2.bf16.msra.mxu0 0
    %4893 = vmatprep.subr.bf16.mxu0 0
    %4894 = vmatpush2.bf16.msra.mxu0 0
    %4895 = vmatprep.subr.bf16.mxu0 0
    %4896 = vmatpush2.bf16.msra.mxu0 0
    %4897 = vmatprep.mubr.bf16.mxu0 0
    %4898 = vmatmul.mubr.bf16.gmra.mxu0 %v3921
    %v4899 = vpop.f32.mrf.mxu0
    %v4900 = vadd.f32 %v4859, %v4899
    %v4901 = vpop.f32.mrf.mxu0
    %v4902 = vadd.f32 %v4861, %v4901
    %v4903 = vpop.f32.mrf.mxu0
    %v4904 = vpop.f32.mrf.mxu0
    %4905 = vdwg.mxu0
    %4906 = vmatprep.subr.bf16.mxu0 %v4663
    %4907 = vmatpush1.bf16.msra.mxu0 %v4662
    %4908 = vmatprep.subr.bf16.mxu0 %v4659
    %4909 = vmatpush1.bf16.msra.mxu0 %v4658
    %4910 = vmatprep.subr.bf16.mxu0 %v4655
    %4911 = vmatpush1.bf16.msra.mxu0 %v4654
    %4912 = vmatprep.subr.bf16.mxu0 %v4651
    %4913 = vmatpush1.bf16.msra.mxu0 %v4650
    %4914 = vmatprep.subr.bf16.mxu0 %v4647
    %4915 = vmatpush1.bf16.msra.mxu0 %v4646
    %4916 = vmatprep.subr.bf16.mxu0 %v4643
    %4917 = vmatpush1.bf16.msra.mxu0 %v4642
    %4918 = vmatprep.subr.bf16.mxu0 %v4639
    %4919 = vmatpush1.bf16.msra.mxu0 %v4638
    %4920 = vmatprep.subr.bf16.mxu0 %v4635
    %4921 = vmatpush1.bf16.msra.mxu0 %v4634
    %4922 = vmatprep.subr.bf16.mxu0 %v4695
    %4923 = vmatpush2.bf16.msra.mxu0 %v4694
    %4924 = vmatprep.subr.bf16.mxu0 %v4691
    %4925 = vmatpush2.bf16.msra.mxu0 %v4690
    %4926 = vmatprep.subr.bf16.mxu0 %v4687
    %4927 = vmatpush2.bf16.msra.mxu0 %v4686
    %4928 = vmatprep.subr.bf16.mxu0 %v4683
    %4929 = vmatpush2.bf16.msra.mxu0 %v4682
    %4930 = vmatprep.subr.bf16.mxu0 %v4679
    %4931 = vmatpush2.bf16.msra.mxu0 %v4678
    %4932 = vmatprep.subr.bf16.mxu0 %v4675
    %4933 = vmatpush2.bf16.msra.mxu0 %v4674
    %4934 = vmatprep.subr.bf16.mxu0 %v4671
    %4935 = vmatpush2.bf16.msra.mxu0 %v4670
    %4936 = vmatprep.subr.bf16.mxu0 %v4667
    %4937 = vmatpush2.bf16.msra.mxu0 %v4666
    %4938 = vmatprep.mubr.bf16.mxu0 %v4225
    %4939 = vmatmul.mubr.bf16.gmra.mxu0 %v4224
    %v4940 = vpop.f32.mrf.mxu0
    %v4941 = vadd.f32 %v4335, %v4940
    %v4942 = vpop.f32.mrf.mxu0
    %v4943 = vadd.f32 %v4339, %v4942
    %v4944 = vpop.f32.mrf.mxu0
    %v4945 = vpop.f32.mrf.mxu0
    %4946 = vdwg.mxu0
    %4947 = vmatprep.subr.bf16.mxu0 %v4727
    %4948 = vmatpush1.bf16.msra.mxu0 %v4726
    %4949 = vmatprep.subr.bf16.mxu0 %v4723
    %4950 = vmatpush1.bf16.msra.mxu0 %v4722
    %4951 = vmatprep.subr.bf16.mxu0 %v4719
    %4952 = vmatpush1.bf16.msra.mxu0 %v4718
    %4953 = vmatprep.subr.bf16.mxu0 %v4715
    %4954 = vmatpush1.bf16.msra.mxu0 %v4714
    %4955 = vmatprep.subr.bf16.mxu0 %v4711
    %4956 = vmatpush1.bf16.msra.mxu0 %v4710
    %4957 = vmatprep.subr.bf16.mxu0 %v4707
    %4958 = vmatpush1.bf16.msra.mxu0 %v4706
    %4959 = vmatprep.subr.bf16.mxu0 %v4703
    %4960 = vmatpush1.bf16.msra.mxu0 %v4702
    %4961 = vmatprep.subr.bf16.mxu0 %v4699
    %4962 = vmatpush1.bf16.msra.mxu0 %v4698
    %4963 = vmatprep.subr.bf16.mxu0 0
    %4964 = vmatpush2.bf16.msra.mxu0 0
    %4965 = vmatprep.subr.bf16.mxu0 0
    %4966 = vmatpush2.bf16.msra.mxu0 0
    %4967 = vmatprep.subr.bf16.mxu0 0
    %4968 = vmatpush2.bf16.msra.mxu0 0
    %4969 = vmatprep.subr.bf16.mxu0 0
    %4970 = vmatpush2.bf16.msra.mxu0 0
    %4971 = vmatprep.subr.bf16.mxu0 0
    %4972 = vmatpush2.bf16.msra.mxu0 0
    %4973 = vmatprep.subr.bf16.mxu0 0
    %4974 = vmatpush2.bf16.msra.mxu0 0
    %4975 = vmatprep.subr.bf16.mxu0 0
    %4976 = vmatpush2.bf16.msra.mxu0 0
    %4977 = vmatprep.subr.bf16.mxu0 0
    %4978 = vmatpush2.bf16.msra.mxu0 0
    %4979 = vmatprep.mubr.bf16.mxu0 0
    %4980 = vmatmul.mubr.bf16.gmra.mxu0 %v3921
    %v4981 = vpop.f32.mrf.mxu0
    %v4982 = vadd.f32 %v4941, %v4981
    %v4983 = vpop.f32.mrf.mxu0
    %v4984 = vadd.f32 %v4943, %v4983
    %v4985 = vpop.f32.mrf.mxu0
    %v4986 = vpop.f32.mrf.mxu0
    %4987 = vdwg.mxu0
    %v4988 = vxor.u32 %v4900, 2147483648
    %v4989 = vmul.f32 %v4988, 1.442695
    %v4990 = vpow.pop %v4989
    %v4991 = vadd.f32 %v4990, 1.0
    %v4992 = vrcp.pop %v4991
    %v4993 = vmul.f32 1.0, %v4992
    %v4994 = vxor.u32 %v4902, 2147483648
    %v4995 = vmul.f32 %v4994, 1.442695
    %v4996 = vpow.pop %v4995
    %v4997 = vadd.f32 %v4996, 1.0
    %v4998 = vrcp.pop %v4997
    %v4999 = vmul.f32 1.0, %v4998
    %v5000 = vtanh.pop %v4982
    %v5001 = vxor.u32 %v4984, 2147483648
    %v5002 = vmul.f32 %v5001, 1.442695
    %v5003 = vpow.pop %v5002
    %v5004 = vadd.f32 %v5003, 1.0
    %v5005 = vrcp.pop %v5004
    %v5006 = vmul.f32 1.0, %v5005
    %v5007 = vmul.f32 %v4999, %v3918
    %v5008 = vmul.f32 %v4993, %v5000
    %v5009 = vadd.f32 %v5007, %v5008
    %v5010 = vtanh.pop %v5009
    %v5011 = vmul.f32 %v5006, %v5010
    %v5012 = vpack.c.bf16 %v5011, %v5011
    %v5013 = vld [vmem:[%s8] sm:$0xf]
    %v5014 = vld [vmem:[%s8 + $0x4] sm:$0xf]
    %v5015 = vld [vmem:[%s8 + $0x8] sm:$0xf]
    %v5016 = vld [vmem:[%s8 + $0xc] sm:$0xf]
    %v5017 = vld [vmem:[%s8 + $0x10] sm:$0xf]
    %v5018 = vld [vmem:[%s8 + $0x14] sm:$0xf]
    %v5019 = vld [vmem:[%s8 + $0x18] sm:$0xf]
    %v5020 = vld [vmem:[%s8 + $0x1c] sm:$0xf]
    %v5021 = vld [vmem:[%s8 + $0x20] sm:$0xf]
    %v5022 = vld [vmem:[%s8 + $0x24] sm:$0xf]
    %v5023 = vld [vmem:[%s8 + $0x28] sm:$0xf]
    %v5024 = vld [vmem:[%s8 + $0x2c] sm:$0xf]
    %v5025 = vld [vmem:[%s8 + $0x30] sm:$0xf]
    %v5026 = vld [vmem:[%s8 + $0x34] sm:$0xf]
    %v5027 = vld [vmem:[%s8 + $0x38] sm:$0xf]
    %v5028 = vld [vmem:[%s8 + $0x3c] sm:$0xf]
    %v5029 = vld [vmem:[%s8 + $0x40] sm:$0xf]
    %v5030 = vld [vmem:[%s8 + $0x44] sm:$0xf]
    %v5031 = vld [vmem:[%s8 + $0x48] sm:$0xf]
    %v5032 = vld [vmem:[%s8 + $0x4c] sm:$0xf]
    %v5033 = vld [vmem:[%s8 + $0x50] sm:$0xf]
    %v5034 = vld [vmem:[%s8 + $0x54] sm:$0xf]
    %v5035 = vld [vmem:[%s8 + $0x58] sm:$0xf]
    %v5036 = vld [vmem:[%s8 + $0x5c] sm:$0xf]
    %v5037 = vld [vmem:[%s8 + $0x60] sm:$0xf]
    %v5038 = vld [vmem:[%s8 + $0x64] sm:$0xf]
    %v5039 = vld [vmem:[%s8 + $0x68] sm:$0xf]
    %v5040 = vld [vmem:[%s8 + $0x6c] sm:$0xf]
    %v5041 = vld [vmem:[%s8 + $0x70] sm:$0xf]
    %v5042 = vld [vmem:[%s8 + $0x74] sm:$0xf]
    %v5043 = vld [vmem:[%s8 + $0x78] sm:$0xf]
    %v5044 = vld [vmem:[%s8 + $0x7c] sm:$0xf]
    %v5045 = vld [vmem:[%s9] sm:$0x1]
    %v5047 = vlaneseq
    %v5048 = vshrl.u32 %v5047, 7
    %v5049 = vsub.s32 0, %v5048
    %v5050 = vrot.slane %v5045, %v5049
    %v5084 = vunpack.c.l.b16 %v5013
    %v5085 = vunpack.c.l.b16 %v5014
    %v5086 = vunpack.c.l.b16 %v5015
    %v5087 = vunpack.c.l.b16 %v5016
    %v5088 = vunpack.c.l.b16 %v5017
    %v5089 = vunpack.c.l.b16 %v5018
    %v5090 = vunpack.c.l.b16 %v5019
    %v5091 = vunpack.c.l.b16 %v5020
    %v5092 = vunpack.c.l.b16 %v5021
    %v5093 = vunpack.c.l.b16 %v5022
    %v5094 = vunpack.c.l.b16 %v5023
    %v5095 = vunpack.c.l.b16 %v5024
    %v5096 = vunpack.c.l.b16 %v5025
    %v5097 = vunpack.c.l.b16 %v5026
    %v5098 = vunpack.c.l.b16 %v5027
    %v5099 = vunpack.c.l.b16 %v5028
    %v5100 = vunpack.c.l.b16 %v5029
    %v5101 = vunpack.c.l.b16 %v5030
    %v5102 = vunpack.c.l.b16 %v5031
    %v5103 = vunpack.c.l.b16 %v5032
    %v5104 = vunpack.c.l.b16 %v5033
    %v5105 = vunpack.c.l.b16 %v5034
    %v5106 = vunpack.c.l.b16 %v5035
    %v5107 = vunpack.c.l.b16 %v5036
    %v5108 = vunpack.c.l.b16 %v5037
    %v5109 = vunpack.c.l.b16 %v5038
    %v5110 = vunpack.c.l.b16 %v5039
    %v5111 = vunpack.c.l.b16 %v5040
    %v5112 = vunpack.c.l.b16 %v5041
    %v5113 = vunpack.c.l.b16 %v5042
    %v5114 = vunpack.c.l.b16 %v5043
    %v5115 = vunpack.c.l.b16 %v5044
    %v5116 = vpack.c.b16 %v5085, %v5084
    %v5117 = vpack.c.b16 %v5087, %v5086
    %v5118 = vpack.c.b16 %v5089, %v5088
    %v5119 = vpack.c.b16 %v5091, %v5090
    %v5120 = vpack.c.b16 %v5093, %v5092
    %v5121 = vpack.c.b16 %v5095, %v5094
    %v5122 = vpack.c.b16 %v5097, %v5096
    %v5123 = vpack.c.b16 %v5099, %v5098
    %v5124 = vpack.c.b16 %v5101, %v5100
    %v5125 = vpack.c.b16 %v5103, %v5102
    %v5126 = vpack.c.b16 %v5105, %v5104
    %v5127 = vpack.c.b16 %v5107, %v5106
    %v5128 = vpack.c.b16 %v5109, %v5108
    %v5129 = vpack.c.b16 %v5111, %v5110
    %v5130 = vpack.c.b16 %v5113, %v5112
    %v5131 = vpack.c.b16 %v5115, %v5114
    %5148 = vmatprep.subr.bf16.mxu0 0
    %5149 = vmatpush1.bf16.msra.mxu0 %v5123
    %5150 = vmatprep.subr.bf16.mxu0 0
    %5151 = vmatpush1.bf16.msra.mxu0 %v5122
    %5152 = vmatprep.subr.bf16.mxu0 0
    %5153 = vmatpush1.bf16.msra.mxu0 %v5121
    %5154 = vmatprep.subr.bf16.mxu0 0
    %5155 = vmatpush1.bf16.msra.mxu0 %v5120
    %5156 = vmatprep.subr.bf16.mxu0 0
    %5157 = vmatpush1.bf16.msra.mxu0 %v5119
    %5158 = vmatprep.subr.bf16.mxu0 0
    %5159 = vmatpush1.bf16.msra.mxu0 %v5118
    %5160 = vmatprep.subr.bf16.mxu0 0
    %5161 = vmatpush1.bf16.msra.mxu0 %v5117
    %5162 = vmatprep.subr.bf16.mxu0 0
    %5163 = vmatpush1.bf16.msra.mxu0 %v5116
    %5164 = vmatprep.subr.bf16.mxu0 0
    %5165 = vmatpush2.bf16.msra.mxu0 %v5131
    %5166 = vmatprep.subr.bf16.mxu0 0
    %5167 = vmatpush2.bf16.msra.mxu0 %v5130
    %5168 = vmatprep.subr.bf16.mxu0 0
    %5169 = vmatpush2.bf16.msra.mxu0 %v5129
    %5170 = vmatprep.subr.bf16.mxu0 0
    %5171 = vmatpush2.bf16.msra.mxu0 %v5128
    %5172 = vmatprep.subr.bf16.mxu0 0
    %5173 = vmatpush2.bf16.msra.mxu0 %v5127
    %5174 = vmatprep.subr.bf16.mxu0 0
    %5175 = vmatpush2.bf16.msra.mxu0 %v5126
    %5176 = vmatprep.subr.bf16.mxu0 0
    %5177 = vmatpush2.bf16.msra.mxu0 %v5125
    %5178 = vmatprep.subr.bf16.mxu0 0
    %5179 = vmatpush2.bf16.msra.mxu0 %v5124
    %5180 = vmatprep.mubr.bf16.mxu0 %v4225
    %5181 = vmatmul.mubr.bf16.gmra.mxu0 %v5012
    %v5182 = vpop.f32.mrf.mxu0
    %v5183 = vadd.f32 %v5050, %v5182
    %v5184 = vpop.f32.mrf.mxu0
    %v5185 = vpop.f32.mrf.mxu0
    %v5186 = vpop.f32.mrf.mxu0
    %5187 = vdwg.mxu0
    %s5188 = scalar_lea.vmem [#allocation12], 16
    %5189 = vst [vmem:[%s5188] sm:$0xff] %v5183
    %5190 = vmax.xlane.f32.xlu0 %v5183
    %v5191 = vpop.xlane.xlu0 %5190
    %vm5192 = vcmp.ge.f32.partialorder %v5183, %v5191
    %v5193 = vsel %vm5192, %v100, 128
    %v5194 = vand.u32 %v5193, 65535
    %v5195 = vshra.s32 %v5193, 16
    %v5196 = vcvt.s32.f32 %v5194
    %v5197 = vcvt.s32.f32 %v5195
    %5198 = vmin.xlane.f32.xlu0 %v5197
    %v5199 = vpop.xlane.xlu0 %5198
    %vm5200 = vcmp.eq.f32.partialorder %v5197, %v5199
    %v5201 = vsel %vm5200, %v5196, inf
    %5202 = vmin.xlane.f32.xlu0 %v5201
    %v5203 = vpop.xlane.xlu0 %5202
    %v5204 = vcvt.f32.s32 %v5203
    %v5205 = vcvt.f32.s32 %v5199
    %v5206 = vshll.u32 %v5205, 16
    %v5207 = vadd.s32 %v5206, %v5204
    %s5208 = sld [smem:[#allocation4 + $0x2]]
    %p5209 = scmp.ne.s32.totalorder %s5208, 0
    %s5210 = scalar_lea.vmem %s1, 16
    %v5211 = vld [vmem:[%s5210] sm:$0xff]
    %s5212 = scalar_select %p5209, 1, 0
    %v5213 = vstv %s5212
    %vm5214 = vcmp.eq.s32.totalorder %v5213, 1
    %v5215 = vsel %vm5214, %v5211, %v5207
    %v5216 = vld [vmem:[#allocation3] sm:$0xff]
    %v5217 = vld [vmem:[#allocation3 + $0x8] sm:$0xff]
    %v5218 = vld [vmem:[#allocation3 + $0x10] sm:$0xff]
    %v5219 = vld [vmem:[#allocation3 + $0x18] sm:$0xff]
    %v5220 = vld [vmem:[#allocation3 + $0x20] sm:$0xff]
    %v5221 = vld [vmem:[#allocation3 + $0x28] sm:$0xff]
    %v5222 = vld [vmem:[#allocation3 + $0x30] sm:$0xff]
    %v5223 = vld [vmem:[#allocation3 + $0x38] sm:$0xff]
    %v5224 = vmul.f32 %v5216, %v5011
    %v5225 = vmul.f32 %v5217, %v5011
    %v5226 = vmul.f32 %v5218, %v5011
    %v5227 = vmul.f32 %v5219, %v5011
    %v5228 = vmul.f32 %v5220, %v5011
    %v5229 = vmul.f32 %v5221, %v5011
    %v5230 = vmul.f32 %v5222, %v5011
    %v5231 = vmul.f32 %v5223, %v5011
    %5232 = vadd.xlane.f32.xlu0 %v5224
    %v5233 = vpop.xlane.xlu0 %5232
    %5234 = vadd.xlane.f32.xlu0 %v5225
    %v5235 = vpop.xlane.xlu0 %5234
    %5236 = vadd.xlane.f32.xlu0 %v5226
    %v5237 = vpop.xlane.xlu0 %5236
    %5238 = vadd.xlane.f32.xlu0 %v5227
    %v5239 = vpop.xlane.xlu0 %5238
    %5240 = vadd.xlane.f32.xlu0 %v5228
    %v5241 = vpop.xlane.xlu0 %5240
    %5242 = vadd.xlane.f32.xlu0 %v5229
    %v5243 = vpop.xlane.xlu0 %5242
    %5244 = vadd.xlane.f32.xlu0 %v5230
    %v5245 = vpop.xlane.xlu0 %5244
    %5246 = vadd.xlane.f32.xlu0 %v5231
    %v5247 = vpop.xlane.xlu0 %5246
    %v5248 = vmax.f32 %v5233, %v5241
    %v5249 = vmax.f32 %v5235, %v5243
    %v5250 = vmax.f32 %v5237, %v5245
    %v5251 = vmax.f32 %v5239, %v5247
    %v5252 = vmax.f32 %v5248, %v5249
    %v5253 = vmax.f32 %v5250, %v5251
    %v5254 = vmax.f32 %v5252, %v5253
    %v5255 = vsub.f32 %v5233, %v5254
    %v5256 = vsub.f32 %v5235, %v5254
    %v5257 = vsub.f32 %v5237, %v5254
    %v5258 = vsub.f32 %v5239, %v5254
    %v5259 = vsub.f32 %v5241, %v5254
    %v5260 = vsub.f32 %v5243, %v5254
    %v5261 = vsub.f32 %v5245, %v5254
    %v5262 = vsub.f32 %v5247, %v5254
    %v5263 = vmul.f32 %v5255, 1.442695
    %v5264 = vpow.pop %v5263
    %v5265 = vmul.f32 %v5256, 1.442695
    %v5266 = vpow.pop %v5265
    %v5267 = vmul.f32 %v5257, 1.442695
    %v5268 = vpow.pop %v5267
    %v5269 = vmul.f32 %v5258, 1.442695
    %v5270 = vpow.pop %v5269
    %v5271 = vmul.f32 %v5259, 1.442695
    %v5272 = vpow.pop %v5271
    %v5273 = vmul.f32 %v5260, 1.442695
    %v5274 = vpow.pop %v5273
    %v5275 = vmul.f32 %v5261, 1.442695
    %v5276 = vpow.pop %v5275
    %v5277 = vmul.f32 %v5262, 1.442695
    %v5278 = vpow.pop %v5277
    %v5279 = vadd.f32 %v5264, %v5266
    %v5280 = vadd.f32 %v5279, %v5268
    %v5281 = vadd.f32 %v5280, %v5270
    %v5282 = vadd.f32 %v5281, %v5272
    %v5283 = vadd.f32 %v5282, %v5274
    %v5284 = vadd.f32 %v5283, %v5276
    %v5285 = vadd.f32 %v5284, %v5278
    %v5286 = vrcp.pop %v5285
    %v5287 = vmul.f32 %v5264, %v5286
    %v5288 = vmul.f32 %v5266, %v5286
    %v5289 = vmul.f32 %v5268, %v5286
    %v5290 = vmul.f32 %v5270, %v5286
    %v5291 = vmul.f32 %v5272, %v5286
    %v5292 = vmul.f32 %v5274, %v5286
    %v5293 = vmul.f32 %v5276, %v5286
    %v5294 = vmul.f32 %v5278, %v5286
    %v5295 = vmul.f32 %v5287, %v5216
    %v5296 = vmul.f32 %v5288, %v5217
    %v5297 = vmul.f32 %v5289, %v5218
    %v5298 = vmul.f32 %v5290, %v5219
    %v5299 = vmul.f32 %v5291, %v5220
    %v5300 = vmul.f32 %v5292, %v5221
    %v5301 = vmul.f32 %v5293, %v5222
    %v5302 = vmul.f32 %v5294, %v5223
    %v5303 = vadd.f32 %v5295, %v5296
    %v5304 = vadd.f32 %v5303, %v5297
    %v5305 = vadd.f32 %v5304, %v5298
    %v5306 = vadd.f32 %v5305, %v5299
    %v5307 = vadd.f32 %v5306, %v5300
    %v5308 = vadd.f32 %v5307, %v5301
    %v5309 = vadd.f32 %v5308, %v5302
    %5310 = vset.pattern.permute.xlu0 0
    %5311 = vperm.xlu0 %5310, %v5215
    %v5312 = vpop.permute.xlu0 %5311
    %vm5313 = vcmp.eq.s32.totalorder %v5312, %v100
    %v5314 = vsel %vm5313, 1.0, 0.0
    %v5315 = vpack.c.bf16 %v5314, %v5314
    %v5316 = vpack.c.bf16 %v5309, %v5309
    %v5317 = vld [vmem:[#allocation11] sm:$0xff]
    %v5318 = vld [vmem:[#allocation11 + $0x8] sm:$0xff]
    %v5319 = vld [vmem:[#allocation11 + $0x10] sm:$0xff]
    %v5320 = vld [vmem:[#allocation11 + $0x18] sm:$0xff]
    %v5321 = vld [vmem:[#allocation11 + $0x20] sm:$0xff]
    %v5322 = vld [vmem:[#allocation11 + $0x28] sm:$0xff]
    %v5323 = vld [vmem:[#allocation11 + $0x30] sm:$0xff]
    %v5324 = vld [vmem:[#allocation11 + $0x38] sm:$0xff]
    %v5325 = vld [vmem:[#allocation11 + $0x40] sm:$0xff]
    %v5326 = vld [vmem:[#allocation11 + $0x48] sm:$0xff]
    %v5327 = vld [vmem:[#allocation11 + $0x50] sm:$0xff]
    %v5328 = vld [vmem:[#allocation11 + $0x58] sm:$0xff]
    %v5329 = vld [vmem:[#allocation11 + $0x60] sm:$0xff]
    %v5330 = vld [vmem:[#allocation11 + $0x68] sm:$0xff]
    %v5331 = vld [vmem:[#allocation11 + $0x70] sm:$0xff]
    %v5332 = vld [vmem:[#allocation11 + $0x78] sm:$0xff]
    %v5333 = vld [vmem:[#allocation11 + $0x80] sm:$0xff]
    %v5334 = vld [vmem:[#allocation11 + $0x88] sm:$0xff]
    %v5335 = vld [vmem:[#allocation11 + $0x90] sm:$0xff]
    %v5336 = vld [vmem:[#allocation11 + $0x98] sm:$0xff]
    %v5337 = vld [vmem:[#allocation11 + $0xa0] sm:$0xff]
    %v5338 = vld [vmem:[#allocation11 + $0xa8] sm:$0xff]
    %v5339 = vld [vmem:[#allocation11 + $0xb0] sm:$0xff]
    %v5340 = vld [vmem:[#allocation11 + $0xb8] sm:$0xff]
    %v5341 = vld [vmem:[#allocation11 + $0xc0] sm:$0xff]
    %v5342 = vld [vmem:[#allocation11 + $0xc8] sm:$0xff]
    %v5343 = vld [vmem:[#allocation11 + $0xd0] sm:$0xff]
    %v5344 = vld [vmem:[#allocation11 + $0xd8] sm:$0xff]
    %v5345 = vld [vmem:[#allocation11 + $0xe0] sm:$0xff]
    %v5346 = vld [vmem:[#allocation11 + $0xe8] sm:$0xff]
    %v5347 = vld [vmem:[#allocation11 + $0xf0] sm:$0xff]
    %v5348 = vld [vmem:[#allocation11 + $0xf8] sm:$0xff]
    %v5349 = vld [vmem:[#allocation11 + $0x100] sm:$0xff]
    %v5350 = vld [vmem:[#allocation11 + $0x108] sm:$0xff]
    %v5351 = vld [vmem:[#allocation11 + $0x110] sm:$0xff]
    %v5352 = vld [vmem:[#allocation11 + $0x118] sm:$0xff]
    %v5353 = vld [vmem:[#allocation11 + $0x120] sm:$0xff]
    %v5354 = vld [vmem:[#allocation11 + $0x128] sm:$0xff]
    %v5355 = vld [vmem:[#allocation11 + $0x130] sm:$0xff]
    %v5356 = vld [vmem:[#allocation11 + $0x138] sm:$0xff]
    %v5357 = vld [vmem:[#allocation11 + $0x140] sm:$0xff]
    %v5358 = vld [vmem:[#allocation11 + $0x148] sm:$0xff]
    %v5359 = vld [vmem:[#allocation11 + $0x150] sm:$0xff]
    %v5360 = vld [vmem:[#allocation11 + $0x158] sm:$0xff]
    %v5361 = vld [vmem:[#allocation11 + $0x160] sm:$0xff]
    %v5362 = vld [vmem:[#allocation11 + $0x168] sm:$0xff]
    %v5363 = vld [vmem:[#allocation11 + $0x170] sm:$0xff]
    %v5364 = vld [vmem:[#allocation11 + $0x178] sm:$0xff]
    %v5365 = vld [vmem:[#allocation11 + $0x180] sm:$0xff]
    %v5366 = vld [vmem:[#allocation11 + $0x188] sm:$0xff]
    %v5367 = vld [vmem:[#allocation11 + $0x190] sm:$0xff]
    %v5368 = vld [vmem:[#allocation11 + $0x198] sm:$0xff]
    %v5369 = vld [vmem:[#allocation11 + $0x1a0] sm:$0xff]
    %v5370 = vld [vmem:[#allocation11 + $0x1a8] sm:$0xff]
    %v5371 = vld [vmem:[#allocation11 + $0x1b0] sm:$0xff]
    %v5372 = vld [vmem:[#allocation11 + $0x1b8] sm:$0xff]
    %v5373 = vld [vmem:[#allocation11 + $0x1c0] sm:$0xff]
    %v5374 = vld [vmem:[#allocation11 + $0x1c8] sm:$0xff]
    %v5375 = vld [vmem:[#allocation11 + $0x1d0] sm:$0xff]
    %v5376 = vld [vmem:[#allocation11 + $0x1d8] sm:$0xff]
    %v5377 = vld [vmem:[#allocation11 + $0x1e0] sm:$0xff]
    %v5378 = vld [vmem:[#allocation11 + $0x1e8] sm:$0xff]
    %v5379 = vld [vmem:[#allocation11 + $0x1f0] sm:$0xff]
    %v5380 = vld [vmem:[#allocation11 + $0x1f8] sm:$0xff]
    %v5381 = vld [vmem:[#allocation11 + $0x200] sm:$0xff]
    %v5382 = vld [vmem:[#allocation11 + $0x208] sm:$0xff]
    %v5383 = vld [vmem:[#allocation11 + $0x210] sm:$0xff]
    %v5384 = vld [vmem:[#allocation11 + $0x218] sm:$0xff]
    %v5385 = vld [vmem:[#allocation11 + $0x220] sm:$0xff]
    %v5386 = vld [vmem:[#allocation11 + $0x228] sm:$0xff]
    %v5387 = vld [vmem:[#allocation11 + $0x230] sm:$0xff]
    %v5388 = vld [vmem:[#allocation11 + $0x238] sm:$0xff]
    %v5389 = vld [vmem:[#allocation11 + $0x240] sm:$0xff]
    %v5390 = vld [vmem:[#allocation11 + $0x248] sm:$0xff]
    %v5391 = vld [vmem:[#allocation11 + $0x250] sm:$0xff]
    %v5392 = vld [vmem:[#allocation11 + $0x258] sm:$0xff]
    %v5393 = vld [vmem:[#allocation11 + $0x260] sm:$0xff]
    %v5394 = vld [vmem:[#allocation11 + $0x268] sm:$0xff]
    %v5395 = vld [vmem:[#allocation11 + $0x270] sm:$0xff]
    %v5396 = vld [vmem:[#allocation11 + $0x278] sm:$0xff]
    %v5397 = vld [vmem:[#allocation11 + $0x280] sm:$0xff]
    %v5398 = vld [vmem:[#allocation11 + $0x288] sm:$0xff]
    %v5399 = vld [vmem:[#allocation11 + $0x290] sm:$0xff]
    %v5400 = vld [vmem:[#allocation11 + $0x298] sm:$0xff]
    %v5401 = vld [vmem:[#allocation11 + $0x2a0] sm:$0xff]
    %v5402 = vld [vmem:[#allocation11 + $0x2a8] sm:$0xff]
    %v5403 = vld [vmem:[#allocation11 + $0x2b0] sm:$0xff]
    %v5404 = vld [vmem:[#allocation11 + $0x2b8] sm:$0xff]
    %v5405 = vld [vmem:[#allocation11 + $0x2c0] sm:$0xff]
    %v5406 = vld [vmem:[#allocation11 + $0x2c8] sm:$0xff]
    %v5407 = vld [vmem:[#allocation11 + $0x2d0] sm:$0xff]
    %v5408 = vld [vmem:[#allocation11 + $0x2d8] sm:$0xff]
    %v5409 = vld [vmem:[#allocation11 + $0x2e0] sm:$0xff]
    %v5410 = vld [vmem:[#allocation11 + $0x2e8] sm:$0xff]
    %v5411 = vld [vmem:[#allocation11 + $0x2f0] sm:$0xff]
    %v5412 = vld [vmem:[#allocation11 + $0x2f8] sm:$0xff]
    %v5413 = vld [vmem:[%s7] sm:$0xf]
    %v5415 = vlaneseq
    %v5416 = vshrl.u32 %v5415, 7
    %v5417 = vsub.s32 0, %v5416
    %v5418 = vrot.slane %v5413, %v5417
    %v5419 = vlaneseq
    %v5420 = vshrl.u32 %v5419, 7
    %v5421 = vsub.s32 1, %v5420
    %v5422 = vrot.slane %v5413, %v5421
    %v5423 = vlaneseq
    %v5424 = vshrl.u32 %v5423, 7
    %v5425 = vsub.s32 2, %v5424
    %v5426 = vrot.slane %v5413, %v5425
    %v5427 = vlaneseq
    %v5428 = vshrl.u32 %v5427, 7
    %v5429 = vsub.s32 3, %v5428
    %v5430 = vrot.slane %v5413, %v5429
    %v5531 = vunpack.c.l.b16 %v5317
    %v5532 = vunpack.c.h.b16 %v5317
    %v5533 = vunpack.c.l.b16 %v5318
    %v5534 = vunpack.c.h.b16 %v5318
    %v5535 = vunpack.c.l.b16 %v5319
    %v5536 = vunpack.c.h.b16 %v5319
    %v5537 = vunpack.c.l.b16 %v5320
    %v5538 = vunpack.c.h.b16 %v5320
    %v5539 = vunpack.c.l.b16 %v5321
    %v5540 = vunpack.c.h.b16 %v5321
    %v5541 = vunpack.c.l.b16 %v5322
    %v5542 = vunpack.c.h.b16 %v5322
    %v5543 = vunpack.c.l.b16 %v5323
    %v5544 = vunpack.c.h.b16 %v5323
    %v5545 = vunpack.c.l.b16 %v5324
    %v5546 = vunpack.c.h.b16 %v5324
    %v5547 = vunpack.c.l.b16 %v5325
    %v5548 = vunpack.c.h.b16 %v5325
    %v5549 = vunpack.c.l.b16 %v5326
    %v5550 = vunpack.c.h.b16 %v5326
    %v5551 = vunpack.c.l.b16 %v5327
    %v5552 = vunpack.c.h.b16 %v5327
    %v5553 = vunpack.c.l.b16 %v5328
    %v5554 = vunpack.c.h.b16 %v5328
    %v5555 = vunpack.c.l.b16 %v5329
    %v5556 = vunpack.c.h.b16 %v5329
    %v5557 = vunpack.c.l.b16 %v5330
    %v5558 = vunpack.c.h.b16 %v5330
    %v5559 = vunpack.c.l.b16 %v5331
    %v5560 = vunpack.c.h.b16 %v5331
    %v5561 = vunpack.c.l.b16 %v5332
    %v5562 = vunpack.c.h.b16 %v5332
    %v5563 = vunpack.c.l.b16 %v5333
    %v5564 = vunpack.c.h.b16 %v5333
    %v5565 = vunpack.c.l.b16 %v5334
    %v5566 = vunpack.c.h.b16 %v5334
    %v5567 = vunpack.c.l.b16 %v5335
    %v5568 = vunpack.c.h.b16 %v5335
    %v5569 = vunpack.c.l.b16 %v5336
    %v5570 = vunpack.c.h.b16 %v5336
    %v5571 = vunpack.c.l.b16 %v5337
    %v5572 = vunpack.c.h.b16 %v5337
    %v5573 = vunpack.c.l.b16 %v5338
    %v5574 = vunpack.c.h.b16 %v5338
    %v5575 = vunpack.c.l.b16 %v5339
    %v5576 = vunpack.c.h.b16 %v5339
    %v5577 = vunpack.c.l.b16 %v5340
    %v5578 = vunpack.c.h.b16 %v5340
    %v5579 = vunpack.c.l.b16 %v5341
    %v5580 = vunpack.c.h.b16 %v5341
    %v5581 = vunpack.c.l.b16 %v5342
    %v5582 = vunpack.c.h.b16 %v5342
    %v5583 = vunpack.c.l.b16 %v5343
    %v5584 = vunpack.c.h.b16 %v5343
    %v5585 = vunpack.c.l.b16 %v5344
    %v5586 = vunpack.c.h.b16 %v5344
    %v5587 = vunpack.c.l.b16 %v5345
    %v5588 = vunpack.c.h.b16 %v5345
    %v5589 = vunpack.c.l.b16 %v5346
    %v5590 = vunpack.c.h.b16 %v5346
    %v5591 = vunpack.c.l.b16 %v5347
    %v5592 = vunpack.c.h.b16 %v5347
    %v5593 = vunpack.c.l.b16 %v5348
    %v5594 = vunpack.c.h.b16 %v5348
    %v5595 = vunpack.c.l.b16 %v5349
    %v5596 = vunpack.c.h.b16 %v5349
    %v5597 = vunpack.c.l.b16 %v5350
    %v5598 = vunpack.c.h.b16 %v5350
    %v5599 = vunpack.c.l.b16 %v5351
    %v5600 = vunpack.c.h.b16 %v5351
    %v5601 = vunpack.c.l.b16 %v5352
    %v5602 = vunpack.c.h.b16 %v5352
    %v5603 = vunpack.c.l.b16 %v5353
    %v5604 = vunpack.c.h.b16 %v5353
    %v5605 = vunpack.c.l.b16 %v5354
    %v5606 = vunpack.c.h.b16 %v5354
    %v5607 = vunpack.c.l.b16 %v5355
    %v5608 = vunpack.c.h.b16 %v5355
    %v5609 = vunpack.c.l.b16 %v5356
    %v5610 = vunpack.c.h.b16 %v5356
    %v5611 = vunpack.c.l.b16 %v5357
    %v5612 = vunpack.c.h.b16 %v5357
    %v5613 = vunpack.c.l.b16 %v5358
    %v5614 = vunpack.c.h.b16 %v5358
    %v5615 = vunpack.c.l.b16 %v5359
    %v5616 = vunpack.c.h.b16 %v5359
    %v5617 = vunpack.c.l.b16 %v5360
    %v5618 = vunpack.c.h.b16 %v5360
    %v5619 = vunpack.c.l.b16 %v5361
    %v5620 = vunpack.c.h.b16 %v5361
    %v5621 = vunpack.c.l.b16 %v5362
    %v5622 = vunpack.c.h.b16 %v5362
    %v5623 = vunpack.c.l.b16 %v5363
    %v5624 = vunpack.c.h.b16 %v5363
    %v5625 = vunpack.c.l.b16 %v5364
    %v5626 = vunpack.c.h.b16 %v5364
    %v5627 = vunpack.c.l.b16 %v5365
    %v5628 = vunpack.c.h.b16 %v5365
    %v5629 = vunpack.c.l.b16 %v5366
    %v5630 = vunpack.c.h.b16 %v5366
    %v5631 = vunpack.c.l.b16 %v5367
    %v5632 = vunpack.c.h.b16 %v5367
    %v5633 = vunpack.c.l.b16 %v5368
    %v5634 = vunpack.c.h.b16 %v5368
    %v5635 = vunpack.c.l.b16 %v5369
    %v5636 = vunpack.c.h.b16 %v5369
    %v5637 = vunpack.c.l.b16 %v5370
    %v5638 = vunpack.c.h.b16 %v5370
    %v5639 = vunpack.c.l.b16 %v5371
    %v5640 = vunpack.c.h.b16 %v5371
    %v5641 = vunpack.c.l.b16 %v5372
    %v5642 = vunpack.c.h.b16 %v5372
    %v5643 = vunpack.c.l.b16 %v5373
    %v5644 = vunpack.c.h.b16 %v5373
    %v5645 = vunpack.c.l.b16 %v5374
    %v5646 = vunpack.c.h.b16 %v5374
    %v5647 = vunpack.c.l.b16 %v5375
    %v5648 = vunpack.c.h.b16 %v5375
    %v5649 = vunpack.c.l.b16 %v5376
    %v5650 = vunpack.c.h.b16 %v5376
    %v5651 = vunpack.c.l.b16 %v5377
    %v5652 = vunpack.c.h.b16 %v5377
    %v5653 = vunpack.c.l.b16 %v5378
    %v5654 = vunpack.c.h.b16 %v5378
    %v5655 = vunpack.c.l.b16 %v5379
    %v5656 = vunpack.c.h.b16 %v5379
    %v5657 = vunpack.c.l.b16 %v5380
    %v5658 = vunpack.c.h.b16 %v5380
    %v5659 = vunpack.c.l.b16 %v5381
    %v5660 = vunpack.c.h.b16 %v5381
    %v5661 = vunpack.c.l.b16 %v5382
    %v5662 = vunpack.c.h.b16 %v5382
    %v5663 = vunpack.c.l.b16 %v5383
    %v5664 = vunpack.c.h.b16 %v5383
    %v5665 = vunpack.c.l.b16 %v5384
    %v5666 = vunpack.c.h.b16 %v5384
    %v5667 = vunpack.c.l.b16 %v5385
    %v5668 = vunpack.c.h.b16 %v5385
    %v5669 = vunpack.c.l.b16 %v5386
    %v5670 = vunpack.c.h.b16 %v5386
    %v5671 = vunpack.c.l.b16 %v5387
    %v5672 = vunpack.c.h.b16 %v5387
    %v5673 = vunpack.c.l.b16 %v5388
    %v5674 = vunpack.c.h.b16 %v5388
    %v5675 = vunpack.c.l.b16 %v5389
    %v5676 = vunpack.c.h.b16 %v5389
    %v5677 = vunpack.c.l.b16 %v5390
    %v5678 = vunpack.c.h.b16 %v5390
    %v5679 = vunpack.c.l.b16 %v5391
    %v5680 = vunpack.c.h.b16 %v5391
    %v5681 = vunpack.c.l.b16 %v5392
    %v5682 = vunpack.c.h.b16 %v5392
    %v5683 = vunpack.c.l.b16 %v5393
    %v5684 = vunpack.c.h.b16 %v5393
    %v5685 = vunpack.c.l.b16 %v5394
    %v5686 = vunpack.c.h.b16 %v5394
    %v5687 = vunpack.c.l.b16 %v5395
    %v5688 = vunpack.c.h.b16 %v5395
    %v5689 = vunpack.c.l.b16 %v5396
    %v5690 = vunpack.c.h.b16 %v5396
    %v5691 = vunpack.c.l.b16 %v5397
    %v5692 = vunpack.c.h.b16 %v5397
    %v5693 = vunpack.c.l.b16 %v5398
    %v5694 = vunpack.c.h.b16 %v5398
    %v5695 = vunpack.c.l.b16 %v5399
    %v5696 = vunpack.c.h.b16 %v5399
    %v5697 = vunpack.c.l.b16 %v5400
    %v5698 = vunpack.c.h.b16 %v5400
    %v5699 = vunpack.c.l.b16 %v5401
    %v5700 = vunpack.c.h.b16 %v5401
    %v5701 = vunpack.c.l.b16 %v5402
    %v5702 = vunpack.c.h.b16 %v5402
    %v5703 = vunpack.c.l.b16 %v5403
    %v5704 = vunpack.c.h.b16 %v5403
    %v5705 = vunpack.c.l.b16 %v5404
    %v5706 = vunpack.c.h.b16 %v5404
    %v5707 = vunpack.c.l.b16 %v5405
    %v5708 = vunpack.c.h.b16 %v5405
    %v5709 = vunpack.c.l.b16 %v5406
    %v5710 = vunpack.c.h.b16 %v5406
    %v5711 = vunpack.c.l.b16 %v5407
    %v5712 = vunpack.c.h.b16 %v5407
    %v5713 = vunpack.c.l.b16 %v5408
    %v5714 = vunpack.c.h.b16 %v5408
    %v5715 = vunpack.c.l.b16 %v5409
    %v5716 = vunpack.c.h.b16 %v5409
    %v5717 = vunpack.c.l.b16 %v5410
    %v5718 = vunpack.c.h.b16 %v5410
    %v5719 = vunpack.c.l.b16 %v5411
    %v5720 = vunpack.c.h.b16 %v5411
    %v5721 = vunpack.c.l.b16 %v5412
    %v5722 = vunpack.c.h.b16 %v5412
    %v5723 = vpack.c.b16 %v5535, %v5531
    %v5724 = vpack.c.b16 %v5536, %v5532
    %v5725 = vpack.c.b16 %v5537, %v5533
    %v5726 = vpack.c.b16 %v5538, %v5534
    %v5727 = vpack.c.b16 %v5543, %v5539
    %v5728 = vpack.c.b16 %v5544, %v5540
    %v5729 = vpack.c.b16 %v5545, %v5541
    %v5730 = vpack.c.b16 %v5546, %v5542
    %v5731 = vpack.c.b16 %v5551, %v5547
    %v5732 = vpack.c.b16 %v5552, %v5548
    %v5733 = vpack.c.b16 %v5553, %v5549
    %v5734 = vpack.c.b16 %v5554, %v5550
    %v5735 = vpack.c.b16 %v5559, %v5555
    %v5736 = vpack.c.b16 %v5560, %v5556
    %v5737 = vpack.c.b16 %v5561, %v5557
    %v5738 = vpack.c.b16 %v5562, %v5558
    %v5739 = vpack.c.b16 %v5567, %v5563
    %v5740 = vpack.c.b16 %v5568, %v5564
    %v5741 = vpack.c.b16 %v5569, %v5565
    %v5742 = vpack.c.b16 %v5570, %v5566
    %v5743 = vpack.c.b16 %v5575, %v5571
    %v5744 = vpack.c.b16 %v5576, %v5572
    %v5745 = vpack.c.b16 %v5577, %v5573
    %v5746 = vpack.c.b16 %v5578, %v5574
    %v5747 = vpack.c.b16 %v5583, %v5579
    %v5748 = vpack.c.b16 %v5584, %v5580
    %v5749 = vpack.c.b16 %v5585, %v5581
    %v5750 = vpack.c.b16 %v5586, %v5582
    %v5751 = vpack.c.b16 %v5591, %v5587
    %v5752 = vpack.c.b16 %v5592, %v5588
    %v5753 = vpack.c.b16 %v5593, %v5589
    %v5754 = vpack.c.b16 %v5594, %v5590
    %v5755 = vpack.c.b16 %v5599, %v5595
    %v5756 = vpack.c.b16 %v5600, %v5596
    %v5757 = vpack.c.b16 %v5601, %v5597
    %v5758 = vpack.c.b16 %v5602, %v5598
    %v5759 = vpack.c.b16 %v5607, %v5603
    %v5760 = vpack.c.b16 %v5608, %v5604
    %v5761 = vpack.c.b16 %v5609, %v5605
    %v5762 = vpack.c.b16 %v5610, %v5606
    %v5763 = vpack.c.b16 %v5615, %v5611
    %v5764 = vpack.c.b16 %v5616, %v5612
    %v5765 = vpack.c.b16 %v5617, %v5613
    %v5766 = vpack.c.b16 %v5618, %v5614
    %v5767 = vpack.c.b16 %v5623, %v5619
    %v5768 = vpack.c.b16 %v5624, %v5620
    %v5769 = vpack.c.b16 %v5625, %v5621
    %v5770 = vpack.c.b16 %v5626, %v5622
    %v5771 = vpack.c.b16 %v5631, %v5627
    %v5772 = vpack.c.b16 %v5632, %v5628
    %v5773 = vpack.c.b16 %v5633, %v5629
    %v5774 = vpack.c.b16 %v5634, %v5630
    %v5775 = vpack.c.b16 %v5639, %v5635
    %v5776 = vpack.c.b16 %v5640, %v5636
    %v5777 = vpack.c.b16 %v5641, %v5637
    %v5778 = vpack.c.b16 %v5642, %v5638
    %v5779 = vpack.c.b16 %v5647, %v5643
    %v5780 = vpack.c.b16 %v5648, %v5644
    %v5781 = vpack.c.b16 %v5649, %v5645
    %v5782 = vpack.c.b16 %v5650, %v5646
    %v5783 = vpack.c.b16 %v5655, %v5651
    %v5784 = vpack.c.b16 %v5656, %v5652
    %v5785 = vpack.c.b16 %v5657, %v5653
    %v5786 = vpack.c.b16 %v5658, %v5654
    %v5787 = vpack.c.b16 %v5663, %v5659
    %v5788 = vpack.c.b16 %v5664, %v5660
    %v5789 = vpack.c.b16 %v5665, %v5661
    %v5790 = vpack.c.b16 %v5666, %v5662
    %v5791 = vpack.c.b16 %v5671, %v5667
    %v5792 = vpack.c.b16 %v5672, %v5668
    %v5793 = vpack.c.b16 %v5673, %v5669
    %v5794 = vpack.c.b16 %v5674, %v5670
    %v5795 = vpack.c.b16 %v5679, %v5675
    %v5796 = vpack.c.b16 %v5680, %v5676
    %v5797 = vpack.c.b16 %v5681, %v5677
    %v5798 = vpack.c.b16 %v5682, %v5678
    %v5799 = vpack.c.b16 %v5687, %v5683
    %v5800 = vpack.c.b16 %v5688, %v5684
    %v5801 = vpack.c.b16 %v5689, %v5685
    %v5802 = vpack.c.b16 %v5690, %v5686
    %v5803 = vpack.c.b16 %v5695, %v5691
    %v5804 = vpack.c.b16 %v5696, %v5692
    %v5805 = vpack.c.b16 %v5697, %v5693
    %v5806 = vpack.c.b16 %v5698, %v5694
    %v5807 = vpack.c.b16 %v5703, %v5699
    %v5808 = vpack.c.b16 %v5704, %v5700
    %v5809 = vpack.c.b16 %v5705, %v5701
    %v5810 = vpack.c.b16 %v5706, %v5702
    %v5811 = vpack.c.b16 %v5711, %v5707
    %v5812 = vpack.c.b16 %v5712, %v5708
    %v5813 = vpack.c.b16 %v5713, %v5709
    %v5814 = vpack.c.b16 %v5714, %v5710
    %v5815 = vpack.c.b16 %v5719, %v5715
    %v5816 = vpack.c.b16 %v5720, %v5716
    %v5817 = vpack.c.b16 %v5721, %v5717
    %v5818 = vpack.c.b16 %v5722, %v5718
    %5915 = vmatprep.subr.bf16.mxu0 %v5752
    %5916 = vmatpush1.bf16.msra.mxu0 %v5751
    %5917 = vmatprep.subr.bf16.mxu0 %v5748
    %5918 = vmatpush1.bf16.msra.mxu0 %v5747
    %5919 = vmatprep.subr.bf16.mxu0 %v5744
    %5920 = vmatpush1.bf16.msra.mxu0 %v5743
    %5921 = vmatprep.subr.bf16.mxu0 %v5740
    %5922 = vmatpush1.bf16.msra.mxu0 %v5739
    %5923 = vmatprep.subr.bf16.mxu0 %v5736
    %5924 = vmatpush1.bf16.msra.mxu0 %v5735
    %5925 = vmatprep.subr.bf16.mxu0 %v5732
    %5926 = vmatpush1.bf16.msra.mxu0 %v5731
    %5927 = vmatprep.subr.bf16.mxu0 %v5728
    %5928 = vmatpush1.bf16.msra.mxu0 %v5727
    %5929 = vmatprep.subr.bf16.mxu0 %v5724
    %5930 = vmatpush1.bf16.msra.mxu0 %v5723
    %5931 = vmatprep.subr.bf16.mxu0 %v5784
    %5932 = vmatpush2.bf16.msra.mxu0 %v5783
    %5933 = vmatprep.subr.bf16.mxu0 %v5780
    %5934 = vmatpush2.bf16.msra.mxu0 %v5779
    %5935 = vmatprep.subr.bf16.mxu0 %v5776
    %5936 = vmatpush2.bf16.msra.mxu0 %v5775
    %5937 = vmatprep.subr.bf16.mxu0 %v5772
    %5938 = vmatpush2.bf16.msra.mxu0 %v5771
    %5939 = vmatprep.subr.bf16.mxu0 %v5768
    %5940 = vmatpush2.bf16.msra.mxu0 %v5767
    %5941 = vmatprep.subr.bf16.mxu0 %v5764
    %5942 = vmatpush2.bf16.msra.mxu0 %v5763
    %5943 = vmatprep.subr.bf16.mxu0 %v5760
    %5944 = vmatpush2.bf16.msra.mxu0 %v5759
    %5945 = vmatprep.subr.bf16.mxu0 %v5756
    %5946 = vmatpush2.bf16.msra.mxu0 %v5755
    %5947 = vmatprep.mubr.bf16.mxu0 %v5316
    %5948 = vmatmul.mubr.bf16.gmra.mxu0 %v5315
    %v5949 = vpop.f32.mrf.mxu0
    %v5950 = vadd.f32 %v5418, %v5949
    %v5951 = vpop.f32.mrf.mxu0
    %v5952 = vadd.f32 %v5422, %v5951
    %v5953 = vpop.f32.mrf.mxu0
    %v5954 = vpop.f32.mrf.mxu0
    %5955 = vdwg.mxu0
    %5956 = vmatprep.subr.bf16.mxu0 %v5816
    %5957 = vmatpush1.bf16.msra.mxu0 %v5815
    %5958 = vmatprep.subr.bf16.mxu0 %v5812
    %5959 = vmatpush1.bf16.msra.mxu0 %v5811
    %5960 = vmatprep.subr.bf16.mxu0 %v5808
    %5961 = vmatpush1.bf16.msra.mxu0 %v5807
    %5962 = vmatprep.subr.bf16.mxu0 %v5804
    %5963 = vmatpush1.bf16.msra.mxu0 %v5803
    %5964 = vmatprep.subr.bf16.mxu0 %v5800
    %5965 = vmatpush1.bf16.msra.mxu0 %v5799
    %5966 = vmatprep.subr.bf16.mxu0 %v5796
    %5967 = vmatpush1.bf16.msra.mxu0 %v5795
    %5968 = vmatprep.subr.bf16.mxu0 %v5792
    %5969 = vmatpush1.bf16.msra.mxu0 %v5791
    %5970 = vmatprep.subr.bf16.mxu0 %v5788
    %5971 = vmatpush1.bf16.msra.mxu0 %v5787
    %5972 = vmatprep.subr.bf16.mxu0 0
    %5973 = vmatpush2.bf16.msra.mxu0 0
    %5974 = vmatprep.subr.bf16.mxu0 0
    %5975 = vmatpush2.bf16.msra.mxu0 0
    %5976 = vmatprep.subr.bf16.mxu0 0
    %5977 = vmatpush2.bf16.msra.mxu0 0
    %5978 = vmatprep.subr.bf16.mxu0 0
    %5979 = vmatpush2.bf16.msra.mxu0 0
    %5980 = vmatprep.subr.bf16.mxu0 0
    %5981 = vmatpush2.bf16.msra.mxu0 0
    %5982 = vmatprep.subr.bf16.mxu0 0
    %5983 = vmatpush2.bf16.msra.mxu0 0
    %5984 = vmatprep.subr.bf16.mxu0 0
    %5985 = vmatpush2.bf16.msra.mxu0 0
    %5986 = vmatprep.subr.bf16.mxu0 0
    %5987 = vmatpush2.bf16.msra.mxu0 0
    %5988 = vmatprep.mubr.bf16.mxu0 0
    %5989 = vmatmul.mubr.bf16.gmra.mxu0 %v5012
    %v5990 = vpop.f32.mrf.mxu0
    %v5991 = vadd.f32 %v5950, %v5990
    %v5992 = vpop.f32.mrf.mxu0
    %v5993 = vadd.f32 %v5952, %v5992
    %v5994 = vpop.f32.mrf.mxu0
    %v5995 = vpop.f32.mrf.mxu0
    %5996 = vdwg.mxu0
    %5997 = vmatprep.subr.bf16.mxu0 %v5754
    %5998 = vmatpush1.bf16.msra.mxu0 %v5753
    %5999 = vmatprep.subr.bf16.mxu0 %v5750
    %6000 = vmatpush1.bf16.msra.mxu0 %v5749
    %6001 = vmatprep.subr.bf16.mxu0 %v5746
    %6002 = vmatpush1.bf16.msra.mxu0 %v5745
    %6003 = vmatprep.subr.bf16.mxu0 %v5742
    %6004 = vmatpush1.bf16.msra.mxu0 %v5741
    %6005 = vmatprep.subr.bf16.mxu0 %v5738
    %6006 = vmatpush1.bf16.msra.mxu0 %v5737
    %6007 = vmatprep.subr.bf16.mxu0 %v5734
    %6008 = vmatpush1.bf16.msra.mxu0 %v5733
    %6009 = vmatprep.subr.bf16.mxu0 %v5730
    %6010 = vmatpush1.bf16.msra.mxu0 %v5729
    %6011 = vmatprep.subr.bf16.mxu0 %v5726
    %6012 = vmatpush1.bf16.msra.mxu0 %v5725
    %6013 = vmatprep.subr.bf16.mxu0 %v5786
    %6014 = vmatpush2.bf16.msra.mxu0 %v5785
    %6015 = vmatprep.subr.bf16.mxu0 %v5782
    %6016 = vmatpush2.bf16.msra.mxu0 %v5781
    %6017 = vmatprep.subr.bf16.mxu0 %v5778
    %6018 = vmatpush2.bf16.msra.mxu0 %v5777
    %6019 = vmatprep.subr.bf16.mxu0 %v5774
    %6020 = vmatpush2.bf16.msra.mxu0 %v5773
    %6021 = vmatprep.subr.bf16.mxu0 %v5770
    %6022 = vmatpush2.bf16.msra.mxu0 %v5769
    %6023 = vmatprep.subr.bf16.mxu0 %v5766
    %6024 = vmatpush2.bf16.msra.mxu0 %v5765
    %6025 = vmatprep.subr.bf16.mxu0 %v5762
    %6026 = vmatpush2.bf16.msra.mxu0 %v5761
    %6027 = vmatprep.subr.bf16.mxu0 %v5758
    %6028 = vmatpush2.bf16.msra.mxu0 %v5757
    %6029 = vmatprep.mubr.bf16.mxu0 %v5316
    %6030 = vmatmul.mubr.bf16.gmra.mxu0 %v5315
    %v6031 = vpop.f32.mrf.mxu0
    %v6032 = vadd.f32 %v5426, %v6031
    %v6033 = vpop.f32.mrf.mxu0
    %v6034 = vadd.f32 %v5430, %v6033
    %v6035 = vpop.f32.mrf.mxu0
    %v6036 = vpop.f32.mrf.mxu0
    %6037 = vdwg.mxu0
    %6038 = vmatprep.subr.bf16.mxu0 %v5818
    %6039 = vmatpush1.bf16.msra.mxu0 %v5817
    %6040 = vmatprep.subr.bf16.mxu0 %v5814
    %6041 = vmatpush1.bf16.msra.mxu0 %v5813
    %6042 = vmatprep.subr.bf16.mxu0 %v5810
    %6043 = vmatpush1.bf16.msra.mxu0 %v5809
    %6044 = vmatprep.subr.bf16.mxu0 %v5806
    %6045 = vmatpush1.bf16.msra.mxu0 %v5805
    %6046 = vmatprep.subr.bf16.mxu0 %v5802
    %6047 = vmatpush1.bf16.msra.mxu0 %v5801
    %6048 = vmatprep.subr.bf16.mxu0 %v5798
    %6049 = vmatpush1.bf16.msra.mxu0 %v5797
    %6050 = vmatprep.subr.bf16.mxu0 %v5794
    %6051 = vmatpush1.bf16.msra.mxu0 %v5793
    %6052 = vmatprep.subr.bf16.mxu0 %v5790
    %6053 = vmatpush1.bf16.msra.mxu0 %v5789
    %6054 = vmatprep.subr.bf16.mxu0 0
    %6055 = vmatpush2.bf16.msra.mxu0 0
    %6056 = vmatprep.subr.bf16.mxu0 0
    %6057 = vmatpush2.bf16.msra.mxu0 0
    %6058 = vmatprep.subr.bf16.mxu0 0
    %6059 = vmatpush2.bf16.msra.mxu0 0
    %6060 = vmatprep.subr.bf16.mxu0 0
    %6061 = vmatpush2.bf16.msra.mxu0 0
    %6062 = vmatprep.subr.bf16.mxu0 0
    %6063 = vmatpush2.bf16.msra.mxu0 0
    %6064 = vmatprep.subr.bf16.mxu0 0
    %6065 = vmatpush2.bf16.msra.mxu0 0
    %6066 = vmatprep.subr.bf16.mxu0 0
    %6067 = vmatpush2.bf16.msra.mxu0 0
    %6068 = vmatprep.subr.bf16.mxu0 0
    %6069 = vmatpush2.bf16.msra.mxu0 0
    %6070 = vmatprep.mubr.bf16.mxu0 0
    %6071 = vmatmul.mubr.bf16.gmra.mxu0 %v5012
    %v6072 = vpop.f32.mrf.mxu0
    %v6073 = vadd.f32 %v6032, %v6072
    %v6074 = vpop.f32.mrf.mxu0
    %v6075 = vadd.f32 %v6034, %v6074
    %v6076 = vpop.f32.mrf.mxu0
    %v6077 = vpop.f32.mrf.mxu0
    %6078 = vdwg.mxu0
    %v6079 = vxor.u32 %v5991, 2147483648
    %v6080 = vmul.f32 %v6079, 1.442695
    %v6081 = vpow.pop %v6080
    %v6082 = vadd.f32 %v6081, 1.0
    %v6083 = vrcp.pop %v6082
    %v6084 = vmul.f32 1.0, %v6083
    %v6085 = vxor.u32 %v5993, 2147483648
    %v6086 = vmul.f32 %v6085, 1.442695
    %v6087 = vpow.pop %v6086
    %v6088 = vadd.f32 %v6087, 1.0
    %v6089 = vrcp.pop %v6088
    %v6090 = vmul.f32 1.0, %v6089
    %v6091 = vtanh.pop %v6073
    %v6092 = vxor.u32 %v6075, 2147483648
    %v6093 = vmul.f32 %v6092, 1.442695
    %v6094 = vpow.pop %v6093
    %v6095 = vadd.f32 %v6094, 1.0
    %v6096 = vrcp.pop %v6095
    %v6097 = vmul.f32 1.0, %v6096
    %v6098 = vmul.f32 %v6090, %v5009
    %v6099 = vmul.f32 %v6084, %v6091
    %v6100 = vadd.f32 %v6098, %v6099
    %v6101 = vtanh.pop %v6100
    %v6102 = vmul.f32 %v6097, %v6101
    %v6103 = vpack.c.bf16 %v6102, %v6102
    %v6104 = vld [vmem:[%s8] sm:$0xf]
    %v6105 = vld [vmem:[%s8 + $0x4] sm:$0xf]
    %v6106 = vld [vmem:[%s8 + $0x8] sm:$0xf]
    %v6107 = vld [vmem:[%s8 + $0xc] sm:$0xf]
    %v6108 = vld [vmem:[%s8 + $0x10] sm:$0xf]
    %v6109 = vld [vmem:[%s8 + $0x14] sm:$0xf]
    %v6110 = vld [vmem:[%s8 + $0x18] sm:$0xf]
    %v6111 = vld [vmem:[%s8 + $0x1c] sm:$0xf]
    %v6112 = vld [vmem:[%s8 + $0x20] sm:$0xf]
    %v6113 = vld [vmem:[%s8 + $0x24] sm:$0xf]
    %v6114 = vld [vmem:[%s8 + $0x28] sm:$0xf]
    %v6115 = vld [vmem:[%s8 + $0x2c] sm:$0xf]
    %v6116 = vld [vmem:[%s8 + $0x30] sm:$0xf]
    %v6117 = vld [vmem:[%s8 + $0x34] sm:$0xf]
    %v6118 = vld [vmem:[%s8 + $0x38] sm:$0xf]
    %v6119 = vld [vmem:[%s8 + $0x3c] sm:$0xf]
    %v6120 = vld [vmem:[%s8 + $0x40] sm:$0xf]
    %v6121 = vld [vmem:[%s8 + $0x44] sm:$0xf]
    %v6122 = vld [vmem:[%s8 + $0x48] sm:$0xf]
    %v6123 = vld [vmem:[%s8 + $0x4c] sm:$0xf]
    %v6124 = vld [vmem:[%s8 + $0x50] sm:$0xf]
    %v6125 = vld [vmem:[%s8 + $0x54] sm:$0xf]
    %v6126 = vld [vmem:[%s8 + $0x58] sm:$0xf]
    %v6127 = vld [vmem:[%s8 + $0x5c] sm:$0xf]
    %v6128 = vld [vmem:[%s8 + $0x60] sm:$0xf]
    %v6129 = vld [vmem:[%s8 + $0x64] sm:$0xf]
    %v6130 = vld [vmem:[%s8 + $0x68] sm:$0xf]
    %v6131 = vld [vmem:[%s8 + $0x6c] sm:$0xf]
    %v6132 = vld [vmem:[%s8 + $0x70] sm:$0xf]
    %v6133 = vld [vmem:[%s8 + $0x74] sm:$0xf]
    %v6134 = vld [vmem:[%s8 + $0x78] sm:$0xf]
    %v6135 = vld [vmem:[%s8 + $0x7c] sm:$0xf]
    %v6136 = vld [vmem:[%s9] sm:$0x1]
    %v6138 = vlaneseq
    %v6139 = vshrl.u32 %v6138, 7
    %v6140 = vsub.s32 0, %v6139
    %v6141 = vrot.slane %v6136, %v6140
    %v6175 = vunpack.c.l.b16 %v6104
    %v6176 = vunpack.c.l.b16 %v6105
    %v6177 = vunpack.c.l.b16 %v6106
    %v6178 = vunpack.c.l.b16 %v6107
    %v6179 = vunpack.c.l.b16 %v6108
    %v6180 = vunpack.c.l.b16 %v6109
    %v6181 = vunpack.c.l.b16 %v6110
    %v6182 = vunpack.c.l.b16 %v6111
    %v6183 = vunpack.c.l.b16 %v6112
    %v6184 = vunpack.c.l.b16 %v6113
    %v6185 = vunpack.c.l.b16 %v6114
    %v6186 = vunpack.c.l.b16 %v6115
    %v6187 = vunpack.c.l.b16 %v6116
    %v6188 = vunpack.c.l.b16 %v6117
    %v6189 = vunpack.c.l.b16 %v6118
    %v6190 = vunpack.c.l.b16 %v6119
    %v6191 = vunpack.c.l.b16 %v6120
    %v6192 = vunpack.c.l.b16 %v6121
    %v6193 = vunpack.c.l.b16 %v6122
    %v6194 = vunpack.c.l.b16 %v6123
    %v6195 = vunpack.c.l.b16 %v6124
    %v6196 = vunpack.c.l.b16 %v6125
    %v6197 = vunpack.c.l.b16 %v6126
    %v6198 = vunpack.c.l.b16 %v6127
    %v6199 = vunpack.c.l.b16 %v6128
    %v6200 = vunpack.c.l.b16 %v6129
    %v6201 = vunpack.c.l.b16 %v6130
    %v6202 = vunpack.c.l.b16 %v6131
    %v6203 = vunpack.c.l.b16 %v6132
    %v6204 = vunpack.c.l.b16 %v6133
    %v6205 = vunpack.c.l.b16 %v6134
    %v6206 = vunpack.c.l.b16 %v6135
    %v6207 = vpack.c.b16 %v6176, %v6175
    %v6208 = vpack.c.b16 %v6178, %v6177
    %v6209 = vpack.c.b16 %v6180, %v6179
    %v6210 = vpack.c.b16 %v6182, %v6181
    %v6211 = vpack.c.b16 %v6184, %v6183
    %v6212 = vpack.c.b16 %v6186, %v6185
    %v6213 = vpack.c.b16 %v6188, %v6187
    %v6214 = vpack.c.b16 %v6190, %v6189
    %v6215 = vpack.c.b16 %v6192, %v6191
    %v6216 = vpack.c.b16 %v6194, %v6193
    %v6217 = vpack.c.b16 %v6196, %v6195
    %v6218 = vpack.c.b16 %v6198, %v6197
    %v6219 = vpack.c.b16 %v6200, %v6199
    %v6220 = vpack.c.b16 %v6202, %v6201
    %v6221 = vpack.c.b16 %v6204, %v6203
    %v6222 = vpack.c.b16 %v6206, %v6205
    %6239 = vmatprep.subr.bf16.mxu0 0
    %6240 = vmatpush1.bf16.msra.mxu0 %v6214
    %6241 = vmatprep.subr.bf16.mxu0 0
    %6242 = vmatpush1.bf16.msra.mxu0 %v6213
    %6243 = vmatprep.subr.bf16.mxu0 0
    %6244 = vmatpush1.bf16.msra.mxu0 %v6212
    %6245 = vmatprep.subr.bf16.mxu0 0
    %6246 = vmatpush1.bf16.msra.mxu0 %v6211
    %6247 = vmatprep.subr.bf16.mxu0 0
    %6248 = vmatpush1.bf16.msra.mxu0 %v6210
    %6249 = vmatprep.subr.bf16.mxu0 0
    %6250 = vmatpush1.bf16.msra.mxu0 %v6209
    %6251 = vmatprep.subr.bf16.mxu0 0
    %6252 = vmatpush1.bf16.msra.mxu0 %v6208
    %6253 = vmatprep.subr.bf16.mxu0 0
    %6254 = vmatpush1.bf16.msra.mxu0 %v6207
    %6255 = vmatprep.subr.bf16.mxu0 0
    %6256 = vmatpush2.bf16.msra.mxu0 %v6222
    %6257 = vmatprep.subr.bf16.mxu0 0
    %6258 = vmatpush2.bf16.msra.mxu0 %v6221
    %6259 = vmatprep.subr.bf16.mxu0 0
    %6260 = vmatpush2.bf16.msra.mxu0 %v6220
    %6261 = vmatprep.subr.bf16.mxu0 0
    %6262 = vmatpush2.bf16.msra.mxu0 %v6219
    %6263 = vmatprep.subr.bf16.mxu0 0
    %6264 = vmatpush2.bf16.msra.mxu0 %v6218
    %6265 = vmatprep.subr.bf16.mxu0 0
    %6266 = vmatpush2.bf16.msra.mxu0 %v6217
    %6267 = vmatprep.subr.bf16.mxu0 0
    %6268 = vmatpush2.bf16.msra.mxu0 %v6216
    %6269 = vmatprep.subr.bf16.mxu0 0
    %6270 = vmatpush2.bf16.msra.mxu0 %v6215
    %6271 = vmatprep.mubr.bf16.mxu0 %v5316
    %6272 = vmatmul.mubr.bf16.gmra.mxu0 %v6103
    %v6273 = vpop.f32.mrf.mxu0
    %v6274 = vadd.f32 %v6141, %v6273
    %v6275 = vpop.f32.mrf.mxu0
    %v6276 = vpop.f32.mrf.mxu0
    %v6277 = vpop.f32.mrf.mxu0
    %6278 = vdwg.mxu0
    %s6279 = scalar_lea.vmem [#allocation12], 24
    %6280 = vst [vmem:[%s6279] sm:$0xff] %v6274
    %6281 = vmax.xlane.f32.xlu0 %v6274
    %v6282 = vpop.xlane.xlu0 %6281
    %vm6283 = vcmp.ge.f32.partialorder %v6274, %v6282
    %v6284 = vsel %vm6283, %v100, 128
    %v6285 = vand.u32 %v6284, 65535
    %v6286 = vshra.s32 %v6284, 16
    %v6287 = vcvt.s32.f32 %v6285
    %v6288 = vcvt.s32.f32 %v6286
    %6289 = vmin.xlane.f32.xlu0 %v6288
    %v6290 = vpop.xlane.xlu0 %6289
    %vm6291 = vcmp.eq.f32.partialorder %v6288, %v6290
    %v6292 = vsel %vm6291, %v6287, inf
    %6293 = vmin.xlane.f32.xlu0 %v6292
    %v6294 = vpop.xlane.xlu0 %6293
    %v6295 = vcvt.f32.s32 %v6294
    %v6296 = vcvt.f32.s32 %v6290
    %v6297 = vshll.u32 %v6296, 16
    %v6298 = vadd.s32 %v6297, %v6295
    %s6299 = sld [smem:[#allocation4 + $0x3]]
    %p6300 = scmp.ne.s32.totalorder %s6299, 0
    %s6301 = scalar_lea.vmem %s1, 24
    %v6302 = vld [vmem:[%s6301] sm:$0xff]
    %s6303 = scalar_select %p6300, 1, 0
    %v6304 = vstv %s6303
    %vm6305 = vcmp.eq.s32.totalorder %v6304, 1
    %v6306 = vsel %vm6305, %v6302, %v6298
    %v6307 = vld [vmem:[#allocation3] sm:$0xff]
    %v6308 = vld [vmem:[#allocation3 + $0x8] sm:$0xff]
    %v6309 = vld [vmem:[#allocation3 + $0x10] sm:$0xff]
    %v6310 = vld [vmem:[#allocation3 + $0x18] sm:$0xff]
    %v6311 = vld [vmem:[#allocation3 + $0x20] sm:$0xff]
    %v6312 = vld [vmem:[#allocation3 + $0x28] sm:$0xff]
    %v6313 = vld [vmem:[#allocation3 + $0x30] sm:$0xff]
    %v6314 = vld [vmem:[#allocation3 + $0x38] sm:$0xff]
    %v6315 = vmul.f32 %v6307, %v6102
    %v6316 = vmul.f32 %v6308, %v6102
    %v6317 = vmul.f32 %v6309, %v6102
    %v6318 = vmul.f32 %v6310, %v6102
    %v6319 = vmul.f32 %v6311, %v6102
    %v6320 = vmul.f32 %v6312, %v6102
    %v6321 = vmul.f32 %v6313, %v6102
    %v6322 = vmul.f32 %v6314, %v6102
    %6323 = vadd.xlane.f32.xlu0 %v6315
    %v6324 = vpop.xlane.xlu0 %6323
    %6325 = vadd.xlane.f32.xlu0 %v6316
    %v6326 = vpop.xlane.xlu0 %6325
    %6327 = vadd.xlane.f32.xlu0 %v6317
    %v6328 = vpop.xlane.xlu0 %6327
    %6329 = vadd.xlane.f32.xlu0 %v6318
    %v6330 = vpop.xlane.xlu0 %6329
    %6331 = vadd.xlane.f32.xlu0 %v6319
    %v6332 = vpop.xlane.xlu0 %6331
    %6333 = vadd.xlane.f32.xlu0 %v6320
    %v6334 = vpop.xlane.xlu0 %6333
    %6335 = vadd.xlane.f32.xlu0 %v6321
    %v6336 = vpop.xlane.xlu0 %6335
    %6337 = vadd.xlane.f32.xlu0 %v6322
    %v6338 = vpop.xlane.xlu0 %6337
    %v6339 = vmax.f32 %v6324, %v6332
    %v6340 = vmax.f32 %v6326, %v6334
    %v6341 = vmax.f32 %v6328, %v6336
    %v6342 = vmax.f32 %v6330, %v6338
    %v6343 = vmax.f32 %v6339, %v6340
    %v6344 = vmax.f32 %v6341, %v6342
    %v6345 = vmax.f32 %v6343, %v6344
    %v6346 = vsub.f32 %v6324, %v6345
    %v6347 = vsub.f32 %v6326, %v6345
    %v6348 = vsub.f32 %v6328, %v6345
    %v6349 = vsub.f32 %v6330, %v6345
    %v6350 = vsub.f32 %v6332, %v6345
    %v6351 = vsub.f32 %v6334, %v6345
    %v6352 = vsub.f32 %v6336, %v6345
    %v6353 = vsub.f32 %v6338, %v6345
    %v6354 = vmul.f32 %v6346, 1.442695
    %v6355 = vpow.pop %v6354
    %v6356 = vmul.f32 %v6347, 1.442695
    %v6357 = vpow.pop %v6356
    %v6358 = vmul.f32 %v6348, 1.442695
    %v6359 = vpow.pop %v6358
    %v6360 = vmul.f32 %v6349, 1.442695
    %v6361 = vpow.pop %v6360
    %v6362 = vmul.f32 %v6350, 1.442695
    %v6363 = vpow.pop %v6362
    %v6364 = vmul.f32 %v6351, 1.442695
    %v6365 = vpow.pop %v6364
    %v6366 = vmul.f32 %v6352, 1.442695
    %v6367 = vpow.pop %v6366
    %v6368 = vmul.f32 %v6353, 1.442695
    %v6369 = vpow.pop %v6368
    %v6370 = vadd.f32 %v6355, %v6357
    %v6371 = vadd.f32 %v6370, %v6359
    %v6372 = vadd.f32 %v6371, %v6361
    %v6373 = vadd.f32 %v6372, %v6363
    %v6374 = vadd.f32 %v6373, %v6365
    %v6375 = vadd.f32 %v6374, %v6367
    %v6376 = vadd.f32 %v6375, %v6369
    %v6377 = vrcp.pop %v6376
    %v6378 = vmul.f32 %v6355, %v6377
    %v6379 = vmul.f32 %v6357, %v6377
    %v6380 = vmul.f32 %v6359, %v6377
    %v6381 = vmul.f32 %v6361, %v6377
    %v6382 = vmul.f32 %v6363, %v6377
    %v6383 = vmul.f32 %v6365, %v6377
    %v6384 = vmul.f32 %v6367, %v6377
    %v6385 = vmul.f32 %v6369, %v6377
    %v6386 = vmul.f32 %v6378, %v6307
    %v6387 = vmul.f32 %v6379, %v6308
    %v6388 = vmul.f32 %v6380, %v6309
    %v6389 = vmul.f32 %v6381, %v6310
    %v6390 = vmul.f32 %v6382, %v6311
    %v6391 = vmul.f32 %v6383, %v6312
    %v6392 = vmul.f32 %v6384, %v6313
    %v6393 = vmul.f32 %v6385, %v6314
    %v6394 = vadd.f32 %v6386, %v6387
    %v6395 = vadd.f32 %v6394, %v6388
    %v6396 = vadd.f32 %v6395, %v6389
    %v6397 = vadd.f32 %v6396, %v6390
    %v6398 = vadd.f32 %v6397, %v6391
    %v6399 = vadd.f32 %v6398, %v6392
    %v6400 = vadd.f32 %v6399, %v6393
    %6401 = vset.pattern.permute.xlu0 0
    %6402 = vperm.xlu0 %6401, %v6306
    %v6403 = vpop.permute.xlu0 %6402
    %vm6404 = vcmp.eq.s32.totalorder %v6403, %v100
    %v6405 = vsel %vm6404, 1.0, 0.0
    %v6406 = vpack.c.bf16 %v6405, %v6405
    %v6407 = vpack.c.bf16 %v6400, %v6400
    %v6408 = vld [vmem:[#allocation11] sm:$0xff]
    %v6409 = vld [vmem:[#allocation11 + $0x8] sm:$0xff]
    %v6410 = vld [vmem:[#allocation11 + $0x10] sm:$0xff]
    %v6411 = vld [vmem:[#allocation11 + $0x18] sm:$0xff]
    %v6412 = vld [vmem:[#allocation11 + $0x20] sm:$0xff]
    %v6413 = vld [vmem:[#allocation11 + $0x28] sm:$0xff]
    %v6414 = vld [vmem:[#allocation11 + $0x30] sm:$0xff]
    %v6415 = vld [vmem:[#allocation11 + $0x38] sm:$0xff]
    %v6416 = vld [vmem:[#allocation11 + $0x40] sm:$0xff]
    %v6417 = vld [vmem:[#allocation11 + $0x48] sm:$0xff]
    %v6418 = vld [vmem:[#allocation11 + $0x50] sm:$0xff]
    %v6419 = vld [vmem:[#allocation11 + $0x58] sm:$0xff]
    %v6420 = vld [vmem:[#allocation11 + $0x60] sm:$0xff]
    %v6421 = vld [vmem:[#allocation11 + $0x68] sm:$0xff]
    %v6422 = vld [vmem:[#allocation11 + $0x70] sm:$0xff]
    %v6423 = vld [vmem:[#allocation11 + $0x78] sm:$0xff]
    %v6424 = vld [vmem:[#allocation11 + $0x80] sm:$0xff]
    %v6425 = vld [vmem:[#allocation11 + $0x88] sm:$0xff]
    %v6426 = vld [vmem:[#allocation11 + $0x90] sm:$0xff]
    %v6427 = vld [vmem:[#allocation11 + $0x98] sm:$0xff]
    %v6428 = vld [vmem:[#allocation11 + $0xa0] sm:$0xff]
    %v6429 = vld [vmem:[#allocation11 + $0xa8] sm:$0xff]
    %v6430 = vld [vmem:[#allocation11 + $0xb0] sm:$0xff]
    %v6431 = vld [vmem:[#allocation11 + $0xb8] sm:$0xff]
    %v6432 = vld [vmem:[#allocation11 + $0xc0] sm:$0xff]
    %v6433 = vld [vmem:[#allocation11 + $0xc8] sm:$0xff]
    %v6434 = vld [vmem:[#allocation11 + $0xd0] sm:$0xff]
    %v6435 = vld [vmem:[#allocation11 + $0xd8] sm:$0xff]
    %v6436 = vld [vmem:[#allocation11 + $0xe0] sm:$0xff]
    %v6437 = vld [vmem:[#allocation11 + $0xe8] sm:$0xff]
    %v6438 = vld [vmem:[#allocation11 + $0xf0] sm:$0xff]
    %v6439 = vld [vmem:[#allocation11 + $0xf8] sm:$0xff]
    %v6440 = vld [vmem:[#allocation11 + $0x100] sm:$0xff]
    %v6441 = vld [vmem:[#allocation11 + $0x108] sm:$0xff]
    %v6442 = vld [vmem:[#allocation11 + $0x110] sm:$0xff]
    %v6443 = vld [vmem:[#allocation11 + $0x118] sm:$0xff]
    %v6444 = vld [vmem:[#allocation11 + $0x120] sm:$0xff]
    %v6445 = vld [vmem:[#allocation11 + $0x128] sm:$0xff]
    %v6446 = vld [vmem:[#allocation11 + $0x130] sm:$0xff]
    %v6447 = vld [vmem:[#allocation11 + $0x138] sm:$0xff]
    %v6448 = vld [vmem:[#allocation11 + $0x140] sm:$0xff]
    %v6449 = vld [vmem:[#allocation11 + $0x148] sm:$0xff]
    %v6450 = vld [vmem:[#allocation11 + $0x150] sm:$0xff]
    %v6451 = vld [vmem:[#allocation11 + $0x158] sm:$0xff]
    %v6452 = vld [vmem:[#allocation11 + $0x160] sm:$0xff]
    %v6453 = vld [vmem:[#allocation11 + $0x168] sm:$0xff]
    %v6454 = vld [vmem:[#allocation11 + $0x170] sm:$0xff]
    %v6455 = vld [vmem:[#allocation11 + $0x178] sm:$0xff]
    %v6456 = vld [vmem:[#allocation11 + $0x180] sm:$0xff]
    %v6457 = vld [vmem:[#allocation11 + $0x188] sm:$0xff]
    %v6458 = vld [vmem:[#allocation11 + $0x190] sm:$0xff]
    %v6459 = vld [vmem:[#allocation11 + $0x198] sm:$0xff]
    %v6460 = vld [vmem:[#allocation11 + $0x1a0] sm:$0xff]
    %v6461 = vld [vmem:[#allocation11 + $0x1a8] sm:$0xff]
    %v6462 = vld [vmem:[#allocation11 + $0x1b0] sm:$0xff]
    %v6463 = vld [vmem:[#allocation11 + $0x1b8] sm:$0xff]
    %v6464 = vld [vmem:[#allocation11 + $0x1c0] sm:$0xff]
    %v6465 = vld [vmem:[#allocation11 + $0x1c8] sm:$0xff]
    %v6466 = vld [vmem:[#allocation11 + $0x1d0] sm:$0xff]
    %v6467 = vld [vmem:[#allocation11 + $0x1d8] sm:$0xff]
    %v6468 = vld [vmem:[#allocation11 + $0x1e0] sm:$0xff]
    %v6469 = vld [vmem:[#allocation11 + $0x1e8] sm:$0xff]
    %v6470 = vld [vmem:[#allocation11 + $0x1f0] sm:$0xff]
    %v6471 = vld [vmem:[#allocation11 + $0x1f8] sm:$0xff]
    %v6472 = vld [vmem:[#allocation11 + $0x200] sm:$0xff]
    %v6473 = vld [vmem:[#allocation11 + $0x208] sm:$0xff]
    %v6474 = vld [vmem:[#allocation11 + $0x210] sm:$0xff]
    %v6475 = vld [vmem:[#allocation11 + $0x218] sm:$0xff]
    %v6476 = vld [vmem:[#allocation11 + $0x220] sm:$0xff]
    %v6477 = vld [vmem:[#allocation11 + $0x228] sm:$0xff]
    %v6478 = vld [vmem:[#allocation11 + $0x230] sm:$0xff]
    %v6479 = vld [vmem:[#allocation11 + $0x238] sm:$0xff]
    %v6480 = vld [vmem:[#allocation11 + $0x240] sm:$0xff]
    %v6481 = vld [vmem:[#allocation11 + $0x248] sm:$0xff]
    %v6482 = vld [vmem:[#allocation11 + $0x250] sm:$0xff]
    %v6483 = vld [vmem:[#allocation11 + $0x258] sm:$0xff]
    %v6484 = vld [vmem:[#allocation11 + $0x260] sm:$0xff]
    %v6485 = vld [vmem:[#allocation11 + $0x268] sm:$0xff]
    %v6486 = vld [vmem:[#allocation11 + $0x270] sm:$0xff]
    %v6487 = vld [vmem:[#allocation11 + $0x278] sm:$0xff]
    %v6488 = vld [vmem:[#allocation11 + $0x280] sm:$0xff]
    %v6489 = vld [vmem:[#allocation11 + $0x288] sm:$0xff]
    %v6490 = vld [vmem:[#allocation11 + $0x290] sm:$0xff]
    %v6491 = vld [vmem:[#allocation11 + $0x298] sm:$0xff]
    %v6492 = vld [vmem:[#allocation11 + $0x2a0] sm:$0xff]
    %v6493 = vld [vmem:[#allocation11 + $0x2a8] sm:$0xff]
    %v6494 = vld [vmem:[#allocation11 + $0x2b0] sm:$0xff]
    %v6495 = vld [vmem:[#allocation11 + $0x2b8] sm:$0xff]
    %v6496 = vld [vmem:[#allocation11 + $0x2c0] sm:$0xff]
    %v6497 = vld [vmem:[#allocation11 + $0x2c8] sm:$0xff]
    %v6498 = vld [vmem:[#allocation11 + $0x2d0] sm:$0xff]
    %v6499 = vld [vmem:[#allocation11 + $0x2d8] sm:$0xff]
    %v6500 = vld [vmem:[#allocation11 + $0x2e0] sm:$0xff]
    %v6501 = vld [vmem:[#allocation11 + $0x2e8] sm:$0xff]
    %v6502 = vld [vmem:[#allocation11 + $0x2f0] sm:$0xff]
    %v6503 = vld [vmem:[#allocation11 + $0x2f8] sm:$0xff]
    %v6504 = vld [vmem:[%s7] sm:$0xf]
    %v6506 = vlaneseq
    %v6507 = vshrl.u32 %v6506, 7
    %v6508 = vsub.s32 0, %v6507
    %v6509 = vrot.slane %v6504, %v6508
    %v6510 = vlaneseq
    %v6511 = vshrl.u32 %v6510, 7
    %v6512 = vsub.s32 1, %v6511
    %v6513 = vrot.slane %v6504, %v6512
    %v6514 = vlaneseq
    %v6515 = vshrl.u32 %v6514, 7
    %v6516 = vsub.s32 2, %v6515
    %v6517 = vrot.slane %v6504, %v6516
    %v6518 = vlaneseq
    %v6519 = vshrl.u32 %v6518, 7
    %v6520 = vsub.s32 3, %v6519
    %v6521 = vrot.slane %v6504, %v6520
    %v6622 = vunpack.c.l.b16 %v6408
    %v6623 = vunpack.c.h.b16 %v6408
    %v6624 = vunpack.c.l.b16 %v6409
    %v6625 = vunpack.c.h.b16 %v6409
    %v6626 = vunpack.c.l.b16 %v6410
    %v6627 = vunpack.c.h.b16 %v6410
    %v6628 = vunpack.c.l.b16 %v6411
    %v6629 = vunpack.c.h.b16 %v6411
    %v6630 = vunpack.c.l.b16 %v6412
    %v6631 = vunpack.c.h.b16 %v6412
    %v6632 = vunpack.c.l.b16 %v6413
    %v6633 = vunpack.c.h.b16 %v6413
    %v6634 = vunpack.c.l.b16 %v6414
    %v6635 = vunpack.c.h.b16 %v6414
    %v6636 = vunpack.c.l.b16 %v6415
    %v6637 = vunpack.c.h.b16 %v6415
    %v6638 = vunpack.c.l.b16 %v6416
    %v6639 = vunpack.c.h.b16 %v6416
    %v6640 = vunpack.c.l.b16 %v6417
    %v6641 = vunpack.c.h.b16 %v6417
    %v6642 = vunpack.c.l.b16 %v6418
    %v6643 = vunpack.c.h.b16 %v6418
    %v6644 = vunpack.c.l.b16 %v6419
    %v6645 = vunpack.c.h.b16 %v6419
    %v6646 = vunpack.c.l.b16 %v6420
    %v6647 = vunpack.c.h.b16 %v6420
    %v6648 = vunpack.c.l.b16 %v6421
    %v6649 = vunpack.c.h.b16 %v6421
    %v6650 = vunpack.c.l.b16 %v6422
    %v6651 = vunpack.c.h.b16 %v6422
    %v6652 = vunpack.c.l.b16 %v6423
    %v6653 = vunpack.c.h.b16 %v6423
    %v6654 = vunpack.c.l.b16 %v6424
    %v6655 = vunpack.c.h.b16 %v6424
    %v6656 = vunpack.c.l.b16 %v6425
    %v6657 = vunpack.c.h.b16 %v6425
    %v6658 = vunpack.c.l.b16 %v6426
    %v6659 = vunpack.c.h.b16 %v6426
    %v6660 = vunpack.c.l.b16 %v6427
    %v6661 = vunpack.c.h.b16 %v6427
    %v6662 = vunpack.c.l.b16 %v6428
    %v6663 = vunpack.c.h.b16 %v6428
    %v6664 = vunpack.c.l.b16 %v6429
    %v6665 = vunpack.c.h.b16 %v6429
    %v6666 = vunpack.c.l.b16 %v6430
    %v6667 = vunpack.c.h.b16 %v6430
    %v6668 = vunpack.c.l.b16 %v6431
    %v6669 = vunpack.c.h.b16 %v6431
    %v6670 = vunpack.c.l.b16 %v6432
    %v6671 = vunpack.c.h.b16 %v6432
    %v6672 = vunpack.c.l.b16 %v6433
    %v6673 = vunpack.c.h.b16 %v6433
    %v6674 = vunpack.c.l.b16 %v6434
    %v6675 = vunpack.c.h.b16 %v6434
    %v6676 = vunpack.c.l.b16 %v6435
    %v6677 = vunpack.c.h.b16 %v6435
    %v6678 = vunpack.c.l.b16 %v6436
    %v6679 = vunpack.c.h.b16 %v6436
    %v6680 = vunpack.c.l.b16 %v6437
    %v6681 = vunpack.c.h.b16 %v6437
    %v6682 = vunpack.c.l.b16 %v6438
    %v6683 = vunpack.c.h.b16 %v6438
    %v6684 = vunpack.c.l.b16 %v6439
    %v6685 = vunpack.c.h.b16 %v6439
    %v6686 = vunpack.c.l.b16 %v6440
    %v6687 = vunpack.c.h.b16 %v6440
    %v6688 = vunpack.c.l.b16 %v6441
    %v6689 = vunpack.c.h.b16 %v6441
    %v6690 = vunpack.c.l.b16 %v6442
    %v6691 = vunpack.c.h.b16 %v6442
    %v6692 = vunpack.c.l.b16 %v6443
    %v6693 = vunpack.c.h.b16 %v6443
    %v6694 = vunpack.c.l.b16 %v6444
    %v6695 = vunpack.c.h.b16 %v6444
    %v6696 = vunpack.c.l.b16 %v6445
    %v6697 = vunpack.c.h.b16 %v6445
    %v6698 = vunpack.c.l.b16 %v6446
    %v6699 = vunpack.c.h.b16 %v6446
    %v6700 = vunpack.c.l.b16 %v6447
    %v6701 = vunpack.c.h.b16 %v6447
    %v6702 = vunpack.c.l.b16 %v6448
    %v6703 = vunpack.c.h.b16 %v6448
    %v6704 = vunpack.c.l.b16 %v6449
    %v6705 = vunpack.c.h.b16 %v6449
    %v6706 = vunpack.c.l.b16 %v6450
    %v6707 = vunpack.c.h.b16 %v6450
    %v6708 = vunpack.c.l.b16 %v6451
    %v6709 = vunpack.c.h.b16 %v6451
    %v6710 = vunpack.c.l.b16 %v6452
    %v6711 = vunpack.c.h.b16 %v6452
    %v6712 = vunpack.c.l.b16 %v6453
    %v6713 = vunpack.c.h.b16 %v6453
    %v6714 = vunpack.c.l.b16 %v6454
    %v6715 = vunpack.c.h.b16 %v6454
    %v6716 = vunpack.c.l.b16 %v6455
    %v6717 = vunpack.c.h.b16 %v6455
    %v6718 = vunpack.c.l.b16 %v6456
    %v6719 = vunpack.c.h.b16 %v6456
    %v6720 = vunpack.c.l.b16 %v6457
    %v6721 = vunpack.c.h.b16 %v6457
    %v6722 = vunpack.c.l.b16 %v6458
    %v6723 = vunpack.c.h.b16 %v6458
    %v6724 = vunpack.c.l.b16 %v6459
    %v6725 = vunpack.c.h.b16 %v6459
    %v6726 = vunpack.c.l.b16 %v6460
    %v6727 = vunpack.c.h.b16 %v6460
    %v6728 = vunpack.c.l.b16 %v6461
    %v6729 = vunpack.c.h.b16 %v6461
    %v6730 = vunpack.c.l.b16 %v6462
    %v6731 = vunpack.c.h.b16 %v6462
    %v6732 = vunpack.c.l.b16 %v6463
    %v6733 = vunpack.c.h.b16 %v6463
    %v6734 = vunpack.c.l.b16 %v6464
    %v6735 = vunpack.c.h.b16 %v6464
    %v6736 = vunpack.c.l.b16 %v6465
    %v6737 = vunpack.c.h.b16 %v6465
    %v6738 = vunpack.c.l.b16 %v6466
    %v6739 = vunpack.c.h.b16 %v6466
    %v6740 = vunpack.c.l.b16 %v6467
    %v6741 = vunpack.c.h.b16 %v6467
    %v6742 = vunpack.c.l.b16 %v6468
    %v6743 = vunpack.c.h.b16 %v6468
    %v6744 = vunpack.c.l.b16 %v6469
    %v6745 = vunpack.c.h.b16 %v6469
    %v6746 = vunpack.c.l.b16 %v6470
    %v6747 = vunpack.c.h.b16 %v6470
    %v6748 = vunpack.c.l.b16 %v6471
    %v6749 = vunpack.c.h.b16 %v6471
    %v6750 = vunpack.c.l.b16 %v6472
    %v6751 = vunpack.c.h.b16 %v6472
    %v6752 = vunpack.c.l.b16 %v6473
    %v6753 = vunpack.c.h.b16 %v6473
    %v6754 = vunpack.c.l.b16 %v6474
    %v6755 = vunpack.c.h.b16 %v6474
    %v6756 = vunpack.c.l.b16 %v6475
    %v6757 = vunpack.c.h.b16 %v6475
    %v6758 = vunpack.c.l.b16 %v6476
    %v6759 = vunpack.c.h.b16 %v6476
    %v6760 = vunpack.c.l.b16 %v6477
    %v6761 = vunpack.c.h.b16 %v6477
    %v6762 = vunpack.c.l.b16 %v6478
    %v6763 = vunpack.c.h.b16 %v6478
    %v6764 = vunpack.c.l.b16 %v6479
    %v6765 = vunpack.c.h.b16 %v6479
    %v6766 = vunpack.c.l.b16 %v6480
    %v6767 = vunpack.c.h.b16 %v6480
    %v6768 = vunpack.c.l.b16 %v6481
    %v6769 = vunpack.c.h.b16 %v6481
    %v6770 = vunpack.c.l.b16 %v6482
    %v6771 = vunpack.c.h.b16 %v6482
    %v6772 = vunpack.c.l.b16 %v6483
    %v6773 = vunpack.c.h.b16 %v6483
    %v6774 = vunpack.c.l.b16 %v6484
    %v6775 = vunpack.c.h.b16 %v6484
    %v6776 = vunpack.c.l.b16 %v6485
    %v6777 = vunpack.c.h.b16 %v6485
    %v6778 = vunpack.c.l.b16 %v6486
    %v6779 = vunpack.c.h.b16 %v6486
    %v6780 = vunpack.c.l.b16 %v6487
    %v6781 = vunpack.c.h.b16 %v6487
    %v6782 = vunpack.c.l.b16 %v6488
    %v6783 = vunpack.c.h.b16 %v6488
    %v6784 = vunpack.c.l.b16 %v6489
    %v6785 = vunpack.c.h.b16 %v6489
    %v6786 = vunpack.c.l.b16 %v6490
    %v6787 = vunpack.c.h.b16 %v6490
    %v6788 = vunpack.c.l.b16 %v6491
    %v6789 = vunpack.c.h.b16 %v6491
    %v6790 = vunpack.c.l.b16 %v6492
    %v6791 = vunpack.c.h.b16 %v6492
    %v6792 = vunpack.c.l.b16 %v6493
    %v6793 = vunpack.c.h.b16 %v6493
    %v6794 = vunpack.c.l.b16 %v6494
    %v6795 = vunpack.c.h.b16 %v6494
    %v6796 = vunpack.c.l.b16 %v6495
    %v6797 = vunpack.c.h.b16 %v6495
    %v6798 = vunpack.c.l.b16 %v6496
    %v6799 = vunpack.c.h.b16 %v6496
    %v6800 = vunpack.c.l.b16 %v6497
    %v6801 = vunpack.c.h.b16 %v6497
    %v6802 = vunpack.c.l.b16 %v6498
    %v6803 = vunpack.c.h.b16 %v6498
    %v6804 = vunpack.c.l.b16 %v6499
    %v6805 = vunpack.c.h.b16 %v6499
    %v6806 = vunpack.c.l.b16 %v6500
    %v6807 = vunpack.c.h.b16 %v6500
    %v6808 = vunpack.c.l.b16 %v6501
    %v6809 = vunpack.c.h.b16 %v6501
    %v6810 = vunpack.c.l.b16 %v6502
    %v6811 = vunpack.c.h.b16 %v6502
    %v6812 = vunpack.c.l.b16 %v6503
    %v6813 = vunpack.c.h.b16 %v6503
    %v6814 = vpack.c.b16 %v6626, %v6622
    %v6815 = vpack.c.b16 %v6627, %v6623
    %v6816 = vpack.c.b16 %v6628, %v6624
    %v6817 = vpack.c.b16 %v6629, %v6625
    %v6818 = vpack.c.b16 %v6634, %v6630
    %v6819 = vpack.c.b16 %v6635, %v6631
    %v6820 = vpack.c.b16 %v6636, %v6632
    %v6821 = vpack.c.b16 %v6637, %v6633
    %v6822 = vpack.c.b16 %v6642, %v6638
    %v6823 = vpack.c.b16 %v6643, %v6639
    %v6824 = vpack.c.b16 %v6644, %v6640
    %v6825 = vpack.c.b16 %v6645, %v6641
    %v6826 = vpack.c.b16 %v6650, %v6646
    %v6827 = vpack.c.b16 %v6651, %v6647
    %v6828 = vpack.c.b16 %v6652, %v6648
    %v6829 = vpack.c.b16 %v6653, %v6649
    %v6830 = vpack.c.b16 %v6658, %v6654
    %v6831 = vpack.c.b16 %v6659, %v6655
    %v6832 = vpack.c.b16 %v6660, %v6656
    %v6833 = vpack.c.b16 %v6661, %v6657
    %v6834 = vpack.c.b16 %v6666, %v6662
    %v6835 = vpack.c.b16 %v6667, %v6663
    %v6836 = vpack.c.b16 %v6668, %v6664
    %v6837 = vpack.c.b16 %v6669, %v6665
    %v6838 = vpack.c.b16 %v6674, %v6670
    %v6839 = vpack.c.b16 %v6675, %v6671
    %v6840 = vpack.c.b16 %v6676, %v6672
    %v6841 = vpack.c.b16 %v6677, %v6673
    %v6842 = vpack.c.b16 %v6682, %v6678
    %v6843 = vpack.c.b16 %v6683, %v6679
    %v6844 = vpack.c.b16 %v6684, %v6680
    %v6845 = vpack.c.b16 %v6685, %v6681
    %v6846 = vpack.c.b16 %v6690, %v6686
    %v6847 = vpack.c.b16 %v6691, %v6687
    %v6848 = vpack.c.b16 %v6692, %v6688
    %v6849 = vpack.c.b16 %v6693, %v6689
    %v6850 = vpack.c.b16 %v6698, %v6694
    %v6851 = vpack.c.b16 %v6699, %v6695
    %v6852 = vpack.c.b16 %v6700, %v6696
    %v6853 = vpack.c.b16 %v6701, %v6697
    %v6854 = vpack.c.b16 %v6706, %v6702
    %v6855 = vpack.c.b16 %v6707, %v6703
    %v6856 = vpack.c.b16 %v6708, %v6704
    %v6857 = vpack.c.b16 %v6709, %v6705
    %v6858 = vpack.c.b16 %v6714, %v6710
    %v6859 = vpack.c.b16 %v6715, %v6711
    %v6860 = vpack.c.b16 %v6716, %v6712
    %v6861 = vpack.c.b16 %v6717, %v6713
    %v6862 = vpack.c.b16 %v6722, %v6718
    %v6863 = vpack.c.b16 %v6723, %v6719
    %v6864 = vpack.c.b16 %v6724, %v6720
    %v6865 = vpack.c.b16 %v6725, %v6721
    %v6866 = vpack.c.b16 %v6730, %v6726
    %v6867 = vpack.c.b16 %v6731, %v6727
    %v6868 = vpack.c.b16 %v6732, %v6728
    %v6869 = vpack.c.b16 %v6733, %v6729
    %v6870 = vpack.c.b16 %v6738, %v6734
    %v6871 = vpack.c.b16 %v6739, %v6735
    %v6872 = vpack.c.b16 %v6740, %v6736
    %v6873 = vpack.c.b16 %v6741, %v6737
    %v6874 = vpack.c.b16 %v6746, %v6742
    %v6875 = vpack.c.b16 %v6747, %v6743
    %v6876 = vpack.c.b16 %v6748, %v6744
    %v6877 = vpack.c.b16 %v6749, %v6745
    %v6878 = vpack.c.b16 %v6754, %v6750
    %v6879 = vpack.c.b16 %v6755, %v6751
    %v6880 = vpack.c.b16 %v6756, %v6752
    %v6881 = vpack.c.b16 %v6757, %v6753
    %v6882 = vpack.c.b16 %v6762, %v6758
    %v6883 = vpack.c.b16 %v6763, %v6759
    %v6884 = vpack.c.b16 %v6764, %v6760
    %v6885 = vpack.c.b16 %v6765, %v6761
    %v6886 = vpack.c.b16 %v6770, %v6766
    %v6887 = vpack.c.b16 %v6771, %v6767
    %v6888 = vpack.c.b16 %v6772, %v6768
    %v6889 = vpack.c.b16 %v6773, %v6769
    %v6890 = vpack.c.b16 %v6778, %v6774
    %v6891 = vpack.c.b16 %v6779, %v6775
    %v6892 = vpack.c.b16 %v6780, %v6776
    %v6893 = vpack.c.b16 %v6781, %v6777
    %v6894 = vpack.c.b16 %v6786, %v6782
    %v6895 = vpack.c.b16 %v6787, %v6783
    %v6896 = vpack.c.b16 %v6788, %v6784
    %v6897 = vpack.c.b16 %v6789, %v6785
    %v6898 = vpack.c.b16 %v6794, %v6790
    %v6899 = vpack.c.b16 %v6795, %v6791
    %v6900 = vpack.c.b16 %v6796, %v6792
    %v6901 = vpack.c.b16 %v6797, %v6793
    %v6902 = vpack.c.b16 %v6802, %v6798
    %v6903 = vpack.c.b16 %v6803, %v6799
    %v6904 = vpack.c.b16 %v6804, %v6800
    %v6905 = vpack.c.b16 %v6805, %v6801
    %v6906 = vpack.c.b16 %v6810, %v6806
    %v6907 = vpack.c.b16 %v6811, %v6807
    %v6908 = vpack.c.b16 %v6812, %v6808
    %v6909 = vpack.c.b16 %v6813, %v6809
    %7006 = vmatprep.subr.bf16.mxu0 %v6843
    %7007 = vmatpush1.bf16.msra.mxu0 %v6842
    %7008 = vmatprep.subr.bf16.mxu0 %v6839
    %7009 = vmatpush1.bf16.msra.mxu0 %v6838
    %7010 = vmatprep.subr.bf16.mxu0 %v6835
    %7011 = vmatpush1.bf16.msra.mxu0 %v6834
    %7012 = vmatprep.subr.bf16.mxu0 %v6831
    %7013 = vmatpush1.bf16.msra.mxu0 %v6830
    %7014 = vmatprep.subr.bf16.mxu0 %v6827
    %7015 = vmatpush1.bf16.msra.mxu0 %v6826
    %7016 = vmatprep.subr.bf16.mxu0 %v6823
    %7017 = vmatpush1.bf16.msra.mxu0 %v6822
    %7018 = vmatprep.subr.bf16.mxu0 %v6819
    %7019 = vmatpush1.bf16.msra.mxu0 %v6818
    %7020 = vmatprep.subr.bf16.mxu0 %v6815
    %7021 = vmatpush1.bf16.msra.mxu0 %v6814
    %7022 = vmatprep.subr.bf16.mxu0 %v6875
    %7023 = vmatpush2.bf16.msra.mxu0 %v6874
    %7024 = vmatprep.subr.bf16.mxu0 %v6871
    %7025 = vmatpush2.bf16.msra.mxu0 %v6870
    %7026 = vmatprep.subr.bf16.mxu0 %v6867
    %7027 = vmatpush2.bf16.msra.mxu0 %v6866
    %7028 = vmatprep.subr.bf16.mxu0 %v6863
    %7029 = vmatpush2.bf16.msra.mxu0 %v6862
    %7030 = vmatprep.subr.bf16.mxu0 %v6859
    %7031 = vmatpush2.bf16.msra.mxu0 %v6858
    %7032 = vmatprep.subr.bf16.mxu0 %v6855
    %7033 = vmatpush2.bf16.msra.mxu0 %v6854
    %7034 = vmatprep.subr.bf16.mxu0 %v6851
    %7035 = vmatpush2.bf16.msra.mxu0 %v6850
    %7036 = vmatprep.subr.bf16.mxu0 %v6847
    %7037 = vmatpush2.bf16.msra.mxu0 %v6846
    %7038 = vmatprep.mubr.bf16.mxu0 %v6407
    %7039 = vmatmul.mubr.bf16.gmra.mxu0 %v6406
    %v7040 = vpop.f32.mrf.mxu0
    %v7041 = vadd.f32 %v6509, %v7040
    %v7042 = vpop.f32.mrf.mxu0
    %v7043 = vadd.f32 %v6513, %v7042
    %v7044 = vpop.f32.mrf.mxu0
    %v7045 = vpop.f32.mrf.mxu0
    %7046 = vdwg.mxu0
    %7047 = vmatprep.subr.bf16.mxu0 %v6907
    %7048 = vmatpush1.bf16.msra.mxu0 %v6906
    %7049 = vmatprep.subr.bf16.mxu0 %v6903
    %7050 = vmatpush1.bf16.msra.mxu0 %v6902
    %7051 = vmatprep.subr.bf16.mxu0 %v6899
    %7052 = vmatpush1.bf16.msra.mxu0 %v6898
    %7053 = vmatprep.subr.bf16.mxu0 %v6895
    %7054 = vmatpush1.bf16.msra.mxu0 %v6894
    %7055 = vmatprep.subr.bf16.mxu0 %v6891
    %7056 = vmatpush1.bf16.msra.mxu0 %v6890
    %7057 = vmatprep.subr.bf16.mxu0 %v6887
    %7058 = vmatpush1.bf16.msra.mxu0 %v6886
    %7059 = vmatprep.subr.bf16.mxu0 %v6883
    %7060 = vmatpush1.bf16.msra.mxu0 %v6882
    %7061 = vmatprep.subr.bf16.mxu0 %v6879
    %7062 = vmatpush1.bf16.msra.mxu0 %v6878
    %7063 = vmatprep.subr.bf16.mxu0 0
    %7064 = vmatpush2.bf16.msra.mxu0 0
    %7065 = vmatprep.subr.bf16.mxu0 0
    %7066 = vmatpush2.bf16.msra.mxu0 0
    %7067 = vmatprep.subr.bf16.mxu0 0
    %7068 = vmatpush2.bf16.msra.mxu0 0
    %7069 = vmatprep.subr.bf16.mxu0 0
    %7070 = vmatpush2.bf16.msra.mxu0 0
    %7071 = vmatprep.subr.bf16.mxu0 0
    %7072 = vmatpush2.bf16.msra.mxu0 0
    %7073 = vmatprep.subr.bf16.mxu0 0
    %7074 = vmatpush2.bf16.msra.mxu0 0
    %7075 = vmatprep.subr.bf16.mxu0 0
    %7076 = vmatpush2.bf16.msra.mxu0 0
    %7077 = vmatprep.subr.bf16.mxu0 0
    %7078 = vmatpush2.bf16.msra.mxu0 0
    %7079 = vmatprep.mubr.bf16.mxu0 0
    %7080 = vmatmul.mubr.bf16.gmra.mxu0 %v6103
    %v7081 = vpop.f32.mrf.mxu0
    %v7082 = vadd.f32 %v7041, %v7081
    %v7083 = vpop.f32.mrf.mxu0
    %v7084 = vadd.f32 %v7043, %v7083
    %v7085 = vpop.f32.mrf.mxu0
    %v7086 = vpop.f32.mrf.mxu0
    %7087 = vdwg.mxu0
    %7088 = vmatprep.subr.bf16.mxu0 %v6845
    %7089 = vmatpush1.bf16.msra.mxu0 %v6844
    %7090 = vmatprep.subr.bf16.mxu0 %v6841
    %7091 = vmatpush1.bf16.msra.mxu0 %v6840
    %7092 = vmatprep.subr.bf16.mxu0 %v6837
    %7093 = vmatpush1.bf16.msra.mxu0 %v6836
    %7094 = vmatprep.subr.bf16.mxu0 %v6833
    %7095 = vmatpush1.bf16.msra.mxu0 %v6832
    %7096 = vmatprep.subr.bf16.mxu0 %v6829
    %7097 = vmatpush1.bf16.msra.mxu0 %v6828
    %7098 = vmatprep.subr.bf16.mxu0 %v6825
    %7099 = vmatpush1.bf16.msra.mxu0 %v6824
    %7100 = vmatprep.subr.bf16.mxu0 %v6821
    %7101 = vmatpush1.bf16.msra.mxu0 %v6820
    %7102 = vmatprep.subr.bf16.mxu0 %v6817
    %7103 = vmatpush1.bf16.msra.mxu0 %v6816
    %7104 = vmatprep.subr.bf16.mxu0 %v6877
    %7105 = vmatpush2.bf16.msra.mxu0 %v6876
    %7106 = vmatprep.subr.bf16.mxu0 %v6873
    %7107 = vmatpush2.bf16.msra.mxu0 %v6872
    %7108 = vmatprep.subr.bf16.mxu0 %v6869
    %7109 = vmatpush2.bf16.msra.mxu0 %v6868
    %7110 = vmatprep.subr.bf16.mxu0 %v6865
    %7111 = vmatpush2.bf16.msra.mxu0 %v6864
    %7112 = vmatprep.subr.bf16.mxu0 %v6861
    %7113 = vmatpush2.bf16.msra.mxu0 %v6860
    %7114 = vmatprep.subr.bf16.mxu0 %v6857
    %7115 = vmatpush2.bf16.msra.mxu0 %v6856
    %7116 = vmatprep.subr.bf16.mxu0 %v6853
    %7117 = vmatpush2.bf16.msra.mxu0 %v6852
    %7118 = vmatprep.subr.bf16.mxu0 %v6849
    %7119 = vmatpush2.bf16.msra.mxu0 %v6848
    %7120 = vmatprep.mubr.bf16.mxu0 %v6407
    %7121 = vmatmul.mubr.bf16.gmra.mxu0 %v6406
    %v7122 = vpop.f32.mrf.mxu0
    %v7123 = vadd.f32 %v6517, %v7122
    %v7124 = vpop.f32.mrf.mxu0
    %v7125 = vadd.f32 %v6521, %v7124
    %v7126 = vpop.f32.mrf.mxu0
    %v7127 = vpop.f32.mrf.mxu0
    %7128 = vdwg.mxu0
    %7129 = vmatprep.subr.bf16.mxu0 %v6909
    %7130 = vmatpush1.bf16.msra.mxu0 %v6908
    %7131 = vmatprep.subr.bf16.mxu0 %v6905
    %7132 = vmatpush1.bf16.msra.mxu0 %v6904
    %7133 = vmatprep.subr.bf16.mxu0 %v6901
    %7134 = vmatpush1.bf16.msra.mxu0 %v6900
    %7135 = vmatprep.subr.bf16.mxu0 %v6897
    %7136 = vmatpush1.bf16.msra.mxu0 %v6896
    %7137 = vmatprep.subr.bf16.mxu0 %v6893
    %7138 = vmatpush1.bf16.msra.mxu0 %v6892
    %7139 = vmatprep.subr.bf16.mxu0 %v6889
    %7140 = vmatpush1.bf16.msra.mxu0 %v6888
    %7141 = vmatprep.subr.bf16.mxu0 %v6885
    %7142 = vmatpush1.bf16.msra.mxu0 %v6884
    %7143 = vmatprep.subr.bf16.mxu0 %v6881
    %7144 = vmatpush1.bf16.msra.mxu0 %v6880
    %7145 = vmatprep.subr.bf16.mxu0 0
    %7146 = vmatpush2.bf16.msra.mxu0 0
    %7147 = vmatprep.subr.bf16.mxu0 0
    %7148 = vmatpush2.bf16.msra.mxu0 0
    %7149 = vmatprep.subr.bf16.mxu0 0
    %7150 = vmatpush2.bf16.msra.mxu0 0
    %7151 = vmatprep.subr.bf16.mxu0 0
    %7152 = vmatpush2.bf16.msra.mxu0 0
    %7153 = vmatprep.subr.bf16.mxu0 0
    %7154 = vmatpush2.bf16.msra.mxu0 0
    %7155 = vmatprep.subr.bf16.mxu0 0
    %7156 = vmatpush2.bf16.msra.mxu0 0
    %7157 = vmatprep.subr.bf16.mxu0 0
    %7158 = vmatpush2.bf16.msra.mxu0 0
    %7159 = vmatprep.subr.bf16.mxu0 0
    %7160 = vmatpush2.bf16.msra.mxu0 0
    %7161 = vmatprep.mubr.bf16.mxu0 0
    %7162 = vmatmul.mubr.bf16.gmra.mxu0 %v6103
    %v7163 = vpop.f32.mrf.mxu0
    %v7164 = vadd.f32 %v7123, %v7163
    %v7165 = vpop.f32.mrf.mxu0
    %v7166 = vadd.f32 %v7125, %v7165
    %v7167 = vpop.f32.mrf.mxu0
    %v7168 = vpop.f32.mrf.mxu0
    %7169 = vdwg.mxu0
    %v7170 = vxor.u32 %v7082, 2147483648
    %v7171 = vmul.f32 %v7170, 1.442695
    %v7172 = vpow.pop %v7171
    %v7173 = vadd.f32 %v7172, 1.0
    %v7174 = vrcp.pop %v7173
    %v7175 = vmul.f32 1.0, %v7174
    %v7176 = vxor.u32 %v7084, 2147483648
    %v7177 = vmul.f32 %v7176, 1.442695
    %v7178 = vpow.pop %v7177
    %v7179 = vadd.f32 %v7178, 1.0
    %v7180 = vrcp.pop %v7179
    %v7181 = vmul.f32 1.0, %v7180
    %v7182 = vtanh.pop %v7164
    %v7183 = vxor.u32 %v7166, 2147483648
    %v7184 = vmul.f32 %v7183, 1.442695
    %v7185 = vpow.pop %v7184
    %v7186 = vadd.f32 %v7185, 1.0
    %v7187 = vrcp.pop %v7186
    %v7188 = vmul.f32 1.0, %v7187
    %v7189 = vmul.f32 %v7181, %v6100
    %v7190 = vmul.f32 %v7175, %v7182
    %v7191 = vadd.f32 %v7189, %v7190
    %v7192 = vtanh.pop %v7191
    %v7193 = vmul.f32 %v7188, %v7192
    %v7194 = vpack.c.bf16 %v7193, %v7193
    %v7195 = vld [vmem:[%s8] sm:$0xf]
    %v7196 = vld [vmem:[%s8 + $0x4] sm:$0xf]
    %v7197 = vld [vmem:[%s8 + $0x8] sm:$0xf]
    %v7198 = vld [vmem:[%s8 + $0xc] sm:$0xf]
    %v7199 = vld [vmem:[%s8 + $0x10] sm:$0xf]
    %v7200 = vld [vmem:[%s8 + $0x14] sm:$0xf]
    %v7201 = vld [vmem:[%s8 + $0x18] sm:$0xf]
    %v7202 = vld [vmem:[%s8 + $0x1c] sm:$0xf]
    %v7203 = vld [vmem:[%s8 + $0x20] sm:$0xf]
    %v7204 = vld [vmem:[%s8 + $0x24] sm:$0xf]
    %v7205 = vld [vmem:[%s8 + $0x28] sm:$0xf]
    %v7206 = vld [vmem:[%s8 + $0x2c] sm:$0xf]
    %v7207 = vld [vmem:[%s8 + $0x30] sm:$0xf]
    %v7208 = vld [vmem:[%s8 + $0x34] sm:$0xf]
    %v7209 = vld [vmem:[%s8 + $0x38] sm:$0xf]
    %v7210 = vld [vmem:[%s8 + $0x3c] sm:$0xf]
    %v7211 = vld [vmem:[%s8 + $0x40] sm:$0xf]
    %v7212 = vld [vmem:[%s8 + $0x44] sm:$0xf]
    %v7213 = vld [vmem:[%s8 + $0x48] sm:$0xf]
    %v7214 = vld [vmem:[%s8 + $0x4c] sm:$0xf]
    %v7215 = vld [vmem:[%s8 + $0x50] sm:$0xf]
    %v7216 = vld [vmem:[%s8 + $0x54] sm:$0xf]
    %v7217 = vld [vmem:[%s8 + $0x58] sm:$0xf]
    %v7218 = vld [vmem:[%s8 + $0x5c] sm:$0xf]
    %v7219 = vld [vmem:[%s8 + $0x60] sm:$0xf]
    %v7220 = vld [vmem:[%s8 + $0x64] sm:$0xf]
    %v7221 = vld [vmem:[%s8 + $0x68] sm:$0xf]
    %v7222 = vld [vmem:[%s8 + $0x6c] sm:$0xf]
    %v7223 = vld [vmem:[%s8 + $0x70] sm:$0xf]
    %v7224 = vld [vmem:[%s8 + $0x74] sm:$0xf]
    %v7225 = vld [vmem:[%s8 + $0x78] sm:$0xf]
    %v7226 = vld [vmem:[%s8 + $0x7c] sm:$0xf]
    %v7227 = vld [vmem:[%s9] sm:$0x1]
    %v7229 = vlaneseq
    %v7230 = vshrl.u32 %v7229, 7
    %v7231 = vsub.s32 0, %v7230
    %v7232 = vrot.slane %v7227, %v7231
    %v7266 = vunpack.c.l.b16 %v7195
    %v7267 = vunpack.c.l.b16 %v7196
    %v7268 = vunpack.c.l.b16 %v7197
    %v7269 = vunpack.c.l.b16 %v7198
    %v7270 = vunpack.c.l.b16 %v7199
    %v7271 = vunpack.c.l.b16 %v7200
    %v7272 = vunpack.c.l.b16 %v7201
    %v7273 = vunpack.c.l.b16 %v7202
    %v7274 = vunpack.c.l.b16 %v7203
    %v7275 = vunpack.c.l.b16 %v7204
    %v7276 = vunpack.c.l.b16 %v7205
    %v7277 = vunpack.c.l.b16 %v7206
    %v7278 = vunpack.c.l.b16 %v7207
    %v7279 = vunpack.c.l.b16 %v7208
    %v7280 = vunpack.c.l.b16 %v7209
    %v7281 = vunpack.c.l.b16 %v7210
    %v7282 = vunpack.c.l.b16 %v7211
    %v7283 = vunpack.c.l.b16 %v7212
    %v7284 = vunpack.c.l.b16 %v7213
    %v7285 = vunpack.c.l.b16 %v7214
    %v7286 = vunpack.c.l.b16 %v7215
    %v7287 = vunpack.c.l.b16 %v7216
    %v7288 = vunpack.c.l.b16 %v7217
    %v7289 = vunpack.c.l.b16 %v7218
    %v7290 = vunpack.c.l.b16 %v7219
    %v7291 = vunpack.c.l.b16 %v7220
    %v7292 = vunpack.c.l.b16 %v7221
    %v7293 = vunpack.c.l.b16 %v7222
    %v7294 = vunpack.c.l.b16 %v7223
    %v7295 = vunpack.c.l.b16 %v7224
    %v7296 = vunpack.c.l.b16 %v7225
    %v7297 = vunpack.c.l.b16 %v7226
    %v7298 = vpack.c.b16 %v7267, %v7266
    %v7299 = vpack.c.b16 %v7269, %v7268
    %v7300 = vpack.c.b16 %v7271, %v7270
    %v7301 = vpack.c.b16 %v7273, %v7272
    %v7302 = vpack.c.b16 %v7275, %v7274
    %v7303 = vpack.c.b16 %v7277, %v7276
    %v7304 = vpack.c.b16 %v7279, %v7278
    %v7305 = vpack.c.b16 %v7281, %v7280
    %v7306 = vpack.c.b16 %v7283, %v7282
    %v7307 = vpack.c.b16 %v7285, %v7284
    %v7308 = vpack.c.b16 %v7287, %v7286
    %v7309 = vpack.c.b16 %v7289, %v7288
    %v7310 = vpack.c.b16 %v7291, %v7290
    %v7311 = vpack.c.b16 %v7293, %v7292
    %v7312 = vpack.c.b16 %v7295, %v7294
    %v7313 = vpack.c.b16 %v7297, %v7296
    %7330 = vmatprep.subr.bf16.mxu0 0
    %7331 = vmatpush1.bf16.msra.mxu0 %v7305
    %7332 = vmatprep.subr.bf16.mxu0 0
    %7333 = vmatpush1.bf16.msra.mxu0 %v7304
    %7334 = vmatprep.subr.bf16.mxu0 0
    %7335 = vmatpush1.bf16.msra.mxu0 %v7303
    %7336 = vmatprep.subr.bf16.mxu0 0
    %7337 = vmatpush1.bf16.msra.mxu0 %v7302
    %7338 = vmatprep.subr.bf16.mxu0 0
    %7339 = vmatpush1.bf16.msra.mxu0 %v7301
    %7340 = vmatprep.subr.bf16.mxu0 0
    %7341 = vmatpush1.bf16.msra.mxu0 %v7300
    %7342 = vmatprep.subr.bf16.mxu0 0
    %7343 = vmatpush1.bf16.msra.mxu0 %v7299
    %7344 = vmatprep.subr.bf16.mxu0 0
    %7345 = vmatpush1.bf16.msra.mxu0 %v7298
    %7346 = vmatprep.subr.bf16.mxu0 0
    %7347 = vmatpush2.bf16.msra.mxu0 %v7313
    %7348 = vmatprep.subr.bf16.mxu0 0
    %7349 = vmatpush2.bf16.msra.mxu0 %v7312
    %7350 = vmatprep.subr.bf16.mxu0 0
    %7351 = vmatpush2.bf16.msra.mxu0 %v7311
    %7352 = vmatprep.subr.bf16.mxu0 0
    %7353 = vmatpush2.bf16.msra.mxu0 %v7310
    %7354 = vmatprep.subr.bf16.mxu0 0
    %7355 = vmatpush2.bf16.msra.mxu0 %v7309
    %7356 = vmatprep.subr.bf16.mxu0 0
    %7357 = vmatpush2.bf16.msra.mxu0 %v7308
    %7358 = vmatprep.subr.bf16.mxu0 0
    %7359 = vmatpush2.bf16.msra.mxu0 %v7307
    %7360 = vmatprep.subr.bf16.mxu0 0
    %7361 = vmatpush2.bf16.msra.mxu0 %v7306
    %7362 = vmatprep.mubr.bf16.mxu0 %v6407
    %7363 = vmatmul.mubr.bf16.gmra.mxu0 %v7194
    %v7364 = vpop.f32.mrf.mxu0
    %v7365 = vadd.f32 %v7232, %v7364
    %v7366 = vpop.f32.mrf.mxu0
    %v7367 = vpop.f32.mrf.mxu0
    %v7368 = vpop.f32.mrf.mxu0
    %7369 = vdwg.mxu0
    %s7370 = scalar_lea.vmem [#allocation12], 32
    %7371 = vst [vmem:[%s7370] sm:$0xff] %v7365
    %7372 = vmax.xlane.f32.xlu0 %v7365
    %v7373 = vpop.xlane.xlu0 %7372
    %vm7374 = vcmp.ge.f32.partialorder %v7365, %v7373
    %v7375 = vsel %vm7374, %v100, 128
    %v7376 = vand.u32 %v7375, 65535
    %v7377 = vshra.s32 %v7375, 16
    %v7378 = vcvt.s32.f32 %v7376
    %v7379 = vcvt.s32.f32 %v7377
    %7380 = vmin.xlane.f32.xlu0 %v7379
    %v7381 = vpop.xlane.xlu0 %7380
    %vm7382 = vcmp.eq.f32.partialorder %v7379, %v7381
    %v7383 = vsel %vm7382, %v7378, inf
    %7384 = vmin.xlane.f32.xlu0 %v7383
    %v7385 = vpop.xlane.xlu0 %7384
    %v7386 = vcvt.f32.s32 %v7385
    %v7387 = vcvt.f32.s32 %v7381
    %v7388 = vshll.u32 %v7387, 16
    %v7389 = vadd.s32 %v7388, %v7386
    %s7390 = sld [smem:[#allocation4 + $0x4]]
    %p7391 = scmp.ne.s32.totalorder %s7390, 0
    %s7392 = scalar_lea.vmem %s1, 32
    %v7393 = vld [vmem:[%s7392] sm:$0xff]
    %s7394 = scalar_select %p7391, 1, 0
    %v7395 = vstv %s7394
    %vm7396 = vcmp.eq.s32.totalorder %v7395, 1
    %v7397 = vsel %vm7396, %v7393, %v7389
    %v7398 = vld [vmem:[#allocation3] sm:$0xff]
    %v7399 = vld [vmem:[#allocation3 + $0x8] sm:$0xff]
    %v7400 = vld [vmem:[#allocation3 + $0x10] sm:$0xff]
    %v7401 = vld [vmem:[#allocation3 + $0x18] sm:$0xff]
    %v7402 = vld [vmem:[#allocation3 + $0x20] sm:$0xff]
    %v7403 = vld [vmem:[#allocation3 + $0x28] sm:$0xff]
    %v7404 = vld [vmem:[#allocation3 + $0x30] sm:$0xff]
    %v7405 = vld [vmem:[#allocation3 + $0x38] sm:$0xff]
    %v7406 = vmul.f32 %v7398, %v7193
    %v7407 = vmul.f32 %v7399, %v7193
    %v7408 = vmul.f32 %v7400, %v7193
    %v7409 = vmul.f32 %v7401, %v7193
    %v7410 = vmul.f32 %v7402, %v7193
    %v7411 = vmul.f32 %v7403, %v7193
    %v7412 = vmul.f32 %v7404, %v7193
    %v7413 = vmul.f32 %v7405, %v7193
    %7414 = vadd.xlane.f32.xlu0 %v7406
    %v7415 = vpop.xlane.xlu0 %7414
    %7416 = vadd.xlane.f32.xlu0 %v7407
    %v7417 = vpop.xlane.xlu0 %7416
    %7418 = vadd.xlane.f32.xlu0 %v7408
    %v7419 = vpop.xlane.xlu0 %7418
    %7420 = vadd.xlane.f32.xlu0 %v7409
    %v7421 = vpop.xlane.xlu0 %7420
    %7422 = vadd.xlane.f32.xlu0 %v7410
    %v7423 = vpop.xlane.xlu0 %7422
    %7424 = vadd.xlane.f32.xlu0 %v7411
    %v7425 = vpop.xlane.xlu0 %7424
    %7426 = vadd.xlane.f32.xlu0 %v7412
    %v7427 = vpop.xlane.xlu0 %7426
    %7428 = vadd.xlane.f32.xlu0 %v7413
    %v7429 = vpop.xlane.xlu0 %7428
    %v7430 = vmax.f32 %v7415, %v7423
    %v7431 = vmax.f32 %v7417, %v7425
    %v7432 = vmax.f32 %v7419, %v7427
    %v7433 = vmax.f32 %v7421, %v7429
    %v7434 = vmax.f32 %v7430, %v7431
    %v7435 = vmax.f32 %v7432, %v7433
    %v7436 = vmax.f32 %v7434, %v7435
    %v7437 = vsub.f32 %v7415, %v7436
    %v7438 = vsub.f32 %v7417, %v7436
    %v7439 = vsub.f32 %v7419, %v7436
    %v7440 = vsub.f32 %v7421, %v7436
    %v7441 = vsub.f32 %v7423, %v7436
    %v7442 = vsub.f32 %v7425, %v7436
    %v7443 = vsub.f32 %v7427, %v7436
    %v7444 = vsub.f32 %v7429, %v7436
    %v7445 = vmul.f32 %v7437, 1.442695
    %v7446 = vpow.pop %v7445
    %v7447 = vmul.f32 %v7438, 1.442695
    %v7448 = vpow.pop %v7447
    %v7449 = vmul.f32 %v7439, 1.442695
    %v7450 = vpow.pop %v7449
    %v7451 = vmul.f32 %v7440, 1.442695
    %v7452 = vpow.pop %v7451
    %v7453 = vmul.f32 %v7441, 1.442695
    %v7454 = vpow.pop %v7453
    %v7455 = vmul.f32 %v7442, 1.442695
    %v7456 = vpow.pop %v7455
    %v7457 = vmul.f32 %v7443, 1.442695
    %v7458 = vpow.pop %v7457
    %v7459 = vmul.f32 %v7444, 1.442695
    %v7460 = vpow.pop %v7459
    %v7461 = vadd.f32 %v7446, %v7448
    %v7462 = vadd.f32 %v7461, %v7450
    %v7463 = vadd.f32 %v7462, %v7452
    %v7464 = vadd.f32 %v7463, %v7454
    %v7465 = vadd.f32 %v7464, %v7456
    %v7466 = vadd.f32 %v7465, %v7458
    %v7467 = vadd.f32 %v7466, %v7460
    %v7468 = vrcp.pop %v7467
    %v7469 = vmul.f32 %v7446, %v7468
    %v7470 = vmul.f32 %v7448, %v7468
    %v7471 = vmul.f32 %v7450, %v7468
    %v7472 = vmul.f32 %v7452, %v7468
    %v7473 = vmul.f32 %v7454, %v7468
    %v7474 = vmul.f32 %v7456, %v7468
    %v7475 = vmul.f32 %v7458, %v7468
    %v7476 = vmul.f32 %v7460, %v7468
    %v7477 = vmul.f32 %v7469, %v7398
    %v7478 = vmul.f32 %v7470, %v7399
    %v7479 = vmul.f32 %v7471, %v7400
    %v7480 = vmul.f32 %v7472, %v7401
    %v7481 = vmul.f32 %v7473, %v7402
    %v7482 = vmul.f32 %v7474, %v7403
    %v7483 = vmul.f32 %v7475, %v7404
    %v7484 = vmul.f32 %v7476, %v7405
    %v7485 = vadd.f32 %v7477, %v7478
    %v7486 = vadd.f32 %v7485, %v7479
    %v7487 = vadd.f32 %v7486, %v7480
    %v7488 = vadd.f32 %v7487, %v7481
    %v7489 = vadd.f32 %v7488, %v7482
    %v7490 = vadd.f32 %v7489, %v7483
    %v7491 = vadd.f32 %v7490, %v7484
    %7492 = vset.pattern.permute.xlu0 0
    %7493 = vperm.xlu0 %7492, %v7397
    %v7494 = vpop.permute.xlu0 %7493
    %vm7495 = vcmp.eq.s32.totalorder %v7494, %v100
    %v7496 = vsel %vm7495, 1.0, 0.0
    %v7497 = vpack.c.bf16 %v7496, %v7496
    %v7498 = vpack.c.bf16 %v7491, %v7491
    %v7499 = vld [vmem:[#allocation11] sm:$0xff]
    %v7500 = vld [vmem:[#allocation11 + $0x8] sm:$0xff]
    %v7501 = vld [vmem:[#allocation11 + $0x10] sm:$0xff]
    %v7502 = vld [vmem:[#allocation11 + $0x18] sm:$0xff]
    %v7503 = vld [vmem:[#allocation11 + $0x20] sm:$0xff]
    %v7504 = vld [vmem:[#allocation11 + $0x28] sm:$0xff]
    %v7505 = vld [vmem:[#allocation11 + $0x30] sm:$0xff]
    %v7506 = vld [vmem:[#allocation11 + $0x38] sm:$0xff]
    %v7507 = vld [vmem:[#allocation11 + $0x40] sm:$0xff]
    %v7508 = vld [vmem:[#allocation11 + $0x48] sm:$0xff]
    %v7509 = vld [vmem:[#allocation11 + $0x50] sm:$0xff]
    %v7510 = vld [vmem:[#allocation11 + $0x58] sm:$0xff]
    %v7511 = vld [vmem:[#allocation11 + $0x60] sm:$0xff]
    %v7512 = vld [vmem:[#allocation11 + $0x68] sm:$0xff]
    %v7513 = vld [vmem:[#allocation11 + $0x70] sm:$0xff]
    %v7514 = vld [vmem:[#allocation11 + $0x78] sm:$0xff]
    %v7515 = vld [vmem:[#allocation11 + $0x80] sm:$0xff]
    %v7516 = vld [vmem:[#allocation11 + $0x88] sm:$0xff]
    %v7517 = vld [vmem:[#allocation11 + $0x90] sm:$0xff]
    %v7518 = vld [vmem:[#allocation11 + $0x98] sm:$0xff]
    %v7519 = vld [vmem:[#allocation11 + $0xa0] sm:$0xff]
    %v7520 = vld [vmem:[#allocation11 + $0xa8] sm:$0xff]
    %v7521 = vld [vmem:[#allocation11 + $0xb0] sm:$0xff]
    %v7522 = vld [vmem:[#allocation11 + $0xb8] sm:$0xff]
    %v7523 = vld [vmem:[#allocation11 + $0xc0] sm:$0xff]
    %v7524 = vld [vmem:[#allocation11 + $0xc8] sm:$0xff]
    %v7525 = vld [vmem:[#allocation11 + $0xd0] sm:$0xff]
    %v7526 = vld [vmem:[#allocation11 + $0xd8] sm:$0xff]
    %v7527 = vld [vmem:[#allocation11 + $0xe0] sm:$0xff]
    %v7528 = vld [vmem:[#allocation11 + $0xe8] sm:$0xff]
    %v7529 = vld [vmem:[#allocation11 + $0xf0] sm:$0xff]
    %v7530 = vld [vmem:[#allocation11 + $0xf8] sm:$0xff]
    %v7531 = vld [vmem:[#allocation11 + $0x100] sm:$0xff]
    %v7532 = vld [vmem:[#allocation11 + $0x108] sm:$0xff]
    %v7533 = vld [vmem:[#allocation11 + $0x110] sm:$0xff]
    %v7534 = vld [vmem:[#allocation11 + $0x118] sm:$0xff]
    %v7535 = vld [vmem:[#allocation11 + $0x120] sm:$0xff]
    %v7536 = vld [vmem:[#allocation11 + $0x128] sm:$0xff]
    %v7537 = vld [vmem:[#allocation11 + $0x130] sm:$0xff]
    %v7538 = vld [vmem:[#allocation11 + $0x138] sm:$0xff]
    %v7539 = vld [vmem:[#allocation11 + $0x140] sm:$0xff]
    %v7540 = vld [vmem:[#allocation11 + $0x148] sm:$0xff]
    %v7541 = vld [vmem:[#allocation11 + $0x150] sm:$0xff]
    %v7542 = vld [vmem:[#allocation11 + $0x158] sm:$0xff]
    %v7543 = vld [vmem:[#allocation11 + $0x160] sm:$0xff]
    %v7544 = vld [vmem:[#allocation11 + $0x168] sm:$0xff]
    %v7545 = vld [vmem:[#allocation11 + $0x170] sm:$0xff]
    %v7546 = vld [vmem:[#allocation11 + $0x178] sm:$0xff]
    %v7547 = vld [vmem:[#allocation11 + $0x180] sm:$0xff]
    %v7548 = vld [vmem:[#allocation11 + $0x188] sm:$0xff]
    %v7549 = vld [vmem:[#allocation11 + $0x190] sm:$0xff]
    %v7550 = vld [vmem:[#allocation11 + $0x198] sm:$0xff]
    %v7551 = vld [vmem:[#allocation11 + $0x1a0] sm:$0xff]
    %v7552 = vld [vmem:[#allocation11 + $0x1a8] sm:$0xff]
    %v7553 = vld [vmem:[#allocation11 + $0x1b0] sm:$0xff]
    %v7554 = vld [vmem:[#allocation11 + $0x1b8] sm:$0xff]
    %v7555 = vld [vmem:[#allocation11 + $0x1c0] sm:$0xff]
    %v7556 = vld [vmem:[#allocation11 + $0x1c8] sm:$0xff]
    %v7557 = vld [vmem:[#allocation11 + $0x1d0] sm:$0xff]
    %v7558 = vld [vmem:[#allocation11 + $0x1d8] sm:$0xff]
    %v7559 = vld [vmem:[#allocation11 + $0x1e0] sm:$0xff]
    %v7560 = vld [vmem:[#allocation11 + $0x1e8] sm:$0xff]
    %v7561 = vld [vmem:[#allocation11 + $0x1f0] sm:$0xff]
    %v7562 = vld [vmem:[#allocation11 + $0x1f8] sm:$0xff]
    %v7563 = vld [vmem:[#allocation11 + $0x200] sm:$0xff]
    %v7564 = vld [vmem:[#allocation11 + $0x208] sm:$0xff]
    %v7565 = vld [vmem:[#allocation11 + $0x210] sm:$0xff]
    %v7566 = vld [vmem:[#allocation11 + $0x218] sm:$0xff]
    %v7567 = vld [vmem:[#allocation11 + $0x220] sm:$0xff]
    %v7568 = vld [vmem:[#allocation11 + $0x228] sm:$0xff]
    %v7569 = vld [vmem:[#allocation11 + $0x230] sm:$0xff]
    %v7570 = vld [vmem:[#allocation11 + $0x238] sm:$0xff]
    %v7571 = vld [vmem:[#allocation11 + $0x240] sm:$0xff]
    %v7572 = vld [vmem:[#allocation11 + $0x248] sm:$0xff]
    %v7573 = vld [vmem:[#allocation11 + $0x250] sm:$0xff]
    %v7574 = vld [vmem:[#allocation11 + $0x258] sm:$0xff]
    %v7575 = vld [vmem:[#allocation11 + $0x260] sm:$0xff]
    %v7576 = vld [vmem:[#allocation11 + $0x268] sm:$0xff]
    %v7577 = vld [vmem:[#allocation11 + $0x270] sm:$0xff]
    %v7578 = vld [vmem:[#allocation11 + $0x278] sm:$0xff]
    %v7579 = vld [vmem:[#allocation11 + $0x280] sm:$0xff]
    %v7580 = vld [vmem:[#allocation11 + $0x288] sm:$0xff]
    %v7581 = vld [vmem:[#allocation11 + $0x290] sm:$0xff]
    %v7582 = vld [vmem:[#allocation11 + $0x298] sm:$0xff]
    %v7583 = vld [vmem:[#allocation11 + $0x2a0] sm:$0xff]
    %v7584 = vld [vmem:[#allocation11 + $0x2a8] sm:$0xff]
    %v7585 = vld [vmem:[#allocation11 + $0x2b0] sm:$0xff]
    %v7586 = vld [vmem:[#allocation11 + $0x2b8] sm:$0xff]
    %v7587 = vld [vmem:[#allocation11 + $0x2c0] sm:$0xff]
    %v7588 = vld [vmem:[#allocation11 + $0x2c8] sm:$0xff]
    %v7589 = vld [vmem:[#allocation11 + $0x2d0] sm:$0xff]
    %v7590 = vld [vmem:[#allocation11 + $0x2d8] sm:$0xff]
    %v7591 = vld [vmem:[#allocation11 + $0x2e0] sm:$0xff]
    %v7592 = vld [vmem:[#allocation11 + $0x2e8] sm:$0xff]
    %v7593 = vld [vmem:[#allocation11 + $0x2f0] sm:$0xff]
    %v7594 = vld [vmem:[#allocation11 + $0x2f8] sm:$0xff]
    %v7595 = vld [vmem:[%s7] sm:$0xf]
    %v7597 = vlaneseq
    %v7598 = vshrl.u32 %v7597, 7
    %v7599 = vsub.s32 0, %v7598
    %v7600 = vrot.slane %v7595, %v7599
    %v7601 = vlaneseq
    %v7602 = vshrl.u32 %v7601, 7
    %v7603 = vsub.s32 1, %v7602
    %v7604 = vrot.slane %v7595, %v7603
    %v7605 = vlaneseq
    %v7606 = vshrl.u32 %v7605, 7
    %v7607 = vsub.s32 2, %v7606
    %v7608 = vrot.slane %v7595, %v7607
    %v7609 = vlaneseq
    %v7610 = vshrl.u32 %v7609, 7
    %v7611 = vsub.s32 3, %v7610
    %v7612 = vrot.slane %v7595, %v7611
    %v7713 = vunpack.c.l.b16 %v7499
    %v7714 = vunpack.c.h.b16 %v7499
    %v7715 = vunpack.c.l.b16 %v7500
    %v7716 = vunpack.c.h.b16 %v7500
    %v7717 = vunpack.c.l.b16 %v7501
    %v7718 = vunpack.c.h.b16 %v7501
    %v7719 = vunpack.c.l.b16 %v7502
    %v7720 = vunpack.c.h.b16 %v7502
    %v7721 = vunpack.c.l.b16 %v7503
    %v7722 = vunpack.c.h.b16 %v7503
    %v7723 = vunpack.c.l.b16 %v7504
    %v7724 = vunpack.c.h.b16 %v7504
    %v7725 = vunpack.c.l.b16 %v7505
    %v7726 = vunpack.c.h.b16 %v7505
    %v7727 = vunpack.c.l.b16 %v7506
    %v7728 = vunpack.c.h.b16 %v7506
    %v7729 = vunpack.c.l.b16 %v7507
    %v7730 = vunpack.c.h.b16 %v7507
    %v7731 = vunpack.c.l.b16 %v7508
    %v7732 = vunpack.c.h.b16 %v7508
    %v7733 = vunpack.c.l.b16 %v7509
    %v7734 = vunpack.c.h.b16 %v7509
    %v7735 = vunpack.c.l.b16 %v7510
    %v7736 = vunpack.c.h.b16 %v7510
    %v7737 = vunpack.c.l.b16 %v7511
    %v7738 = vunpack.c.h.b16 %v7511
    %v7739 = vunpack.c.l.b16 %v7512
    %v7740 = vunpack.c.h.b16 %v7512
    %v7741 = vunpack.c.l.b16 %v7513
    %v7742 = vunpack.c.h.b16 %v7513
    %v7743 = vunpack.c.l.b16 %v7514
    %v7744 = vunpack.c.h.b16 %v7514
    %v7745 = vunpack.c.l.b16 %v7515
    %v7746 = vunpack.c.h.b16 %v7515
    %v7747 = vunpack.c.l.b16 %v7516
    %v7748 = vunpack.c.h.b16 %v7516
    %v7749 = vunpack.c.l.b16 %v7517
    %v7750 = vunpack.c.h.b16 %v7517
    %v7751 = vunpack.c.l.b16 %v7518
    %v7752 = vunpack.c.h.b16 %v7518
    %v7753 = vunpack.c.l.b16 %v7519
    %v7754 = vunpack.c.h.b16 %v7519
    %v7755 = vunpack.c.l.b16 %v7520
    %v7756 = vunpack.c.h.b16 %v7520
    %v7757 = vunpack.c.l.b16 %v7521
    %v7758 = vunpack.c.h.b16 %v7521
    %v7759 = vunpack.c.l.b16 %v7522
    %v7760 = vunpack.c.h.b16 %v7522
    %v7761 = vunpack.c.l.b16 %v7523
    %v7762 = vunpack.c.h.b16 %v7523
    %v7763 = vunpack.c.l.b16 %v7524
    %v7764 = vunpack.c.h.b16 %v7524
    %v7765 = vunpack.c.l.b16 %v7525
    %v7766 = vunpack.c.h.b16 %v7525
    %v7767 = vunpack.c.l.b16 %v7526
    %v7768 = vunpack.c.h.b16 %v7526
    %v7769 = vunpack.c.l.b16 %v7527
    %v7770 = vunpack.c.h.b16 %v7527
    %v7771 = vunpack.c.l.b16 %v7528
    %v7772 = vunpack.c.h.b16 %v7528
    %v7773 = vunpack.c.l.b16 %v7529
    %v7774 = vunpack.c.h.b16 %v7529
    %v7775 = vunpack.c.l.b16 %v7530
    %v7776 = vunpack.c.h.b16 %v7530
    %v7777 = vunpack.c.l.b16 %v7531
    %v7778 = vunpack.c.h.b16 %v7531
    %v7779 = vunpack.c.l.b16 %v7532
    %v7780 = vunpack.c.h.b16 %v7532
    %v7781 = vunpack.c.l.b16 %v7533
    %v7782 = vunpack.c.h.b16 %v7533
    %v7783 = vunpack.c.l.b16 %v7534
    %v7784 = vunpack.c.h.b16 %v7534
    %v7785 = vunpack.c.l.b16 %v7535
    %v7786 = vunpack.c.h.b16 %v7535
    %v7787 = vunpack.c.l.b16 %v7536
    %v7788 = vunpack.c.h.b16 %v7536
    %v7789 = vunpack.c.l.b16 %v7537
    %v7790 = vunpack.c.h.b16 %v7537
    %v7791 = vunpack.c.l.b16 %v7538
    %v7792 = vunpack.c.h.b16 %v7538
    %v7793 = vunpack.c.l.b16 %v7539
    %v7794 = vunpack.c.h.b16 %v7539
    %v7795 = vunpack.c.l.b16 %v7540
    %v7796 = vunpack.c.h.b16 %v7540
    %v7797 = vunpack.c.l.b16 %v7541
    %v7798 = vunpack.c.h.b16 %v7541
    %v7799 = vunpack.c.l.b16 %v7542
    %v7800 = vunpack.c.h.b16 %v7542
    %v7801 = vunpack.c.l.b16 %v7543
    %v7802 = vunpack.c.h.b16 %v7543
    %v7803 = vunpack.c.l.b16 %v7544
    %v7804 = vunpack.c.h.b16 %v7544
    %v7805 = vunpack.c.l.b16 %v7545
    %v7806 = vunpack.c.h.b16 %v7545
    %v7807 = vunpack.c.l.b16 %v7546
    %v7808 = vunpack.c.h.b16 %v7546
    %v7809 = vunpack.c.l.b16 %v7547
    %v7810 = vunpack.c.h.b16 %v7547
    %v7811 = vunpack.c.l.b16 %v7548
    %v7812 = vunpack.c.h.b16 %v7548
    %v7813 = vunpack.c.l.b16 %v7549
    %v7814 = vunpack.c.h.b16 %v7549
    %v7815 = vunpack.c.l.b16 %v7550
    %v7816 = vunpack.c.h.b16 %v7550
    %v7817 = vunpack.c.l.b16 %v7551
    %v7818 = vunpack.c.h.b16 %v7551
    %v7819 = vunpack.c.l.b16 %v7552
    %v7820 = vunpack.c.h.b16 %v7552
    %v7821 = vunpack.c.l.b16 %v7553
    %v7822 = vunpack.c.h.b16 %v7553
    %v7823 = vunpack.c.l.b16 %v7554
    %v7824 = vunpack.c.h.b16 %v7554
    %v7825 = vunpack.c.l.b16 %v7555
    %v7826 = vunpack.c.h.b16 %v7555
    %v7827 = vunpack.c.l.b16 %v7556
    %v7828 = vunpack.c.h.b16 %v7556
    %v7829 = vunpack.c.l.b16 %v7557
    %v7830 = vunpack.c.h.b16 %v7557
    %v7831 = vunpack.c.l.b16 %v7558
    %v7832 = vunpack.c.h.b16 %v7558
    %v7833 = vunpack.c.l.b16 %v7559
    %v7834 = vunpack.c.h.b16 %v7559
    %v7835 = vunpack.c.l.b16 %v7560
    %v7836 = vunpack.c.h.b16 %v7560
    %v7837 = vunpack.c.l.b16 %v7561
    %v7838 = vunpack.c.h.b16 %v7561
    %v7839 = vunpack.c.l.b16 %v7562
    %v7840 = vunpack.c.h.b16 %v7562
    %v7841 = vunpack.c.l.b16 %v7563
    %v7842 = vunpack.c.h.b16 %v7563
    %v7843 = vunpack.c.l.b16 %v7564
    %v7844 = vunpack.c.h.b16 %v7564
    %v7845 = vunpack.c.l.b16 %v7565
    %v7846 = vunpack.c.h.b16 %v7565
    %v7847 = vunpack.c.l.b16 %v7566
    %v7848 = vunpack.c.h.b16 %v7566
    %v7849 = vunpack.c.l.b16 %v7567
    %v7850 = vunpack.c.h.b16 %v7567
    %v7851 = vunpack.c.l.b16 %v7568
    %v7852 = vunpack.c.h.b16 %v7568
    %v7853 = vunpack.c.l.b16 %v7569
    %v7854 = vunpack.c.h.b16 %v7569
    %v7855 = vunpack.c.l.b16 %v7570
    %v7856 = vunpack.c.h.b16 %v7570
    %v7857 = vunpack.c.l.b16 %v7571
    %v7858 = vunpack.c.h.b16 %v7571
    %v7859 = vunpack.c.l.b16 %v7572
    %v7860 = vunpack.c.h.b16 %v7572
    %v7861 = vunpack.c.l.b16 %v7573
    %v7862 = vunpack.c.h.b16 %v7573
    %v7863 = vunpack.c.l.b16 %v7574
    %v7864 = vunpack.c.h.b16 %v7574
    %v7865 = vunpack.c.l.b16 %v7575
    %v7866 = vunpack.c.h.b16 %v7575
    %v7867 = vunpack.c.l.b16 %v7576
    %v7868 = vunpack.c.h.b16 %v7576
    %v7869 = vunpack.c.l.b16 %v7577
    %v7870 = vunpack.c.h.b16 %v7577
    %v7871 = vunpack.c.l.b16 %v7578
    %v7872 = vunpack.c.h.b16 %v7578
    %v7873 = vunpack.c.l.b16 %v7579
    %v7874 = vunpack.c.h.b16 %v7579
    %v7875 = vunpack.c.l.b16 %v7580
    %v7876 = vunpack.c.h.b16 %v7580
    %v7877 = vunpack.c.l.b16 %v7581
    %v7878 = vunpack.c.h.b16 %v7581
    %v7879 = vunpack.c.l.b16 %v7582
    %v7880 = vunpack.c.h.b16 %v7582
    %v7881 = vunpack.c.l.b16 %v7583
    %v7882 = vunpack.c.h.b16 %v7583
    %v7883 = vunpack.c.l.b16 %v7584
    %v7884 = vunpack.c.h.b16 %v7584
    %v7885 = vunpack.c.l.b16 %v7585
    %v7886 = vunpack.c.h.b16 %v7585
    %v7887 = vunpack.c.l.b16 %v7586
    %v7888 = vunpack.c.h.b16 %v7586
    %v7889 = vunpack.c.l.b16 %v7587
    %v7890 = vunpack.c.h.b16 %v7587
    %v7891 = vunpack.c.l.b16 %v7588
    %v7892 = vunpack.c.h.b16 %v7588
    %v7893 = vunpack.c.l.b16 %v7589
    %v7894 = vunpack.c.h.b16 %v7589
    %v7895 = vunpack.c.l.b16 %v7590
    %v7896 = vunpack.c.h.b16 %v7590
    %v7897 = vunpack.c.l.b16 %v7591
    %v7898 = vunpack.c.h.b16 %v7591
    %v7899 = vunpack.c.l.b16 %v7592
    %v7900 = vunpack.c.h.b16 %v7592
    %v7901 = vunpack.c.l.b16 %v7593
    %v7902 = vunpack.c.h.b16 %v7593
    %v7903 = vunpack.c.l.b16 %v7594
    %v7904 = vunpack.c.h.b16 %v7594
    %v7905 = vpack.c.b16 %v7717, %v7713
    %v7906 = vpack.c.b16 %v7718, %v7714
    %v7907 = vpack.c.b16 %v7719, %v7715
    %v7908 = vpack.c.b16 %v7720, %v7716
    %v7909 = vpack.c.b16 %v7725, %v7721
    %v7910 = vpack.c.b16 %v7726, %v7722
    %v7911 = vpack.c.b16 %v7727, %v7723
    %v7912 = vpack.c.b16 %v7728, %v7724
    %v7913 = vpack.c.b16 %v7733, %v7729
    %v7914 = vpack.c.b16 %v7734, %v7730
    %v7915 = vpack.c.b16 %v7735, %v7731
    %v7916 = vpack.c.b16 %v7736, %v7732
    %v7917 = vpack.c.b16 %v7741, %v7737
    %v7918 = vpack.c.b16 %v7742, %v7738
    %v7919 = vpack.c.b16 %v7743, %v7739
    %v7920 = vpack.c.b16 %v7744, %v7740
    %v7921 = vpack.c.b16 %v7749, %v7745
    %v7922 = vpack.c.b16 %v7750, %v7746
    %v7923 = vpack.c.b16 %v7751, %v7747
    %v7924 = vpack.c.b16 %v7752, %v7748
    %v7925 = vpack.c.b16 %v7757, %v7753
    %v7926 = vpack.c.b16 %v7758, %v7754
    %v7927 = vpack.c.b16 %v7759, %v7755
    %v7928 = vpack.c.b16 %v7760, %v7756
    %v7929 = vpack.c.b16 %v7765, %v7761
    %v7930 = vpack.c.b16 %v7766, %v7762
    %v7931 = vpack.c.b16 %v7767, %v7763
    %v7932 = vpack.c.b16 %v7768, %v7764
    %v7933 = vpack.c.b16 %v7773, %v7769
    %v7934 = vpack.c.b16 %v7774, %v7770
    %v7935 = vpack.c.b16 %v7775, %v7771
    %v7936 = vpack.c.b16 %v7776, %v7772
    %v7937 = vpack.c.b16 %v7781, %v7777
    %v7938 = vpack.c.b16 %v7782, %v7778
    %v7939 = vpack.c.b16 %v7783, %v7779
    %v7940 = vpack.c.b16 %v7784, %v7780
    %v7941 = vpack.c.b16 %v7789, %v7785
    %v7942 = vpack.c.b16 %v7790, %v7786
    %v7943 = vpack.c.b16 %v7791, %v7787
    %v7944 = vpack.c.b16 %v7792, %v7788
    %v7945 = vpack.c.b16 %v7797, %v7793
    %v7946 = vpack.c.b16 %v7798, %v7794
    %v7947 = vpack.c.b16 %v7799, %v7795
    %v7948 = vpack.c.b16 %v7800, %v7796
    %v7949 = vpack.c.b16 %v7805, %v7801
    %v7950 = vpack.c.b16 %v7806, %v7802
    %v7951 = vpack.c.b16 %v7807, %v7803
    %v7952 = vpack.c.b16 %v7808, %v7804
    %v7953 = vpack.c.b16 %v7813, %v7809
    %v7954 = vpack.c.b16 %v7814, %v7810
    %v7955 = vpack.c.b16 %v7815, %v7811
    %v7956 = vpack.c.b16 %v7816, %v7812
    %v7957 = vpack.c.b16 %v7821, %v7817
    %v7958 = vpack.c.b16 %v7822, %v7818
    %v7959 = vpack.c.b16 %v7823, %v7819
    %v7960 = vpack.c.b16 %v7824, %v7820
    %v7961 = vpack.c.b16 %v7829, %v7825
    %v7962 = vpack.c.b16 %v7830, %v7826
    %v7963 = vpack.c.b16 %v7831, %v7827
    %v7964 = vpack.c.b16 %v7832, %v7828
    %v7965 = vpack.c.b16 %v7837, %v7833
    %v7966 = vpack.c.b16 %v7838, %v7834
    %v7967 = vpack.c.b16 %v7839, %v7835
    %v7968 = vpack.c.b16 %v7840, %v7836
    %v7969 = vpack.c.b16 %v7845, %v7841
    %v7970 = vpack.c.b16 %v7846, %v7842
    %v7971 = vpack.c.b16 %v7847, %v7843
    %v7972 = vpack.c.b16 %v7848, %v7844
    %v7973 = vpack.c.b16 %v7853, %v7849
    %v7974 = vpack.c.b16 %v7854, %v7850
    %v7975 = vpack.c.b16 %v7855, %v7851
    %v7976 = vpack.c.b16 %v7856, %v7852
    %v7977 = vpack.c.b16 %v7861, %v7857
    %v7978 = vpack.c.b16 %v7862, %v7858
    %v7979 = vpack.c.b16 %v7863, %v7859
    %v7980 = vpack.c.b16 %v7864, %v7860
    %v7981 = vpack.c.b16 %v7869, %v7865
    %v7982 = vpack.c.b16 %v7870, %v7866
    %v7983 = vpack.c.b16 %v7871, %v7867
    %v7984 = vpack.c.b16 %v7872, %v7868
    %v7985 = vpack.c.b16 %v7877, %v7873
    %v7986 = vpack.c.b16 %v7878, %v7874
    %v7987 = vpack.c.b16 %v7879, %v7875
    %v7988 = vpack.c.b16 %v7880, %v7876
    %v7989 = vpack.c.b16 %v7885, %v7881
    %v7990 = vpack.c.b16 %v7886, %v7882
    %v7991 = vpack.c.b16 %v7887, %v7883
    %v7992 = vpack.c.b16 %v7888, %v7884
    %v7993 = vpack.c.b16 %v7893, %v7889
    %v7994 = vpack.c.b16 %v7894, %v7890
    %v7995 = vpack.c.b16 %v7895, %v7891
    %v7996 = vpack.c.b16 %v7896, %v7892
    %v7997 = vpack.c.b16 %v7901, %v7897
    %v7998 = vpack.c.b16 %v7902, %v7898
    %v7999 = vpack.c.b16 %v7903, %v7899
    %v8000 = vpack.c.b16 %v7904, %v7900
    %8097 = vmatprep.subr.bf16.mxu0 %v7934
    %8098 = vmatpush1.bf16.msra.mxu0 %v7933
    %8099 = vmatprep.subr.bf16.mxu0 %v7930
    %8100 = vmatpush1.bf16.msra.mxu0 %v7929
    %8101 = vmatprep.subr.bf16.mxu0 %v7926
    %8102 = vmatpush1.bf16.msra.mxu0 %v7925
    %8103 = vmatprep.subr.bf16.mxu0 %v7922
    %8104 = vmatpush1.bf16.msra.mxu0 %v7921
    %8105 = vmatprep.subr.bf16.mxu0 %v7918
    %8106 = vmatpush1.bf16.msra.mxu0 %v7917
    %8107 = vmatprep.subr.bf16.mxu0 %v7914
    %8108 = vmatpush1.bf16.msra.mxu0 %v7913
    %8109 = vmatprep.subr.bf16.mxu0 %v7910
    %8110 = vmatpush1.bf16.msra.mxu0 %v7909
    %8111 = vmatprep.subr.bf16.mxu0 %v7906
    %8112 = vmatpush1.bf16.msra.mxu0 %v7905
    %8113 = vmatprep.subr.bf16.mxu0 %v7966
    %8114 = vmatpush2.bf16.msra.mxu0 %v7965
    %8115 = vmatprep.subr.bf16.mxu0 %v7962
    %8116 = vmatpush2.bf16.msra.mxu0 %v7961
    %8117 = vmatprep.subr.bf16.mxu0 %v7958
    %8118 = vmatpush2.bf16.msra.mxu0 %v7957
    %8119 = vmatprep.subr.bf16.mxu0 %v7954
    %8120 = vmatpush2.bf16.msra.mxu0 %v7953
    %8121 = vmatprep.subr.bf16.mxu0 %v7950
    %8122 = vmatpush2.bf16.msra.mxu0 %v7949
    %8123 = vmatprep.subr.bf16.mxu0 %v7946
    %8124 = vmatpush2.bf16.msra.mxu0 %v7945
    %8125 = vmatprep.subr.bf16.mxu0 %v7942
    %8126 = vmatpush2.bf16.msra.mxu0 %v7941
    %8127 = vmatprep.subr.bf16.mxu0 %v7938
    %8128 = vmatpush2.bf16.msra.mxu0 %v7937
    %8129 = vmatprep.mubr.bf16.mxu0 %v7498
    %8130 = vmatmul.mubr.bf16.gmra.mxu0 %v7497
    %v8131 = vpop.f32.mrf.mxu0
    %v8132 = vadd.f32 %v7600, %v8131
    %v8133 = vpop.f32.mrf.mxu0
    %v8134 = vadd.f32 %v7604, %v8133
    %v8135 = vpop.f32.mrf.mxu0
    %v8136 = vpop.f32.mrf.mxu0
    %8137 = vdwg.mxu0
    %8138 = vmatprep.subr.bf16.mxu0 %v7998
    %8139 = vmatpush1.bf16.msra.mxu0 %v7997
    %8140 = vmatprep.subr.bf16.mxu0 %v7994
    %8141 = vmatpush1.bf16.msra.mxu0 %v7993
    %8142 = vmatprep.subr.bf16.mxu0 %v7990
    %8143 = vmatpush1.bf16.msra.mxu0 %v7989
    %8144 = vmatprep.subr.bf16.mxu0 %v7986
    %8145 = vmatpush1.bf16.msra.mxu0 %v7985
    %8146 = vmatprep.subr.bf16.mxu0 %v7982
    %8147 = vmatpush1.bf16.msra.mxu0 %v7981
    %8148 = vmatprep.subr.bf16.mxu0 %v7978
    %8149 = vmatpush1.bf16.msra.mxu0 %v7977
    %8150 = vmatprep.subr.bf16.mxu0 %v7974
    %8151 = vmatpush1.bf16.msra.mxu0 %v7973
    %8152 = vmatprep.subr.bf16.mxu0 %v7970
    %8153 = vmatpush1.bf16.msra.mxu0 %v7969
    %8154 = vmatprep.subr.bf16.mxu0 0
    %8155 = vmatpush2.bf16.msra.mxu0 0
    %8156 = vmatprep.subr.bf16.mxu0 0
    %8157 = vmatpush2.bf16.msra.mxu0 0
    %8158 = vmatprep.subr.bf16.mxu0 0
    %8159 = vmatpush2.bf16.msra.mxu0 0
    %8160 = vmatprep.subr.bf16.mxu0 0
    %8161 = vmatpush2.bf16.msra.mxu0 0
    %8162 = vmatprep.subr.bf16.mxu0 0
    %8163 = vmatpush2.bf16.msra.mxu0 0
    %8164 = vmatprep.subr.bf16.mxu0 0
    %8165 = vmatpush2.bf16.msra.mxu0 0
    %8166 = vmatprep.subr.bf16.mxu0 0
    %8167 = vmatpush2.bf16.msra.mxu0 0
    %8168 = vmatprep.subr.bf16.mxu0 0
    %8169 = vmatpush2.bf16.msra.mxu0 0
    %8170 = vmatprep.mubr.bf16.mxu0 0
    %8171 = vmatmul.mubr.bf16.gmra.mxu0 %v7194
    %v8172 = vpop.f32.mrf.mxu0
    %v8173 = vadd.f32 %v8132, %v8172
    %v8174 = vpop.f32.mrf.mxu0
    %v8175 = vadd.f32 %v8134, %v8174
    %v8176 = vpop.f32.mrf.mxu0
    %v8177 = vpop.f32.mrf.mxu0
    %8178 = vdwg.mxu0
    %8179 = vmatprep.subr.bf16.mxu0 %v7936
    %8180 = vmatpush1.bf16.msra.mxu0 %v7935
    %8181 = vmatprep.subr.bf16.mxu0 %v7932
    %8182 = vmatpush1.bf16.msra.mxu0 %v7931
    %8183 = vmatprep.subr.bf16.mxu0 %v7928
    %8184 = vmatpush1.bf16.msra.mxu0 %v7927
    %8185 = vmatprep.subr.bf16.mxu0 %v7924
    %8186 = vmatpush1.bf16.msra.mxu0 %v7923
    %8187 = vmatprep.subr.bf16.mxu0 %v7920
    %8188 = vmatpush1.bf16.msra.mxu0 %v7919
    %8189 = vmatprep.subr.bf16.mxu0 %v7916
    %8190 = vmatpush1.bf16.msra.mxu0 %v7915
    %8191 = vmatprep.subr.bf16.mxu0 %v7912
    %8192 = vmatpush1.bf16.msra.mxu0 %v7911
    %8193 = vmatprep.subr.bf16.mxu0 %v7908
    %8194 = vmatpush1.bf16.msra.mxu0 %v7907
    %8195 = vmatprep.subr.bf16.mxu0 %v7968
    %8196 = vmatpush2.bf16.msra.mxu0 %v7967
    %8197 = vmatprep.subr.bf16.mxu0 %v7964
    %8198 = vmatpush2.bf16.msra.mxu0 %v7963
    %8199 = vmatprep.subr.bf16.mxu0 %v7960
    %8200 = vmatpush2.bf16.msra.mxu0 %v7959
    %8201 = vmatprep.subr.bf16.mxu0 %v7956
    %8202 = vmatpush2.bf16.msra.mxu0 %v7955
    %8203 = vmatprep.subr.bf16.mxu0 %v7952
    %8204 = vmatpush2.bf16.msra.mxu0 %v7951
    %8205 = vmatprep.subr.bf16.mxu0 %v7948
    %8206 = vmatpush2.bf16.msra.mxu0 %v7947
    %8207 = vmatprep.subr.bf16.mxu0 %v7944
    %8208 = vmatpush2.bf16.msra.mxu0 %v7943
    %8209 = vmatprep.subr.bf16.mxu0 %v7940
    %8210 = vmatpush2.bf16.msra.mxu0 %v7939
    %8211 = vmatprep.mubr.bf16.mxu0 %v7498
    %8212 = vmatmul.mubr.bf16.gmra.mxu0 %v7497
    %v8213 = vpop.f32.mrf.mxu0
    %v8214 = vadd.f32 %v7608, %v8213
    %v8215 = vpop.f32.mrf.mxu0
    %v8216 = vadd.f32 %v7612, %v8215
    %v8217 = vpop.f32.mrf.mxu0
    %v8218 = vpop.f32.mrf.mxu0
    %8219 = vdwg.mxu0
    %8220 = vmatprep.subr.bf16.mxu0 %v8000
    %8221 = vmatpush1.bf16.msra.mxu0 %v7999
    %8222 = vmatprep.subr.bf16.mxu0 %v7996
    %8223 = vmatpush1.bf16.msra.mxu0 %v7995
    %8224 = vmatprep.subr.bf16.mxu0 %v7992
    %8225 = vmatpush1.bf16.msra.mxu0 %v7991
    %8226 = vmatprep.subr.bf16.mxu0 %v7988
    %8227 = vmatpush1.bf16.msra.mxu0 %v7987
    %8228 = vmatprep.subr.bf16.mxu0 %v7984
    %8229 = vmatpush1.bf16.msra.mxu0 %v7983
    %8230 = vmatprep.subr.bf16.mxu0 %v7980
    %8231 = vmatpush1.bf16.msra.mxu0 %v7979
    %8232 = vmatprep.subr.bf16.mxu0 %v7976
    %8233 = vmatpush1.bf16.msra.mxu0 %v7975
    %8234 = vmatprep.subr.bf16.mxu0 %v7972
    %8235 = vmatpush1.bf16.msra.mxu0 %v7971
    %8236 = vmatprep.subr.bf16.mxu0 0
    %8237 = vmatpush2.bf16.msra.mxu0 0
    %8238 = vmatprep.subr.bf16.mxu0 0
    %8239 = vmatpush2.bf16.msra.mxu0 0
    %8240 = vmatprep.subr.bf16.mxu0 0
    %8241 = vmatpush2.bf16.msra.mxu0 0
    %8242 = vmatprep.subr.bf16.mxu0 0
    %8243 = vmatpush2.bf16.msra.mxu0 0
    %8244 = vmatprep.subr.bf16.mxu0 0
    %8245 = vmatpush2.bf16.msra.mxu0 0
    %8246 = vmatprep.subr.bf16.mxu0 0
    %8247 = vmatpush2.bf16.msra.mxu0 0
    %8248 = vmatprep.subr.bf16.mxu0 0
    %8249 = vmatpush2.bf16.msra.mxu0 0
    %8250 = vmatprep.subr.bf16.mxu0 0
    %8251 = vmatpush2.bf16.msra.mxu0 0
    %8252 = vmatprep.mubr.bf16.mxu0 0
    %8253 = vmatmul.mubr.bf16.gmra.mxu0 %v7194
    %v8254 = vpop.f32.mrf.mxu0
    %v8255 = vadd.f32 %v8214, %v8254
    %v8256 = vpop.f32.mrf.mxu0
    %v8257 = vadd.f32 %v8216, %v8256
    %v8258 = vpop.f32.mrf.mxu0
    %v8259 = vpop.f32.mrf.mxu0
    %8260 = vdwg.mxu0
    %v8261 = vxor.u32 %v8173, 2147483648
    %v8262 = vmul.f32 %v8261, 1.442695
    %v8263 = vpow.pop %v8262
    %v8264 = vadd.f32 %v8263, 1.0
    %v8265 = vrcp.pop %v8264
    %v8266 = vmul.f32 1.0, %v8265
    %v8267 = vxor.u32 %v8175, 2147483648
    %v8268 = vmul.f32 %v8267, 1.442695
    %v8269 = vpow.pop %v8268
    %v8270 = vadd.f32 %v8269, 1.0
    %v8271 = vrcp.pop %v8270
    %v8272 = vmul.f32 1.0, %v8271
    %v8273 = vtanh.pop %v8255
    %v8274 = vxor.u32 %v8257, 2147483648
    %v8275 = vmul.f32 %v8274, 1.442695
    %v8276 = vpow.pop %v8275
    %v8277 = vadd.f32 %v8276, 1.0
    %v8278 = vrcp.pop %v8277
    %v8279 = vmul.f32 1.0, %v8278
    %v8280 = vmul.f32 %v8272, %v7191
    %v8281 = vmul.f32 %v8266, %v8273
    %v8282 = vadd.f32 %v8280, %v8281
    %v8283 = vtanh.pop %v8282
    %v8284 = vmul.f32 %v8279, %v8283
    %v8285 = vpack.c.bf16 %v8284, %v8284
    %v8286 = vld [vmem:[%s8] sm:$0xf]
    %v8287 = vld [vmem:[%s8 + $0x4] sm:$0xf]
    %v8288 = vld [vmem:[%s8 + $0x8] sm:$0xf]
    %v8289 = vld [vmem:[%s8 + $0xc] sm:$0xf]
    %v8290 = vld [vmem:[%s8 + $0x10] sm:$0xf]
    %v8291 = vld [vmem:[%s8 + $0x14] sm:$0xf]
    %v8292 = vld [vmem:[%s8 + $0x18] sm:$0xf]
    %v8293 = vld [vmem:[%s8 + $0x1c] sm:$0xf]
    %v8294 = vld [vmem:[%s8 + $0x20] sm:$0xf]
    %v8295 = vld [vmem:[%s8 + $0x24] sm:$0xf]
    %v8296 = vld [vmem:[%s8 + $0x28] sm:$0xf]
    %v8297 = vld [vmem:[%s8 + $0x2c] sm:$0xf]
    %v8298 = vld [vmem:[%s8 + $0x30] sm:$0xf]
    %v8299 = vld [vmem:[%s8 + $0x34] sm:$0xf]
    %v8300 = vld [vmem:[%s8 + $0x38] sm:$0xf]
    %v8301 = vld [vmem:[%s8 + $0x3c] sm:$0xf]
    %v8302 = vld [vmem:[%s8 + $0x40] sm:$0xf]
    %v8303 = vld [vmem:[%s8 + $0x44] sm:$0xf]
    %v8304 = vld [vmem:[%s8 + $0x48] sm:$0xf]
    %v8305 = vld [vmem:[%s8 + $0x4c] sm:$0xf]
    %v8306 = vld [vmem:[%s8 + $0x50] sm:$0xf]
    %v8307 = vld [vmem:[%s8 + $0x54] sm:$0xf]
    %v8308 = vld [vmem:[%s8 + $0x58] sm:$0xf]
    %v8309 = vld [vmem:[%s8 + $0x5c] sm:$0xf]
    %v8310 = vld [vmem:[%s8 + $0x60] sm:$0xf]
    %v8311 = vld [vmem:[%s8 + $0x64] sm:$0xf]
    %v8312 = vld [vmem:[%s8 + $0x68] sm:$0xf]
    %v8313 = vld [vmem:[%s8 + $0x6c] sm:$0xf]
    %v8314 = vld [vmem:[%s8 + $0x70] sm:$0xf]
    %v8315 = vld [vmem:[%s8 + $0x74] sm:$0xf]
    %v8316 = vld [vmem:[%s8 + $0x78] sm:$0xf]
    %v8317 = vld [vmem:[%s8 + $0x7c] sm:$0xf]
    %v8318 = vld [vmem:[%s9] sm:$0x1]
    %v8320 = vlaneseq
    %v8321 = vshrl.u32 %v8320, 7
    %v8322 = vsub.s32 0, %v8321
    %v8323 = vrot.slane %v8318, %v8322
    %v8357 = vunpack.c.l.b16 %v8286
    %v8358 = vunpack.c.l.b16 %v8287
    %v8359 = vunpack.c.l.b16 %v8288
    %v8360 = vunpack.c.l.b16 %v8289
    %v8361 = vunpack.c.l.b16 %v8290
    %v8362 = vunpack.c.l.b16 %v8291
    %v8363 = vunpack.c.l.b16 %v8292
    %v8364 = vunpack.c.l.b16 %v8293
    %v8365 = vunpack.c.l.b16 %v8294
    %v8366 = vunpack.c.l.b16 %v8295
    %v8367 = vunpack.c.l.b16 %v8296
    %v8368 = vunpack.c.l.b16 %v8297
    %v8369 = vunpack.c.l.b16 %v8298
    %v8370 = vunpack.c.l.b16 %v8299
    %v8371 = vunpack.c.l.b16 %v8300
    %v8372 = vunpack.c.l.b16 %v8301
    %v8373 = vunpack.c.l.b16 %v8302
    %v8374 = vunpack.c.l.b16 %v8303
    %v8375 = vunpack.c.l.b16 %v8304
    %v8376 = vunpack.c.l.b16 %v8305
    %v8377 = vunpack.c.l.b16 %v8306
    %v8378 = vunpack.c.l.b16 %v8307
    %v8379 = vunpack.c.l.b16 %v8308
    %v8380 = vunpack.c.l.b16 %v8309
    %v8381 = vunpack.c.l.b16 %v8310
    %v8382 = vunpack.c.l.b16 %v8311
    %v8383 = vunpack.c.l.b16 %v8312
    %v8384 = vunpack.c.l.b16 %v8313
    %v8385 = vunpack.c.l.b16 %v8314
    %v8386 = vunpack.c.l.b16 %v8315
    %v8387 = vunpack.c.l.b16 %v8316
    %v8388 = vunpack.c.l.b16 %v8317
    %v8389 = vpack.c.b16 %v8358, %v8357
    %v8390 = vpack.c.b16 %v8360, %v8359
    %v8391 = vpack.c.b16 %v8362, %v8361
    %v8392 = vpack.c.b16 %v8364, %v8363
    %v8393 = vpack.c.b16 %v8366, %v8365
    %v8394 = vpack.c.b16 %v8368, %v8367
    %v8395 = vpack.c.b16 %v8370, %v8369
    %v8396 = vpack.c.b16 %v8372, %v8371
    %v8397 = vpack.c.b16 %v8374, %v8373
    %v8398 = vpack.c.b16 %v8376, %v8375
    %v8399 = vpack.c.b16 %v8378, %v8377
    %v8400 = vpack.c.b16 %v8380, %v8379
    %v8401 = vpack.c.b16 %v8382, %v8381
    %v8402 = vpack.c.b16 %v8384, %v8383
    %v8403 = vpack.c.b16 %v8386, %v8385
    %v8404 = vpack.c.b16 %v8388, %v8387
    %8421 = vmatprep.subr.bf16.mxu0 0
    %8422 = vmatpush1.bf16.msra.mxu0 %v8396
    %8423 = vmatprep.subr.bf16.mxu0 0
    %8424 = vmatpush1.bf16.msra.mxu0 %v8395
    %8425 = vmatprep.subr.bf16.mxu0 0
    %8426 = vmatpush1.bf16.msra.mxu0 %v8394
    %8427 = vmatprep.subr.bf16.mxu0 0
    %8428 = vmatpush1.bf16.msra.mxu0 %v8393
    %8429 = vmatprep.subr.bf16.mxu0 0
    %8430 = vmatpush1.bf16.msra.mxu0 %v8392
    %8431 = vmatprep.subr.bf16.mxu0 0
    %8432 = vmatpush1.bf16.msra.mxu0 %v8391
    %8433 = vmatprep.subr.bf16.mxu0 0
    %8434 = vmatpush1.bf16.msra.mxu0 %v8390
    %8435 = vmatprep.subr.bf16.mxu0 0
    %8436 = vmatpush1.bf16.msra.mxu0 %v8389
    %8437 = vmatprep.subr.bf16.mxu0 0
    %8438 = vmatpush2.bf16.msra.mxu0 %v8404
    %8439 = vmatprep.subr.bf16.mxu0 0
    %8440 = vmatpush2.bf16.msra.mxu0 %v8403
    %8441 = vmatprep.subr.bf16.mxu0 0
    %8442 = vmatpush2.bf16.msra.mxu0 %v8402
    %8443 = vmatprep.subr.bf16.mxu0 0
    %8444 = vmatpush2.bf16.msra.mxu0 %v8401
    %8445 = vmatprep.subr.bf16.mxu0 0
    %8446 = vmatpush2.bf16.msra.mxu0 %v8400
    %8447 = vmatprep.subr.bf16.mxu0 0
    %8448 = vmatpush2.bf16.msra.mxu0 %v8399
    %8449 = vmatprep.subr.bf16.mxu0 0
    %8450 = vmatpush2.bf16.msra.mxu0 %v8398
    %8451 = vmatprep.subr.bf16.mxu0 0
    %8452 = vmatpush2.bf16.msra.mxu0 %v8397
    %8453 = vmatprep.mubr.bf16.mxu0 %v7498
    %8454 = vmatmul.mubr.bf16.gmra.mxu0 %v8285
    %v8455 = vpop.f32.mrf.mxu0
    %v8456 = vadd.f32 %v8323, %v8455
    %v8457 = vpop.f32.mrf.mxu0
    %v8458 = vpop.f32.mrf.mxu0
    %v8459 = vpop.f32.mrf.mxu0
    %8460 = vdwg.mxu0
    %s8461 = scalar_lea.vmem [#allocation12], 40
    %8462 = vst [vmem:[%s8461] sm:$0xff] %v8456
    %8463 = vmax.xlane.f32.xlu0 %v8456
    %v8464 = vpop.xlane.xlu0 %8463
    %vm8465 = vcmp.ge.f32.partialorder %v8456, %v8464
    %v8466 = vsel %vm8465, %v100, 128
    %v8467 = vand.u32 %v8466, 65535
    %v8468 = vshra.s32 %v8466, 16
    %v8469 = vcvt.s32.f32 %v8467
    %v8470 = vcvt.s32.f32 %v8468
    %8471 = vmin.xlane.f32.xlu0 %v8470
    %v8472 = vpop.xlane.xlu0 %8471
    %vm8473 = vcmp.eq.f32.partialorder %v8470, %v8472
    %v8474 = vsel %vm8473, %v8469, inf
    %8475 = vmin.xlane.f32.xlu0 %v8474
    %v8476 = vpop.xlane.xlu0 %8475
    %v8477 = vcvt.f32.s32 %v8476
    %v8478 = vcvt.f32.s32 %v8472
    %v8479 = vshll.u32 %v8478, 16
    %v8480 = vadd.s32 %v8479, %v8477
    %s8481 = sld [smem:[#allocation4 + $0x5]]
    %p8482 = scmp.ne.s32.totalorder %s8481, 0
    %s8483 = scalar_lea.vmem %s1, 40
    %v8484 = vld [vmem:[%s8483] sm:$0xff]
    %s8485 = scalar_select %p8482, 1, 0
    %v8486 = vstv %s8485
    %vm8487 = vcmp.eq.s32.totalorder %v8486, 1
    %v8488 = vsel %vm8487, %v8484, %v8480
    %v8489 = vld [vmem:[#allocation3] sm:$0xff]
    %v8490 = vld [vmem:[#allocation3 + $0x8] sm:$0xff]
    %v8491 = vld [vmem:[#allocation3 + $0x10] sm:$0xff]
    %v8492 = vld [vmem:[#allocation3 + $0x18] sm:$0xff]
    %v8493 = vld [vmem:[#allocation3 + $0x20] sm:$0xff]
    %v8494 = vld [vmem:[#allocation3 + $0x28] sm:$0xff]
    %v8495 = vld [vmem:[#allocation3 + $0x30] sm:$0xff]
    %v8496 = vld [vmem:[#allocation3 + $0x38] sm:$0xff]
    %v8497 = vmul.f32 %v8489, %v8284
    %v8498 = vmul.f32 %v8490, %v8284
    %v8499 = vmul.f32 %v8491, %v8284
    %v8500 = vmul.f32 %v8492, %v8284
    %v8501 = vmul.f32 %v8493, %v8284
    %v8502 = vmul.f32 %v8494, %v8284
    %v8503 = vmul.f32 %v8495, %v8284
    %v8504 = vmul.f32 %v8496, %v8284
    %8505 = vadd.xlane.f32.xlu0 %v8497
    %v8506 = vpop.xlane.xlu0 %8505
    %8507 = vadd.xlane.f32.xlu0 %v8498
    %v8508 = vpop.xlane.xlu0 %8507
    %8509 = vadd.xlane.f32.xlu0 %v8499
    %v8510 = vpop.xlane.xlu0 %8509
    %8511 = vadd.xlane.f32.xlu0 %v8500
    %v8512 = vpop.xlane.xlu0 %8511
    %8513 = vadd.xlane.f32.xlu0 %v8501
    %v8514 = vpop.xlane.xlu0 %8513
    %8515 = vadd.xlane.f32.xlu0 %v8502
    %v8516 = vpop.xlane.xlu0 %8515
    %8517 = vadd.xlane.f32.xlu0 %v8503
    %v8518 = vpop.xlane.xlu0 %8517
    %8519 = vadd.xlane.f32.xlu0 %v8504
    %v8520 = vpop.xlane.xlu0 %8519
    %v8521 = vmax.f32 %v8506, %v8514
    %v8522 = vmax.f32 %v8508, %v8516
    %v8523 = vmax.f32 %v8510, %v8518
    %v8524 = vmax.f32 %v8512, %v8520
    %v8525 = vmax.f32 %v8521, %v8522
    %v8526 = vmax.f32 %v8523, %v8524
    %v8527 = vmax.f32 %v8525, %v8526
    %v8528 = vsub.f32 %v8506, %v8527
    %v8529 = vsub.f32 %v8508, %v8527
    %v8530 = vsub.f32 %v8510, %v8527
    %v8531 = vsub.f32 %v8512, %v8527
    %v8532 = vsub.f32 %v8514, %v8527
    %v8533 = vsub.f32 %v8516, %v8527
    %v8534 = vsub.f32 %v8518, %v8527
    %v8535 = vsub.f32 %v8520, %v8527
    %v8536 = vmul.f32 %v8528, 1.442695
    %v8537 = vpow.pop %v8536
    %v8538 = vmul.f32 %v8529, 1.442695
    %v8539 = vpow.pop %v8538
    %v8540 = vmul.f32 %v8530, 1.442695
    %v8541 = vpow.pop %v8540
    %v8542 = vmul.f32 %v8531, 1.442695
    %v8543 = vpow.pop %v8542
    %v8544 = vmul.f32 %v8532, 1.442695
    %v8545 = vpow.pop %v8544
    %v8546 = vmul.f32 %v8533, 1.442695
    %v8547 = vpow.pop %v8546
    %v8548 = vmul.f32 %v8534, 1.442695
    %v8549 = vpow.pop %v8548
    %v8550 = vmul.f32 %v8535, 1.442695
    %v8551 = vpow.pop %v8550
    %v8552 = vadd.f32 %v8537, %v8539
    %v8553 = vadd.f32 %v8552, %v8541
    %v8554 = vadd.f32 %v8553, %v8543
    %v8555 = vadd.f32 %v8554, %v8545
    %v8556 = vadd.f32 %v8555, %v8547
    %v8557 = vadd.f32 %v8556, %v8549
    %v8558 = vadd.f32 %v8557, %v8551
    %v8559 = vrcp.pop %v8558
    %v8560 = vmul.f32 %v8537, %v8559
    %v8561 = vmul.f32 %v8539, %v8559
    %v8562 = vmul.f32 %v8541, %v8559
    %v8563 = vmul.f32 %v8543, %v8559
    %v8564 = vmul.f32 %v8545, %v8559
    %v8565 = vmul.f32 %v8547, %v8559
    %v8566 = vmul.f32 %v8549, %v8559
    %v8567 = vmul.f32 %v8551, %v8559
    %v8568 = vmul.f32 %v8560, %v8489
    %v8569 = vmul.f32 %v8561, %v8490
    %v8570 = vmul.f32 %v8562, %v8491
    %v8571 = vmul.f32 %v8563, %v8492
    %v8572 = vmul.f32 %v8564, %v8493
    %v8573 = vmul.f32 %v8565, %v8494
    %v8574 = vmul.f32 %v8566, %v8495
    %v8575 = vmul.f32 %v8567, %v8496
    %v8576 = vadd.f32 %v8568, %v8569
    %v8577 = vadd.f32 %v8576, %v8570
    %v8578 = vadd.f32 %v8577, %v8571
    %v8579 = vadd.f32 %v8578, %v8572
    %v8580 = vadd.f32 %v8579, %v8573
    %v8581 = vadd.f32 %v8580, %v8574
    %v8582 = vadd.f32 %v8581, %v8575
    %8583 = vset.pattern.permute.xlu0 0
    %8584 = vperm.xlu0 %8583, %v8488
    %v8585 = vpop.permute.xlu0 %8584
    %vm8586 = vcmp.eq.s32.totalorder %v8585, %v100
    %v8587 = vsel %vm8586, 1.0, 0.0
    %v8588 = vpack.c.bf16 %v8587, %v8587
    %v8589 = vpack.c.bf16 %v8582, %v8582
    %v8590 = vld [vmem:[#allocation11] sm:$0xff]
    %v8591 = vld [vmem:[#allocation11 + $0x8] sm:$0xff]
    %v8592 = vld [vmem:[#allocation11 + $0x10] sm:$0xff]
    %v8593 = vld [vmem:[#allocation11 + $0x18] sm:$0xff]
    %v8594 = vld [vmem:[#allocation11 + $0x20] sm:$0xff]
    %v8595 = vld [vmem:[#allocation11 + $0x28] sm:$0xff]
    %v8596 = vld [vmem:[#allocation11 + $0x30] sm:$0xff]
    %v8597 = vld [vmem:[#allocation11 + $0x38] sm:$0xff]
    %v8598 = vld [vmem:[#allocation11 + $0x40] sm:$0xff]
    %v8599 = vld [vmem:[#allocation11 + $0x48] sm:$0xff]
    %v8600 = vld [vmem:[#allocation11 + $0x50] sm:$0xff]
    %v8601 = vld [vmem:[#allocation11 + $0x58] sm:$0xff]
    %v8602 = vld [vmem:[#allocation11 + $0x60] sm:$0xff]
    %v8603 = vld [vmem:[#allocation11 + $0x68] sm:$0xff]
    %v8604 = vld [vmem:[#allocation11 + $0x70] sm:$0xff]
    %v8605 = vld [vmem:[#allocation11 + $0x78] sm:$0xff]
    %v8606 = vld [vmem:[#allocation11 + $0x80] sm:$0xff]
    %v8607 = vld [vmem:[#allocation11 + $0x88] sm:$0xff]
    %v8608 = vld [vmem:[#allocation11 + $0x90] sm:$0xff]
    %v8609 = vld [vmem:[#allocation11 + $0x98] sm:$0xff]
    %v8610 = vld [vmem:[#allocation11 + $0xa0] sm:$0xff]
    %v8611 = vld [vmem:[#allocation11 + $0xa8] sm:$0xff]
    %v8612 = vld [vmem:[#allocation11 + $0xb0] sm:$0xff]
    %v8613 = vld [vmem:[#allocation11 + $0xb8] sm:$0xff]
    %v8614 = vld [vmem:[#allocation11 + $0xc0] sm:$0xff]
    %v8615 = vld [vmem:[#allocation11 + $0xc8] sm:$0xff]
    %v8616 = vld [vmem:[#allocation11 + $0xd0] sm:$0xff]
    %v8617 = vld [vmem:[#allocation11 + $0xd8] sm:$0xff]
    %v8618 = vld [vmem:[#allocation11 + $0xe0] sm:$0xff]
    %v8619 = vld [vmem:[#allocation11 + $0xe8] sm:$0xff]
    %v8620 = vld [vmem:[#allocation11 + $0xf0] sm:$0xff]
    %v8621 = vld [vmem:[#allocation11 + $0xf8] sm:$0xff]
    %v8622 = vld [vmem:[#allocation11 + $0x100] sm:$0xff]
    %v8623 = vld [vmem:[#allocation11 + $0x108] sm:$0xff]
    %v8624 = vld [vmem:[#allocation11 + $0x110] sm:$0xff]
    %v8625 = vld [vmem:[#allocation11 + $0x118] sm:$0xff]
    %v8626 = vld [vmem:[#allocation11 + $0x120] sm:$0xff]
    %v8627 = vld [vmem:[#allocation11 + $0x128] sm:$0xff]
    %v8628 = vld [vmem:[#allocation11 + $0x130] sm:$0xff]
    %v8629 = vld [vmem:[#allocation11 + $0x138] sm:$0xff]
    %v8630 = vld [vmem:[#allocation11 + $0x140] sm:$0xff]
    %v8631 = vld [vmem:[#allocation11 + $0x148] sm:$0xff]
    %v8632 = vld [vmem:[#allocation11 + $0x150] sm:$0xff]
    %v8633 = vld [vmem:[#allocation11 + $0x158] sm:$0xff]
    %v8634 = vld [vmem:[#allocation11 + $0x160] sm:$0xff]
    %v8635 = vld [vmem:[#allocation11 + $0x168] sm:$0xff]
    %v8636 = vld [vmem:[#allocation11 + $0x170] sm:$0xff]
    %v8637 = vld [vmem:[#allocation11 + $0x178] sm:$0xff]
    %v8638 = vld [vmem:[#allocation11 + $0x180] sm:$0xff]
    %v8639 = vld [vmem:[#allocation11 + $0x188] sm:$0xff]
    %v8640 = vld [vmem:[#allocation11 + $0x190] sm:$0xff]
    %v8641 = vld [vmem:[#allocation11 + $0x198] sm:$0xff]
    %v8642 = vld [vmem:[#allocation11 + $0x1a0] sm:$0xff]
    %v8643 = vld [vmem:[#allocation11 + $0x1a8] sm:$0xff]
    %v8644 = vld [vmem:[#allocation11 + $0x1b0] sm:$0xff]
    %v8645 = vld [vmem:[#allocation11 + $0x1b8] sm:$0xff]
    %v8646 = vld [vmem:[#allocation11 + $0x1c0] sm:$0xff]
    %v8647 = vld [vmem:[#allocation11 + $0x1c8] sm:$0xff]
    %v8648 = vld [vmem:[#allocation11 + $0x1d0] sm:$0xff]
    %v8649 = vld [vmem:[#allocation11 + $0x1d8] sm:$0xff]
    %v8650 = vld [vmem:[#allocation11 + $0x1e0] sm:$0xff]
    %v8651 = vld [vmem:[#allocation11 + $0x1e8] sm:$0xff]
    %v8652 = vld [vmem:[#allocation11 + $0x1f0] sm:$0xff]
    %v8653 = vld [vmem:[#allocation11 + $0x1f8] sm:$0xff]
    %v8654 = vld [vmem:[#allocation11 + $0x200] sm:$0xff]
    %v8655 = vld [vmem:[#allocation11 + $0x208] sm:$0xff]
    %v8656 = vld [vmem:[#allocation11 + $0x210] sm:$0xff]
    %v8657 = vld [vmem:[#allocation11 + $0x218] sm:$0xff]
    %v8658 = vld [vmem:[#allocation11 + $0x220] sm:$0xff]
    %v8659 = vld [vmem:[#allocation11 + $0x228] sm:$0xff]
    %v8660 = vld [vmem:[#allocation11 + $0x230] sm:$0xff]
    %v8661 = vld [vmem:[#allocation11 + $0x238] sm:$0xff]
    %v8662 = vld [vmem:[#allocation11 + $0x240] sm:$0xff]
    %v8663 = vld [vmem:[#allocation11 + $0x248] sm:$0xff]
    %v8664 = vld [vmem:[#allocation11 + $0x250] sm:$0xff]
    %v8665 = vld [vmem:[#allocation11 + $0x258] sm:$0xff]
    %v8666 = vld [vmem:[#allocation11 + $0x260] sm:$0xff]
    %v8667 = vld [vmem:[#allocation11 + $0x268] sm:$0xff]
    %v8668 = vld [vmem:[#allocation11 + $0x270] sm:$0xff]
    %v8669 = vld [vmem:[#allocation11 + $0x278] sm:$0xff]
    %v8670 = vld [vmem:[#allocation11 + $0x280] sm:$0xff]
    %v8671 = vld [vmem:[#allocation11 + $0x288] sm:$0xff]
    %v8672 = vld [vmem:[#allocation11 + $0x290] sm:$0xff]
    %v8673 = vld [vmem:[#allocation11 + $0x298] sm:$0xff]
    %v8674 = vld [vmem:[#allocation11 + $0x2a0] sm:$0xff]
    %v8675 = vld [vmem:[#allocation11 + $0x2a8] sm:$0xff]
    %v8676 = vld [vmem:[#allocation11 + $0x2b0] sm:$0xff]
    %v8677 = vld [vmem:[#allocation11 + $0x2b8] sm:$0xff]
    %v8678 = vld [vmem:[#allocation11 + $0x2c0] sm:$0xff]
    %v8679 = vld [vmem:[#allocation11 + $0x2c8] sm:$0xff]
    %v8680 = vld [vmem:[#allocation11 + $0x2d0] sm:$0xff]
    %v8681 = vld [vmem:[#allocation11 + $0x2d8] sm:$0xff]
    %v8682 = vld [vmem:[#allocation11 + $0x2e0] sm:$0xff]
    %v8683 = vld [vmem:[#allocation11 + $0x2e8] sm:$0xff]
    %v8684 = vld [vmem:[#allocation11 + $0x2f0] sm:$0xff]
    %v8685 = vld [vmem:[#allocation11 + $0x2f8] sm:$0xff]
    %v8686 = vld [vmem:[%s7] sm:$0xf]
    %v8688 = vlaneseq
    %v8689 = vshrl.u32 %v8688, 7
    %v8690 = vsub.s32 0, %v8689
    %v8691 = vrot.slane %v8686, %v8690
    %v8692 = vlaneseq
    %v8693 = vshrl.u32 %v8692, 7
    %v8694 = vsub.s32 1, %v8693
    %v8695 = vrot.slane %v8686, %v8694
    %v8696 = vlaneseq
    %v8697 = vshrl.u32 %v8696, 7
    %v8698 = vsub.s32 2, %v8697
    %v8699 = vrot.slane %v8686, %v8698
    %v8700 = vlaneseq
    %v8701 = vshrl.u32 %v8700, 7
    %v8702 = vsub.s32 3, %v8701
    %v8703 = vrot.slane %v8686, %v8702
    %v8804 = vunpack.c.l.b16 %v8590
    %v8805 = vunpack.c.h.b16 %v8590
    %v8806 = vunpack.c.l.b16 %v8591
    %v8807 = vunpack.c.h.b16 %v8591
    %v8808 = vunpack.c.l.b16 %v8592
    %v8809 = vunpack.c.h.b16 %v8592
    %v8810 = vunpack.c.l.b16 %v8593
    %v8811 = vunpack.c.h.b16 %v8593
    %v8812 = vunpack.c.l.b16 %v8594
    %v8813 = vunpack.c.h.b16 %v8594
    %v8814 = vunpack.c.l.b16 %v8595
    %v8815 = vunpack.c.h.b16 %v8595
    %v8816 = vunpack.c.l.b16 %v8596
    %v8817 = vunpack.c.h.b16 %v8596
    %v8818 = vunpack.c.l.b16 %v8597
    %v8819 = vunpack.c.h.b16 %v8597
    %v8820 = vunpack.c.l.b16 %v8598
    %v8821 = vunpack.c.h.b16 %v8598
    %v8822 = vunpack.c.l.b16 %v8599
    %v8823 = vunpack.c.h.b16 %v8599
    %v8824 = vunpack.c.l.b16 %v8600
    %v8825 = vunpack.c.h.b16 %v8600
    %v8826 = vunpack.c.l.b16 %v8601
    %v8827 = vunpack.c.h.b16 %v8601
    %v8828 = vunpack.c.l.b16 %v8602
    %v8829 = vunpack.c.h.b16 %v8602
    %v8830 = vunpack.c.l.b16 %v8603
    %v8831 = vunpack.c.h.b16 %v8603
    %v8832 = vunpack.c.l.b16 %v8604
    %v8833 = vunpack.c.h.b16 %v8604
    %v8834 = vunpack.c.l.b16 %v8605
    %v8835 = vunpack.c.h.b16 %v8605
    %v8836 = vunpack.c.l.b16 %v8606
    %v8837 = vunpack.c.h.b16 %v8606
    %v8838 = vunpack.c.l.b16 %v8607
    %v8839 = vunpack.c.h.b16 %v8607
    %v8840 = vunpack.c.l.b16 %v8608
    %v8841 = vunpack.c.h.b16 %v8608
    %v8842 = vunpack.c.l.b16 %v8609
    %v8843 = vunpack.c.h.b16 %v8609
    %v8844 = vunpack.c.l.b16 %v8610
    %v8845 = vunpack.c.h.b16 %v8610
    %v8846 = vunpack.c.l.b16 %v8611
    %v8847 = vunpack.c.h.b16 %v8611
    %v8848 = vunpack.c.l.b16 %v8612
    %v8849 = vunpack.c.h.b16 %v8612
    %v8850 = vunpack.c.l.b16 %v8613
    %v8851 = vunpack.c.h.b16 %v8613
    %v8852 = vunpack.c.l.b16 %v8614
    %v8853 = vunpack.c.h.b16 %v8614
    %v8854 = vunpack.c.l.b16 %v8615
    %v8855 = vunpack.c.h.b16 %v8615
    %v8856 = vunpack.c.l.b16 %v8616
    %v8857 = vunpack.c.h.b16 %v8616
    %v8858 = vunpack.c.l.b16 %v8617
    %v8859 = vunpack.c.h.b16 %v8617
    %v8860 = vunpack.c.l.b16 %v8618
    %v8861 = vunpack.c.h.b16 %v8618
    %v8862 = vunpack.c.l.b16 %v8619
    %v8863 = vunpack.c.h.b16 %v8619
    %v8864 = vunpack.c.l.b16 %v8620
    %v8865 = vunpack.c.h.b16 %v8620
    %v8866 = vunpack.c.l.b16 %v8621
    %v8867 = vunpack.c.h.b16 %v8621
    %v8868 = vunpack.c.l.b16 %v8622
    %v8869 = vunpack.c.h.b16 %v8622
    %v8870 = vunpack.c.l.b16 %v8623
    %v8871 = vunpack.c.h.b16 %v8623
    %v8872 = vunpack.c.l.b16 %v8624
    %v8873 = vunpack.c.h.b16 %v8624
    %v8874 = vunpack.c.l.b16 %v8625
    %v8875 = vunpack.c.h.b16 %v8625
    %v8876 = vunpack.c.l.b16 %v8626
    %v8877 = vunpack.c.h.b16 %v8626
    %v8878 = vunpack.c.l.b16 %v8627
    %v8879 = vunpack.c.h.b16 %v8627
    %v8880 = vunpack.c.l.b16 %v8628
    %v8881 = vunpack.c.h.b16 %v8628
    %v8882 = vunpack.c.l.b16 %v8629
    %v8883 = vunpack.c.h.b16 %v8629
    %v8884 = vunpack.c.l.b16 %v8630
    %v8885 = vunpack.c.h.b16 %v8630
    %v8886 = vunpack.c.l.b16 %v8631
    %v8887 = vunpack.c.h.b16 %v8631
    %v8888 = vunpack.c.l.b16 %v8632
    %v8889 = vunpack.c.h.b16 %v8632
    %v8890 = vunpack.c.l.b16 %v8633
    %v8891 = vunpack.c.h.b16 %v8633
    %v8892 = vunpack.c.l.b16 %v8634
    %v8893 = vunpack.c.h.b16 %v8634
    %v8894 = vunpack.c.l.b16 %v8635
    %v8895 = vunpack.c.h.b16 %v8635
    %v8896 = vunpack.c.l.b16 %v8636
    %v8897 = vunpack.c.h.b16 %v8636
    %v8898 = vunpack.c.l.b16 %v8637
    %v8899 = vunpack.c.h.b16 %v8637
    %v8900 = vunpack.c.l.b16 %v8638
    %v8901 = vunpack.c.h.b16 %v8638
    %v8902 = vunpack.c.l.b16 %v8639
    %v8903 = vunpack.c.h.b16 %v8639
    %v8904 = vunpack.c.l.b16 %v8640
    %v8905 = vunpack.c.h.b16 %v8640
    %v8906 = vunpack.c.l.b16 %v8641
    %v8907 = vunpack.c.h.b16 %v8641
    %v8908 = vunpack.c.l.b16 %v8642
    %v8909 = vunpack.c.h.b16 %v8642
    %v8910 = vunpack.c.l.b16 %v8643
    %v8911 = vunpack.c.h.b16 %v8643
    %v8912 = vunpack.c.l.b16 %v8644
    %v8913 = vunpack.c.h.b16 %v8644
    %v8914 = vunpack.c.l.b16 %v8645
    %v8915 = vunpack.c.h.b16 %v8645
    %v8916 = vunpack.c.l.b16 %v8646
    %v8917 = vunpack.c.h.b16 %v8646
    %v8918 = vunpack.c.l.b16 %v8647
    %v8919 = vunpack.c.h.b16 %v8647
    %v8920 = vunpack.c.l.b16 %v8648
    %v8921 = vunpack.c.h.b16 %v8648
    %v8922 = vunpack.c.l.b16 %v8649
    %v8923 = vunpack.c.h.b16 %v8649
    %v8924 = vunpack.c.l.b16 %v8650
    %v8925 = vunpack.c.h.b16 %v8650
    %v8926 = vunpack.c.l.b16 %v8651
    %v8927 = vunpack.c.h.b16 %v8651
    %v8928 = vunpack.c.l.b16 %v8652
    %v8929 = vunpack.c.h.b16 %v8652
    %v8930 = vunpack.c.l.b16 %v8653
    %v8931 = vunpack.c.h.b16 %v8653
    %v8932 = vunpack.c.l.b16 %v8654
    %v8933 = vunpack.c.h.b16 %v8654
    %v8934 = vunpack.c.l.b16 %v8655
    %v8935 = vunpack.c.h.b16 %v8655
    %v8936 = vunpack.c.l.b16 %v8656
    %v8937 = vunpack.c.h.b16 %v8656
    %v8938 = vunpack.c.l.b16 %v8657
    %v8939 = vunpack.c.h.b16 %v8657
    %v8940 = vunpack.c.l.b16 %v8658
    %v8941 = vunpack.c.h.b16 %v8658
    %v8942 = vunpack.c.l.b16 %v8659
    %v8943 = vunpack.c.h.b16 %v8659
    %v8944 = vunpack.c.l.b16 %v8660
    %v8945 = vunpack.c.h.b16 %v8660
    %v8946 = vunpack.c.l.b16 %v8661
    %v8947 = vunpack.c.h.b16 %v8661
    %v8948 = vunpack.c.l.b16 %v8662
    %v8949 = vunpack.c.h.b16 %v8662
    %v8950 = vunpack.c.l.b16 %v8663
    %v8951 = vunpack.c.h.b16 %v8663
    %v8952 = vunpack.c.l.b16 %v8664
    %v8953 = vunpack.c.h.b16 %v8664
    %v8954 = vunpack.c.l.b16 %v8665
    %v8955 = vunpack.c.h.b16 %v8665
    %v8956 = vunpack.c.l.b16 %v8666
    %v8957 = vunpack.c.h.b16 %v8666
    %v8958 = vunpack.c.l.b16 %v8667
    %v8959 = vunpack.c.h.b16 %v8667
    %v8960 = vunpack.c.l.b16 %v8668
    %v8961 = vunpack.c.h.b16 %v8668
    %v8962 = vunpack.c.l.b16 %v8669
    %v8963 = vunpack.c.h.b16 %v8669
    %v8964 = vunpack.c.l.b16 %v8670
    %v8965 = vunpack.c.h.b16 %v8670
    %v8966 = vunpack.c.l.b16 %v8671
    %v8967 = vunpack.c.h.b16 %v8671
    %v8968 = vunpack.c.l.b16 %v8672
    %v8969 = vunpack.c.h.b16 %v8672
    %v8970 = vunpack.c.l.b16 %v8673
    %v8971 = vunpack.c.h.b16 %v8673
    %v8972 = vunpack.c.l.b16 %v8674
    %v8973 = vunpack.c.h.b16 %v8674
    %v8974 = vunpack.c.l.b16 %v8675
    %v8975 = vunpack.c.h.b16 %v8675
    %v8976 = vunpack.c.l.b16 %v8676
    %v8977 = vunpack.c.h.b16 %v8676
    %v8978 = vunpack.c.l.b16 %v8677
    %v8979 = vunpack.c.h.b16 %v8677
    %v8980 = vunpack.c.l.b16 %v8678
    %v8981 = vunpack.c.h.b16 %v8678
    %v8982 = vunpack.c.l.b16 %v8679
    %v8983 = vunpack.c.h.b16 %v8679
    %v8984 = vunpack.c.l.b16 %v8680
    %v8985 = vunpack.c.h.b16 %v8680
    %v8986 = vunpack.c.l.b16 %v8681
    %v8987 = vunpack.c.h.b16 %v8681
    %v8988 = vunpack.c.l.b16 %v8682
    %v8989 = vunpack.c.h.b16 %v8682
    %v8990 = vunpack.c.l.b16 %v8683
    %v8991 = vunpack.c.h.b16 %v8683
    %v8992 = vunpack.c.l.b16 %v8684
    %v8993 = vunpack.c.h.b16 %v8684
    %v8994 = vunpack.c.l.b16 %v8685
    %v8995 = vunpack.c.h.b16 %v8685
    %v8996 = vpack.c.b16 %v8808, %v8804
    %v8997 = vpack.c.b16 %v8809, %v8805
    %v8998 = vpack.c.b16 %v8810, %v8806
    %v8999 = vpack.c.b16 %v8811, %v8807
    %v9000 = vpack.c.b16 %v8816, %v8812
    %v9001 = vpack.c.b16 %v8817, %v8813
    %v9002 = vpack.c.b16 %v8818, %v8814
    %v9003 = vpack.c.b16 %v8819, %v8815
    %v9004 = vpack.c.b16 %v8824, %v8820
    %v9005 = vpack.c.b16 %v8825, %v8821
    %v9006 = vpack.c.b16 %v8826, %v8822
    %v9007 = vpack.c.b16 %v8827, %v8823
    %v9008 = vpack.c.b16 %v8832, %v8828
    %v9009 = vpack.c.b16 %v8833, %v8829
    %v9010 = vpack.c.b16 %v8834, %v8830
    %v9011 = vpack.c.b16 %v8835, %v8831
    %v9012 = vpack.c.b16 %v8840, %v8836
    %v9013 = vpack.c.b16 %v8841, %v8837
    %v9014 = vpack.c.b16 %v8842, %v8838
    %v9015 = vpack.c.b16 %v8843, %v8839
    %v9016 = vpack.c.b16 %v8848, %v8844
    %v9017 = vpack.c.b16 %v8849, %v8845
    %v9018 = vpack.c.b16 %v8850, %v8846
    %v9019 = vpack.c.b16 %v8851, %v8847
    %v9020 = vpack.c.b16 %v8856, %v8852
    %v9021 = vpack.c.b16 %v8857, %v8853
    %v9022 = vpack.c.b16 %v8858, %v8854
    %v9023 = vpack.c.b16 %v8859, %v8855
    %v9024 = vpack.c.b16 %v8864, %v8860
    %v9025 = vpack.c.b16 %v8865, %v8861
    %v9026 = vpack.c.b16 %v8866, %v8862
    %v9027 = vpack.c.b16 %v8867, %v8863
    %v9028 = vpack.c.b16 %v8872, %v8868
    %v9029 = vpack.c.b16 %v8873, %v8869
    %v9030 = vpack.c.b16 %v8874, %v8870
    %v9031 = vpack.c.b16 %v8875, %v8871
    %v9032 = vpack.c.b16 %v8880, %v8876
    %v9033 = vpack.c.b16 %v8881, %v8877
    %v9034 = vpack.c.b16 %v8882, %v8878
    %v9035 = vpack.c.b16 %v8883, %v8879
    %v9036 = vpack.c.b16 %v8888, %v8884
    %v9037 = vpack.c.b16 %v8889, %v8885
    %v9038 = vpack.c.b16 %v8890, %v8886
    %v9039 = vpack.c.b16 %v8891, %v8887
    %v9040 = vpack.c.b16 %v8896, %v8892
    %v9041 = vpack.c.b16 %v8897, %v8893
    %v9042 = vpack.c.b16 %v8898, %v8894
    %v9043 = vpack.c.b16 %v8899, %v8895
    %v9044 = vpack.c.b16 %v8904, %v8900
    %v9045 = vpack.c.b16 %v8905, %v8901
    %v9046 = vpack.c.b16 %v8906, %v8902
    %v9047 = vpack.c.b16 %v8907, %v8903
    %v9048 = vpack.c.b16 %v8912, %v8908
    %v9049 = vpack.c.b16 %v8913, %v8909
    %v9050 = vpack.c.b16 %v8914, %v8910
    %v9051 = vpack.c.b16 %v8915, %v8911
    %v9052 = vpack.c.b16 %v8920, %v8916
    %v9053 = vpack.c.b16 %v8921, %v8917
    %v9054 = vpack.c.b16 %v8922, %v8918
    %v9055 = vpack.c.b16 %v8923, %v8919
    %v9056 = vpack.c.b16 %v8928, %v8924
    %v9057 = vpack.c.b16 %v8929, %v8925
    %v9058 = vpack.c.b16 %v8930, %v8926
    %v9059 = vpack.c.b16 %v8931, %v8927
    %v9060 = vpack.c.b16 %v8936, %v8932
    %v9061 = vpack.c.b16 %v8937, %v8933
    %v9062 = vpack.c.b16 %v8938, %v8934
    %v9063 = vpack.c.b16 %v8939, %v8935
    %v9064 = vpack.c.b16 %v8944, %v8940
    %v9065 = vpack.c.b16 %v8945, %v8941
    %v9066 = vpack.c.b16 %v8946, %v8942
    %v9067 = vpack.c.b16 %v8947, %v8943
    %v9068 = vpack.c.b16 %v8952, %v8948
    %v9069 = vpack.c.b16 %v8953, %v8949
    %v9070 = vpack.c.b16 %v8954, %v8950
    %v9071 = vpack.c.b16 %v8955, %v8951
    %v9072 = vpack.c.b16 %v8960, %v8956
    %v9073 = vpack.c.b16 %v8961, %v8957
    %v9074 = vpack.c.b16 %v8962, %v8958
    %v9075 = vpack.c.b16 %v8963, %v8959
    %v9076 = vpack.c.b16 %v8968, %v8964
    %v9077 = vpack.c.b16 %v8969, %v8965
    %v9078 = vpack.c.b16 %v8970, %v8966
    %v9079 = vpack.c.b16 %v8971, %v8967
    %v9080 = vpack.c.b16 %v8976, %v8972
    %v9081 = vpack.c.b16 %v8977, %v8973
    %v9082 = vpack.c.b16 %v8978, %v8974
    %v9083 = vpack.c.b16 %v8979, %v8975
    %v9084 = vpack.c.b16 %v8984, %v8980
    %v9085 = vpack.c.b16 %v8985, %v8981
    %v9086 = vpack.c.b16 %v8986, %v8982
    %v9087 = vpack.c.b16 %v8987, %v8983
    %v9088 = vpack.c.b16 %v8992, %v8988
    %v9089 = vpack.c.b16 %v8993, %v8989
    %v9090 = vpack.c.b16 %v8994, %v8990
    %v9091 = vpack.c.b16 %v8995, %v8991
    %9188 = vmatprep.subr.bf16.mxu0 %v9025
    %9189 = vmatpush1.bf16.msra.mxu0 %v9024
    %9190 = vmatprep.subr.bf16.mxu0 %v9021
    %9191 = vmatpush1.bf16.msra.mxu0 %v9020
    %9192 = vmatprep.subr.bf16.mxu0 %v9017
    %9193 = vmatpush1.bf16.msra.mxu0 %v9016
    %9194 = vmatprep.subr.bf16.mxu0 %v9013
    %9195 = vmatpush1.bf16.msra.mxu0 %v9012
    %9196 = vmatprep.subr.bf16.mxu0 %v9009
    %9197 = vmatpush1.bf16.msra.mxu0 %v9008
    %9198 = vmatprep.subr.bf16.mxu0 %v9005
    %9199 = vmatpush1.bf16.msra.mxu0 %v9004
    %9200 = vmatprep.subr.bf16.mxu0 %v9001
    %9201 = vmatpush1.bf16.msra.mxu0 %v9000
    %9202 = vmatprep.subr.bf16.mxu0 %v8997
    %9203 = vmatpush1.bf16.msra.mxu0 %v8996
    %9204 = vmatprep.subr.bf16.mxu0 %v9057
    %9205 = vmatpush2.bf16.msra.mxu0 %v9056
    %9206 = vmatprep.subr.bf16.mxu0 %v9053
    %9207 = vmatpush2.bf16.msra.mxu0 %v9052
    %9208 = vmatprep.subr.bf16.mxu0 %v9049
    %9209 = vmatpush2.bf16.msra.mxu0 %v9048
    %9210 = vmatprep.subr.bf16.mxu0 %v9045
    %9211 = vmatpush2.bf16.msra.mxu0 %v9044
    %9212 = vmatprep.subr.bf16.mxu0 %v9041
    %9213 = vmatpush2.bf16.msra.mxu0 %v9040
    %9214 = vmatprep.subr.bf16.mxu0 %v9037
    %9215 = vmatpush2.bf16.msra.mxu0 %v9036
    %9216 = vmatprep.subr.bf16.mxu0 %v9033
    %9217 = vmatpush2.bf16.msra.mxu0 %v9032
    %9218 = vmatprep.subr.bf16.mxu0 %v9029
    %9219 = vmatpush2.bf16.msra.mxu0 %v9028
    %9220 = vmatprep.mubr.bf16.mxu0 %v8589
    %9221 = vmatmul.mubr.bf16.gmra.mxu0 %v8588
    %v9222 = vpop.f32.mrf.mxu0
    %v9223 = vadd.f32 %v8691, %v9222
    %v9224 = vpop.f32.mrf.mxu0
    %v9225 = vadd.f32 %v8695, %v9224
    %v9226 = vpop.f32.mrf.mxu0
    %v9227 = vpop.f32.mrf.mxu0
    %9228 = vdwg.mxu0
    %9229 = vmatprep.subr.bf16.mxu0 %v9089
    %9230 = vmatpush1.bf16.msra.mxu0 %v9088
    %9231 = vmatprep.subr.bf16.mxu0 %v9085
    %9232 = vmatpush1.bf16.msra.mxu0 %v9084
    %9233 = vmatprep.subr.bf16.mxu0 %v9081
    %9234 = vmatpush1.bf16.msra.mxu0 %v9080
    %9235 = vmatprep.subr.bf16.mxu0 %v9077
    %9236 = vmatpush1.bf16.msra.mxu0 %v9076
    %9237 = vmatprep.subr.bf16.mxu0 %v9073
    %9238 = vmatpush1.bf16.msra.mxu0 %v9072
    %9239 = vmatprep.subr.bf16.mxu0 %v9069
    %9240 = vmatpush1.bf16.msra.mxu0 %v9068
    %9241 = vmatprep.subr.bf16.mxu0 %v9065
    %9242 = vmatpush1.bf16.msra.mxu0 %v9064
    %9243 = vmatprep.subr.bf16.mxu0 %v9061
    %9244 = vmatpush1.bf16.msra.mxu0 %v9060
    %9245 = vmatprep.subr.bf16.mxu0 0
    %9246 = vmatpush2.bf16.msra.mxu0 0
    %9247 = vmatprep.subr.bf16.mxu0 0
    %9248 = vmatpush2.bf16.msra.mxu0 0
    %9249 = vmatprep.subr.bf16.mxu0 0
    %9250 = vmatpush2.bf16.msra.mxu0 0
    %9251 = vmatprep.subr.bf16.mxu0 0
    %9252 = vmatpush2.bf16.msra.mxu0 0
    %9253 = vmatprep.subr.bf16.mxu0 0
    %9254 = vmatpush2.bf16.msra.mxu0 0
    %9255 = vmatprep.subr.bf16.mxu0 0
    %9256 = vmatpush2.bf16.msra.mxu0 0
    %9257 = vmatprep.subr.bf16.mxu0 0
    %9258 = vmatpush2.bf16.msra.mxu0 0
    %9259 = vmatprep.subr.bf16.mxu0 0
    %9260 = vmatpush2.bf16.msra.mxu0 0
    %9261 = vmatprep.mubr.bf16.mxu0 0
    %9262 = vmatmul.mubr.bf16.gmra.mxu0 %v8285
    %v9263 = vpop.f32.mrf.mxu0
    %v9264 = vadd.f32 %v9223, %v9263
    %v9265 = vpop.f32.mrf.mxu0
    %v9266 = vadd.f32 %v9225, %v9265
    %v9267 = vpop.f32.mrf.mxu0
    %v9268 = vpop.f32.mrf.mxu0
    %9269 = vdwg.mxu0
    %9270 = vmatprep.subr.bf16.mxu0 %v9027
    %9271 = vmatpush1.bf16.msra.mxu0 %v9026
    %9272 = vmatprep.subr.bf16.mxu0 %v9023
    %9273 = vmatpush1.bf16.msra.mxu0 %v9022
    %9274 = vmatprep.subr.bf16.mxu0 %v9019
    %9275 = vmatpush1.bf16.msra.mxu0 %v9018
    %9276 = vmatprep.subr.bf16.mxu0 %v9015
    %9277 = vmatpush1.bf16.msra.mxu0 %v9014
    %9278 = vmatprep.subr.bf16.mxu0 %v9011
    %9279 = vmatpush1.bf16.msra.mxu0 %v9010
    %9280 = vmatprep.subr.bf16.mxu0 %v9007
    %9281 = vmatpush1.bf16.msra.mxu0 %v9006
    %9282 = vmatprep.subr.bf16.mxu0 %v9003
    %9283 = vmatpush1.bf16.msra.mxu0 %v9002
    %9284 = vmatprep.subr.bf16.mxu0 %v8999
    %9285 = vmatpush1.bf16.msra.mxu0 %v8998
    %9286 = vmatprep.subr.bf16.mxu0 %v9059
    %9287 = vmatpush2.bf16.msra.mxu0 %v9058
    %9288 = vmatprep.subr.bf16.mxu0 %v9055
    %9289 = vmatpush2.bf16.msra.mxu0 %v9054
    %9290 = vmatprep.subr.bf16.mxu0 %v9051
    %9291 = vmatpush2.bf16.msra.mxu0 %v9050
    %9292 = vmatprep.subr.bf16.mxu0 %v9047
    %9293 = vmatpush2.bf16.msra.mxu0 %v9046
    %9294 = vmatprep.subr.bf16.mxu0 %v9043
    %9295 = vmatpush2.bf16.msra.mxu0 %v9042
    %9296 = vmatprep.subr.bf16.mxu0 %v9039
    %9297 = vmatpush2.bf16.msra.mxu0 %v9038
    %9298 = vmatprep.subr.bf16.mxu0 %v9035
    %9299 = vmatpush2.bf16.msra.mxu0 %v9034
    %9300 = vmatprep.subr.bf16.mxu0 %v9031
    %9301 = vmatpush2.bf16.msra.mxu0 %v9030
    %9302 = vmatprep.mubr.bf16.mxu0 %v8589
    %9303 = vmatmul.mubr.bf16.gmra.mxu0 %v8588
    %v9304 = vpop.f32.mrf.mxu0
    %v9305 = vadd.f32 %v8699, %v9304
    %v9306 = vpop.f32.mrf.mxu0
    %v9307 = vadd.f32 %v8703, %v9306
    %v9308 = vpop.f32.mrf.mxu0
    %v9309 = vpop.f32.mrf.mxu0
    %9310 = vdwg.mxu0
    %9311 = vmatprep.subr.bf16.mxu0 %v9091
    %9312 = vmatpush1.bf16.msra.mxu0 %v9090
    %9313 = vmatprep.subr.bf16.mxu0 %v9087
    %9314 = vmatpush1.bf16.msra.mxu0 %v9086
    %9315 = vmatprep.subr.bf16.mxu0 %v9083
    %9316 = vmatpush1.bf16.msra.mxu0 %v9082
    %9317 = vmatprep.subr.bf16.mxu0 %v9079
    %9318 = vmatpush1.bf16.msra.mxu0 %v9078
    %9319 = vmatprep.subr.bf16.mxu0 %v9075
    %9320 = vmatpush1.bf16.msra.mxu0 %v9074
    %9321 = vmatprep.subr.bf16.mxu0 %v9071
    %9322 = vmatpush1.bf16.msra.mxu0 %v9070
    %9323 = vmatprep.subr.bf16.mxu0 %v9067
    %9324 = vmatpush1.bf16.msra.mxu0 %v9066
    %9325 = vmatprep.subr.bf16.mxu0 %v9063
    %9326 = vmatpush1.bf16.msra.mxu0 %v9062
    %9327 = vmatprep.subr.bf16.mxu0 0
    %9328 = vmatpush2.bf16.msra.mxu0 0
    %9329 = vmatprep.subr.bf16.mxu0 0
    %9330 = vmatpush2.bf16.msra.mxu0 0
    %9331 = vmatprep.subr.bf16.mxu0 0
    %9332 = vmatpush2.bf16.msra.mxu0 0
    %9333 = vmatprep.subr.bf16.mxu0 0
    %9334 = vmatpush2.bf16.msra.mxu0 0
    %9335 = vmatprep.subr.bf16.mxu0 0
    %9336 = vmatpush2.bf16.msra.mxu0 0
    %9337 = vmatprep.subr.bf16.mxu0 0
    %9338 = vmatpush2.bf16.msra.mxu0 0
    %9339 = vmatprep.subr.bf16.mxu0 0
    %9340 = vmatpush2.bf16.msra.mxu0 0
    %9341 = vmatprep.subr.bf16.mxu0 0
    %9342 = vmatpush2.bf16.msra.mxu0 0
    %9343 = vmatprep.mubr.bf16.mxu0 0
    %9344 = vmatmul.mubr.bf16.gmra.mxu0 %v8285
    %v9345 = vpop.f32.mrf.mxu0
    %v9346 = vadd.f32 %v9305, %v9345
    %v9347 = vpop.f32.mrf.mxu0
    %v9348 = vadd.f32 %v9307, %v9347
    %v9349 = vpop.f32.mrf.mxu0
    %v9350 = vpop.f32.mrf.mxu0
    %9351 = vdwg.mxu0
    %v9352 = vxor.u32 %v9264, 2147483648
    %v9353 = vmul.f32 %v9352, 1.442695
    %v9354 = vpow.pop %v9353
    %v9355 = vadd.f32 %v9354, 1.0
    %v9356 = vrcp.pop %v9355
    %v9357 = vmul.f32 1.0, %v9356
    %v9358 = vxor.u32 %v9266, 2147483648
    %v9359 = vmul.f32 %v9358, 1.442695
    %v9360 = vpow.pop %v9359
    %v9361 = vadd.f32 %v9360, 1.0
    %v9362 = vrcp.pop %v9361
    %v9363 = vmul.f32 1.0, %v9362
    %v9364 = vtanh.pop %v9346
    %v9365 = vxor.u32 %v9348, 2147483648
    %v9366 = vmul.f32 %v9365, 1.442695
    %v9367 = vpow.pop %v9366
    %v9368 = vadd.f32 %v9367, 1.0
    %v9369 = vrcp.pop %v9368
    %v9370 = vmul.f32 1.0, %v9369
    %v9371 = vmul.f32 %v9363, %v8282
    %v9372 = vmul.f32 %v9357, %v9364
    %v9373 = vadd.f32 %v9371, %v9372
    %v9374 = vtanh.pop %v9373
    %v9375 = vmul.f32 %v9370, %v9374
    %v9376 = vpack.c.bf16 %v9375, %v9375
    %v9377 = vld [vmem:[%s8] sm:$0xf]
    %v9378 = vld [vmem:[%s8 + $0x4] sm:$0xf]
    %v9379 = vld [vmem:[%s8 + $0x8] sm:$0xf]
    %v9380 = vld [vmem:[%s8 + $0xc] sm:$0xf]
    %v9381 = vld [vmem:[%s8 + $0x10] sm:$0xf]
    %v9382 = vld [vmem:[%s8 + $0x14] sm:$0xf]
    %v9383 = vld [vmem:[%s8 + $0x18] sm:$0xf]
    %v9384 = vld [vmem:[%s8 + $0x1c] sm:$0xf]
    %v9385 = vld [vmem:[%s8 + $0x20] sm:$0xf]
    %v9386 = vld [vmem:[%s8 + $0x24] sm:$0xf]
    %v9387 = vld [vmem:[%s8 + $0x28] sm:$0xf]
    %v9388 = vld [vmem:[%s8 + $0x2c] sm:$0xf]
    %v9389 = vld [vmem:[%s8 + $0x30] sm:$0xf]
    %v9390 = vld [vmem:[%s8 + $0x34] sm:$0xf]
    %v9391 = vld [vmem:[%s8 + $0x38] sm:$0xf]
    %v9392 = vld [vmem:[%s8 + $0x3c] sm:$0xf]
    %v9393 = vld [vmem:[%s8 + $0x40] sm:$0xf]
    %v9394 = vld [vmem:[%s8 + $0x44] sm:$0xf]
    %v9395 = vld [vmem:[%s8 + $0x48] sm:$0xf]
    %v9396 = vld [vmem:[%s8 + $0x4c] sm:$0xf]
    %v9397 = vld [vmem:[%s8 + $0x50] sm:$0xf]
    %v9398 = vld [vmem:[%s8 + $0x54] sm:$0xf]
    %v9399 = vld [vmem:[%s8 + $0x58] sm:$0xf]
    %v9400 = vld [vmem:[%s8 + $0x5c] sm:$0xf]
    %v9401 = vld [vmem:[%s8 + $0x60] sm:$0xf]
    %v9402 = vld [vmem:[%s8 + $0x64] sm:$0xf]
    %v9403 = vld [vmem:[%s8 + $0x68] sm:$0xf]
    %v9404 = vld [vmem:[%s8 + $0x6c] sm:$0xf]
    %v9405 = vld [vmem:[%s8 + $0x70] sm:$0xf]
    %v9406 = vld [vmem:[%s8 + $0x74] sm:$0xf]
    %v9407 = vld [vmem:[%s8 + $0x78] sm:$0xf]
    %v9408 = vld [vmem:[%s8 + $0x7c] sm:$0xf]
    %v9409 = vld [vmem:[%s9] sm:$0x1]
    %v9411 = vlaneseq
    %v9412 = vshrl.u32 %v9411, 7
    %v9413 = vsub.s32 0, %v9412
    %v9414 = vrot.slane %v9409, %v9413
    %v9448 = vunpack.c.l.b16 %v9377
    %v9449 = vunpack.c.l.b16 %v9378
    %v9450 = vunpack.c.l.b16 %v9379
    %v9451 = vunpack.c.l.b16 %v9380
    %v9452 = vunpack.c.l.b16 %v9381
    %v9453 = vunpack.c.l.b16 %v9382
    %v9454 = vunpack.c.l.b16 %v9383
    %v9455 = vunpack.c.l.b16 %v9384
    %v9456 = vunpack.c.l.b16 %v9385
    %v9457 = vunpack.c.l.b16 %v9386
    %v9458 = vunpack.c.l.b16 %v9387
    %v9459 = vunpack.c.l.b16 %v9388
    %v9460 = vunpack.c.l.b16 %v9389
    %v9461 = vunpack.c.l.b16 %v9390
    %v9462 = vunpack.c.l.b16 %v9391
    %v9463 = vunpack.c.l.b16 %v9392
    %v9464 = vunpack.c.l.b16 %v9393
    %v9465 = vunpack.c.l.b16 %v9394
    %v9466 = vunpack.c.l.b16 %v9395
    %v9467 = vunpack.c.l.b16 %v9396
    %v9468 = vunpack.c.l.b16 %v9397
    %v9469 = vunpack.c.l.b16 %v9398
    %v9470 = vunpack.c.l.b16 %v9399
    %v9471 = vunpack.c.l.b16 %v9400
    %v9472 = vunpack.c.l.b16 %v9401
    %v9473 = vunpack.c.l.b16 %v9402
    %v9474 = vunpack.c.l.b16 %v9403
    %v9475 = vunpack.c.l.b16 %v9404
    %v9476 = vunpack.c.l.b16 %v9405
    %v9477 = vunpack.c.l.b16 %v9406
    %v9478 = vunpack.c.l.b16 %v9407
    %v9479 = vunpack.c.l.b16 %v9408
    %v9480 = vpack.c.b16 %v9449, %v9448
    %v9481 = vpack.c.b16 %v9451, %v9450
    %v9482 = vpack.c.b16 %v9453, %v9452
    %v9483 = vpack.c.b16 %v9455, %v9454
    %v9484 = vpack.c.b16 %v9457, %v9456
    %v9485 = vpack.c.b16 %v9459, %v9458
    %v9486 = vpack.c.b16 %v9461, %v9460
    %v9487 = vpack.c.b16 %v9463, %v9462
    %v9488 = vpack.c.b16 %v9465, %v9464
    %v9489 = vpack.c.b16 %v9467, %v9466
    %v9490 = vpack.c.b16 %v9469, %v9468
    %v9491 = vpack.c.b16 %v9471, %v9470
    %v9492 = vpack.c.b16 %v9473, %v9472
    %v9493 = vpack.c.b16 %v9475, %v9474
    %v9494 = vpack.c.b16 %v9477, %v9476
    %v9495 = vpack.c.b16 %v9479, %v9478
    %9512 = vmatprep.subr.bf16.mxu0 0
    %9513 = vmatpush1.bf16.msra.mxu0 %v9487
    %9514 = vmatprep.subr.bf16.mxu0 0
    %9515 = vmatpush1.bf16.msra.mxu0 %v9486
    %9516 = vmatprep.subr.bf16.mxu0 0
    %9517 = vmatpush1.bf16.msra.mxu0 %v9485
    %9518 = vmatprep.subr.bf16.mxu0 0
    %9519 = vmatpush1.bf16.msra.mxu0 %v9484
    %9520 = vmatprep.subr.bf16.mxu0 0
    %9521 = vmatpush1.bf16.msra.mxu0 %v9483
    %9522 = vmatprep.subr.bf16.mxu0 0
    %9523 = vmatpush1.bf16.msra.mxu0 %v9482
    %9524 = vmatprep.subr.bf16.mxu0 0
    %9525 = vmatpush1.bf16.msra.mxu0 %v9481
    %9526 = vmatprep.subr.bf16.mxu0 0
    %9527 = vmatpush1.bf16.msra.mxu0 %v9480
    %9528 = vmatprep.subr.bf16.mxu0 0
    %9529 = vmatpush2.bf16.msra.mxu0 %v9495
    %9530 = vmatprep.subr.bf16.mxu0 0
    %9531 = vmatpush2.bf16.msra.mxu0 %v9494
    %9532 = vmatprep.subr.bf16.mxu0 0
    %9533 = vmatpush2.bf16.msra.mxu0 %v9493
    %9534 = vmatprep.subr.bf16.mxu0 0
    %9535 = vmatpush2.bf16.msra.mxu0 %v9492
    %9536 = vmatprep.subr.bf16.mxu0 0
    %9537 = vmatpush2.bf16.msra.mxu0 %v9491
    %9538 = vmatprep.subr.bf16.mxu0 0
    %9539 = vmatpush2.bf16.msra.mxu0 %v9490
    %9540 = vmatprep.subr.bf16.mxu0 0
    %9541 = vmatpush2.bf16.msra.mxu0 %v9489
    %9542 = vmatprep.subr.bf16.mxu0 0
    %9543 = vmatpush2.bf16.msra.mxu0 %v9488
    %9544 = vmatprep.mubr.bf16.mxu0 %v8589
    %9545 = vmatmul.mubr.bf16.gmra.mxu0 %v9376
    %v9546 = vpop.f32.mrf.mxu0
    %v9547 = vadd.f32 %v9414, %v9546
    %v9548 = vpop.f32.mrf.mxu0
    %v9549 = vpop.f32.mrf.mxu0
    %v9550 = vpop.f32.mrf.mxu0
    %9551 = vdwg.mxu0
    %s9552 = scalar_lea.vmem [#allocation12], 48
    %9553 = vst [vmem:[%s9552] sm:$0xff] %v9547
    %9554 = vmax.xlane.f32.xlu0 %v9547
    %v9555 = vpop.xlane.xlu0 %9554
    %vm9556 = vcmp.ge.f32.partialorder %v9547, %v9555
    %v9557 = vsel %vm9556, %v100, 128
    %v9558 = vand.u32 %v9557, 65535
    %v9559 = vshra.s32 %v9557, 16
    %v9560 = vcvt.s32.f32 %v9558
    %v9561 = vcvt.s32.f32 %v9559
    %9562 = vmin.xlane.f32.xlu0 %v9561
    %v9563 = vpop.xlane.xlu0 %9562
    %vm9564 = vcmp.eq.f32.partialorder %v9561, %v9563
    %v9565 = vsel %vm9564, %v9560, inf
    %9566 = vmin.xlane.f32.xlu0 %v9565
    %v9567 = vpop.xlane.xlu0 %9566
    %v9568 = vcvt.f32.s32 %v9567
    %v9569 = vcvt.f32.s32 %v9563
    %v9570 = vshll.u32 %v9569, 16
    %v9571 = vadd.s32 %v9570, %v9568
    %s9572 = sld [smem:[#allocation4 + $0x6]]
    %p9573 = scmp.ne.s32.totalorder %s9572, 0
    %s9574 = scalar_lea.vmem %s1, 48
    %v9575 = vld [vmem:[%s9574] sm:$0xff]
    %s9576 = scalar_select %p9573, 1, 0
    %v9577 = vstv %s9576
    %vm9578 = vcmp.eq.s32.totalorder %v9577, 1
    %v9579 = vsel %vm9578, %v9575, %v9571
    %v9580 = vld [vmem:[#allocation3] sm:$0xff]
    %v9581 = vld [vmem:[#allocation3 + $0x8] sm:$0xff]
    %v9582 = vld [vmem:[#allocation3 + $0x10] sm:$0xff]
    %v9583 = vld [vmem:[#allocation3 + $0x18] sm:$0xff]
    %v9584 = vld [vmem:[#allocation3 + $0x20] sm:$0xff]
    %v9585 = vld [vmem:[#allocation3 + $0x28] sm:$0xff]
    %v9586 = vld [vmem:[#allocation3 + $0x30] sm:$0xff]
    %v9587 = vld [vmem:[#allocation3 + $0x38] sm:$0xff]
    %v9588 = vmul.f32 %v9580, %v9375
    %v9589 = vmul.f32 %v9581, %v9375
    %v9590 = vmul.f32 %v9582, %v9375
    %v9591 = vmul.f32 %v9583, %v9375
    %v9592 = vmul.f32 %v9584, %v9375
    %v9593 = vmul.f32 %v9585, %v9375
    %v9594 = vmul.f32 %v9586, %v9375
    %v9595 = vmul.f32 %v9587, %v9375
    %9596 = vadd.xlane.f32.xlu0 %v9588
    %v9597 = vpop.xlane.xlu0 %9596
    %9598 = vadd.xlane.f32.xlu0 %v9589
    %v9599 = vpop.xlane.xlu0 %9598
    %9600 = vadd.xlane.f32.xlu0 %v9590
    %v9601 = vpop.xlane.xlu0 %9600
    %9602 = vadd.xlane.f32.xlu0 %v9591
    %v9603 = vpop.xlane.xlu0 %9602
    %9604 = vadd.xlane.f32.xlu0 %v9592
    %v9605 = vpop.xlane.xlu0 %9604
    %9606 = vadd.xlane.f32.xlu0 %v9593
    %v9607 = vpop.xlane.xlu0 %9606
    %9608 = vadd.xlane.f32.xlu0 %v9594
    %v9609 = vpop.xlane.xlu0 %9608
    %9610 = vadd.xlane.f32.xlu0 %v9595
    %v9611 = vpop.xlane.xlu0 %9610
    %v9612 = vmax.f32 %v9597, %v9605
    %v9613 = vmax.f32 %v9599, %v9607
    %v9614 = vmax.f32 %v9601, %v9609
    %v9615 = vmax.f32 %v9603, %v9611
    %v9616 = vmax.f32 %v9612, %v9613
    %v9617 = vmax.f32 %v9614, %v9615
    %v9618 = vmax.f32 %v9616, %v9617
    %v9619 = vsub.f32 %v9597, %v9618
    %v9620 = vsub.f32 %v9599, %v9618
    %v9621 = vsub.f32 %v9601, %v9618
    %v9622 = vsub.f32 %v9603, %v9618
    %v9623 = vsub.f32 %v9605, %v9618
    %v9624 = vsub.f32 %v9607, %v9618
    %v9625 = vsub.f32 %v9609, %v9618
    %v9626 = vsub.f32 %v9611, %v9618
    %v9627 = vmul.f32 %v9619, 1.442695
    %v9628 = vpow.pop %v9627
    %v9629 = vmul.f32 %v9620, 1.442695
    %v9630 = vpow.pop %v9629
    %v9631 = vmul.f32 %v9621, 1.442695
    %v9632 = vpow.pop %v9631
    %v9633 = vmul.f32 %v9622, 1.442695
    %v9634 = vpow.pop %v9633
    %v9635 = vmul.f32 %v9623, 1.442695
    %v9636 = vpow.pop %v9635
    %v9637 = vmul.f32 %v9624, 1.442695
    %v9638 = vpow.pop %v9637
    %v9639 = vmul.f32 %v9625, 1.442695
    %v9640 = vpow.pop %v9639
    %v9641 = vmul.f32 %v9626, 1.442695
    %v9642 = vpow.pop %v9641
    %v9643 = vadd.f32 %v9628, %v9630
    %v9644 = vadd.f32 %v9643, %v9632
    %v9645 = vadd.f32 %v9644, %v9634
    %v9646 = vadd.f32 %v9645, %v9636
    %v9647 = vadd.f32 %v9646, %v9638
    %v9648 = vadd.f32 %v9647, %v9640
    %v9649 = vadd.f32 %v9648, %v9642
    %v9650 = vrcp.pop %v9649
    %v9651 = vmul.f32 %v9628, %v9650
    %v9652 = vmul.f32 %v9630, %v9650
    %v9653 = vmul.f32 %v9632, %v9650
    %v9654 = vmul.f32 %v9634, %v9650
    %v9655 = vmul.f32 %v9636, %v9650
    %v9656 = vmul.f32 %v9638, %v9650
    %v9657 = vmul.f32 %v9640, %v9650
    %v9658 = vmul.f32 %v9642, %v9650
    %v9659 = vmul.f32 %v9651, %v9580
    %v9660 = vmul.f32 %v9652, %v9581
    %v9661 = vmul.f32 %v9653, %v9582
    %v9662 = vmul.f32 %v9654, %v9583
    %v9663 = vmul.f32 %v9655, %v9584
    %v9664 = vmul.f32 %v9656, %v9585
    %v9665 = vmul.f32 %v9657, %v9586
    %v9666 = vmul.f32 %v9658, %v9587
    %v9667 = vadd.f32 %v9659, %v9660
    %v9668 = vadd.f32 %v9667, %v9661
    %v9669 = vadd.f32 %v9668, %v9662
    %v9670 = vadd.f32 %v9669, %v9663
    %v9671 = vadd.f32 %v9670, %v9664
    %v9672 = vadd.f32 %v9671, %v9665
    %v9673 = vadd.f32 %v9672, %v9666
    %9674 = vset.pattern.permute.xlu0 0
    %9675 = vperm.xlu0 %9674, %v9579
    %v9676 = vpop.permute.xlu0 %9675
    %vm9677 = vcmp.eq.s32.totalorder %v9676, %v100
    %v9678 = vsel %vm9677, 1.0, 0.0
    %v9679 = vpack.c.bf16 %v9678, %v9678
    %v9680 = vpack.c.bf16 %v9673, %v9673
    %v9681 = vld [vmem:[#allocation11] sm:$0xff]
    %v9682 = vld [vmem:[#allocation11 + $0x8] sm:$0xff]
    %v9683 = vld [vmem:[#allocation11 + $0x10] sm:$0xff]
    %v9684 = vld [vmem:[#allocation11 + $0x18] sm:$0xff]
    %v9685 = vld [vmem:[#allocation11 + $0x20] sm:$0xff]
    %v9686 = vld [vmem:[#allocation11 + $0x28] sm:$0xff]
    %v9687 = vld [vmem:[#allocation11 + $0x30] sm:$0xff]
    %v9688 = vld [vmem:[#allocation11 + $0x38] sm:$0xff]
    %v9689 = vld [vmem:[#allocation11 + $0x40] sm:$0xff]
    %v9690 = vld [vmem:[#allocation11 + $0x48] sm:$0xff]
    %v9691 = vld [vmem:[#allocation11 + $0x50] sm:$0xff]
    %v9692 = vld [vmem:[#allocation11 + $0x58] sm:$0xff]
    %v9693 = vld [vmem:[#allocation11 + $0x60] sm:$0xff]
    %v9694 = vld [vmem:[#allocation11 + $0x68] sm:$0xff]
    %v9695 = vld [vmem:[#allocation11 + $0x70] sm:$0xff]
    %v9696 = vld [vmem:[#allocation11 + $0x78] sm:$0xff]
    %v9697 = vld [vmem:[#allocation11 + $0x80] sm:$0xff]
    %v9698 = vld [vmem:[#allocation11 + $0x88] sm:$0xff]
    %v9699 = vld [vmem:[#allocation11 + $0x90] sm:$0xff]
    %v9700 = vld [vmem:[#allocation11 + $0x98] sm:$0xff]
    %v9701 = vld [vmem:[#allocation11 + $0xa0] sm:$0xff]
    %v9702 = vld [vmem:[#allocation11 + $0xa8] sm:$0xff]
    %v9703 = vld [vmem:[#allocation11 + $0xb0] sm:$0xff]
    %v9704 = vld [vmem:[#allocation11 + $0xb8] sm:$0xff]
    %v9705 = vld [vmem:[#allocation11 + $0xc0] sm:$0xff]
    %v9706 = vld [vmem:[#allocation11 + $0xc8] sm:$0xff]
    %v9707 = vld [vmem:[#allocation11 + $0xd0] sm:$0xff]
    %v9708 = vld [vmem:[#allocation11 + $0xd8] sm:$0xff]
    %v9709 = vld [vmem:[#allocation11 + $0xe0] sm:$0xff]
    %v9710 = vld [vmem:[#allocation11 + $0xe8] sm:$0xff]
    %v9711 = vld [vmem:[#allocation11 + $0xf0] sm:$0xff]
    %v9712 = vld [vmem:[#allocation11 + $0xf8] sm:$0xff]
    %v9713 = vld [vmem:[#allocation11 + $0x100] sm:$0xff]
    %v9714 = vld [vmem:[#allocation11 + $0x108] sm:$0xff]
    %v9715 = vld [vmem:[#allocation11 + $0x110] sm:$0xff]
    %v9716 = vld [vmem:[#allocation11 + $0x118] sm:$0xff]
    %v9717 = vld [vmem:[#allocation11 + $0x120] sm:$0xff]
    %v9718 = vld [vmem:[#allocation11 + $0x128] sm:$0xff]
    %v9719 = vld [vmem:[#allocation11 + $0x130] sm:$0xff]
    %v9720 = vld [vmem:[#allocation11 + $0x138] sm:$0xff]
    %v9721 = vld [vmem:[#allocation11 + $0x140] sm:$0xff]
    %v9722 = vld [vmem:[#allocation11 + $0x148] sm:$0xff]
    %v9723 = vld [vmem:[#allocation11 + $0x150] sm:$0xff]
    %v9724 = vld [vmem:[#allocation11 + $0x158] sm:$0xff]
    %v9725 = vld [vmem:[#allocation11 + $0x160] sm:$0xff]
    %v9726 = vld [vmem:[#allocation11 + $0x168] sm:$0xff]
    %v9727 = vld [vmem:[#allocation11 + $0x170] sm:$0xff]
    %v9728 = vld [vmem:[#allocation11 + $0x178] sm:$0xff]
    %v9729 = vld [vmem:[#allocation11 + $0x180] sm:$0xff]
    %v9730 = vld [vmem:[#allocation11 + $0x188] sm:$0xff]
    %v9731 = vld [vmem:[#allocation11 + $0x190] sm:$0xff]
    %v9732 = vld [vmem:[#allocation11 + $0x198] sm:$0xff]
    %v9733 = vld [vmem:[#allocation11 + $0x1a0] sm:$0xff]
    %v9734 = vld [vmem:[#allocation11 + $0x1a8] sm:$0xff]
    %v9735 = vld [vmem:[#allocation11 + $0x1b0] sm:$0xff]
    %v9736 = vld [vmem:[#allocation11 + $0x1b8] sm:$0xff]
    %v9737 = vld [vmem:[#allocation11 + $0x1c0] sm:$0xff]
    %v9738 = vld [vmem:[#allocation11 + $0x1c8] sm:$0xff]
    %v9739 = vld [vmem:[#allocation11 + $0x1d0] sm:$0xff]
    %v9740 = vld [vmem:[#allocation11 + $0x1d8] sm:$0xff]
    %v9741 = vld [vmem:[#allocation11 + $0x1e0] sm:$0xff]
    %v9742 = vld [vmem:[#allocation11 + $0x1e8] sm:$0xff]
    %v9743 = vld [vmem:[#allocation11 + $0x1f0] sm:$0xff]
    %v9744 = vld [vmem:[#allocation11 + $0x1f8] sm:$0xff]
    %v9745 = vld [vmem:[#allocation11 + $0x200] sm:$0xff]
    %v9746 = vld [vmem:[#allocation11 + $0x208] sm:$0xff]
    %v9747 = vld [vmem:[#allocation11 + $0x210] sm:$0xff]
    %v9748 = vld [vmem:[#allocation11 + $0x218] sm:$0xff]
    %v9749 = vld [vmem:[#allocation11 + $0x220] sm:$0xff]
    %v9750 = vld [vmem:[#allocation11 + $0x228] sm:$0xff]
    %v9751 = vld [vmem:[#allocation11 + $0x230] sm:$0xff]
    %v9752 = vld [vmem:[#allocation11 + $0x238] sm:$0xff]
    %v9753 = vld [vmem:[#allocation11 + $0x240] sm:$0xff]
    %v9754 = vld [vmem:[#allocation11 + $0x248] sm:$0xff]
    %v9755 = vld [vmem:[#allocation11 + $0x250] sm:$0xff]
    %v9756 = vld [vmem:[#allocation11 + $0x258] sm:$0xff]
    %v9757 = vld [vmem:[#allocation11 + $0x260] sm:$0xff]
    %v9758 = vld [vmem:[#allocation11 + $0x268] sm:$0xff]
    %v9759 = vld [vmem:[#allocation11 + $0x270] sm:$0xff]
    %v9760 = vld [vmem:[#allocation11 + $0x278] sm:$0xff]
    %v9761 = vld [vmem:[#allocation11 + $0x280] sm:$0xff]
    %v9762 = vld [vmem:[#allocation11 + $0x288] sm:$0xff]
    %v9763 = vld [vmem:[#allocation11 + $0x290] sm:$0xff]
    %v9764 = vld [vmem:[#allocation11 + $0x298] sm:$0xff]
    %v9765 = vld [vmem:[#allocation11 + $0x2a0] sm:$0xff]
    %v9766 = vld [vmem:[#allocation11 + $0x2a8] sm:$0xff]
    %v9767 = vld [vmem:[#allocation11 + $0x2b0] sm:$0xff]
    %v9768 = vld [vmem:[#allocation11 + $0x2b8] sm:$0xff]
    %v9769 = vld [vmem:[#allocation11 + $0x2c0] sm:$0xff]
    %v9770 = vld [vmem:[#allocation11 + $0x2c8] sm:$0xff]
    %v9771 = vld [vmem:[#allocation11 + $0x2d0] sm:$0xff]
    %v9772 = vld [vmem:[#allocation11 + $0x2d8] sm:$0xff]
    %v9773 = vld [vmem:[#allocation11 + $0x2e0] sm:$0xff]
    %v9774 = vld [vmem:[#allocation11 + $0x2e8] sm:$0xff]
    %v9775 = vld [vmem:[#allocation11 + $0x2f0] sm:$0xff]
    %v9776 = vld [vmem:[#allocation11 + $0x2f8] sm:$0xff]
    %v9777 = vld [vmem:[%s7] sm:$0xf]
    %v9779 = vlaneseq
    %v9780 = vshrl.u32 %v9779, 7
    %v9781 = vsub.s32 0, %v9780
    %v9782 = vrot.slane %v9777, %v9781
    %v9783 = vlaneseq
    %v9784 = vshrl.u32 %v9783, 7
    %v9785 = vsub.s32 1, %v9784
    %v9786 = vrot.slane %v9777, %v9785
    %v9787 = vlaneseq
    %v9788 = vshrl.u32 %v9787, 7
    %v9789 = vsub.s32 2, %v9788
    %v9790 = vrot.slane %v9777, %v9789
    %v9791 = vlaneseq
    %v9792 = vshrl.u32 %v9791, 7
    %v9793 = vsub.s32 3, %v9792
    %v9794 = vrot.slane %v9777, %v9793
    %v9895 = vunpack.c.l.b16 %v9681
    %v9896 = vunpack.c.h.b16 %v9681
    %v9897 = vunpack.c.l.b16 %v9682
    %v9898 = vunpack.c.h.b16 %v9682
    %v9899 = vunpack.c.l.b16 %v9683
    %v9900 = vunpack.c.h.b16 %v9683
    %v9901 = vunpack.c.l.b16 %v9684
    %v9902 = vunpack.c.h.b16 %v9684
    %v9903 = vunpack.c.l.b16 %v9685
    %v9904 = vunpack.c.h.b16 %v9685
    %v9905 = vunpack.c.l.b16 %v9686
    %v9906 = vunpack.c.h.b16 %v9686
    %v9907 = vunpack.c.l.b16 %v9687
    %v9908 = vunpack.c.h.b16 %v9687
    %v9909 = vunpack.c.l.b16 %v9688
    %v9910 = vunpack.c.h.b16 %v9688
    %v9911 = vunpack.c.l.b16 %v9689
    %v9912 = vunpack.c.h.b16 %v9689
    %v9913 = vunpack.c.l.b16 %v9690
    %v9914 = vunpack.c.h.b16 %v9690
    %v9915 = vunpack.c.l.b16 %v9691
    %v9916 = vunpack.c.h.b16 %v9691
    %v9917 = vunpack.c.l.b16 %v9692
    %v9918 = vunpack.c.h.b16 %v9692
    %v9919 = vunpack.c.l.b16 %v9693
    %v9920 = vunpack.c.h.b16 %v9693
    %v9921 = vunpack.c.l.b16 %v9694
    %v9922 = vunpack.c.h.b16 %v9694
    %v9923 = vunpack.c.l.b16 %v9695
    %v9924 = vunpack.c.h.b16 %v9695
    %v9925 = vunpack.c.l.b16 %v9696
    %v9926 = vunpack.c.h.b16 %v9696
    %v9927 = vunpack.c.l.b16 %v9697
    %v9928 = vunpack.c.h.b16 %v9697
    %v9929 = vunpack.c.l.b16 %v9698
    %v9930 = vunpack.c.h.b16 %v9698
    %v9931 = vunpack.c.l.b16 %v9699
    %v9932 = vunpack.c.h.b16 %v9699
    %v9933 = vunpack.c.l.b16 %v9700
    %v9934 = vunpack.c.h.b16 %v9700
    %v9935 = vunpack.c.l.b16 %v9701
    %v9936 = vunpack.c.h.b16 %v9701
    %v9937 = vunpack.c.l.b16 %v9702
    %v9938 = vunpack.c.h.b16 %v9702
    %v9939 = vunpack.c.l.b16 %v9703
    %v9940 = vunpack.c.h.b16 %v9703
    %v9941 = vunpack.c.l.b16 %v9704
    %v9942 = vunpack.c.h.b16 %v9704
    %v9943 = vunpack.c.l.b16 %v9705
    %v9944 = vunpack.c.h.b16 %v9705
    %v9945 = vunpack.c.l.b16 %v9706
    %v9946 = vunpack.c.h.b16 %v9706
    %v9947 = vunpack.c.l.b16 %v9707
    %v9948 = vunpack.c.h.b16 %v9707
    %v9949 = vunpack.c.l.b16 %v9708
    %v9950 = vunpack.c.h.b16 %v9708
    %v9951 = vunpack.c.l.b16 %v9709
    %v9952 = vunpack.c.h.b16 %v9709
    %v9953 = vunpack.c.l.b16 %v9710
    %v9954 = vunpack.c.h.b16 %v9710
    %v9955 = vunpack.c.l.b16 %v9711
    %v9956 = vunpack.c.h.b16 %v9711
    %v9957 = vunpack.c.l.b16 %v9712
    %v9958 = vunpack.c.h.b16 %v9712
    %v9959 = vunpack.c.l.b16 %v9713
    %v9960 = vunpack.c.h.b16 %v9713
    %v9961 = vunpack.c.l.b16 %v9714
    %v9962 = vunpack.c.h.b16 %v9714
    %v9963 = vunpack.c.l.b16 %v9715
    %v9964 = vunpack.c.h.b16 %v9715
    %v9965 = vunpack.c.l.b16 %v9716
    %v9966 = vunpack.c.h.b16 %v9716
    %v9967 = vunpack.c.l.b16 %v9717
    %v9968 = vunpack.c.h.b16 %v9717
    %v9969 = vunpack.c.l.b16 %v9718
    %v9970 = vunpack.c.h.b16 %v9718
    %v9971 = vunpack.c.l.b16 %v9719
    %v9972 = vunpack.c.h.b16 %v9719
    %v9973 = vunpack.c.l.b16 %v9720
    %v9974 = vunpack.c.h.b16 %v9720
    %v9975 = vunpack.c.l.b16 %v9721
    %v9976 = vunpack.c.h.b16 %v9721
    %v9977 = vunpack.c.l.b16 %v9722
    %v9978 = vunpack.c.h.b16 %v9722
    %v9979 = vunpack.c.l.b16 %v9723
    %v9980 = vunpack.c.h.b16 %v9723
    %v9981 = vunpack.c.l.b16 %v9724
    %v9982 = vunpack.c.h.b16 %v9724
    %v9983 = vunpack.c.l.b16 %v9725
    %v9984 = vunpack.c.h.b16 %v9725
    %v9985 = vunpack.c.l.b16 %v9726
    %v9986 = vunpack.c.h.b16 %v9726
    %v9987 = vunpack.c.l.b16 %v9727
    %v9988 = vunpack.c.h.b16 %v9727
    %v9989 = vunpack.c.l.b16 %v9728
    %v9990 = vunpack.c.h.b16 %v9728
    %v9991 = vunpack.c.l.b16 %v9729
    %v9992 = vunpack.c.h.b16 %v9729
    %v9993 = vunpack.c.l.b16 %v9730
    %v9994 = vunpack.c.h.b16 %v9730
    %v9995 = vunpack.c.l.b16 %v9731
    %v9996 = vunpack.c.h.b16 %v9731
    %v9997 = vunpack.c.l.b16 %v9732
    %v9998 = vunpack.c.h.b16 %v9732
    %v9999 = vunpack.c.l.b16 %v9733
    %v10000 = vunpack.c.h.b16 %v9733
    %v10001 = vunpack.c.l.b16 %v9734
    %v10002 = vunpack.c.h.b16 %v9734
    %v10003 = vunpack.c.l.b16 %v9735
    %v10004 = vunpack.c.h.b16 %v9735
    %v10005 = vunpack.c.l.b16 %v9736
    %v10006 = vunpack.c.h.b16 %v9736
    %v10007 = vunpack.c.l.b16 %v9737
    %v10008 = vunpack.c.h.b16 %v9737
    %v10009 = vunpack.c.l.b16 %v9738
    %v10010 = vunpack.c.h.b16 %v9738
    %v10011 = vunpack.c.l.b16 %v9739
    %v10012 = vunpack.c.h.b16 %v9739
    %v10013 = vunpack.c.l.b16 %v9740
    %v10014 = vunpack.c.h.b16 %v9740
    %v10015 = vunpack.c.l.b16 %v9741
    %v10016 = vunpack.c.h.b16 %v9741
    %v10017 = vunpack.c.l.b16 %v9742
    %v10018 = vunpack.c.h.b16 %v9742
    %v10019 = vunpack.c.l.b16 %v9743
    %v10020 = vunpack.c.h.b16 %v9743
    %v10021 = vunpack.c.l.b16 %v9744
    %v10022 = vunpack.c.h.b16 %v9744
    %v10023 = vunpack.c.l.b16 %v9745
    %v10024 = vunpack.c.h.b16 %v9745
    %v10025 = vunpack.c.l.b16 %v9746
    %v10026 = vunpack.c.h.b16 %v9746
    %v10027 = vunpack.c.l.b16 %v9747
    %v10028 = vunpack.c.h.b16 %v9747
    %v10029 = vunpack.c.l.b16 %v9748
    %v10030 = vunpack.c.h.b16 %v9748
    %v10031 = vunpack.c.l.b16 %v9749
    %v10032 = vunpack.c.h.b16 %v9749
    %v10033 = vunpack.c.l.b16 %v9750
    %v10034 = vunpack.c.h.b16 %v9750
    %v10035 = vunpack.c.l.b16 %v9751
    %v10036 = vunpack.c.h.b16 %v9751
    %v10037 = vunpack.c.l.b16 %v9752
    %v10038 = vunpack.c.h.b16 %v9752
    %v10039 = vunpack.c.l.b16 %v9753
    %v10040 = vunpack.c.h.b16 %v9753
    %v10041 = vunpack.c.l.b16 %v9754
    %v10042 = vunpack.c.h.b16 %v9754
    %v10043 = vunpack.c.l.b16 %v9755
    %v10044 = vunpack.c.h.b16 %v9755
    %v10045 = vunpack.c.l.b16 %v9756
    %v10046 = vunpack.c.h.b16 %v9756
    %v10047 = vunpack.c.l.b16 %v9757
    %v10048 = vunpack.c.h.b16 %v9757
    %v10049 = vunpack.c.l.b16 %v9758
    %v10050 = vunpack.c.h.b16 %v9758
    %v10051 = vunpack.c.l.b16 %v9759
    %v10052 = vunpack.c.h.b16 %v9759
    %v10053 = vunpack.c.l.b16 %v9760
    %v10054 = vunpack.c.h.b16 %v9760
    %v10055 = vunpack.c.l.b16 %v9761
    %v10056 = vunpack.c.h.b16 %v9761
    %v10057 = vunpack.c.l.b16 %v9762
    %v10058 = vunpack.c.h.b16 %v9762
    %v10059 = vunpack.c.l.b16 %v9763
    %v10060 = vunpack.c.h.b16 %v9763
    %v10061 = vunpack.c.l.b16 %v9764
    %v10062 = vunpack.c.h.b16 %v9764
    %v10063 = vunpack.c.l.b16 %v9765
    %v10064 = vunpack.c.h.b16 %v9765
    %v10065 = vunpack.c.l.b16 %v9766
    %v10066 = vunpack.c.h.b16 %v9766
    %v10067 = vunpack.c.l.b16 %v9767
    %v10068 = vunpack.c.h.b16 %v9767
    %v10069 = vunpack.c.l.b16 %v9768
    %v10070 = vunpack.c.h.b16 %v9768
    %v10071 = vunpack.c.l.b16 %v9769
    %v10072 = vunpack.c.h.b16 %v9769
    %v10073 = vunpack.c.l.b16 %v9770
    %v10074 = vunpack.c.h.b16 %v9770
    %v10075 = vunpack.c.l.b16 %v9771
    %v10076 = vunpack.c.h.b16 %v9771
    %v10077 = vunpack.c.l.b16 %v9772
    %v10078 = vunpack.c.h.b16 %v9772
    %v10079 = vunpack.c.l.b16 %v9773
    %v10080 = vunpack.c.h.b16 %v9773
    %v10081 = vunpack.c.l.b16 %v9774
    %v10082 = vunpack.c.h.b16 %v9774
    %v10083 = vunpack.c.l.b16 %v9775
    %v10084 = vunpack.c.h.b16 %v9775
    %v10085 = vunpack.c.l.b16 %v9776
    %v10086 = vunpack.c.h.b16 %v9776
    %v10087 = vpack.c.b16 %v9899, %v9895
    %v10088 = vpack.c.b16 %v9900, %v9896
    %v10089 = vpack.c.b16 %v9901, %v9897
    %v10090 = vpack.c.b16 %v9902, %v9898
    %v10091 = vpack.c.b16 %v9907, %v9903
    %v10092 = vpack.c.b16 %v9908, %v9904
    %v10093 = vpack.c.b16 %v9909, %v9905
    %v10094 = vpack.c.b16 %v9910, %v9906
    %v10095 = vpack.c.b16 %v9915, %v9911
    %v10096 = vpack.c.b16 %v9916, %v9912
    %v10097 = vpack.c.b16 %v9917, %v9913
    %v10098 = vpack.c.b16 %v9918, %v9914
    %v10099 = vpack.c.b16 %v9923, %v9919
    %v10100 = vpack.c.b16 %v9924, %v9920
    %v10101 = vpack.c.b16 %v9925, %v9921
    %v10102 = vpack.c.b16 %v9926, %v9922
    %v10103 = vpack.c.b16 %v9931, %v9927
    %v10104 = vpack.c.b16 %v9932, %v9928
    %v10105 = vpack.c.b16 %v9933, %v9929
    %v10106 = vpack.c.b16 %v9934, %v9930
    %v10107 = vpack.c.b16 %v9939, %v9935
    %v10108 = vpack.c.b16 %v9940, %v9936
    %v10109 = vpack.c.b16 %v9941, %v9937
    %v10110 = vpack.c.b16 %v9942, %v9938
    %v10111 = vpack.c.b16 %v9947, %v9943
    %v10112 = vpack.c.b16 %v9948, %v9944
    %v10113 = vpack.c.b16 %v9949, %v9945
    %v10114 = vpack.c.b16 %v9950, %v9946
    %v10115 = vpack.c.b16 %v9955, %v9951
    %v10116 = vpack.c.b16 %v9956, %v9952
    %v10117 = vpack.c.b16 %v9957, %v9953
    %v10118 = vpack.c.b16 %v9958, %v9954
    %v10119 = vpack.c.b16 %v9963, %v9959
    %v10120 = vpack.c.b16 %v9964, %v9960
    %v10121 = vpack.c.b16 %v9965, %v9961
    %v10122 = vpack.c.b16 %v9966, %v9962
    %v10123 = vpack.c.b16 %v9971, %v9967
    %v10124 = vpack.c.b16 %v9972, %v9968
    %v10125 = vpack.c.b16 %v9973, %v9969
    %v10126 = vpack.c.b16 %v9974, %v9970
    %v10127 = vpack.c.b16 %v9979, %v9975
    %v10128 = vpack.c.b16 %v9980, %v9976
    %v10129 = vpack.c.b16 %v9981, %v9977
    %v10130 = vpack.c.b16 %v9982, %v9978
    %v10131 = vpack.c.b16 %v9987, %v9983
    %v10132 = vpack.c.b16 %v9988, %v9984
    %v10133 = vpack.c.b16 %v9989, %v9985
    %v10134 = vpack.c.b16 %v9990, %v9986
    %v10135 = vpack.c.b16 %v9995, %v9991
    %v10136 = vpack.c.b16 %v9996, %v9992
    %v10137 = vpack.c.b16 %v9997, %v9993
    %v10138 = vpack.c.b16 %v9998, %v9994
    %v10139 = vpack.c.b16 %v10003, %v9999
    %v10140 = vpack.c.b16 %v10004, %v10000
    %v10141 = vpack.c.b16 %v10005, %v10001
    %v10142 = vpack.c.b16 %v10006, %v10002
    %v10143 = vpack.c.b16 %v10011, %v10007
    %v10144 = vpack.c.b16 %v10012, %v10008
    %v10145 = vpack.c.b16 %v10013, %v10009
    %v10146 = vpack.c.b16 %v10014, %v10010
    %v10147 = vpack.c.b16 %v10019, %v10015
    %v10148 = vpack.c.b16 %v10020, %v10016
    %v10149 = vpack.c.b16 %v10021, %v10017
    %v10150 = vpack.c.b16 %v10022, %v10018
    %v10151 = vpack.c.b16 %v10027, %v10023
    %v10152 = vpack.c.b16 %v10028, %v10024
    %v10153 = vpack.c.b16 %v10029, %v10025
    %v10154 = vpack.c.b16 %v10030, %v10026
    %v10155 = vpack.c.b16 %v10035, %v10031
    %v10156 = vpack.c.b16 %v10036, %v10032
    %v10157 = vpack.c.b16 %v10037, %v10033
    %v10158 = vpack.c.b16 %v10038, %v10034
    %v10159 = vpack.c.b16 %v10043, %v10039
    %v10160 = vpack.c.b16 %v10044, %v10040
    %v10161 = vpack.c.b16 %v10045, %v10041
    %v10162 = vpack.c.b16 %v10046, %v10042
    %v10163 = vpack.c.b16 %v10051, %v10047
    %v10164 = vpack.c.b16 %v10052, %v10048
    %v10165 = vpack.c.b16 %v10053, %v10049
    %v10166 = vpack.c.b16 %v10054, %v10050
    %v10167 = vpack.c.b16 %v10059, %v10055
    %v10168 = vpack.c.b16 %v10060, %v10056
    %v10169 = vpack.c.b16 %v10061, %v10057
    %v10170 = vpack.c.b16 %v10062, %v10058
    %v10171 = vpack.c.b16 %v10067, %v10063
    %v10172 = vpack.c.b16 %v10068, %v10064
    %v10173 = vpack.c.b16 %v10069, %v10065
    %v10174 = vpack.c.b16 %v10070, %v10066
    %v10175 = vpack.c.b16 %v10075, %v10071
    %v10176 = vpack.c.b16 %v10076, %v10072
    %v10177 = vpack.c.b16 %v10077, %v10073
    %v10178 = vpack.c.b16 %v10078, %v10074
    %v10179 = vpack.c.b16 %v10083, %v10079
    %v10180 = vpack.c.b16 %v10084, %v10080
    %v10181 = vpack.c.b16 %v10085, %v10081
    %v10182 = vpack.c.b16 %v10086, %v10082
    %10279 = vmatprep.subr.bf16.mxu0 %v10116
    %10280 = vmatpush1.bf16.msra.mxu0 %v10115
    %10281 = vmatprep.subr.bf16.mxu0 %v10112
    %10282 = vmatpush1.bf16.msra.mxu0 %v10111
    %10283 = vmatprep.subr.bf16.mxu0 %v10108
    %10284 = vmatpush1.bf16.msra.mxu0 %v10107
    %10285 = vmatprep.subr.bf16.mxu0 %v10104
    %10286 = vmatpush1.bf16.msra.mxu0 %v10103
    %10287 = vmatprep.subr.bf16.mxu0 %v10100
    %10288 = vmatpush1.bf16.msra.mxu0 %v10099
    %10289 = vmatprep.subr.bf16.mxu0 %v10096
    %10290 = vmatpush1.bf16.msra.mxu0 %v10095
    %10291 = vmatprep.subr.bf16.mxu0 %v10092
    %10292 = vmatpush1.bf16.msra.mxu0 %v10091
    %10293 = vmatprep.subr.bf16.mxu0 %v10088
    %10294 = vmatpush1.bf16.msra.mxu0 %v10087
    %10295 = vmatprep.subr.bf16.mxu0 %v10148
    %10296 = vmatpush2.bf16.msra.mxu0 %v10147
    %10297 = vmatprep.subr.bf16.mxu0 %v10144
    %10298 = vmatpush2.bf16.msra.mxu0 %v10143
    %10299 = vmatprep.subr.bf16.mxu0 %v10140
    %10300 = vmatpush2.bf16.msra.mxu0 %v10139
    %10301 = vmatprep.subr.bf16.mxu0 %v10136
    %10302 = vmatpush2.bf16.msra.mxu0 %v10135
    %10303 = vmatprep.subr.bf16.mxu0 %v10132
    %10304 = vmatpush2.bf16.msra.mxu0 %v10131
    %10305 = vmatprep.subr.bf16.mxu0 %v10128
    %10306 = vmatpush2.bf16.msra.mxu0 %v10127
    %10307 = vmatprep.subr.bf16.mxu0 %v10124
    %10308 = vmatpush2.bf16.msra.mxu0 %v10123
    %10309 = vmatprep.subr.bf16.mxu0 %v10120
    %10310 = vmatpush2.bf16.msra.mxu0 %v10119
    %10311 = vmatprep.mubr.bf16.mxu0 %v9680
    %10312 = vmatmul.mubr.bf16.gmra.mxu0 %v9679
    %v10313 = vpop.f32.mrf.mxu0
    %v10314 = vadd.f32 %v9782, %v10313
    %v10315 = vpop.f32.mrf.mxu0
    %v10316 = vadd.f32 %v9786, %v10315
    %v10317 = vpop.f32.mrf.mxu0
    %v10318 = vpop.f32.mrf.mxu0
    %10319 = vdwg.mxu0
    %10320 = vmatprep.subr.bf16.mxu0 %v10180
    %10321 = vmatpush1.bf16.msra.mxu0 %v10179
    %10322 = vmatprep.subr.bf16.mxu0 %v10176
    %10323 = vmatpush1.bf16.msra.mxu0 %v10175
    %10324 = vmatprep.subr.bf16.mxu0 %v10172
    %10325 = vmatpush1.bf16.msra.mxu0 %v10171
    %10326 = vmatprep.subr.bf16.mxu0 %v10168
    %10327 = vmatpush1.bf16.msra.mxu0 %v10167
    %10328 = vmatprep.subr.bf16.mxu0 %v10164
    %10329 = vmatpush1.bf16.msra.mxu0 %v10163
    %10330 = vmatprep.subr.bf16.mxu0 %v10160
    %10331 = vmatpush1.bf16.msra.mxu0 %v10159
    %10332 = vmatprep.subr.bf16.mxu0 %v10156
    %10333 = vmatpush1.bf16.msra.mxu0 %v10155
    %10334 = vmatprep.subr.bf16.mxu0 %v10152
    %10335 = vmatpush1.bf16.msra.mxu0 %v10151
    %10336 = vmatprep.subr.bf16.mxu0 0
    %10337 = vmatpush2.bf16.msra.mxu0 0
    %10338 = vmatprep.subr.bf16.mxu0 0
    %10339 = vmatpush2.bf16.msra.mxu0 0
    %10340 = vmatprep.subr.bf16.mxu0 0
    %10341 = vmatpush2.bf16.msra.mxu0 0
    %10342 = vmatprep.subr.bf16.mxu0 0
    %10343 = vmatpush2.bf16.msra.mxu0 0
    %10344 = vmatprep.subr.bf16.mxu0 0
    %10345 = vmatpush2.bf16.msra.mxu0 0
    %10346 = vmatprep.subr.bf16.mxu0 0
    %10347 = vmatpush2.bf16.msra.mxu0 0
    %10348 = vmatprep.subr.bf16.mxu0 0
    %10349 = vmatpush2.bf16.msra.mxu0 0
    %10350 = vmatprep.subr.bf16.mxu0 0
    %10351 = vmatpush2.bf16.msra.mxu0 0
    %10352 = vmatprep.mubr.bf16.mxu0 0
    %10353 = vmatmul.mubr.bf16.gmra.mxu0 %v9376
    %v10354 = vpop.f32.mrf.mxu0
    %v10355 = vadd.f32 %v10314, %v10354
    %v10356 = vpop.f32.mrf.mxu0
    %v10357 = vadd.f32 %v10316, %v10356
    %v10358 = vpop.f32.mrf.mxu0
    %v10359 = vpop.f32.mrf.mxu0
    %10360 = vdwg.mxu0
    %10361 = vmatprep.subr.bf16.mxu0 %v10118
    %10362 = vmatpush1.bf16.msra.mxu0 %v10117
    %10363 = vmatprep.subr.bf16.mxu0 %v10114
    %10364 = vmatpush1.bf16.msra.mxu0 %v10113
    %10365 = vmatprep.subr.bf16.mxu0 %v10110
    %10366 = vmatpush1.bf16.msra.mxu0 %v10109
    %10367 = vmatprep.subr.bf16.mxu0 %v10106
    %10368 = vmatpush1.bf16.msra.mxu0 %v10105
    %10369 = vmatprep.subr.bf16.mxu0 %v10102
    %10370 = vmatpush1.bf16.msra.mxu0 %v10101
    %10371 = vmatprep.subr.bf16.mxu0 %v10098
    %10372 = vmatpush1.bf16.msra.mxu0 %v10097
    %10373 = vmatprep.subr.bf16.mxu0 %v10094
    %10374 = vmatpush1.bf16.msra.mxu0 %v10093
    %10375 = vmatprep.subr.bf16.mxu0 %v10090
    %10376 = vmatpush1.bf16.msra.mxu0 %v10089
    %10377 = vmatprep.subr.bf16.mxu0 %v10150
    %10378 = vmatpush2.bf16.msra.mxu0 %v10149
    %10379 = vmatprep.subr.bf16.mxu0 %v10146
    %10380 = vmatpush2.bf16.msra.mxu0 %v10145
    %10381 = vmatprep.subr.bf16.mxu0 %v10142
    %10382 = vmatpush2.bf16.msra.mxu0 %v10141
    %10383 = vmatprep.subr.bf16.mxu0 %v10138
    %10384 = vmatpush2.bf16.msra.mxu0 %v10137
    %10385 = vmatprep.subr.bf16.mxu0 %v10134
    %10386 = vmatpush2.bf16.msra.mxu0 %v10133
    %10387 = vmatprep.subr.bf16.mxu0 %v10130
    %10388 = vmatpush2.bf16.msra.mxu0 %v10129
    %10389 = vmatprep.subr.bf16.mxu0 %v10126
    %10390 = vmatpush2.bf16.msra.mxu0 %v10125
    %10391 = vmatprep.subr.bf16.mxu0 %v10122
    %10392 = vmatpush2.bf16.msra.mxu0 %v10121
    %10393 = vmatprep.mubr.bf16.mxu0 %v9680
    %10394 = vmatmul.mubr.bf16.gmra.mxu0 %v9679
    %v10395 = vpop.f32.mrf.mxu0
    %v10396 = vadd.f32 %v9790, %v10395
    %v10397 = vpop.f32.mrf.mxu0
    %v10398 = vadd.f32 %v9794, %v10397
    %v10399 = vpop.f32.mrf.mxu0
    %v10400 = vpop.f32.mrf.mxu0
    %10401 = vdwg.mxu0
    %10402 = vmatprep.subr.bf16.mxu0 %v10182
    %10403 = vmatpush1.bf16.msra.mxu0 %v10181
    %10404 = vmatprep.subr.bf16.mxu0 %v10178
    %10405 = vmatpush1.bf16.msra.mxu0 %v10177
    %10406 = vmatprep.subr.bf16.mxu0 %v10174
    %10407 = vmatpush1.bf16.msra.mxu0 %v10173
    %10408 = vmatprep.subr.bf16.mxu0 %v10170
    %10409 = vmatpush1.bf16.msra.mxu0 %v10169
    %10410 = vmatprep.subr.bf16.mxu0 %v10166
    %10411 = vmatpush1.bf16.msra.mxu0 %v10165
    %10412 = vmatprep.subr.bf16.mxu0 %v10162
    %10413 = vmatpush1.bf16.msra.mxu0 %v10161
    %10414 = vmatprep.subr.bf16.mxu0 %v10158
    %10415 = vmatpush1.bf16.msra.mxu0 %v10157
    %10416 = vmatprep.subr.bf16.mxu0 %v10154
    %10417 = vmatpush1.bf16.msra.mxu0 %v10153
    %10418 = vmatprep.subr.bf16.mxu0 0
    %10419 = vmatpush2.bf16.msra.mxu0 0
    %10420 = vmatprep.subr.bf16.mxu0 0
    %10421 = vmatpush2.bf16.msra.mxu0 0
    %10422 = vmatprep.subr.bf16.mxu0 0
    %10423 = vmatpush2.bf16.msra.mxu0 0
    %10424 = vmatprep.subr.bf16.mxu0 0
    %10425 = vmatpush2.bf16.msra.mxu0 0
    %10426 = vmatprep.subr.bf16.mxu0 0
    %10427 = vmatpush2.bf16.msra.mxu0 0
    %10428 = vmatprep.subr.bf16.mxu0 0
    %10429 = vmatpush2.bf16.msra.mxu0 0
    %10430 = vmatprep.subr.bf16.mxu0 0
    %10431 = vmatpush2.bf16.msra.mxu0 0
    %10432 = vmatprep.subr.bf16.mxu0 0
    %10433 = vmatpush2.bf16.msra.mxu0 0
    %10434 = vmatprep.mubr.bf16.mxu0 0
    %10435 = vmatmul.mubr.bf16.gmra.mxu0 %v9376
    %v10436 = vpop.f32.mrf.mxu0
    %v10437 = vadd.f32 %v10396, %v10436
    %v10438 = vpop.f32.mrf.mxu0
    %v10439 = vadd.f32 %v10398, %v10438
    %v10440 = vpop.f32.mrf.mxu0
    %v10441 = vpop.f32.mrf.mxu0
    %10442 = vdwg.mxu0
    %v10443 = vxor.u32 %v10355, 2147483648
    %v10444 = vmul.f32 %v10443, 1.442695
    %v10445 = vpow.pop %v10444
    %v10446 = vadd.f32 %v10445, 1.0
    %v10447 = vrcp.pop %v10446
    %v10448 = vmul.f32 1.0, %v10447
    %v10449 = vxor.u32 %v10357, 2147483648
    %v10450 = vmul.f32 %v10449, 1.442695
    %v10451 = vpow.pop %v10450
    %v10452 = vadd.f32 %v10451, 1.0
    %v10453 = vrcp.pop %v10452
    %v10454 = vmul.f32 1.0, %v10453
    %v10455 = vtanh.pop %v10437
    %v10456 = vxor.u32 %v10439, 2147483648
    %v10457 = vmul.f32 %v10456, 1.442695
    %v10458 = vpow.pop %v10457
    %v10459 = vadd.f32 %v10458, 1.0
    %v10460 = vrcp.pop %v10459
    %v10461 = vmul.f32 1.0, %v10460
    %v10462 = vmul.f32 %v10454, %v9373
    %v10463 = vmul.f32 %v10448, %v10455
    %v10464 = vadd.f32 %v10462, %v10463
    %v10465 = vtanh.pop %v10464
    %v10466 = vmul.f32 %v10461, %v10465
    %v10467 = vpack.c.bf16 %v10466, %v10466
    %v10468 = vld [vmem:[%s8] sm:$0xf]
    %v10469 = vld [vmem:[%s8 + $0x4] sm:$0xf]
    %v10470 = vld [vmem:[%s8 + $0x8] sm:$0xf]
    %v10471 = vld [vmem:[%s8 + $0xc] sm:$0xf]
    %v10472 = vld [vmem:[%s8 + $0x10] sm:$0xf]
    %v10473 = vld [vmem:[%s8 + $0x14] sm:$0xf]
    %v10474 = vld [vmem:[%s8 + $0x18] sm:$0xf]
    %v10475 = vld [vmem:[%s8 + $0x1c] sm:$0xf]
    %v10476 = vld [vmem:[%s8 + $0x20] sm:$0xf]
    %v10477 = vld [vmem:[%s8 + $0x24] sm:$0xf]
    %v10478 = vld [vmem:[%s8 + $0x28] sm:$0xf]
    %v10479 = vld [vmem:[%s8 + $0x2c] sm:$0xf]
    %v10480 = vld [vmem:[%s8 + $0x30] sm:$0xf]
    %v10481 = vld [vmem:[%s8 + $0x34] sm:$0xf]
    %v10482 = vld [vmem:[%s8 + $0x38] sm:$0xf]
    %v10483 = vld [vmem:[%s8 + $0x3c] sm:$0xf]
    %v10484 = vld [vmem:[%s8 + $0x40] sm:$0xf]
    %v10485 = vld [vmem:[%s8 + $0x44] sm:$0xf]
    %v10486 = vld [vmem:[%s8 + $0x48] sm:$0xf]
    %v10487 = vld [vmem:[%s8 + $0x4c] sm:$0xf]
    %v10488 = vld [vmem:[%s8 + $0x50] sm:$0xf]
    %v10489 = vld [vmem:[%s8 + $0x54] sm:$0xf]
    %v10490 = vld [vmem:[%s8 + $0x58] sm:$0xf]
    %v10491 = vld [vmem:[%s8 + $0x5c] sm:$0xf]
    %v10492 = vld [vmem:[%s8 + $0x60] sm:$0xf]
    %v10493 = vld [vmem:[%s8 + $0x64] sm:$0xf]
    %v10494 = vld [vmem:[%s8 + $0x68] sm:$0xf]
    %v10495 = vld [vmem:[%s8 + $0x6c] sm:$0xf]
    %v10496 = vld [vmem:[%s8 + $0x70] sm:$0xf]
    %v10497 = vld [vmem:[%s8 + $0x74] sm:$0xf]
    %v10498 = vld [vmem:[%s8 + $0x78] sm:$0xf]
    %v10499 = vld [vmem:[%s8 + $0x7c] sm:$0xf]
    %v10500 = vld [vmem:[%s9] sm:$0x1]
    %v10502 = vlaneseq
    %v10503 = vshrl.u32 %v10502, 7
    %v10504 = vsub.s32 0, %v10503
    %v10505 = vrot.slane %v10500, %v10504
    %v10539 = vunpack.c.l.b16 %v10468
    %v10540 = vunpack.c.l.b16 %v10469
    %v10541 = vunpack.c.l.b16 %v10470
    %v10542 = vunpack.c.l.b16 %v10471
    %v10543 = vunpack.c.l.b16 %v10472
    %v10544 = vunpack.c.l.b16 %v10473
    %v10545 = vunpack.c.l.b16 %v10474
    %v10546 = vunpack.c.l.b16 %v10475
    %v10547 = vunpack.c.l.b16 %v10476
    %v10548 = vunpack.c.l.b16 %v10477
    %v10549 = vunpack.c.l.b16 %v10478
    %v10550 = vunpack.c.l.b16 %v10479
    %v10551 = vunpack.c.l.b16 %v10480
    %v10552 = vunpack.c.l.b16 %v10481
    %v10553 = vunpack.c.l.b16 %v10482
    %v10554 = vunpack.c.l.b16 %v10483
    %v10555 = vunpack.c.l.b16 %v10484
    %v10556 = vunpack.c.l.b16 %v10485
    %v10557 = vunpack.c.l.b16 %v10486
    %v10558 = vunpack.c.l.b16 %v10487
    %v10559 = vunpack.c.l.b16 %v10488
    %v10560 = vunpack.c.l.b16 %v10489
    %v10561 = vunpack.c.l.b16 %v10490
    %v10562 = vunpack.c.l.b16 %v10491
    %v10563 = vunpack.c.l.b16 %v10492
    %v10564 = vunpack.c.l.b16 %v10493
    %v10565 = vunpack.c.l.b16 %v10494
    %v10566 = vunpack.c.l.b16 %v10495
    %v10567 = vunpack.c.l.b16 %v10496
    %v10568 = vunpack.c.l.b16 %v10497
    %v10569 = vunpack.c.l.b16 %v10498
    %v10570 = vunpack.c.l.b16 %v10499
    %v10571 = vpack.c.b16 %v10540, %v10539
    %v10572 = vpack.c.b16 %v10542, %v10541
    %v10573 = vpack.c.b16 %v10544, %v10543
    %v10574 = vpack.c.b16 %v10546, %v10545
    %v10575 = vpack.c.b16 %v10548, %v10547
    %v10576 = vpack.c.b16 %v10550, %v10549
    %v10577 = vpack.c.b16 %v10552, %v10551
    %v10578 = vpack.c.b16 %v10554, %v10553
    %v10579 = vpack.c.b16 %v10556, %v10555
    %v10580 = vpack.c.b16 %v10558, %v10557
    %v10581 = vpack.c.b16 %v10560, %v10559
    %v10582 = vpack.c.b16 %v10562, %v10561
    %v10583 = vpack.c.b16 %v10564, %v10563
    %v10584 = vpack.c.b16 %v10566, %v10565
    %v10585 = vpack.c.b16 %v10568, %v10567
    %v10586 = vpack.c.b16 %v10570, %v10569
    %10603 = vmatprep.subr.bf16.mxu0 0
    %10604 = vmatpush1.bf16.msra.mxu0 %v10578
    %10605 = vmatprep.subr.bf16.mxu0 0
    %10606 = vmatpush1.bf16.msra.mxu0 %v10577
    %10607 = vmatprep.subr.bf16.mxu0 0
    %10608 = vmatpush1.bf16.msra.mxu0 %v10576
    %10609 = vmatprep.subr.bf16.mxu0 0
    %10610 = vmatpush1.bf16.msra.mxu0 %v10575
    %10611 = vmatprep.subr.bf16.mxu0 0
    %10612 = vmatpush1.bf16.msra.mxu0 %v10574
    %10613 = vmatprep.subr.bf16.mxu0 0
    %10614 = vmatpush1.bf16.msra.mxu0 %v10573
    %10615 = vmatprep.subr.bf16.mxu0 0
    %10616 = vmatpush1.bf16.msra.mxu0 %v10572
    %10617 = vmatprep.subr.bf16.mxu0 0
    %10618 = vmatpush1.bf16.msra.mxu0 %v10571
    %10619 = vmatprep.subr.bf16.mxu0 0
    %10620 = vmatpush2.bf16.msra.mxu0 %v10586
    %10621 = vmatprep.subr.bf16.mxu0 0
    %10622 = vmatpush2.bf16.msra.mxu0 %v10585
    %10623 = vmatprep.subr.bf16.mxu0 0
    %10624 = vmatpush2.bf16.msra.mxu0 %v10584
    %10625 = vmatprep.subr.bf16.mxu0 0
    %10626 = vmatpush2.bf16.msra.mxu0 %v10583
    %10627 = vmatprep.subr.bf16.mxu0 0
    %10628 = vmatpush2.bf16.msra.mxu0 %v10582
    %10629 = vmatprep.subr.bf16.mxu0 0
    %10630 = vmatpush2.bf16.msra.mxu0 %v10581
    %10631 = vmatprep.subr.bf16.mxu0 0
    %10632 = vmatpush2.bf16.msra.mxu0 %v10580
    %10633 = vmatprep.subr.bf16.mxu0 0
    %10634 = vmatpush2.bf16.msra.mxu0 %v10579
    %10635 = vmatprep.mubr.bf16.mxu0 %v9680
    %10636 = vmatmul.mubr.bf16.gmra.mxu0 %v10467
    %v10637 = vpop.f32.mrf.mxu0
    %v10638 = vadd.f32 %v10505, %v10637
    %v10639 = vpop.f32.mrf.mxu0
    %v10640 = vpop.f32.mrf.mxu0
    %v10641 = vpop.f32.mrf.mxu0
    %10642 = vdwg.mxu0
    %s10643 = scalar_lea.vmem [#allocation12], 56
    %10644 = vst [vmem:[%s10643] sm:$0xff] %v10638
    // Predicated region
    $region58: #{seq2seq_forward.1} parent=1 // pred_check
      _
    $region59: #{seq2seq_forward.1} parent=1 // pred_check_branch
      %10646 = sbr.rel (0) target = $region61
    $region60: #{seq2seq_forward.1} parent=1 // pred_region
      %s10648 = ssub.s32 1024, 1024
      %10649 = vsyncadd [#allocation6], %s10648
      %s10650 = sshll.u32 [#allocation12], 4
      %s10651 = int_to_ptr.vmem [resolvable:$true] %s10650
      %10656 = dma.vmem_to_hbm [thread:$0]  %s10651, 1024, %s10, [#allocation6], 128, 128, 8
    $region61: #{seq2seq_forward.1} parent=1 // pred_fallthru
      _
    // Predicated region
    $region62: #{seq2seq_forward.1} parent=1 // pred_check
      _
    $region63: #{seq2seq_forward.1} parent=1 // pred_check_branch
      %10658 = sbr.rel (0) target = $region65
    $region64: #{seq2seq_forward.1} parent=1 // pred_region
      %10659 = dma.done [#allocation6], 1024
    $region65: #{seq2seq_forward.1} parent=1 // pred_fallthru
      _
    %10660 = vsyncpa [#allocation5], 1
    %10661 = vsyncpa [#allocation10], 1
    %10662 = vsyncpa [#allocation6], 1
    %10663 = vsyncpa [#allocation7], 1

</llo_original>
